<compile_context>
chip_gen: v6e
topology: v6e:2x2x1
jax: 0.10.0
libtpu: 0.0.40
codegen_flags: <defaults>
</compile_context>

<pallas_src>
import jax
import jax.numpy as jnp
from jax.experimental import pallas as pl
from jax.experimental.pallas import tpu as pltpu

EPS = 1e-5
_COMPILER_PARAMS = pltpu.CompilerParams(vmem_limit_bytes=32 * 1024 * 1024)


def _vmem():
    return pl.BlockSpec(memory_space=pltpu.MemorySpace.VMEM)


# ----------------------------- in-kernel helpers -----------------------------

def _bn_relu_pool(z, gamma, beta):
    """z: (C, 4*Rq) conv output, columns ordered (pool corner, oh, ow, b).

    Training-mode BatchNorm (batch stats over all columns = N,H,W) folded into
    a single scale/shift FMA, then ReLU, then the 2x2 max-pool as a max over
    the 4 contiguous corner column blocks.  Returns (C, Rq).
    """
    mean = jnp.mean(z, axis=1, keepdims=True)                 # (C, 1)
    var = jnp.mean((z - mean) ** 2, axis=1, keepdims=True)    # biased, as in BN fwd
    s = gamma * jax.lax.rsqrt(var + EPS)                      # (C, 1)
    t = beta - s * mean
    z = jnp.maximum(z * s + t, 0.0)                           # BN + ReLU (one FMA + max)
    rq = z.shape[1] // 4
    return jnp.maximum(jnp.maximum(z[:, :rq], z[:, rq:2 * rq]),
                       jnp.maximum(z[:, 2 * rq:3 * rq], z[:, 3 * rq:]))


# ----------------------------- Pallas kernels -----------------------------

def stage1_kernel(p_ref, w_ref, g_ref, b_ref, o_ref):
    """conv1 + BN1 + ReLU + 2x2 maxpool, fully in VMEM.

    p: (25, 4*14*14*B) im2col'd input, columns (corner, oh, ow, b)
    w: (6, 25) conv1 weight, (dh, dw, cin) column order
    g/b: (6, 1) BN affine params.   o: (6, 14*14*B)
    """
    z = jnp.dot(w_ref[...], p_ref[...], preferred_element_type=jnp.float32)
    o_ref[...] = _bn_relu_pool(z, g_ref[...], b_ref[...])


def stage2_head_kernel(p_ref, w_ref, g_ref, b_ref,
                       fc1w_ref, fc1b_ref, fc2w_ref, fc2b_ref,
                       fc3w_ref, fc3b_ref, o_ref):
    """conv2 + BN2 + ReLU + maxpool + fc1 + ReLU + fc2 + ReLU + fc3.

    p: (150, 4*5*5*B) im2col'd stage-1 output, columns (corner, oh, ow, b)
    w: (16, 150).  fc1w: (25, 120, 16) per-spatial-position slabs of the fc1
    weight (permuted to our layout at init).  FC biases are (out, 1) columns.
    o: (10, B) logits (transposed; batch on lanes).
    """
    z = jnp.dot(w_ref[...], p_ref[...], preferred_element_type=jnp.float32)
    a = _bn_relu_pool(z, g_ref[...], b_ref[...])       # (16, 25*B), cols (oh, ow, b)
    batch = a.shape[1] // 25
    fc1w = fc1w_ref[...]                               # (25, 120, 16)

    # fc1: flatten(NCHW) + matmul expressed as 25 accumulated per-position dots.
    h = jnp.zeros((fc1w.shape[1], batch), jnp.float32)
    for k in range(25):
        h = h + jnp.dot(fc1w[k], a[:, k * batch:(k + 1) * batch],
                        preferred_element_type=jnp.float32)
    h = jnp.maximum(h + fc1b_ref[...], 0.0)            # (120, B)
    h = jnp.maximum(jnp.dot(fc2w_ref[...], h, preferred_element_type=jnp.float32)
                    + fc2b_ref[...], 0.0)              # (84, B)
    o_ref[...] = (jnp.dot(fc3w_ref[...], h, preferred_element_type=jnp.float32)
                  + fc3b_ref[...])                     # (10, B)


# ----------------------------- XLA-side glue -----------------------------

def _im2col_corners_T(x, k):
    """x: (B, H, W, C) NHWC -> (k*k*C, 4 * (OH//2) * (OW//2) * B).

    Row order: (dh, dw, cin).  Column order: (pool corner 2p+q, oh, ow, b), so
    that the 2x2/stride-2 max-pool of the conv output is a max over 4
    contiguous column blocks inside the kernel, and per-spatial-position
    batch blocks are contiguous (consumed by the fused fc1).
    """
    B, H, W, C = x.shape
    oh, ow = H - k + 1, W - k + 1
    taps = [x[:, dh:dh + oh, dw:dw + ow, :] for dh in range(k) for dw in range(k)]
    p = jnp.stack(taps, axis=0)                           # (k*k, B, OH, OW, C)
    p = p.reshape(k * k, B, oh // 2, 2, ow // 2, 2, C)    # split pool parity
    p = jnp.transpose(p, (0, 6, 3, 5, 2, 4, 1))           # (tap, C, p, q, i, j, b)
    return p.reshape(k * k * C, 4 * (oh // 2) * (ow // 2) * B)


# ----------------------------- parameters -----------------------------

def init_params(key):
    """Raw parameters in PyTorch-native shapes (Conv2d / BatchNorm2d / Linear).

    Conv biases are omitted: with BatchNorm in training mode (batch stats) the
    conv bias is exactly cancelled by the mean subtraction, so the forward
    output is unchanged.
    """
    ks = jax.random.split(key, 12)
    n = lambda k, shape, s=0.1: s * jax.random.normal(k, shape, jnp.float32)
    return dict(
        conv1_w=n(ks[0], (6, 1, 5, 5)),
        conv2_w=n(ks[1], (16, 6, 5, 5)),
        bn1_g=1.0 + n(ks[2], (6,)), bn1_b=n(ks[3], (6,)),
        bn2_g=1.0 + n(ks[4], (16,)), bn2_b=n(ks[5], (16,)),
        fc1_w=n(ks[6], (120, 400)), fc1_b=n(ks[7], (120,)),
        fc2_w=n(ks[8], (84, 120)), fc2_b=n(ks[9], (84,)),
        fc3_w=n(ks[10], (10, 84)), fc3_b=n(ks[11], (10,)),
    )


def prepare_params(raw):
    """One-time weight re-layouts (done at init, never per forward)."""
    conv1_wT = raw["conv1_w"].reshape(6, 25)                     # (dh, dw) cols, cin=1
    conv2_wT = jnp.transpose(raw["conv2_w"], (2, 3, 1, 0)).reshape(150, 16).T  # (16,150)
    # fc1 expects PyTorch NCHW-flatten order f = c*25 + i*5 + j; the kernel
    # holds pooled activations as (c, (i,j,b)), so pre-split fc1_w into 25
    # per-position (120, 16) slabs.
    fc1_slabs = jnp.transpose(raw["fc1_w"].reshape(120, 16, 25), (2, 0, 1))  # (25,120,16)
    col = lambda v: v.reshape(-1, 1)
    return dict(
        conv1_wT=conv1_wT, conv2_wT=conv2_wT,
        bn1_g=col(raw["bn1_g"]), bn1_b=col(raw["bn1_b"]),
        bn2_g=col(raw["bn2_g"]), bn2_b=col(raw["bn2_b"]),
        fc1_w_slabs=fc1_slabs, fc1_b=col(raw["fc1_b"]),
        fc2_w=raw["fc2_w"], fc2_b=col(raw["fc2_b"]),
        fc3_w=raw["fc3_w"], fc3_b=col(raw["fc3_b"]),
    )


# ----------------------------- forward -----------------------------

def lenet_bn_forward(x_nchw, p):
    B = x_nchw.shape[0]
    x = jnp.transpose(x_nchw, (0, 2, 3, 1))                    # NCHW -> NHWC (B,32,32,1)

    # stage 1: conv1 (1->6, k5) + BN + ReLU + pool : 32 -> 28 -> 14
    p1 = _im2col_corners_T(x, 5)                               # (25, 4*196*B)
    a1 = pl.pallas_call(
        stage1_kernel,
        out_shape=jax.ShapeDtypeStruct((6, 196 * B), jnp.float32),
        in_specs=[_vmem()] * 4, out_specs=_vmem(),
        compiler_params=_COMPILER_PARAMS,
    )(p1, p["conv1_wT"], p["bn1_g"], p["bn1_b"])               # (6, 14*14*B), cols (i,j,b)

    # stage 2 + FC head: conv2 (6->16, k5) + BN + ReLU + pool + fc1/2/3
    a1_nhwc = jnp.transpose(a1.reshape(6, 14, 14, B), (3, 1, 2, 0))   # (B,14,14,6)
    p2 = _im2col_corners_T(a1_nhwc, 5)                         # (150, 4*25*B)
    out_t = pl.pallas_call(
        stage2_head_kernel,
        out_shape=jax.ShapeDtypeStruct((10, B), jnp.float32),
        in_specs=[_vmem()] * 10, out_specs=_vmem(),
        compiler_params=_COMPILER_PARAMS,
    )(p2, p["conv2_wT"], p["bn2_g"], p["bn2_b"],
      p["fc1_w_slabs"], p["fc1_b"], p["fc2_w"], p["fc2_b"],
      p["fc3_w"], p["fc3_b"])
    return out_t.T                                             # (B, 10)


if __name__ == "__main__":
    key = jax.random.PRNGKey(0)
    k_x, k_p = jax.random.split(key)
    # LeNet geometry requires a 32x32 single-channel input for 16*5*5 features.
    x = jax.random.normal(k_x, (2, 1, 32, 32), jnp.float32)
    params = prepare_params(init_params(k_p))

    fwd = jax.jit(lenet_bn_forward)
    out = jax.block_until_ready(fwd(x, params))
    assert out.shape == (2, 10) and out.dtype == jnp.float32
    print("KERNEL_OK")
</pallas_src>

<mosaic_0001>
module attributes {stable_mosaic.version = 11 : i64} {
  func.func @stage1_kernel(%arg0: memref<25x1568xf32, #tpu.memory_space<vmem>>, %arg1: memref<6x25xf32, #tpu.memory_space<vmem>>, %arg2: memref<6x1xf32, #tpu.memory_space<vmem>>, %arg3: memref<6x1xf32, #tpu.memory_space<vmem>>, %arg4: memref<6x392xf32, #tpu.memory_space<vmem>>) attributes {dimension_semantics = [], scalar_prefetch = 0 : i64, scratch_operands = 0 : i64, tpu.core_type = #tpu.core_type<tc>} {
    %c0 = arith.constant 0 : index
    %c0_0 = arith.constant 0 : index
    %0 = vector.load %arg1[%c0, %c0_0] : memref<6x25xf32, #tpu.memory_space<vmem>>, vector<6x25xf32>
    %c0_1 = arith.constant 0 : index
    %c0_2 = arith.constant 0 : index
    %1 = vector.load %arg0[%c0_1, %c0_2] : memref<25x1568xf32, #tpu.memory_space<vmem>>, vector<25x1568xf32>
    %cst = arith.constant dense<0.000000e+00> : vector<6x1568xf32>
    %2 = tpu.matmul %0, %1, %cst {dimension_numbers = #tpu.dot_dimension_numbers<[1], [0], [0], [1], [0, 0, 1, 1], [], []>} : vector<6x25xf32>, vector<25x1568xf32>, vector<6x1568xf32> -> vector<6x1568xf32>
    %c0_3 = arith.constant 0 : index
    %c0_4 = arith.constant 0 : index
    %3 = vector.load %arg2[%c0_3, %c0_4] : memref<6x1xf32, #tpu.memory_space<vmem>>, vector<6x1xf32>
    %c0_5 = arith.constant 0 : index
    %c0_6 = arith.constant 0 : index
    %4 = vector.load %arg3[%c0_5, %c0_6] : memref<6x1xf32, #tpu.memory_space<vmem>>, vector<6x1xf32>
    %cst_7 = arith.constant dense<0.000000e+00> : vector<6xf32>
    %5 = vector.multi_reduction <add>, %2, %cst_7 [1] : vector<6x1568xf32> to vector<6xf32>
    %6 = vector.shape_cast %5 : vector<6xf32> to vector<6x1xf32>
    %cst_8 = arith.constant 1.568000e+03 : f32
    %7 = vector.broadcast %cst_8 : f32 to vector<6x1xf32>
    %8 = arith.divf %6, %7 : vector<6x1xf32>
    %9 = vector.broadcast %8 : vector<6x1xf32> to vector<6x1568xf32>
    %10 = arith.subf %2, %9 : vector<6x1568xf32>
    %11 = arith.mulf %10, %10 : vector<6x1568xf32>
    %cst_9 = arith.constant dense<0.000000e+00> : vector<6xf32>
    %12 = vector.multi_reduction <add>, %11, %cst_9 [1] : vector<6x1568xf32> to vector<6xf32>
    %13 = vector.shape_cast %12 : vector<6xf32> to vector<6x1xf32>
    %cst_10 = arith.constant 1.568000e+03 : f32
    %14 = vector.broadcast %cst_10 : f32 to vector<6x1xf32>
    %15 = arith.divf %13, %14 : vector<6x1xf32>
    %cst_11 = arith.constant 9.99999974E-6 : f32
    %16 = vector.broadcast %cst_11 : f32 to vector<6x1xf32>
    %17 = arith.addf %15, %16 : vector<6x1xf32>
    %18 = math.rsqrt %17 : vector<6x1xf32>
    %19 = arith.mulf %3, %18 : vector<6x1xf32>
    %20 = arith.mulf %19, %8 : vector<6x1xf32>
    %21 = arith.subf %4, %20 : vector<6x1xf32>
    %22 = vector.broadcast %19 : vector<6x1xf32> to vector<6x1568xf32>
    %23 = arith.mulf %2, %22 : vector<6x1568xf32>
    %24 = vector.broadcast %21 : vector<6x1xf32> to vector<6x1568xf32>
    %25 = arith.addf %23, %24 : vector<6x1568xf32>
    %cst_12 = arith.constant 0.000000e+00 : f32
    %26 = vector.broadcast %cst_12 : f32 to vector<6x1568xf32>
    %27 = arith.maximumf %25, %26 : vector<6x1568xf32>
    %28 = vector.extract_strided_slice %27 {offsets = [0, 0], sizes = [6, 392], strides = [1, 1]} : vector<6x1568xf32> to vector<6x392xf32>
    %29 = vector.extract_strided_slice %27 {offsets = [0, 392], sizes = [6, 392], strides = [1, 1]} : vector<6x1568xf32> to vector<6x392xf32>
    %30 = arith.maximumf %28, %29 : vector<6x392xf32>
    %31 = vector.extract_strided_slice %27 {offsets = [0, 784], sizes = [6, 392], strides = [1, 1]} : vector<6x1568xf32> to vector<6x392xf32>
    %32 = vector.extract_strided_slice %27 {offsets = [0, 1176], sizes = [6, 392], strides = [1, 1]} : vector<6x1568xf32> to vector<6x392xf32>
    %33 = arith.maximumf %31, %32 : vector<6x392xf32>
    %34 = arith.maximumf %30, %33 : vector<6x392xf32>
    %c0_13 = arith.constant 0 : index
    %c0_14 = arith.constant 0 : index
    %35 = vector.load %arg4[%c0_13, %c0_14] : memref<6x392xf32, #tpu.memory_space<vmem>>, vector<6x392xf32>
    tpu.vector_store %arg4[%c0_13, %c0_14], %34 {strides = array<i32>} : memref<6x392xf32, #tpu.memory_space<vmem>>, vector<6x392xf32>,
    return
  }
}

module attributes {stable_mosaic.version = 11 : i64} {
  func.func @stage2_head_kernel(%arg0: memref<150x200xf32, #tpu.memory_space<vmem>>, %arg1: memref<16x150xf32, #tpu.memory_space<vmem>>, %arg2: memref<16x1xf32, #tpu.memory_space<vmem>>, %arg3: memref<16x1xf32, #tpu.memory_space<vmem>>, %arg4: memref<25x120x16xf32, #tpu.memory_space<vmem>>, %arg5: memref<120x1xf32, #tpu.memory_space<vmem>>, %arg6: memref<84x120xf32, #tpu.memory_space<vmem>>, %arg7: memref<84x1xf32, #tpu.memory_space<vmem>>, %arg8: memref<10x84xf32, #tpu.memory_space<vmem>>, %arg9: memref<10x1xf32, #tpu.memory_space<vmem>>, %arg10: memref<10x2xf32, #tpu.memory_space<vmem>>) attributes {dimension_semantics = [], scalar_prefetch = 0 : i64, scratch_operands = 0 : i64, tpu.core_type = #tpu.core_type<tc>} {
    %c0 = arith.constant 0 : index
    %c0_0 = arith.constant 0 : index
    %0 = vector.load %arg1[%c0, %c0_0] : memref<16x150xf32, #tpu.memory_space<vmem>>, vector<16x150xf32>
    %c0_1 = arith.constant 0 : index
    %c0_2 = arith.constant 0 : index
    %1 = vector.load %arg0[%c0_1, %c0_2] : memref<150x200xf32, #tpu.memory_space<vmem>>, vector<150x200xf32>
    %cst = arith.constant dense<0.000000e+00> : vector<16x200xf32>
    %2 = tpu.matmul %0, %1, %cst {dimension_numbers = #tpu.dot_dimension_numbers<[1], [0], [0], [1], [0, 0, 1, 1], [], []>} : vector<16x150xf32>, vector<150x200xf32>, vector<16x200xf32> -> vector<16x200xf32>
    %c0_3 = arith.constant 0 : index
    %c0_4 = arith.constant 0 : index
    %3 = vector.load %arg2[%c0_3, %c0_4] : memref<16x1xf32, #tpu.memory_space<vmem>>, vector<16x1xf32>
    %c0_5 = arith.constant 0 : index
    %c0_6 = arith.constant 0 : index
    %4 = vector.load %arg3[%c0_5, %c0_6] : memref<16x1xf32, #tpu.memory_space<vmem>>, vector<16x1xf32>
    %cst_7 = arith.constant dense<0.000000e+00> : vector<16xf32>
    %5 = vector.multi_reduction <add>, %2, %cst_7 [1] : vector<16x200xf32> to vector<16xf32>
    %6 = vector.shape_cast %5 : vector<16xf32> to vector<16x1xf32>
    %cst_8 = arith.constant 2.000000e+02 : f32
    %7 = vector.broadcast %cst_8 : f32 to vector<16x1xf32>
    %8 = arith.divf %6, %7 : vector<16x1xf32>
    %9 = vector.broadcast %8 : vector<16x1xf32> to vector<16x200xf32>
    %10 = arith.subf %2, %9 : vector<16x200xf32>
    %11 = arith.mulf %10, %10 : vector<16x200xf32>
    %cst_9 = arith.constant dense<0.000000e+00> : vector<16xf32>
    %12 = vector.multi_reduction <add>, %11, %cst_9 [1] : vector<16x200xf32> to vector<16xf32>
    %13 = vector.shape_cast %12 : vector<16xf32> to vector<16x1xf32>
    %cst_10 = arith.constant 2.000000e+02 : f32
    %14 = vector.broadcast %cst_10 : f32 to vector<16x1xf32>
    %15 = arith.divf %13, %14 : vector<16x1xf32>
    %cst_11 = arith.constant 9.99999974E-6 : f32
    %16 = vector.broadcast %cst_11 : f32 to vector<16x1xf32>
    %17 = arith.addf %15, %16 : vector<16x1xf32>
    %18 = math.rsqrt %17 : vector<16x1xf32>
    %19 = arith.mulf %3, %18 : vector<16x1xf32>
    %20 = arith.mulf %19, %8 : vector<16x1xf32>
    %21 = arith.subf %4, %20 : vector<16x1xf32>
    %22 = vector.broadcast %19 : vector<16x1xf32> to vector<16x200xf32>
    %23 = arith.mulf %2, %22 : vector<16x200xf32>
    %24 = vector.broadcast %21 : vector<16x1xf32> to vector<16x200xf32>
    %25 = arith.addf %23, %24 : vector<16x200xf32>
    %cst_12 = arith.constant 0.000000e+00 : f32
    %26 = vector.broadcast %cst_12 : f32 to vector<16x200xf32>
    %27 = arith.maximumf %25, %26 : vector<16x200xf32>
    %28 = vector.extract_strided_slice %27 {offsets = [0, 0], sizes = [16, 50], strides = [1, 1]} : vector<16x200xf32> to vector<16x50xf32>
    %29 = vector.extract_strided_slice %27 {offsets = [0, 50], sizes = [16, 50], strides = [1, 1]} : vector<16x200xf32> to vector<16x50xf32>
    %30 = arith.maximumf %28, %29 : vector<16x50xf32>
    %31 = vector.extract_strided_slice %27 {offsets = [0, 100], sizes = [16, 50], strides = [1, 1]} : vector<16x200xf32> to vector<16x50xf32>
    %32 = vector.extract_strided_slice %27 {offsets = [0, 150], sizes = [16, 50], strides = [1, 1]} : vector<16x200xf32> to vector<16x50xf32>
    %33 = arith.maximumf %31, %32 : vector<16x50xf32>
    %34 = arith.maximumf %30, %33 : vector<16x50xf32>
    %c0_13 = arith.constant 0 : index
    %c0_14 = arith.constant 0 : index
    %c0_15 = arith.constant 0 : index
    %35 = vector.load %arg4[%c0_13, %c0_14, %c0_15] : memref<25x120x16xf32, #tpu.memory_space<vmem>>, vector<25x120x16xf32>
    %cst_16 = arith.constant 0.000000e+00 : f32
    %36 = vector.broadcast %cst_16 : f32 to vector<120x2xf32>
    %37 = vector.extract_strided_slice %35 {offsets = [0, 0, 0], sizes = [1, 120, 16], strides = [1, 1, 1]} : vector<25x120x16xf32> to vector<1x120x16xf32>
    %38 = vector.shape_cast %37 : vector<1x120x16xf32> to vector<120x16xf32>
    %39 = vector.extract_strided_slice %34 {offsets = [0, 0], sizes = [16, 2], strides = [1, 1]} : vector<16x50xf32> to vector<16x2xf32>
    %cst_17 = arith.constant dense<0.000000e+00> : vector<120x2xf32>
    %40 = tpu.matmul %38, %39, %cst_17 {dimension_numbers = #tpu.dot_dimension_numbers<[1], [0], [0], [1], [0, 0, 1, 1], [], []>} : vector<120x16xf32>, vector<16x2xf32>, vector<120x2xf32> -> vector<120x2xf32>
    %41 = arith.addf %36, %40 : vector<120x2xf32>
    %42 = vector.extract_strided_slice %35 {offsets = [1, 0, 0], sizes = [1, 120, 16], strides = [1, 1, 1]} : vector<25x120x16xf32> to vector<1x120x16xf32>
    %43 = vector.shape_cast %42 : vector<1x120x16xf32> to vector<120x16xf32>
    %44 = vector.extract_strided_slice %34 {offsets = [0, 2], sizes = [16, 2], strides = [1, 1]} : vector<16x50xf32> to vector<16x2xf32>
    %cst_18 = arith.constant dense<0.000000e+00> : vector<120x2xf32>
    %45 = tpu.matmul %43, %44, %cst_18 {dimension_numbers = #tpu.dot_dimension_numbers<[1], [0], [0], [1], [0, 0, 1, 1], [], []>} : vector<120x16xf32>, vector<16x2xf32>, vector<120x2xf32> -> vector<120x2xf32>
    %46 = arith.addf %41, %45 : vector<120x2xf32>
    %47 = vector.extract_strided_slice %35 {offsets = [2, 0, 0], sizes = [1, 120, 16], strides = [1, 1, 1]} : vector<25x120x16xf32> to vector<1x120x16xf32>
    %48 = vector.shape_cast %47 : vector<1x120x16xf32> to vector<120x16xf32>
    %49 = vector.extract_strided_slice %34 {offsets = [0, 4], sizes = [16, 2], strides = [1, 1]} : vector<16x50xf32> to vector<16x2xf32>
    %cst_19 = arith.constant dense<0.000000e+00> : vector<120x2xf32>
    %50 = tpu.matmul %48, %49, %cst_19 {dimension_numbers = #tpu.dot_dimension_numbers<[1], [0], [0], [1], [0, 0, 1, 1], [], []>} : vector<120x16xf32>, vector<16x2xf32>, vector<120x2xf32> -> vector<120x2xf32>
    %51 = arith.addf %46, %50 : vector<120x2xf32>
    %52 = vector.extract_strided_slice %35 {offsets = [3, 0, 0], sizes = [1, 120, 16], strides = [1, 1, 1]} : vector<25x120x16xf32> to vector<1x120x16xf32>
    %53 = vector.shape_cast %52 : vector<1x120x16xf32> to vector<120x16xf32>
    %54 = vector.extract_strided_slice %34 {offsets = [0, 6], sizes = [16, 2], strides = [1, 1]} : vector<16x50xf32> to vector<16x2xf32>
    %cst_20 = arith.constant dense<0.000000e+00> : vector<120x2xf32>
    %55 = tpu.matmul %53, %54, %cst_20 {dimension_numbers = #tpu.dot_dimension_numbers<[1], [0], [0], [1], [0, 0, 1, 1], [], []>} : vector<120x16xf32>, vector<16x2xf32>, vector<120x2xf32> -> vector<120x2xf32>
    %56 = arith.addf %51, %55 : vector<120x2xf32>
    %57 = vector.extract_strided_slice %35 {offsets = [4, 0, 0], sizes = [1, 120, 16], strides = [1, 1, 1]} : vector<25x120x16xf32> to vector<1x120x16xf32>
    %58 = vector.shape_cast %57 : vector<1x120x16xf32> to vector<120x16xf32>
    %59 = vector.extract_strided_slice %34 {offsets = [0, 8], sizes = [16, 2], strides = [1, 1]} : vector<16x50xf32> to vector<16x2xf32>
    %cst_21 = arith.constant dense<0.000000e+00> : vector<120x2xf32>
    %60 = tpu.matmul %58, %59, %cst_21 {dimension_numbers = #tpu.dot_dimension_numbers<[1], [0], [0], [1], [0, 0, 1, 1], [], []>} : vector<120x16xf32>, vector<16x2xf32>, vector<120x2xf32> -> vector<120x2xf32>
    %61 = arith.addf %56, %60 : vector<120x2xf32>
    %62 = vector.extract_strided_slice %35 {offsets = [5, 0, 0], sizes = [1, 120, 16], strides = [1, 1, 1]} : vector<25x120x16xf32> to vector<1x120x16xf32>
    %63 = vector.shape_cast %62 : vector<1x120x16xf32> to vector<120x16xf32>
    %64 = vector.extract_strided_slice %34 {offsets = [0, 10], sizes = [16, 2], strides = [1, 1]} : vector<16x50xf32> to vector<16x2xf32>
    %cst_22 = arith.constant dense<0.000000e+00> : vector<120x2xf32>
    %65 = tpu.matmul %63, %64, %cst_22 {dimension_numbers = #tpu.dot_dimension_numbers<[1], [0], [0], [1], [0, 0, 1, 1], [], []>} : vector<120x16xf32>, vector<16x2xf32>, vector<120x2xf32> -> vector<120x2xf32>
    %66 = arith.addf %61, %65 : vector<120x2xf32>
    %67 = vector.extract_strided_slice %35 {offsets = [6, 0, 0], sizes = [1, 120, 16], strides = [1, 1, 1]} : vector<25x120x16xf32> to vector<1x120x16xf32>
    %68 = vector.shape_cast %67 : vector<1x120x16xf32> to vector<120x16xf32>
    %69 = vector.extract_strided_slice %34 {offsets = [0, 12], sizes = [16, 2], strides = [1, 1]} : vector<16x50xf32> to vector<16x2xf32>
    %cst_23 = arith.constant dense<0.000000e+00> : vector<120x2xf32>
    %70 = tpu.matmul %68, %69, %cst_23 {dimension_numbers = #tpu.dot_dimension_numbers<[1], [0], [0], [1], [0, 0, 1, 1], [], []>} : vector<120x16xf32>, vector<16x2xf32>, vector<120x2xf32> -> vector<120x2xf32>
    %71 = arith.addf %66, %70 : vector<120x2xf32>
    %72 = vector.extract_strided_slice %35 {offsets = [7, 0, 0], sizes = [1, 120, 16], strides = [1, 1, 1]} : vector<25x120x16xf32> to vector<1x120x16xf32>
    %73 = vector.shape_cast %72 : vector<1x120x16xf32> to vector<120x16xf32>
    %74 = vector.extract_strided_slice %34 {offsets = [0, 14], sizes = [16, 2], strides = [1, 1]} : vector<16x50xf32> to vector<16x2xf32>
    %cst_24 = arith.constant dense<0.000000e+00> : vector<120x2xf32>
    %75 = tpu.matmul %73, %74, %cst_24 {dimension_numbers = #tpu.dot_dimension_numbers<[1], [0], [0], [1], [0, 0, 1, 1], [], []>} : vector<120x16xf32>, vector<16x2xf32>, vector<120x2xf32> -> vector<120x2xf32>
    %76 = arith.addf %71, %75 : vector<120x2xf32>
    %77 = vector.extract_strided_slice %35 {offsets = [8, 0, 0], sizes = [1, 120, 16], strides = [1, 1, 1]} : vector<25x120x16xf32> to vector<1x120x16xf32>
    %78 = vector.shape_cast %77 : vector<1x120x16xf32> to vector<120x16xf32>
    %79 = vector.extract_strided_slice %34 {offsets = [0, 16], sizes = [16, 2], strides = [1, 1]} : vector<16x50xf32> to vector<16x2xf32>
    %cst_25 = arith.constant dense<0.000000e+00> : vector<120x2xf32>
    %80 = tpu.matmul %78, %79, %cst_25 {dimension_numbers = #tpu.dot_dimension_numbers<[1], [0], [0], [1], [0, 0, 1, 1], [], []>} : vector<120x16xf32>, vector<16x2xf32>, vector<120x2xf32> -> vector<120x2xf32>
    %81 = arith.addf %76, %80 : vector<120x2xf32>
    %82 = vector.extract_strided_slice %35 {offsets = [9, 0, 0], sizes = [1, 120, 16], strides = [1, 1, 1]} : vector<25x120x16xf32> to vector<1x120x16xf32>
    %83 = vector.shape_cast %82 : vector<1x120x16xf32> to vector<120x16xf32>
    %84 = vector.extract_strided_slice %34 {offsets = [0, 18], sizes = [16, 2], strides = [1, 1]} : vector<16x50xf32> to vector<16x2xf32>
    %cst_26 = arith.constant dense<0.000000e+00> : vector<120x2xf32>
    %85 = tpu.matmul %83, %84, %cst_26 {dimension_numbers = #tpu.dot_dimension_numbers<[1], [0], [0], [1], [0, 0, 1, 1], [], []>} : vector<120x16xf32>, vector<16x2xf32>, vector<120x2xf32> -> vector<120x2xf32>
    %86 = arith.addf %81, %85 : vector<120x2xf32>
    %87 = vector.extract_strided_slice %35 {offsets = [10, 0, 0], sizes = [1, 120, 16], strides = [1, 1, 1]} : vector<25x120x16xf32> to vector<1x120x16xf32>
    %88 = vector.shape_cast %87 : vector<1x120x16xf32> to vector<120x16xf32>
    %89 = vector.extract_strided_slice %34 {offsets = [0, 20], sizes = [16, 2], strides = [1, 1]} : vector<16x50xf32> to vector<16x2xf32>
    %cst_27 = arith.constant dense<0.000000e+00> : vector<120x2xf32>
    %90 = tpu.matmul %88, %89, %cst_27 {dimension_numbers = #tpu.dot_dimension_numbers<[1], [0], [0], [1], [0, 0, 1, 1], [], []>} : vector<120x16xf32>, vector<16x2xf32>, vector<120x2xf32> -> vector<120x2xf32>
    %91 = arith.addf %86, %90 : vector<120x2xf32>
    %92 = vector.extract_strided_slice %35 {offsets = [11, 0, 0], sizes = [1, 120, 16], strides = [1, 1, 1]} : vector<25x120x16xf32> to vector<1x120x16xf32>
    %93 = vector.shape_cast %92 : vector<1x120x16xf32> to vector<120x16xf32>
    %94 = vector.extract_strided_slice %34 {offsets = [0, 22], sizes = [16, 2], strides = [1, 1]} : vector<16x50xf32> to vector<16x2xf32>
    %cst_28 = arith.constant dense<0.000000e+00> : vector<120x2xf32>
    %95 = tpu.matmul %93, %94, %cst_28 {dimension_numbers = #tpu.dot_dimension_numbers<[1], [0], [0], [1], [0, 0, 1, 1], [], []>} : vector<120x16xf32>, vector<16x2xf32>, vector<120x2xf32> -> vector<120x2xf32>
    %96 = arith.addf %91, %95 : vector<120x2xf32>
    %97 = vector.extract_strided_slice %35 {offsets = [12, 0, 0], sizes = [1, 120, 16], strides = [1, 1, 1]} : vector<25x120x16xf32> to vector<1x120x16xf32>
    %98 = vector.shape_cast %97 : vector<1x120x16xf32> to vector<120x16xf32>
    %99 = vector.extract_strided_slice %34 {offsets = [0, 24], sizes = [16, 2], strides = [1, 1]} : vector<16x50xf32> to vector<16x2xf32>
    %cst_29 = arith.constant dense<0.000000e+00> : vector<120x2xf32>
    %100 = tpu.matmul %98, %99, %cst_29 {dimension_numbers = #tpu.dot_dimension_numbers<[1], [0], [0], [1], [0, 0, 1, 1], [], []>} : vector<120x16xf32>, vector<16x2xf32>, vector<120x2xf32> -> vector<120x2xf32>
    %101 = arith.addf %96, %100 : vector<120x2xf32>
    %102 = vector.extract_strided_slice %35 {offsets = [13, 0, 0], sizes = [1, 120, 16], strides = [1, 1, 1]} : vector<25x120x16xf32> to vector<1x120x16xf32>
    %103 = vector.shape_cast %102 : vector<1x120x16xf32> to vector<120x16xf32>
    %104 = vector.extract_strided_slice %34 {offsets = [0, 26], sizes = [16, 2], strides = [1, 1]} : vector<16x50xf32> to vector<16x2xf32>
    %cst_30 = arith.constant dense<0.000000e+00> : vector<120x2xf32>
    %105 = tpu.matmul %103, %104, %cst_30 {dimension_numbers = #tpu.dot_dimension_numbers<[1], [0], [0], [1], [0, 0, 1, 1], [], []>} : vector<120x16xf32>, vector<16x2xf32>, vector<120x2xf32> -> vector<120x2xf32>
    %106 = arith.addf %101, %105 : vector<120x2xf32>
    %107 = vector.extract_strided_slice %35 {offsets = [14, 0, 0], sizes = [1, 120, 16], strides = [1, 1, 1]} : vector<25x120x16xf32> to vector<1x120x16xf32>
    %108 = vector.shape_cast %107 : vector<1x120x16xf32> to vector<120x16xf32>
    %109 = vector.extract_strided_slice %34 {offsets = [0, 28], sizes = [16, 2], strides = [1, 1]} : vector<16x50xf32> to vector<16x2xf32>
    %cst_31 = arith.constant dense<0.000000e+00> : vector<120x2xf32>
    %110 = tpu.matmul %108, %109, %cst_31 {dimension_numbers = #tpu.dot_dimension_numbers<[1], [0], [0], [1], [0, 0, 1, 1], [], []>} : vector<120x16xf32>, vector<16x2xf32>, vector<120x2xf32> -> vector<120x2xf32>
    %111 = arith.addf %106, %110 : vector<120x2xf32>
    %112 = vector.extract_strided_slice %35 {offsets = [15, 0, 0], sizes = [1, 120, 16], strides = [1, 1, 1]} : vector<25x120x16xf32> to vector<1x120x16xf32>
    %113 = vector.shape_cast %112 : vector<1x120x16xf32> to vector<120x16xf32>
    %114 = vector.extract_strided_slice %34 {offsets = [0, 30], sizes = [16, 2], strides = [1, 1]} : vector<16x50xf32> to vector<16x2xf32>
    %cst_32 = arith.constant dense<0.000000e+00> : vector<120x2xf32>
    %115 = tpu.matmul %113, %114, %cst_32 {dimension_numbers = #tpu.dot_dimension_numbers<[1], [0], [0], [1], [0, 0, 1, 1], [], []>} : vector<120x16xf32>, vector<16x2xf32>, vector<120x2xf32> -> vector<120x2xf32>
    %116 = arith.addf %111, %115 : vector<120x2xf32>
    %117 = vector.extract_strided_slice %35 {offsets = [16, 0, 0], sizes = [1, 120, 16], strides = [1, 1, 1]} : vector<25x120x16xf32> to vector<1x120x16xf32>
    %118 = vector.shape_cast %117 : vector<1x120x16xf32> to vector<120x16xf32>
    %119 = vector.extract_strided_slice %34 {offsets = [0, 32], sizes = [16, 2], strides = [1, 1]} : vector<16x50xf32> to vector<16x2xf32>
    %cst_33 = arith.constant dense<0.000000e+00> : vector<120x2xf32>
    %120 = tpu.matmul %118, %119, %cst_33 {dimension_numbers = #tpu.dot_dimension_numbers<[1], [0], [0], [1], [0, 0, 1, 1], [], []>} : vector<120x16xf32>, vector<16x2xf32>, vector<120x2xf32> -> vector<120x2xf32>
    %121 = arith.addf %116, %120 : vector<120x2xf32>
    %122 = vector.extract_strided_slice %35 {offsets = [17, 0, 0], sizes = [1, 120, 16], strides = [1, 1, 1]} : vector<25x120x16xf32> to vector<1x120x16xf32>
    %123 = vector.shape_cast %122 : vector<1x120x16xf32> to vector<120x16xf32>
    %124 = vector.extract_strided_slice %34 {offsets = [0, 34], sizes = [16, 2], strides = [1, 1]} : vector<16x50xf32> to vector<16x2xf32>
    %cst_34 = arith.constant dense<0.000000e+00> : vector<120x2xf32>
    %125 = tpu.matmul %123, %124, %cst_34 {dimension_numbers = #tpu.dot_dimension_numbers<[1], [0], [0], [1], [0, 0, 1, 1], [], []>} : vector<120x16xf32>, vector<16x2xf32>, vector<120x2xf32> -> vector<120x2xf32>
    %126 = arith.addf %121, %125 : vector<120x2xf32>
    %127 = vector.extract_strided_slice %35 {offsets = [18, 0, 0], sizes = [1, 120, 16], strides = [1, 1, 1]} : vector<25x120x16xf32> to vector<1x120x16xf32>
    %128 = vector.shape_cast %127 : vector<1x120x16xf32> to vector<120x16xf32>
    %129 = vector.extract_strided_slice %34 {offsets = [0, 36], sizes = [16, 2], strides = [1, 1]} : vector<16x50xf32> to vector<16x2xf32>
    %cst_35 = arith.constant dense<0.000000e+00> : vector<120x2xf32>
    %130 = tpu.matmul %128, %129, %cst_35 {dimension_numbers = #tpu.dot_dimension_numbers<[1], [0], [0], [1], [0, 0, 1, 1], [], []>} : vector<120x16xf32>, vector<16x2xf32>, vector<120x2xf32> -> vector<120x2xf32>
    %131 = arith.addf %126, %130 : vector<120x2xf32>
    %132 = vector.extract_strided_slice %35 {offsets = [19, 0, 0], sizes = [1, 120, 16], strides = [1, 1, 1]} : vector<25x120x16xf32> to vector<1x120x16xf32>
    %133 = vector.shape_cast %132 : vector<1x120x16xf32> to vector<120x16xf32>
    %134 = vector.extract_strided_slice %34 {offsets = [0, 38], sizes = [16, 2], strides = [1, 1]} : vector<16x50xf32> to vector<16x2xf32>
    %cst_36 = arith.constant dense<0.000000e+00> : vector<120x2xf32>
    %135 = tpu.matmul %133, %134, %cst_36 {dimension_numbers = #tpu.dot_dimension_numbers<[1], [0], [0], [1], [0, 0, 1, 1], [], []>} : vector<120x16xf32>, vector<16x2xf32>, vector<120x2xf32> -> vector<120x2xf32>
    %136 = arith.addf %131, %135 : vector<120x2xf32>
    %137 = vector.extract_strided_slice %35 {offsets = [20, 0, 0], sizes = [1, 120, 16], strides = [1, 1, 1]} : vector<25x120x16xf32> to vector<1x120x16xf32>
    %138 = vector.shape_cast %137 : vector<1x120x16xf32> to vector<120x16xf32>
    %139 = vector.extract_strided_slice %34 {offsets = [0, 40], sizes = [16, 2], strides = [1, 1]} : vector<16x50xf32> to vector<16x2xf32>
    %cst_37 = arith.constant dense<0.000000e+00> : vector<120x2xf32>
    %140 = tpu.matmul %138, %139, %cst_37 {dimension_numbers = #tpu.dot_dimension_numbers<[1], [0], [0], [1], [0, 0, 1, 1], [], []>} : vector<120x16xf32>, vector<16x2xf32>, vector<120x2xf32> -> vector<120x2xf32>
    %141 = arith.addf %136, %140 : vector<120x2xf32>
    %142 = vector.extract_strided_slice %35 {offsets = [21, 0, 0], sizes = [1, 120, 16], strides = [1, 1, 1]} : vector<25x120x16xf32> to vector<1x120x16xf32>
    %143 = vector.shape_cast %142 : vector<1x120x16xf32> to vector<120x16xf32>
    %144 = vector.extract_strided_slice %34 {offsets = [0, 42], sizes = [16, 2], strides = [1, 1]} : vector<16x50xf32> to vector<16x2xf32>
    %cst_38 = arith.constant dense<0.000000e+00> : vector<120x2xf32>
    %145 = tpu.matmul %143, %144, %cst_38 {dimension_numbers = #tpu.dot_dimension_numbers<[1], [0], [0], [1], [0, 0, 1, 1], [], []>} : vector<120x16xf32>, vector<16x2xf32>, vector<120x2xf32> -> vector<120x2xf32>
    %146 = arith.addf %141, %145 : vector<120x2xf32>
    %147 = vector.extract_strided_slice %35 {offsets = [22, 0, 0], sizes = [1, 120, 16], strides = [1, 1, 1]} : vector<25x120x16xf32> to vector<1x120x16xf32>
    %148 = vector.shape_cast %147 : vector<1x120x16xf32> to vector<120x16xf32>
    %149 = vector.extract_strided_slice %34 {offsets = [0, 44], sizes = [16, 2], strides = [1, 1]} : vector<16x50xf32> to vector<16x2xf32>
    %cst_39 = arith.constant dense<0.000000e+00> : vector<120x2xf32>
    %150 = tpu.matmul %148, %149, %cst_39 {dimension_numbers = #tpu.dot_dimension_numbers<[1], [0], [0], [1], [0, 0, 1, 1], [], []>} : vector<120x16xf32>, vector<16x2xf32>, vector<120x2xf32> -> vector<120x2xf32>
    %151 = arith.addf %146, %150 : vector<120x2xf32>
    %152 = vector.extract_strided_slice %35 {offsets = [23, 0, 0], sizes = [1, 120, 16], strides = [1, 1, 1]} : vector<25x120x16xf32> to vector<1x120x16xf32>
    %153 = vector.shape_cast %152 : vector<1x120x16xf32> to vector<120x16xf32>
    %154 = vector.extract_strided_slice %34 {offsets = [0, 46], sizes = [16, 2], strides = [1, 1]} : vector<16x50xf32> to vector<16x2xf32>
    %cst_40 = arith.constant dense<0.000000e+00> : vector<120x2xf32>
    %155 = tpu.matmul %153, %154, %cst_40 {dimension_numbers = #tpu.dot_dimension_numbers<[1], [0], [0], [1], [0, 0, 1, 1], [], []>} : vector<120x16xf32>, vector<16x2xf32>, vector<120x2xf32> -> vector<120x2xf32>
    %156 = arith.addf %151, %155 : vector<120x2xf32>
    %157 = vector.extract_strided_slice %35 {offsets = [24, 0, 0], sizes = [1, 120, 16], strides = [1, 1, 1]} : vector<25x120x16xf32> to vector<1x120x16xf32>
    %158 = vector.shape_cast %157 : vector<1x120x16xf32> to vector<120x16xf32>
    %159 = vector.extract_strided_slice %34 {offsets = [0, 48], sizes = [16, 2], strides = [1, 1]} : vector<16x50xf32> to vector<16x2xf32>
    %cst_41 = arith.constant dense<0.000000e+00> : vector<120x2xf32>
    %160 = tpu.matmul %158, %159, %cst_41 {dimension_numbers = #tpu.dot_dimension_numbers<[1], [0], [0], [1], [0, 0, 1, 1], [], []>} : vector<120x16xf32>, vector<16x2xf32>, vector<120x2xf32> -> vector<120x2xf32>
    %161 = arith.addf %156, %160 : vector<120x2xf32>
    %c0_42 = arith.constant 0 : index
    %c0_43 = arith.constant 0 : index
    %162 = vector.load %arg5[%c0_42, %c0_43] : memref<120x1xf32, #tpu.memory_space<vmem>>, vector<120x1xf32>
    %163 = vector.broadcast %162 : vector<120x1xf32> to vector<120x2xf32>
    %164 = arith.addf %161, %163 : vector<120x2xf32>
    %cst_44 = arith.constant 0.000000e+00 : f32
    %165 = vector.broadcast %cst_44 : f32 to vector<120x2xf32>
    %166 = arith.maximumf %164, %165 : vector<120x2xf32>
    %c0_45 = arith.constant 0 : index
    %c0_46 = arith.constant 0 : index
    %167 = vector.load %arg6[%c0_45, %c0_46] : memref<84x120xf32, #tpu.memory_space<vmem>>, vector<84x120xf32>
    %cst_47 = arith.constant dense<0.000000e+00> : vector<84x2xf32>
    %168 = tpu.matmul %167, %166, %cst_47 {dimension_numbers = #tpu.dot_dimension_numbers<[1], [0], [0], [1], [0, 0, 1, 1], [], []>} : vector<84x120xf32>, vector<120x2xf32>, vector<84x2xf32> -> vector<84x2xf32>
    %c0_48 = arith.constant 0 : index
    %c0_49 = arith.constant 0 : index
    %169 = vector.load %arg7[%c0_48, %c0_49] : memref<84x1xf32, #tpu.memory_space<vmem>>, vector<84x1xf32>
    %170 = vector.broadcast %169 : vector<84x1xf32> to vector<84x2xf32>
    %171 = arith.addf %168, %170 : vector<84x2xf32>
    %cst_50 = arith.constant 0.000000e+00 : f32
    %172 = vector.broadcast %cst_50 : f32 to vector<84x2xf32>
    %173 = arith.maximumf %171, %172 : vector<84x2xf32>
    %c0_51 = arith.constant 0 : index
    %c0_52 = arith.constant 0 : index
    %174 = vector.load %arg8[%c0_51, %c0_52] : memref<10x84xf32, #tpu.memory_space<vmem>>, vector<10x84xf32>
    %cst_53 = arith.constant dense<0.000000e+00> : vector<10x2xf32>
    %175 = tpu.matmul %174, %173, %cst_53 {dimension_numbers = #tpu.dot_dimension_numbers<[1], [0], [0], [1], [0, 0, 1, 1], [], []>} : vector<10x84xf32>, vector<84x2xf32>, vector<10x2xf32> -> vector<10x2xf32>
    %c0_54 = arith.constant 0 : index
    %c0_55 = arith.constant 0 : index
    %176 = vector.load %arg9[%c0_54, %c0_55] : memref<10x1xf32, #tpu.memory_space<vmem>>, vector<10x1xf32>
    %177 = vector.broadcast %176 : vector<10x1xf32> to vector<10x2xf32>
    %178 = arith.addf %175, %177 : vector<10x2xf32>
    %c0_56 = arith.constant 0 : index
    %c0_57 = arith.constant 0 : index
    %179 = vector.load %arg10[%c0_56, %c0_57] : memref<10x2xf32, #tpu.memory_space<vmem>>, vector<10x2xf32>
    tpu.vector_store %arg10[%c0_56, %c0_57], %178 {strides = array<i32>} : memref<10x2xf32, #tpu.memory_space<vmem>>, vector<10x2xf32>,
    return
  }
}

</mosaic_0001>

<llo_original>
// kernel: lenet_bn_forward.2
$region0: #{lenet_bn_forward.2}
  #allocation0 [shape = 'u32[]', space=smem, size = 0x4, offset = 0x4, fixed_abs, tag = 'smem constant byte address 0x4 - core index']
  #allocation1 [shape = 'u32[144,128]{1,0:T(1,128)}', space=vmem, size = 0x12000, scoped, tag = 'internal scratch']
  %s0 = inlined_call_operand.vmem [shape: f32[25,1568], index: 0, kind: input, shape index: {}]
  %s1 = inlined_call_operand.vmem [shape: f32[6,25], index: 1, kind: input, shape index: {}]
  %s2 = inlined_call_operand.vmem [shape: f32[6,1], index: 2, kind: input, shape index: {}]
  %s3 = inlined_call_operand.vmem [shape: f32[6,1], index: 3, kind: input, shape index: {}]
  %s4 = inlined_call_operand.vmem [shape: f32[6,392], index: 4, kind: output, shape index: {}]
  %s5 = sld [smem:[#allocation0]]
  $region26: #{lenet_bn_forward.2} parent=0
    _
  %s7 = ssub.s32 1, %s5
  %s8 = scalar_select 0, %s7, %s5
  // Predicated region
  $region2: #{lenet_bn_forward.2} parent=0 // pred_check
    _
  $region3: #{lenet_bn_forward.2} parent=0 // pred_check_branch
    %10 = sbr.rel (0) target = $region5
  $region4: #{lenet_bn_forward.2} parent=0 // pred_region
    _
  $region5: #{lenet_bn_forward.2} parent=0 // pred_fallthru
    _
  // Predicated region
  $region6: #{lenet_bn_forward.2} parent=0 // pred_check
    _
  $region7: #{lenet_bn_forward.2} parent=0 // pred_check_branch
    %12 = sbr.rel (0) target = $region9
  $region8: #{lenet_bn_forward.2} parent=0 // pred_region
    _
  $region9: #{lenet_bn_forward.2} parent=0 // pred_fallthru
    _
  // Predicated region
  $region10: #{lenet_bn_forward.2} parent=0 // pred_check
    _
  $region11: #{lenet_bn_forward.2} parent=0 // pred_check_branch
    %14 = sbr.rel (0) target = $region13
  $region12: #{lenet_bn_forward.2} parent=0 // pred_region
    _
  $region13: #{lenet_bn_forward.2} parent=0 // pred_fallthru
    _
  // Predicated region
  $region14: #{lenet_bn_forward.2} parent=0 // pred_check
    _
  $region15: #{lenet_bn_forward.2} parent=0 // pred_check_branch
    %16 = sbr.rel (0) target = $region17
  $region16: #{lenet_bn_forward.2} parent=0 // pred_region
    _
  $region17: #{lenet_bn_forward.2} parent=0 // pred_fallthru
    _
  %v17 = vld [vmem:[%s1] sm:$0x3f]
  %v18 = vld [vmem:[%s0] sm:$0xff]
  %v19 = vld [vmem:[%s0 + $0x8] sm:$0xff]
  %v20 = vld [vmem:[%s0 + $0x10] sm:$0xff]
  %v21 = vld [vmem:[%s0 + $0x18] sm:$0xff]
  %v22 = vld [vmem:[%s0 + $0x20] sm:$0xff]
  %v23 = vld [vmem:[%s0 + $0x28] sm:$0xff]
  %v24 = vld [vmem:[%s0 + $0x30] sm:$0xff]
  %v25 = vld [vmem:[%s0 + $0x38] sm:$0xff]
  %v26 = vld [vmem:[%s0 + $0x40] sm:$0xff]
  %v27 = vld [vmem:[%s0 + $0x48] sm:$0xff]
  %v28 = vld [vmem:[%s0 + $0x50] sm:$0xff]
  %v29 = vld [vmem:[%s0 + $0x58] sm:$0xff]
  %v30 = vld [vmem:[%s0 + $0x60] sm:$0xff]
  %v31 = vld [vmem:[%s0 + $0x68] sm:$0xff]
  %v32 = vld [vmem:[%s0 + $0x70] sm:$0xff]
  %v33 = vld [vmem:[%s0 + $0x78] sm:$0xff]
  %v34 = vld [vmem:[%s0 + $0x80] sm:$0xff]
  %v35 = vld [vmem:[%s0 + $0x88] sm:$0xff]
  %v36 = vld [vmem:[%s0 + $0x90] sm:$0xff]
  %v37 = vld [vmem:[%s0 + $0x98] sm:$0xff]
  %v38 = vld [vmem:[%s0 + $0xa0] sm:$0xff]
  %v39 = vld [vmem:[%s0 + $0xa8] sm:$0xff]
  %v40 = vld [vmem:[%s0 + $0xb0] sm:$0xff]
  %v41 = vld [vmem:[%s0 + $0xb8] sm:$0xff]
  %v42 = vld [vmem:[%s0 + $0xc0] sm:$0xff]
  %v43 = vld [vmem:[%s0 + $0xc8] sm:$0xff]
  %v44 = vld [vmem:[%s0 + $0xd0] sm:$0xff]
  %v45 = vld [vmem:[%s0 + $0xd8] sm:$0xff]
  %v46 = vld [vmem:[%s0 + $0xe0] sm:$0xff]
  %v47 = vld [vmem:[%s0 + $0xe8] sm:$0xff]
  %v48 = vld [vmem:[%s0 + $0xf0] sm:$0xff]
  %v49 = vld [vmem:[%s0 + $0xf8] sm:$0xff]
  %v50 = vld [vmem:[%s0 + $0x100] sm:$0xff]
  %v51 = vld [vmem:[%s0 + $0x108] sm:$0xff]
  %v52 = vld [vmem:[%s0 + $0x110] sm:$0xff]
  %v53 = vld [vmem:[%s0 + $0x118] sm:$0xff]
  %v54 = vld [vmem:[%s0 + $0x120] sm:$0xff]
  %v55 = vld [vmem:[%s0 + $0x128] sm:$0xff]
  %v56 = vld [vmem:[%s0 + $0x130] sm:$0xff]
  %v57 = vld [vmem:[%s0 + $0x138] sm:$0x1]
  %v58 = vld [vmem:[%s0 + $0x140] sm:$0x1]
  %v59 = vld [vmem:[%s0 + $0x148] sm:$0x1]
  %v60 = vld [vmem:[%s0 + $0x150] sm:$0x1]
  %v61 = vld [vmem:[%s0 + $0x158] sm:$0x1]
  %v62 = vld [vmem:[%s0 + $0x160] sm:$0x1]
  %v63 = vld [vmem:[%s0 + $0x168] sm:$0x1]
  %v64 = vld [vmem:[%s0 + $0x170] sm:$0x1]
  %v65 = vld [vmem:[%s0 + $0x178] sm:$0x1]
  %v66 = vld [vmem:[%s0 + $0x180] sm:$0x1]
  %v67 = vld [vmem:[%s0 + $0x188] sm:$0x1]
  %v68 = vld [vmem:[%s0 + $0x190] sm:$0x1]
  %v69 = vld [vmem:[%s0 + $0x198] sm:$0x1]
  %vm70 = vcmask 203776
  %v72 = vsel %vm70, %v17, 0
  %vm74 = vcmask 1040384
  %v76 = vsel %vm74, %v57, 0
  %v79 = vsel %vm74, %v58, 0
  %v82 = vsel %vm74, %v59, 0
  %v85 = vsel %vm74, %v60, 0
  %v88 = vsel %vm74, %v61, 0
  %v91 = vsel %vm74, %v62, 0
  %v94 = vsel %vm74, %v63, 0
  %v97 = vsel %vm74, %v64, 0
  %v100 = vsel %vm74, %v65, 0
  %v103 = vsel %vm74, %v66, 0
  %v106 = vsel %vm74, %v67, 0
  %v109 = vsel %vm74, %v68, 0
  %v112 = vsel %vm74, %v69, 0
  %114 = vmatprep.subr.mxu0 0.0
  %115 = vmatpush1.msra.mxu0 0.0
  %116 = vmatprep.subr.mxu0 0.0
  %117 = vmatpush1.msra.mxu0 0.0
  %118 = vmatprep.subr.mxu0 0.0
  %119 = vmatpush1.msra.mxu0 0.0
  %120 = vmatprep.subr.mxu0 0.0
  %121 = vmatpush1.msra.mxu0 0.0
  %122 = vmatprep.subr.mxu0 0.0
  %123 = vmatpush1.msra.mxu0 0.0
  %124 = vmatprep.subr.mxu0 0.0
  %125 = vmatpush1.msra.mxu0 0.0
  %126 = vmatprep.subr.mxu0 0.0
  %127 = vmatpush1.msra.mxu0 0.0
  %128 = vmatprep.subr.mxu0 0.0
  %129 = vmatpush1.msra.mxu0 0.0
  %130 = vmatprep.subr.mxu0 0.0
  %131 = vmatpush1.msra.mxu0 0.0
  %132 = vmatprep.subr.mxu0 0.0
  %133 = vmatpush1.msra.mxu0 0.0
  %134 = vmatprep.subr.mxu0 0.0
  %135 = vmatpush1.msra.mxu0 0.0
  %136 = vmatprep.subr.mxu0 0.0
  %137 = vmatpush1.msra.mxu0 0.0
  %138 = vmatprep.subr.mxu0 %v79
  %139 = vmatpush1.msra.mxu0 %v76
  %140 = vmatprep.subr.mxu0 %v45
  %141 = vmatpush1.msra.mxu0 %v44
  %142 = vmatprep.subr.mxu0 %v32
  %143 = vmatpush1.msra.mxu0 %v31
  %144 = vmatprep.subr.mxu0 %v19
  %145 = vmatpush1.msra.mxu0 %v18
  %146 = vmatprep.subr.mxu0 0.0
  %147 = vmatpush2.msra.mxu0 0.0
  %148 = vmatprep.subr.mxu0 0.0
  %149 = vmatpush2.msra.mxu0 0.0
  %150 = vmatprep.subr.mxu0 0.0
  %151 = vmatpush2.msra.mxu0 0.0
  %152 = vmatprep.subr.mxu0 0.0
  %153 = vmatpush2.msra.mxu0 0.0
  %154 = vmatprep.subr.mxu0 0.0
  %155 = vmatpush2.msra.mxu0 0.0
  %156 = vmatprep.subr.mxu0 0.0
  %157 = vmatpush2.msra.mxu0 0.0
  %158 = vmatprep.subr.mxu0 0.0
  %159 = vmatpush2.msra.mxu0 0.0
  %160 = vmatprep.subr.mxu0 0.0
  %161 = vmatpush2.msra.mxu0 0.0
  %162 = vmatprep.subr.mxu0 0.0
  %163 = vmatpush2.msra.mxu0 0.0
  %164 = vmatprep.subr.mxu0 0.0
  %165 = vmatpush2.msra.mxu0 0.0
  %166 = vmatprep.subr.mxu0 0.0
  %167 = vmatpush2.msra.mxu0 0.0
  %168 = vmatprep.subr.mxu0 0.0
  %169 = vmatpush2.msra.mxu0 0.0
  %170 = vmatprep.subr.mxu0 0.0
  %171 = vmatpush2.msra.mxu0 0.0
  %172 = vmatprep.subr.mxu0 0.0
  %173 = vmatpush2.msra.mxu0 0.0
  %174 = vmatprep.subr.mxu0 0.0
  %175 = vmatpush2.msra.mxu0 0.0
  %176 = vmatprep.subr.mxu0 0.0
  %177 = vmatpush2.msra.mxu0 0.0
  %178 = vmatprep.mubr.f32.mxu0 0.0
  %179 = vmatmul.mubr.f32.gmra.mxu0 %v72
  %v180 = vpop.f32.mrf.mxu0
  %v181 = vadd.f32 0.0, %v180
  %v182 = vpop.f32.mrf.mxu0
  %v183 = vadd.f32 0.0, %v182
  %184 = vdwg.mxu0
  %185 = vmatprep.subr.mxu0 0.0
  %186 = vmatpush1.msra.mxu0 0.0
  %187 = vmatprep.subr.mxu0 0.0
  %188 = vmatpush1.msra.mxu0 0.0
  %189 = vmatprep.subr.mxu0 0.0
  %190 = vmatpush1.msra.mxu0 0.0
  %191 = vmatprep.subr.mxu0 0.0
  %192 = vmatpush1.msra.mxu0 0.0
  %193 = vmatprep.subr.mxu0 0.0
  %194 = vmatpush1.msra.mxu0 0.0
  %195 = vmatprep.subr.mxu0 0.0
  %196 = vmatpush1.msra.mxu0 0.0
  %197 = vmatprep.subr.mxu0 0.0
  %198 = vmatpush1.msra.mxu0 0.0
  %199 = vmatprep.subr.mxu0 0.0
  %200 = vmatpush1.msra.mxu0 0.0
  %201 = vmatprep.subr.mxu0 0.0
  %202 = vmatpush1.msra.mxu0 0.0
  %203 = vmatprep.subr.mxu0 0.0
  %204 = vmatpush1.msra.mxu0 0.0
  %205 = vmatprep.subr.mxu0 0.0
  %206 = vmatpush1.msra.mxu0 0.0
  %207 = vmatprep.subr.mxu0 0.0
  %208 = vmatpush1.msra.mxu0 0.0
  %209 = vmatprep.subr.mxu0 %v85
  %210 = vmatpush1.msra.mxu0 %v82
  %211 = vmatprep.subr.mxu0 %v47
  %212 = vmatpush1.msra.mxu0 %v46
  %213 = vmatprep.subr.mxu0 %v34
  %214 = vmatpush1.msra.mxu0 %v33
  %215 = vmatprep.subr.mxu0 %v21
  %216 = vmatpush1.msra.mxu0 %v20
  %217 = vmatprep.subr.mxu0 0.0
  %218 = vmatpush2.msra.mxu0 0.0
  %219 = vmatprep.subr.mxu0 0.0
  %220 = vmatpush2.msra.mxu0 0.0
  %221 = vmatprep.subr.mxu0 0.0
  %222 = vmatpush2.msra.mxu0 0.0
  %223 = vmatprep.subr.mxu0 0.0
  %224 = vmatpush2.msra.mxu0 0.0
  %225 = vmatprep.subr.mxu0 0.0
  %226 = vmatpush2.msra.mxu0 0.0
  %227 = vmatprep.subr.mxu0 0.0
  %228 = vmatpush2.msra.mxu0 0.0
  %229 = vmatprep.subr.mxu0 0.0
  %230 = vmatpush2.msra.mxu0 0.0
  %231 = vmatprep.subr.mxu0 0.0
  %232 = vmatpush2.msra.mxu0 0.0
  %233 = vmatprep.subr.mxu0 0.0
  %234 = vmatpush2.msra.mxu0 0.0
  %235 = vmatprep.subr.mxu0 0.0
  %236 = vmatpush2.msra.mxu0 0.0
  %237 = vmatprep.subr.mxu0 0.0
  %238 = vmatpush2.msra.mxu0 0.0
  %239 = vmatprep.subr.mxu0 0.0
  %240 = vmatpush2.msra.mxu0 0.0
  %241 = vmatprep.subr.mxu0 0.0
  %242 = vmatpush2.msra.mxu0 0.0
  %243 = vmatprep.subr.mxu0 0.0
  %244 = vmatpush2.msra.mxu0 0.0
  %245 = vmatprep.subr.mxu0 0.0
  %246 = vmatpush2.msra.mxu0 0.0
  %247 = vmatprep.subr.mxu0 0.0
  %248 = vmatpush2.msra.mxu0 0.0
  %249 = vmatprep.mubr.f32.mxu0 0.0
  %250 = vmatmul.mubr.f32.gmra.mxu0 %v72
  %v251 = vpop.f32.mrf.mxu0
  %v252 = vadd.f32 0.0, %v251
  %v253 = vpop.f32.mrf.mxu0
  %v254 = vadd.f32 0.0, %v253
  %255 = vdwg.mxu0
  %256 = vmatprep.subr.mxu0 0.0
  %257 = vmatpush1.msra.mxu0 0.0
  %258 = vmatprep.subr.mxu0 0.0
  %259 = vmatpush1.msra.mxu0 0.0
  %260 = vmatprep.subr.mxu0 0.0
  %261 = vmatpush1.msra.mxu0 0.0
  %262 = vmatprep.subr.mxu0 0.0
  %263 = vmatpush1.msra.mxu0 0.0
  %264 = vmatprep.subr.mxu0 0.0
  %265 = vmatpush1.msra.mxu0 0.0
  %266 = vmatprep.subr.mxu0 0.0
  %267 = vmatpush1.msra.mxu0 0.0
  %268 = vmatprep.subr.mxu0 0.0
  %269 = vmatpush1.msra.mxu0 0.0
  %270 = vmatprep.subr.mxu0 0.0
  %271 = vmatpush1.msra.mxu0 0.0
  %272 = vmatprep.subr.mxu0 0.0
  %273 = vmatpush1.msra.mxu0 0.0
  %274 = vmatprep.subr.mxu0 0.0
  %275 = vmatpush1.msra.mxu0 0.0
  %276 = vmatprep.subr.mxu0 0.0
  %277 = vmatpush1.msra.mxu0 0.0
  %278 = vmatprep.subr.mxu0 0.0
  %279 = vmatpush1.msra.mxu0 0.0
  %280 = vmatprep.subr.mxu0 %v91
  %281 = vmatpush1.msra.mxu0 %v88
  %282 = vmatprep.subr.mxu0 %v49
  %283 = vmatpush1.msra.mxu0 %v48
  %284 = vmatprep.subr.mxu0 %v36
  %285 = vmatpush1.msra.mxu0 %v35
  %286 = vmatprep.subr.mxu0 %v23
  %287 = vmatpush1.msra.mxu0 %v22
  %288 = vmatprep.subr.mxu0 0.0
  %289 = vmatpush2.msra.mxu0 0.0
  %290 = vmatprep.subr.mxu0 0.0
  %291 = vmatpush2.msra.mxu0 0.0
  %292 = vmatprep.subr.mxu0 0.0
  %293 = vmatpush2.msra.mxu0 0.0
  %294 = vmatprep.subr.mxu0 0.0
  %295 = vmatpush2.msra.mxu0 0.0
  %296 = vmatprep.subr.mxu0 0.0
  %297 = vmatpush2.msra.mxu0 0.0
  %298 = vmatprep.subr.mxu0 0.0
  %299 = vmatpush2.msra.mxu0 0.0
  %300 = vmatprep.subr.mxu0 0.0
  %301 = vmatpush2.msra.mxu0 0.0
  %302 = vmatprep.subr.mxu0 0.0
  %303 = vmatpush2.msra.mxu0 0.0
  %304 = vmatprep.subr.mxu0 0.0
  %305 = vmatpush2.msra.mxu0 0.0
  %306 = vmatprep.subr.mxu0 0.0
  %307 = vmatpush2.msra.mxu0 0.0
  %308 = vmatprep.subr.mxu0 0.0
  %309 = vmatpush2.msra.mxu0 0.0
  %310 = vmatprep.subr.mxu0 0.0
  %311 = vmatpush2.msra.mxu0 0.0
  %312 = vmatprep.subr.mxu0 0.0
  %313 = vmatpush2.msra.mxu0 0.0
  %314 = vmatprep.subr.mxu0 0.0
  %315 = vmatpush2.msra.mxu0 0.0
  %316 = vmatprep.subr.mxu0 0.0
  %317 = vmatpush2.msra.mxu0 0.0
  %318 = vmatprep.subr.mxu0 0.0
  %319 = vmatpush2.msra.mxu0 0.0
  %320 = vmatprep.mubr.f32.mxu0 0.0
  %321 = vmatmul.mubr.f32.gmra.mxu0 %v72
  %v322 = vpop.f32.mrf.mxu0
  %v323 = vadd.f32 0.0, %v322
  %v324 = vpop.f32.mrf.mxu0
  %v325 = vadd.f32 0.0, %v324
  %326 = vdwg.mxu0
  %327 = vmatprep.subr.mxu0 0.0
  %328 = vmatpush1.msra.mxu0 0.0
  %329 = vmatprep.subr.mxu0 0.0
  %330 = vmatpush1.msra.mxu0 0.0
  %331 = vmatprep.subr.mxu0 0.0
  %332 = vmatpush1.msra.mxu0 0.0
  %333 = vmatprep.subr.mxu0 0.0
  %334 = vmatpush1.msra.mxu0 0.0
  %335 = vmatprep.subr.mxu0 0.0
  %336 = vmatpush1.msra.mxu0 0.0
  %337 = vmatprep.subr.mxu0 0.0
  %338 = vmatpush1.msra.mxu0 0.0
  %339 = vmatprep.subr.mxu0 0.0
  %340 = vmatpush1.msra.mxu0 0.0
  %341 = vmatprep.subr.mxu0 0.0
  %342 = vmatpush1.msra.mxu0 0.0
  %343 = vmatprep.subr.mxu0 0.0
  %344 = vmatpush1.msra.mxu0 0.0
  %345 = vmatprep.subr.mxu0 0.0
  %346 = vmatpush1.msra.mxu0 0.0
  %347 = vmatprep.subr.mxu0 0.0
  %348 = vmatpush1.msra.mxu0 0.0
  %349 = vmatprep.subr.mxu0 0.0
  %350 = vmatpush1.msra.mxu0 0.0
  %351 = vmatprep.subr.mxu0 %v97
  %352 = vmatpush1.msra.mxu0 %v94
  %353 = vmatprep.subr.mxu0 %v51
  %354 = vmatpush1.msra.mxu0 %v50
  %355 = vmatprep.subr.mxu0 %v38
  %356 = vmatpush1.msra.mxu0 %v37
  %357 = vmatprep.subr.mxu0 %v25
  %358 = vmatpush1.msra.mxu0 %v24
  %359 = vmatprep.subr.mxu0 0.0
  %360 = vmatpush2.msra.mxu0 0.0
  %361 = vmatprep.subr.mxu0 0.0
  %362 = vmatpush2.msra.mxu0 0.0
  %363 = vmatprep.subr.mxu0 0.0
  %364 = vmatpush2.msra.mxu0 0.0
  %365 = vmatprep.subr.mxu0 0.0
  %366 = vmatpush2.msra.mxu0 0.0
  %367 = vmatprep.subr.mxu0 0.0
  %368 = vmatpush2.msra.mxu0 0.0
  %369 = vmatprep.subr.mxu0 0.0
  %370 = vmatpush2.msra.mxu0 0.0
  %371 = vmatprep.subr.mxu0 0.0
  %372 = vmatpush2.msra.mxu0 0.0
  %373 = vmatprep.subr.mxu0 0.0
  %374 = vmatpush2.msra.mxu0 0.0
  %375 = vmatprep.subr.mxu0 0.0
  %376 = vmatpush2.msra.mxu0 0.0
  %377 = vmatprep.subr.mxu0 0.0
  %378 = vmatpush2.msra.mxu0 0.0
  %379 = vmatprep.subr.mxu0 0.0
  %380 = vmatpush2.msra.mxu0 0.0
  %381 = vmatprep.subr.mxu0 0.0
  %382 = vmatpush2.msra.mxu0 0.0
  %383 = vmatprep.subr.mxu0 0.0
  %384 = vmatpush2.msra.mxu0 0.0
  %385 = vmatprep.subr.mxu0 0.0
  %386 = vmatpush2.msra.mxu0 0.0
  %387 = vmatprep.subr.mxu0 0.0
  %388 = vmatpush2.msra.mxu0 0.0
  %389 = vmatprep.subr.mxu0 0.0
  %390 = vmatpush2.msra.mxu0 0.0
  %391 = vmatprep.mubr.f32.mxu0 0.0
  %392 = vmatmul.mubr.f32.gmra.mxu0 %v72
  %v393 = vpop.f32.mrf.mxu0
  %v394 = vadd.f32 0.0, %v393
  %v395 = vpop.f32.mrf.mxu0
  %v396 = vadd.f32 0.0, %v395
  %397 = vdwg.mxu0
  %398 = vmatprep.subr.mxu0 0.0
  %399 = vmatpush1.msra.mxu0 0.0
  %400 = vmatprep.subr.mxu0 0.0
  %401 = vmatpush1.msra.mxu0 0.0
  %402 = vmatprep.subr.mxu0 0.0
  %403 = vmatpush1.msra.mxu0 0.0
  %404 = vmatprep.subr.mxu0 0.0
  %405 = vmatpush1.msra.mxu0 0.0
  %406 = vmatprep.subr.mxu0 0.0
  %407 = vmatpush1.msra.mxu0 0.0
  %408 = vmatprep.subr.mxu0 0.0
  %409 = vmatpush1.msra.mxu0 0.0
  %410 = vmatprep.subr.mxu0 0.0
  %411 = vmatpush1.msra.mxu0 0.0
  %412 = vmatprep.subr.mxu0 0.0
  %413 = vmatpush1.msra.mxu0 0.0
  %414 = vmatprep.subr.mxu0 0.0
  %415 = vmatpush1.msra.mxu0 0.0
  %416 = vmatprep.subr.mxu0 0.0
  %417 = vmatpush1.msra.mxu0 0.0
  %418 = vmatprep.subr.mxu0 0.0
  %419 = vmatpush1.msra.mxu0 0.0
  %420 = vmatprep.subr.mxu0 0.0
  %421 = vmatpush1.msra.mxu0 0.0
  %422 = vmatprep.subr.mxu0 %v103
  %423 = vmatpush1.msra.mxu0 %v100
  %424 = vmatprep.subr.mxu0 %v53
  %425 = vmatpush1.msra.mxu0 %v52
  %426 = vmatprep.subr.mxu0 %v40
  %427 = vmatpush1.msra.mxu0 %v39
  %428 = vmatprep.subr.mxu0 %v27
  %429 = vmatpush1.msra.mxu0 %v26
  %430 = vmatprep.subr.mxu0 0.0
  %431 = vmatpush2.msra.mxu0 0.0
  %432 = vmatprep.subr.mxu0 0.0
  %433 = vmatpush2.msra.mxu0 0.0
  %434 = vmatprep.subr.mxu0 0.0
  %435 = vmatpush2.msra.mxu0 0.0
  %436 = vmatprep.subr.mxu0 0.0
  %437 = vmatpush2.msra.mxu0 0.0
  %438 = vmatprep.subr.mxu0 0.0
  %439 = vmatpush2.msra.mxu0 0.0
  %440 = vmatprep.subr.mxu0 0.0
  %441 = vmatpush2.msra.mxu0 0.0
  %442 = vmatprep.subr.mxu0 0.0
  %443 = vmatpush2.msra.mxu0 0.0
  %444 = vmatprep.subr.mxu0 0.0
  %445 = vmatpush2.msra.mxu0 0.0
  %446 = vmatprep.subr.mxu0 0.0
  %447 = vmatpush2.msra.mxu0 0.0
  %448 = vmatprep.subr.mxu0 0.0
  %449 = vmatpush2.msra.mxu0 0.0
  %450 = vmatprep.subr.mxu0 0.0
  %451 = vmatpush2.msra.mxu0 0.0
  %452 = vmatprep.subr.mxu0 0.0
  %453 = vmatpush2.msra.mxu0 0.0
  %454 = vmatprep.subr.mxu0 0.0
  %455 = vmatpush2.msra.mxu0 0.0
  %456 = vmatprep.subr.mxu0 0.0
  %457 = vmatpush2.msra.mxu0 0.0
  %458 = vmatprep.subr.mxu0 0.0
  %459 = vmatpush2.msra.mxu0 0.0
  %460 = vmatprep.subr.mxu0 0.0
  %461 = vmatpush2.msra.mxu0 0.0
  %462 = vmatprep.mubr.f32.mxu0 0.0
  %463 = vmatmul.mubr.f32.gmra.mxu0 %v72
  %v464 = vpop.f32.mrf.mxu0
  %v465 = vadd.f32 0.0, %v464
  %v466 = vpop.f32.mrf.mxu0
  %v467 = vadd.f32 0.0, %v466
  %468 = vdwg.mxu0
  %469 = vmatprep.subr.mxu0 0.0
  %470 = vmatpush1.msra.mxu0 0.0
  %471 = vmatprep.subr.mxu0 0.0
  %472 = vmatpush1.msra.mxu0 0.0
  %473 = vmatprep.subr.mxu0 0.0
  %474 = vmatpush1.msra.mxu0 0.0
  %475 = vmatprep.subr.mxu0 0.0
  %476 = vmatpush1.msra.mxu0 0.0
  %477 = vmatprep.subr.mxu0 0.0
  %478 = vmatpush1.msra.mxu0 0.0
  %479 = vmatprep.subr.mxu0 0.0
  %480 = vmatpush1.msra.mxu0 0.0
  %481 = vmatprep.subr.mxu0 0.0
  %482 = vmatpush1.msra.mxu0 0.0
  %483 = vmatprep.subr.mxu0 0.0
  %484 = vmatpush1.msra.mxu0 0.0
  %485 = vmatprep.subr.mxu0 0.0
  %486 = vmatpush1.msra.mxu0 0.0
  %487 = vmatprep.subr.mxu0 0.0
  %488 = vmatpush1.msra.mxu0 0.0
  %489 = vmatprep.subr.mxu0 0.0
  %490 = vmatpush1.msra.mxu0 0.0
  %491 = vmatprep.subr.mxu0 0.0
  %492 = vmatpush1.msra.mxu0 0.0
  %493 = vmatprep.subr.mxu0 %v109
  %494 = vmatpush1.msra.mxu0 %v106
  %495 = vmatprep.subr.mxu0 %v55
  %496 = vmatpush1.msra.mxu0 %v54
  %497 = vmatprep.subr.mxu0 %v42
  %498 = vmatpush1.msra.mxu0 %v41
  %499 = vmatprep.subr.mxu0 %v29
  %500 = vmatpush1.msra.mxu0 %v28
  %501 = vmatprep.subr.mxu0 0.0
  %502 = vmatpush2.msra.mxu0 0.0
  %503 = vmatprep.subr.mxu0 0.0
  %504 = vmatpush2.msra.mxu0 0.0
  %505 = vmatprep.subr.mxu0 0.0
  %506 = vmatpush2.msra.mxu0 0.0
  %507 = vmatprep.subr.mxu0 0.0
  %508 = vmatpush2.msra.mxu0 0.0
  %509 = vmatprep.subr.mxu0 0.0
  %510 = vmatpush2.msra.mxu0 0.0
  %511 = vmatprep.subr.mxu0 0.0
  %512 = vmatpush2.msra.mxu0 0.0
  %513 = vmatprep.subr.mxu0 0.0
  %514 = vmatpush2.msra.mxu0 0.0
  %515 = vmatprep.subr.mxu0 0.0
  %516 = vmatpush2.msra.mxu0 0.0
  %517 = vmatprep.subr.mxu0 0.0
  %518 = vmatpush2.msra.mxu0 0.0
  %519 = vmatprep.subr.mxu0 0.0
  %520 = vmatpush2.msra.mxu0 0.0
  %521 = vmatprep.subr.mxu0 0.0
  %522 = vmatpush2.msra.mxu0 0.0
  %523 = vmatprep.subr.mxu0 0.0
  %524 = vmatpush2.msra.mxu0 0.0
  %525 = vmatprep.subr.mxu0 0.0
  %526 = vmatpush2.msra.mxu0 0.0
  %527 = vmatprep.subr.mxu0 0.0
  %528 = vmatpush2.msra.mxu0 0.0
  %529 = vmatprep.subr.mxu0 0.0
  %530 = vmatpush2.msra.mxu0 0.0
  %531 = vmatprep.subr.mxu0 0.0
  %532 = vmatpush2.msra.mxu0 0.0
  %533 = vmatprep.mubr.f32.mxu0 0.0
  %534 = vmatmul.mubr.f32.gmra.mxu0 %v72
  %v535 = vpop.f32.mrf.mxu0
  %v536 = vadd.f32 0.0, %v535
  %v537 = vpop.f32.mrf.mxu0
  %v538 = vadd.f32 0.0, %v537
  %539 = vdwg.mxu0
  %540 = vmatprep.subr.mxu0 0.0
  %541 = vmatpush1.msra.mxu0 0.0
  %542 = vmatprep.subr.mxu0 0.0
  %543 = vmatpush1.msra.mxu0 0.0
  %544 = vmatprep.subr.mxu0 0.0
  %545 = vmatpush1.msra.mxu0 0.0
  %546 = vmatprep.subr.mxu0 0.0
  %547 = vmatpush1.msra.mxu0 0.0
  %548 = vmatprep.subr.mxu0 0.0
  %549 = vmatpush1.msra.mxu0 0.0
  %550 = vmatprep.subr.mxu0 0.0
  %551 = vmatpush1.msra.mxu0 0.0
  %552 = vmatprep.subr.mxu0 0.0
  %553 = vmatpush1.msra.mxu0 0.0
  %554 = vmatprep.subr.mxu0 0.0
  %555 = vmatpush1.msra.mxu0 0.0
  %556 = vmatprep.subr.mxu0 0.0
  %557 = vmatpush1.msra.mxu0 0.0
  %558 = vmatprep.subr.mxu0 0.0
  %559 = vmatpush1.msra.mxu0 0.0
  %560 = vmatprep.subr.mxu0 0.0
  %561 = vmatpush1.msra.mxu0 0.0
  %562 = vmatprep.subr.mxu0 0.0
  %563 = vmatpush1.msra.mxu0 0.0
  %564 = vmatprep.subr.mxu0 0.0
  %565 = vmatpush1.msra.mxu0 %v112
  %566 = vmatprep.subr.mxu0 0.0
  %567 = vmatpush1.msra.mxu0 %v56
  %568 = vmatprep.subr.mxu0 0.0
  %569 = vmatpush1.msra.mxu0 %v43
  %570 = vmatprep.subr.mxu0 0.0
  %571 = vmatpush1.msra.mxu0 %v30
  %572 = vmatprep.subr.mxu0 0.0
  %573 = vmatpush2.msra.mxu0 0.0
  %574 = vmatprep.subr.mxu0 0.0
  %575 = vmatpush2.msra.mxu0 0.0
  %576 = vmatprep.subr.mxu0 0.0
  %577 = vmatpush2.msra.mxu0 0.0
  %578 = vmatprep.subr.mxu0 0.0
  %579 = vmatpush2.msra.mxu0 0.0
  %580 = vmatprep.subr.mxu0 0.0
  %581 = vmatpush2.msra.mxu0 0.0
  %582 = vmatprep.subr.mxu0 0.0
  %583 = vmatpush2.msra.mxu0 0.0
  %584 = vmatprep.subr.mxu0 0.0
  %585 = vmatpush2.msra.mxu0 0.0
  %586 = vmatprep.subr.mxu0 0.0
  %587 = vmatpush2.msra.mxu0 0.0
  %588 = vmatprep.subr.mxu0 0.0
  %589 = vmatpush2.msra.mxu0 0.0
  %590 = vmatprep.subr.mxu0 0.0
  %591 = vmatpush2.msra.mxu0 0.0
  %592 = vmatprep.subr.mxu0 0.0
  %593 = vmatpush2.msra.mxu0 0.0
  %594 = vmatprep.subr.mxu0 0.0
  %595 = vmatpush2.msra.mxu0 0.0
  %596 = vmatprep.subr.mxu0 0.0
  %597 = vmatpush2.msra.mxu0 0.0
  %598 = vmatprep.subr.mxu0 0.0
  %599 = vmatpush2.msra.mxu0 0.0
  %600 = vmatprep.subr.mxu0 0.0
  %601 = vmatpush2.msra.mxu0 0.0
  %602 = vmatprep.subr.mxu0 0.0
  %603 = vmatpush2.msra.mxu0 0.0
  %604 = vmatprep.mubr.f32.mxu0 0.0
  %605 = vmatmul.mubr.f32.gmra.mxu0 %v72
  %v606 = vpop.f32.mrf.mxu0
  %v607 = vadd.f32 0.0, %v606
  %v608 = vpop.f32.mrf.mxu0
  %609 = vdwg.mxu0
  %v610 = vld [vmem:[%s2] sm:$0x3f]
  %v611 = vld [vmem:[%s3] sm:$0x3f]
  %vm612 = vcmask 1045504
  %v613 = vsel %vm612, %v181, 0.0
  %v614 = vsel %vm612, %v183, 0.0
  %v615 = vadd.f32 %v613, %v614
  %v616 = vsel %vm612, %v252, 0.0
  %v617 = vadd.f32 %v615, %v616
  %v618 = vsel %vm612, %v254, 0.0
  %v619 = vadd.f32 %v617, %v618
  %v620 = vsel %vm612, %v323, 0.0
  %v621 = vadd.f32 %v619, %v620
  %v622 = vsel %vm612, %v325, 0.0
  %v623 = vadd.f32 %v621, %v622
  %v624 = vsel %vm612, %v394, 0.0
  %v625 = vadd.f32 %v623, %v624
  %v626 = vsel %vm612, %v396, 0.0
  %v627 = vadd.f32 %v625, %v626
  %v628 = vsel %vm612, %v465, 0.0
  %v629 = vadd.f32 %v627, %v628
  %v630 = vsel %vm612, %v467, 0.0
  %v631 = vadd.f32 %v629, %v630
  %v632 = vsel %vm612, %v536, 0.0
  %v633 = vadd.f32 %v631, %v632
  %v634 = vsel %vm612, %v538, 0.0
  %v635 = vadd.f32 %v633, %v634
  %vm636 = vcmask 259072
  %v637 = vsel %vm636, %v607, 0.0
  %v638 = vadd.f32 %v635, %v637
  %639 = vadd.xlane.f32.xlu0 %v638
  %v640 = vpop.xlane.xlu0 %639
  %v641 = vrcp.pop 1568.0
  %v642 = vmul.f32 %v640, %v641
  %v643 = vsub.f32 %v181, %v642
  %v644 = vsub.f32 %v183, %v642
  %v645 = vsub.f32 %v252, %v642
  %v646 = vsub.f32 %v254, %v642
  %v647 = vsub.f32 %v323, %v642
  %v648 = vsub.f32 %v325, %v642
  %v649 = vsub.f32 %v394, %v642
  %v650 = vsub.f32 %v396, %v642
  %v651 = vsub.f32 %v465, %v642
  %v652 = vsub.f32 %v467, %v642
  %v653 = vsub.f32 %v536, %v642
  %v654 = vsub.f32 %v538, %v642
  %v655 = vsub.f32 %v607, %v642
  %v656 = vmul.f32 %v643, %v643
  %v657 = vmul.f32 %v644, %v644
  %v658 = vmul.f32 %v645, %v645
  %v659 = vmul.f32 %v646, %v646
  %v660 = vmul.f32 %v647, %v647
  %v661 = vmul.f32 %v648, %v648
  %v662 = vmul.f32 %v649, %v649
  %v663 = vmul.f32 %v650, %v650
  %v664 = vmul.f32 %v651, %v651
  %v665 = vmul.f32 %v652, %v652
  %v666 = vmul.f32 %v653, %v653
  %v667 = vmul.f32 %v654, %v654
  %v668 = vmul.f32 %v655, %v655
  %v669 = vsel %vm612, %v656, 0.0
  %v670 = vsel %vm612, %v657, 0.0
  %v671 = vadd.f32 %v669, %v670
  %v672 = vsel %vm612, %v658, 0.0
  %v673 = vadd.f32 %v671, %v672
  %v674 = vsel %vm612, %v659, 0.0
  %v675 = vadd.f32 %v673, %v674
  %v676 = vsel %vm612, %v660, 0.0
  %v677 = vadd.f32 %v675, %v676
  %v678 = vsel %vm612, %v661, 0.0
  %v679 = vadd.f32 %v677, %v678
  %v680 = vsel %vm612, %v662, 0.0
  %v681 = vadd.f32 %v679, %v680
  %v682 = vsel %vm612, %v663, 0.0
  %v683 = vadd.f32 %v681, %v682
  %v684 = vsel %vm612, %v664, 0.0
  %v685 = vadd.f32 %v683, %v684
  %v686 = vsel %vm612, %v665, 0.0
  %v687 = vadd.f32 %v685, %v686
  %v688 = vsel %vm612, %v666, 0.0
  %v689 = vadd.f32 %v687, %v688
  %v690 = vsel %vm612, %v667, 0.0
  %v691 = vadd.f32 %v689, %v690
  %v692 = vsel %vm636, %v668, 0.0
  %v693 = vadd.f32 %v691, %v692
  %694 = vadd.xlane.f32.xlu0 %v693
  %v695 = vpop.xlane.xlu0 %694
  %v696 = vmul.f32 %v695, %v641
  %v697 = vadd.f32 %v696, 1e-05
  %v698 = vrsqrt.pop %v697
  %v699 = vmul.f32 %v610, %v698
  %v700 = vmul.f32 %v699, %v642
  %v701 = vsub.f32 %v611, %v700
  %703 = vset.pattern.permute.xlu0 0
  %704 = vperm.xlu0 %703, %v699
  %v705 = vpop.permute.xlu0 %704
  %v707 = vmul.f32 %v181, %v705
  %v708 = vmul.f32 %v183, %v705
  %v709 = vmul.f32 %v252, %v705
  %v710 = vmul.f32 %v254, %v705
  %v711 = vmul.f32 %v323, %v705
  %v712 = vmul.f32 %v325, %v705
  %v713 = vmul.f32 %v394, %v705
  %v714 = vmul.f32 %v396, %v705
  %v715 = vmul.f32 %v465, %v705
  %v716 = vmul.f32 %v467, %v705
  %v717 = vmul.f32 %v536, %v705
  %v718 = vmul.f32 %v538, %v705
  %v719 = vmul.f32 %v607, %v705
  %721 = vset.pattern.permute.xlu0 0
  %722 = vperm.xlu0 %721, %v701
  %v723 = vpop.permute.xlu0 %722
  %v725 = vadd.f32 %v707, %v723
  %v726 = vadd.f32 %v708, %v723
  %v727 = vadd.f32 %v709, %v723
  %v728 = vadd.f32 %v710, %v723
  %v729 = vadd.f32 %v711, %v723
  %v730 = vadd.f32 %v712, %v723
  %v731 = vadd.f32 %v713, %v723
  %v732 = vadd.f32 %v714, %v723
  %v733 = vadd.f32 %v715, %v723
  %v734 = vadd.f32 %v716, %v723
  %v735 = vadd.f32 %v717, %v723
  %v736 = vadd.f32 %v718, %v723
  %v737 = vadd.f32 %v719, %v723
  %v738 = vmax.f32 %v725, 0.0
  %v739 = vmax.f32 %v726, 0.0
  %v740 = vmax.f32 %v727, 0.0
  %v741 = vmax.f32 %v728, 0.0
  %v742 = vmax.f32 %v729, 0.0
  %v743 = vmax.f32 %v730, 0.0
  %v744 = vmax.f32 %v731, 0.0
  %v745 = vmax.f32 %v732, 0.0
  %v746 = vmax.f32 %v733, 0.0
  %v747 = vmax.f32 %v734, 0.0
  %v748 = vmax.f32 %v735, 0.0
  %v749 = vmax.f32 %v736, 0.0
  %v750 = vmax.f32 %v737, 0.0
  %755 = vrot.lane.b32.xlu0 %v741, 120
  %v756 = vpop.permute.xlu0 %755
  %757 = vrot.lane.b32.xlu0 %v742, 120
  %v758 = vpop.permute.xlu0 %757
  %759 = vrot.lane.b32.xlu0 %v743, 120
  %v760 = vpop.permute.xlu0 %759
  %761 = vrot.lane.b32.xlu0 %v744, 120
  %v762 = vpop.permute.xlu0 %761
  %vm763 = vcmask 982016
  %v764 = vsel %vm763, %v756, %v758
  %v765 = vsel %vm763, %v758, %v760
  %v766 = vsel %vm763, %v760, %v762
  %v771 = vmax.f32 %v738, %v764
  %v772 = vmax.f32 %v739, %v765
  %v773 = vmax.f32 %v740, %v766
  %v774 = vmax.f32 %v741, %v762
  %779 = vrot.lane.b32.xlu0 %v747, 120
  %v780 = vpop.permute.xlu0 %779
  %781 = vrot.lane.b32.xlu0 %v748, 120
  %v782 = vpop.permute.xlu0 %781
  %783 = vrot.lane.b32.xlu0 %v749, 120
  %v784 = vpop.permute.xlu0 %783
  %785 = vrot.lane.b32.xlu0 %v750, 120
  %v786 = vpop.permute.xlu0 %785
  %v787 = vsel %vm763, %v780, %v782
  %v788 = vsel %vm763, %v782, %v784
  %v789 = vsel %vm763, %v784, %v786
  %v794 = vmax.f32 %v744, %v787
  %v795 = vmax.f32 %v745, %v788
  %v796 = vmax.f32 %v746, %v789
  %v797 = vmax.f32 %v747, %v786
  %802 = vrot.lane.b32.xlu0 %v794, 112
  %v803 = vpop.permute.xlu0 %802
  %804 = vrot.lane.b32.xlu0 %v795, 112
  %v805 = vpop.permute.xlu0 %804
  %806 = vrot.lane.b32.xlu0 %v796, 112
  %v807 = vpop.permute.xlu0 %806
  %808 = vrot.lane.b32.xlu0 %v797, 112
  %v809 = vpop.permute.xlu0 %808
  %vm810 = vcmask 916480
  %v811 = vsel %vm810, %v803, %v805
  %v812 = vsel %vm810, %v805, %v807
  %v813 = vsel %vm810, %v807, %v809
  %v818 = vmax.f32 %v771, %v811
  %v819 = vmax.f32 %v772, %v812
  %v820 = vmax.f32 %v773, %v813
  %v821 = vmax.f32 %v774, %v809
  %822 = vst [vmem:[%s4] sm:$0x3f] %v818
  %823 = vst [vmem:[%s4 + $0x8] sm:$0x3f] %v819
  %824 = vst [vmem:[%s4 + $0x10] sm:$0x3f] %v820
  %vm825 = vcmask 62464
  %826 = vst.msk [vmem:[%s4 + $0x18] sm:$0x3f] %vm825, %v821
  // Predicated region
  $region18: #{lenet_bn_forward.2} parent=0 // pred_check
    _
  $region19: #{lenet_bn_forward.2} parent=0 // pred_check_branch
    %828 = sbr.rel (0) target = $region21
  $region20: #{lenet_bn_forward.2} parent=0 // pred_region
    _
  $region21: #{lenet_bn_forward.2} parent=0 // pred_fallthru
    _
  // Predicated region
  $region22: #{lenet_bn_forward.2} parent=0 // pred_check
    _
  $region23: #{lenet_bn_forward.2} parent=0 // pred_check_branch
    %830 = sbr.rel (0) target = $region25
  $region24: #{lenet_bn_forward.2} parent=0 // pred_region
    _
  $region25: #{lenet_bn_forward.2} parent=0 // pred_fallthru
    _

// kernel: lenet_bn_forward.3
$region0: #{lenet_bn_forward.3}
  #allocation0 [shape = 'u32[]', space=smem, size = 0x4, offset = 0x4, fixed_abs, tag = 'smem constant byte address 0x4 - core index']
  #allocation1 [shape = 'u32[144,128]{1,0:T(1,128)}', space=vmem, size = 0x12000, scoped, tag = 'internal scratch']
  %s0 = inlined_call_operand.vmem [shape: f32[150,200], index: 0, kind: input, shape index: {}]
  %s1 = inlined_call_operand.vmem [shape: f32[16,150], index: 1, kind: input, shape index: {}]
  %s2 = inlined_call_operand.vmem [shape: f32[16,1], index: 2, kind: input, shape index: {}]
  %s3 = inlined_call_operand.vmem [shape: f32[16,1], index: 3, kind: input, shape index: {}]
  %s4 = inlined_call_operand.vmem [shape: f32[25,120,16], index: 4, kind: input, shape index: {}]
  %s5 = inlined_call_operand.vmem [shape: f32[120,1], index: 5, kind: input, shape index: {}]
  %s6 = inlined_call_operand.vmem [shape: f32[84,120], index: 6, kind: input, shape index: {}]
  %s7 = inlined_call_operand.vmem [shape: f32[84,1], index: 7, kind: input, shape index: {}]
  %s8 = inlined_call_operand.vmem [shape: f32[10,84], index: 8, kind: input, shape index: {}]
  %s9 = inlined_call_operand.vmem [shape: f32[10,1], index: 9, kind: input, shape index: {}]
  %s10 = inlined_call_operand.vmem [shape: f32[10,2], index: 10, kind: output, shape index: {}]
  %s11 = sld [smem:[#allocation0]]
  $region50: #{lenet_bn_forward.3} parent=0
    _
  %s13 = ssub.s32 1, %s11
  %s14 = scalar_select 0, %s13, %s11
  // Predicated region
  $region2: #{lenet_bn_forward.3} parent=0 // pred_check
    _
  $region3: #{lenet_bn_forward.3} parent=0 // pred_check_branch
    %16 = sbr.rel (0) target = $region5
  $region4: #{lenet_bn_forward.3} parent=0 // pred_region
    _
  $region5: #{lenet_bn_forward.3} parent=0 // pred_fallthru
    _
  // Predicated region
  $region6: #{lenet_bn_forward.3} parent=0 // pred_check
    _
  $region7: #{lenet_bn_forward.3} parent=0 // pred_check_branch
    %18 = sbr.rel (0) target = $region9
  $region8: #{lenet_bn_forward.3} parent=0 // pred_region
    _
  $region9: #{lenet_bn_forward.3} parent=0 // pred_fallthru
    _
  // Predicated region
  $region10: #{lenet_bn_forward.3} parent=0 // pred_check
    _
  $region11: #{lenet_bn_forward.3} parent=0 // pred_check_branch
    %20 = sbr.rel (0) target = $region13
  $region12: #{lenet_bn_forward.3} parent=0 // pred_region
    _
  $region13: #{lenet_bn_forward.3} parent=0 // pred_fallthru
    _
  // Predicated region
  $region14: #{lenet_bn_forward.3} parent=0 // pred_check
    _
  $region15: #{lenet_bn_forward.3} parent=0 // pred_check_branch
    %22 = sbr.rel (0) target = $region17
  $region16: #{lenet_bn_forward.3} parent=0 // pred_region
    _
  $region17: #{lenet_bn_forward.3} parent=0 // pred_fallthru
    _
  // Predicated region
  $region18: #{lenet_bn_forward.3} parent=0 // pred_check
    _
  $region19: #{lenet_bn_forward.3} parent=0 // pred_check_branch
    %24 = sbr.rel (0) target = $region21
  $region20: #{lenet_bn_forward.3} parent=0 // pred_region
    _
  $region21: #{lenet_bn_forward.3} parent=0 // pred_fallthru
    _
  // Predicated region
  $region22: #{lenet_bn_forward.3} parent=0 // pred_check
    _
  $region23: #{lenet_bn_forward.3} parent=0 // pred_check_branch
    %26 = sbr.rel (0) target = $region25
  $region24: #{lenet_bn_forward.3} parent=0 // pred_region
    _
  $region25: #{lenet_bn_forward.3} parent=0 // pred_fallthru
    _
  // Predicated region
  $region26: #{lenet_bn_forward.3} parent=0 // pred_check
    _
  $region27: #{lenet_bn_forward.3} parent=0 // pred_check_branch
    %28 = sbr.rel (0) target = $region29
  $region28: #{lenet_bn_forward.3} parent=0 // pred_region
    _
  $region29: #{lenet_bn_forward.3} parent=0 // pred_fallthru
    _
  // Predicated region
  $region30: #{lenet_bn_forward.3} parent=0 // pred_check
    _
  $region31: #{lenet_bn_forward.3} parent=0 // pred_check_branch
    %30 = sbr.rel (0) target = $region33
  $region32: #{lenet_bn_forward.3} parent=0 // pred_region
    _
  $region33: #{lenet_bn_forward.3} parent=0 // pred_fallthru
    _
  // Predicated region
  $region34: #{lenet_bn_forward.3} parent=0 // pred_check
    _
  $region35: #{lenet_bn_forward.3} parent=0 // pred_check_branch
    %32 = sbr.rel (0) target = $region37
  $region36: #{lenet_bn_forward.3} parent=0 // pred_region
    _
  $region37: #{lenet_bn_forward.3} parent=0 // pred_fallthru
    _
  // Predicated region
  $region38: #{lenet_bn_forward.3} parent=0 // pred_check
    _
  $region39: #{lenet_bn_forward.3} parent=0 // pred_check_branch
    %34 = sbr.rel (0) target = $region41
  $region40: #{lenet_bn_forward.3} parent=0 // pred_region
    _
  $region41: #{lenet_bn_forward.3} parent=0 // pred_fallthru
    _
  %v35 = vld [vmem:[%s1] sm:$0xff]
  %v36 = vld [vmem:[%s1 + $0x8] sm:$0xff]
  %v37 = vld [vmem:[%s1 + $0x10] sm:$0xff]
  %v38 = vld [vmem:[%s1 + $0x18] sm:$0xff]
  %v39 = vld [vmem:[%s0] sm:$0xff]
  %v40 = vld [vmem:[%s0 + $0x8] sm:$0xff]
  %v41 = vld [vmem:[%s0 + $0x10] sm:$0xff]
  %v42 = vld [vmem:[%s0 + $0x18] sm:$0xff]
  %v43 = vld [vmem:[%s0 + $0x20] sm:$0xff]
  %v44 = vld [vmem:[%s0 + $0x28] sm:$0xff]
  %v45 = vld [vmem:[%s0 + $0x30] sm:$0xff]
  %v46 = vld [vmem:[%s0 + $0x38] sm:$0xff]
  %v47 = vld [vmem:[%s0 + $0x40] sm:$0xff]
  %v48 = vld [vmem:[%s0 + $0x48] sm:$0xff]
  %v49 = vld [vmem:[%s0 + $0x50] sm:$0xff]
  %v50 = vld [vmem:[%s0 + $0x58] sm:$0xff]
  %v51 = vld [vmem:[%s0 + $0x60] sm:$0xff]
  %v52 = vld [vmem:[%s0 + $0x68] sm:$0xff]
  %v53 = vld [vmem:[%s0 + $0x70] sm:$0xff]
  %v54 = vld [vmem:[%s0 + $0x78] sm:$0xff]
  %v55 = vld [vmem:[%s0 + $0x80] sm:$0xff]
  %v56 = vld [vmem:[%s0 + $0x88] sm:$0xff]
  %v57 = vld [vmem:[%s0 + $0x90] sm:$0xff]
  %v58 = vld [vmem:[%s0 + $0x98] sm:$0xff]
  %v59 = vld [vmem:[%s0 + $0xa0] sm:$0xff]
  %v60 = vld [vmem:[%s0 + $0xa8] sm:$0xff]
  %v61 = vld [vmem:[%s0 + $0xb0] sm:$0xff]
  %v62 = vld [vmem:[%s0 + $0xb8] sm:$0xff]
  %v63 = vld [vmem:[%s0 + $0xc0] sm:$0xff]
  %v64 = vld [vmem:[%s0 + $0xc8] sm:$0xff]
  %v65 = vld [vmem:[%s0 + $0xd0] sm:$0xff]
  %v66 = vld [vmem:[%s0 + $0xd8] sm:$0xff]
  %v67 = vld [vmem:[%s0 + $0xe0] sm:$0xff]
  %v68 = vld [vmem:[%s0 + $0xe8] sm:$0xff]
  %v69 = vld [vmem:[%s0 + $0xf0] sm:$0xff]
  %v70 = vld [vmem:[%s0 + $0xf8] sm:$0xff]
  %v71 = vld [vmem:[%s0 + $0x100] sm:$0xff]
  %v72 = vld [vmem:[%s0 + $0x108] sm:$0xff]
  %v73 = vld [vmem:[%s0 + $0x110] sm:$0xff]
  %v74 = vld [vmem:[%s0 + $0x118] sm:$0xff]
  %v75 = vld [vmem:[%s0 + $0x120] sm:$0x3f]
  %v76 = vld [vmem:[%s0 + $0x128] sm:$0x3f]
  %vm77 = vcmask 179200
  %v79 = vsel %vm77, %v36, 0
  %v82 = vsel %vm77, %v38, 0
  %vm84 = vcmask 1045504
  %v86 = vsel %vm84, %v75, 0
  %v89 = vsel %vm84, %v76, 0
  %91 = vmatprep.subr.mxu0 %v70
  %92 = vmatpush1.msra.mxu0 %v69
  %93 = vmatprep.subr.mxu0 %v68
  %94 = vmatpush1.msra.mxu0 %v67
  %95 = vmatprep.subr.mxu0 %v66
  %96 = vmatpush1.msra.mxu0 %v65
  %97 = vmatprep.subr.mxu0 %v64
  %98 = vmatpush1.msra.mxu0 %v63
  %99 = vmatprep.subr.mxu0 %v62
  %100 = vmatpush1.msra.mxu0 %v61
  %101 = vmatprep.subr.mxu0 %v60
  %102 = vmatpush1.msra.mxu0 %v59
  %103 = vmatprep.subr.mxu0 %v58
  %104 = vmatpush1.msra.mxu0 %v57
  %105 = vmatprep.subr.mxu0 %v56
  %106 = vmatpush1.msra.mxu0 %v55
  %107 = vmatprep.subr.mxu0 %v54
  %108 = vmatpush1.msra.mxu0 %v53
  %109 = vmatprep.subr.mxu0 %v52
  %110 = vmatpush1.msra.mxu0 %v51
  %111 = vmatprep.subr.mxu0 %v50
  %112 = vmatpush1.msra.mxu0 %v49
  %113 = vmatprep.subr.mxu0 %v48
  %114 = vmatpush1.msra.mxu0 %v47
  %115 = vmatprep.subr.mxu0 %v46
  %116 = vmatpush1.msra.mxu0 %v45
  %117 = vmatprep.subr.mxu0 %v44
  %118 = vmatpush1.msra.mxu0 %v43
  %119 = vmatprep.subr.mxu0 %v42
  %120 = vmatpush1.msra.mxu0 %v41
  %121 = vmatprep.subr.mxu0 %v40
  %122 = vmatpush1.msra.mxu0 %v39
  %123 = vmatprep.subr.mxu0 0.0
  %124 = vmatpush2.msra.mxu0 0.0
  %125 = vmatprep.subr.mxu0 0.0
  %126 = vmatpush2.msra.mxu0 0.0
  %127 = vmatprep.subr.mxu0 0.0
  %128 = vmatpush2.msra.mxu0 0.0
  %129 = vmatprep.subr.mxu0 0.0
  %130 = vmatpush2.msra.mxu0 0.0
  %131 = vmatprep.subr.mxu0 0.0
  %132 = vmatpush2.msra.mxu0 0.0
  %133 = vmatprep.subr.mxu0 0.0
  %134 = vmatpush2.msra.mxu0 0.0
  %135 = vmatprep.subr.mxu0 0.0
  %136 = vmatpush2.msra.mxu0 0.0
  %137 = vmatprep.subr.mxu0 0.0
  %138 = vmatpush2.msra.mxu0 0.0
  %139 = vmatprep.subr.mxu0 0.0
  %140 = vmatpush2.msra.mxu0 0.0
  %141 = vmatprep.subr.mxu0 0.0
  %142 = vmatpush2.msra.mxu0 0.0
  %143 = vmatprep.subr.mxu0 0.0
  %144 = vmatpush2.msra.mxu0 0.0
  %145 = vmatprep.subr.mxu0 0.0
  %146 = vmatpush2.msra.mxu0 0.0
  %147 = vmatprep.subr.mxu0 0.0
  %148 = vmatpush2.msra.mxu0 0.0
  %149 = vmatprep.subr.mxu0 %v89
  %150 = vmatpush2.msra.mxu0 %v86
  %151 = vmatprep.subr.mxu0 %v74
  %152 = vmatpush2.msra.mxu0 %v73
  %153 = vmatprep.subr.mxu0 %v72
  %154 = vmatpush2.msra.mxu0 %v71
  %155 = vmatprep.mubr.f32.mxu0 %v79
  %156 = vmatmul.mubr.f32.gmra.mxu0 %v35
  %v157 = vpop.f32.mrf.mxu0
  %v158 = vadd.f32 0.0, %v157
  %v159 = vpop.f32.mrf.mxu0
  %v160 = vadd.f32 0.0, %v159
  %161 = vmatprep.mubr.f32.mxu0 %v82
  %162 = vmatmul.mubr.f32.gmra.mxu0 %v37
  %v163 = vpop.f32.mrf.mxu0
  %v164 = vadd.f32 0.0, %v163
  %v165 = vpop.f32.mrf.mxu0
  %v166 = vadd.f32 0.0, %v165
  %167 = vdwg.mxu0
  %v168 = vld [vmem:[%s2] sm:$0xff]
  %v169 = vld [vmem:[%s2 + $0x8] sm:$0xff]
  %v170 = vld [vmem:[%s3] sm:$0xff]
  %v171 = vld [vmem:[%s3 + $0x8] sm:$0xff]
  %vm172 = vcmask 588800
  %v173 = vsel %vm172, %v160, 0.0
  %v174 = vadd.f32 %v158, %v173
  %175 = vadd.xlane.f32.xlu0 %v174
  %v176 = vpop.xlane.xlu0 %175
  %v177 = vsel %vm172, %v166, 0.0
  %v178 = vadd.f32 %v164, %v177
  %179 = vadd.xlane.f32.xlu0 %v178
  %v180 = vpop.xlane.xlu0 %179
  %v181 = vrcp.pop 200.0
  %v182 = vmul.f32 %v176, %v181
  %v183 = vmul.f32 %v180, %v181
  %v184 = vsub.f32 %v158, %v182
  %v185 = vsub.f32 %v160, %v182
  %v186 = vsub.f32 %v164, %v183
  %v187 = vsub.f32 %v166, %v183
  %v188 = vmul.f32 %v184, %v184
  %v189 = vmul.f32 %v185, %v185
  %v190 = vmul.f32 %v186, %v186
  %v191 = vmul.f32 %v187, %v187
  %v192 = vsel %vm172, %v189, 0.0
  %v193 = vadd.f32 %v188, %v192
  %194 = vadd.xlane.f32.xlu0 %v193
  %v195 = vpop.xlane.xlu0 %194
  %v196 = vsel %vm172, %v191, 0.0
  %v197 = vadd.f32 %v190, %v196
  %198 = vadd.xlane.f32.xlu0 %v197
  %v199 = vpop.xlane.xlu0 %198
  %v200 = vmul.f32 %v195, %v181
  %v201 = vmul.f32 %v199, %v181
  %v202 = vadd.f32 %v200, 1e-05
  %v203 = vadd.f32 %v201, 1e-05
  %v204 = vrsqrt.pop %v202
  %v205 = vrsqrt.pop %v203
  %v206 = vmul.f32 %v168, %v204
  %v207 = vmul.f32 %v169, %v205
  %v208 = vmul.f32 %v206, %v182
  %v209 = vmul.f32 %v207, %v183
  %v210 = vsub.f32 %v170, %v208
  %v211 = vsub.f32 %v171, %v209
  %213 = vset.pattern.permute.xlu0 0
  %214 = vperm.xlu0 %213, %v206
  %v215 = vpop.permute.xlu0 %214
  %218 = vset.pattern.permute.xlu0 0
  %219 = vperm.xlu0 %218, %v207
  %v220 = vpop.permute.xlu0 %219
  %v222 = vmul.f32 %v158, %v215
  %v223 = vmul.f32 %v160, %v215
  %v224 = vmul.f32 %v164, %v220
  %v225 = vmul.f32 %v166, %v220
  %227 = vset.pattern.permute.xlu0 0
  %228 = vperm.xlu0 %227, %v210
  %v229 = vpop.permute.xlu0 %228
  %232 = vset.pattern.permute.xlu0 0
  %233 = vperm.xlu0 %232, %v211
  %v234 = vpop.permute.xlu0 %233
  %v236 = vadd.f32 %v222, %v229
  %v237 = vadd.f32 %v223, %v229
  %v238 = vadd.f32 %v224, %v234
  %v239 = vadd.f32 %v225, %v234
  %v240 = vmax.f32 %v236, 0.0
  %v241 = vmax.f32 %v237, 0.0
  %v242 = vmax.f32 %v238, 0.0
  %v243 = vmax.f32 %v239, 0.0
  %246 = vrot.lane.b32.xlu0 %v240, 78
  %v247 = vpop.permute.xlu0 %246
  %248 = vrot.lane.b32.xlu0 %v242, 78
  %v249 = vpop.permute.xlu0 %248
  %v252 = vmax.f32 %v240, %v247
  %v253 = vmax.f32 %v242, %v249
  %256 = vrot.lane.b32.xlu0 %v241, 78
  %v257 = vpop.permute.xlu0 %256
  %258 = vrot.lane.b32.xlu0 %v243, 78
  %v259 = vpop.permute.xlu0 %258
  %v262 = vmax.f32 %v240, %v257
  %v263 = vmax.f32 %v241, %v257
  %v264 = vmax.f32 %v242, %v259
  %v265 = vmax.f32 %v243, %v259
  %270 = vrot.lane.b32.xlu0 %v262, 28
  %v271 = vpop.permute.xlu0 %270
  %272 = vrot.lane.b32.xlu0 %v263, 28
  %v273 = vpop.permute.xlu0 %272
  %274 = vrot.lane.b32.xlu0 %v264, 28
  %v275 = vpop.permute.xlu0 %274
  %276 = vrot.lane.b32.xlu0 %v265, 28
  %v277 = vpop.permute.xlu0 %276
  %vm278 = vcmask 228352
  %v279 = vsel %vm278, %v271, %v273
  %v280 = vsel %vm278, %v275, %v277
  %v283 = vmax.f32 %v252, %v279
  %v284 = vmax.f32 %v253, %v280
  %v285 = vld [vmem:[%s4] sm:$0xff]
  %v286 = vld [vmem:[%s4 + $0x8] sm:$0xff]
  %v287 = vld [vmem:[%s4 + $0x10] sm:$0xff]
  %v288 = vld [vmem:[%s4 + $0x18] sm:$0xff]
  %v289 = vld [vmem:[%s4 + $0x20] sm:$0xff]
  %v290 = vld [vmem:[%s4 + $0x28] sm:$0xff]
  %v291 = vld [vmem:[%s4 + $0x30] sm:$0xff]
  %v292 = vld [vmem:[%s4 + $0x38] sm:$0xff]
  %v293 = vld [vmem:[%s4 + $0x40] sm:$0xff]
  %v294 = vld [vmem:[%s4 + $0x48] sm:$0xff]
  %v295 = vld [vmem:[%s4 + $0x50] sm:$0xff]
  %v296 = vld [vmem:[%s4 + $0x58] sm:$0xff]
  %v297 = vld [vmem:[%s4 + $0x60] sm:$0xff]
  %v298 = vld [vmem:[%s4 + $0x68] sm:$0xff]
  %v299 = vld [vmem:[%s4 + $0x70] sm:$0xff]
  %v300 = vld [vmem:[%s4 + $0x78] sm:$0xff]
  %v301 = vld [vmem:[%s4 + $0x80] sm:$0xff]
  %v302 = vld [vmem:[%s4 + $0x88] sm:$0xff]
  %v303 = vld [vmem:[%s4 + $0x90] sm:$0xff]
  %v304 = vld [vmem:[%s4 + $0x98] sm:$0xff]
  %v305 = vld [vmem:[%s4 + $0xa0] sm:$0xff]
  %v306 = vld [vmem:[%s4 + $0xa8] sm:$0xff]
  %v307 = vld [vmem:[%s4 + $0xb0] sm:$0xff]
  %v308 = vld [vmem:[%s4 + $0xb8] sm:$0xff]
  %v309 = vld [vmem:[%s4 + $0xc0] sm:$0xff]
  %v310 = vld [vmem:[%s4 + $0xc8] sm:$0xff]
  %v311 = vld [vmem:[%s4 + $0xd0] sm:$0xff]
  %v312 = vld [vmem:[%s4 + $0xd8] sm:$0xff]
  %v313 = vld [vmem:[%s4 + $0xe0] sm:$0xff]
  %v314 = vld [vmem:[%s4 + $0xe8] sm:$0xff]
  %v315 = vld [vmem:[%s4 + $0xf0] sm:$0xff]
  %v316 = vld [vmem:[%s4 + $0xf8] sm:$0xff]
  %v317 = vld [vmem:[%s4 + $0x100] sm:$0xff]
  %v318 = vld [vmem:[%s4 + $0x108] sm:$0xff]
  %v319 = vld [vmem:[%s4 + $0x110] sm:$0xff]
  %v320 = vld [vmem:[%s4 + $0x118] sm:$0xff]
  %v321 = vld [vmem:[%s4 + $0x120] sm:$0xff]
  %v322 = vld [vmem:[%s4 + $0x128] sm:$0xff]
  %v323 = vld [vmem:[%s4 + $0x130] sm:$0xff]
  %v324 = vld [vmem:[%s4 + $0x138] sm:$0xff]
  %v325 = vld [vmem:[%s4 + $0x140] sm:$0xff]
  %v326 = vld [vmem:[%s4 + $0x148] sm:$0xff]
  %v327 = vld [vmem:[%s4 + $0x150] sm:$0xff]
  %v328 = vld [vmem:[%s4 + $0x158] sm:$0xff]
  %v329 = vld [vmem:[%s4 + $0x160] sm:$0xff]
  %v330 = vld [vmem:[%s4 + $0x168] sm:$0xff]
  %v331 = vld [vmem:[%s4 + $0x170] sm:$0xff]
  %v332 = vld [vmem:[%s4 + $0x178] sm:$0xff]
  %v333 = vld [vmem:[%s4 + $0x180] sm:$0xff]
  %v334 = vld [vmem:[%s4 + $0x188] sm:$0xff]
  %v335 = vld [vmem:[%s4 + $0x190] sm:$0xff]
  %v336 = vld [vmem:[%s4 + $0x198] sm:$0xff]
  %v337 = vld [vmem:[%s4 + $0x1a0] sm:$0xff]
  %v338 = vld [vmem:[%s4 + $0x1a8] sm:$0xff]
  %v339 = vld [vmem:[%s4 + $0x1b0] sm:$0xff]
  %v340 = vld [vmem:[%s4 + $0x1b8] sm:$0xff]
  %v341 = vld [vmem:[%s4 + $0x1c0] sm:$0xff]
  %v342 = vld [vmem:[%s4 + $0x1c8] sm:$0xff]
  %v343 = vld [vmem:[%s4 + $0x1d0] sm:$0xff]
  %v344 = vld [vmem:[%s4 + $0x1d8] sm:$0xff]
  %v345 = vld [vmem:[%s4 + $0x1e0] sm:$0xff]
  %v346 = vld [vmem:[%s4 + $0x1e8] sm:$0xff]
  %v347 = vld [vmem:[%s4 + $0x1f0] sm:$0xff]
  %v348 = vld [vmem:[%s4 + $0x1f8] sm:$0xff]
  %v349 = vld [vmem:[%s4 + $0x200] sm:$0xff]
  %v350 = vld [vmem:[%s4 + $0x208] sm:$0xff]
  %v351 = vld [vmem:[%s4 + $0x210] sm:$0xff]
  %v352 = vld [vmem:[%s4 + $0x218] sm:$0xff]
  %v353 = vld [vmem:[%s4 + $0x220] sm:$0xff]
  %v354 = vld [vmem:[%s4 + $0x228] sm:$0xff]
  %v355 = vld [vmem:[%s4 + $0x230] sm:$0xff]
  %v356 = vld [vmem:[%s4 + $0x238] sm:$0xff]
  %v357 = vld [vmem:[%s4 + $0x240] sm:$0xff]
  %v358 = vld [vmem:[%s4 + $0x248] sm:$0xff]
  %v359 = vld [vmem:[%s4 + $0x250] sm:$0xff]
  %v360 = vld [vmem:[%s4 + $0x258] sm:$0xff]
  %v361 = vld [vmem:[%s4 + $0x260] sm:$0xff]
  %v362 = vld [vmem:[%s4 + $0x268] sm:$0xff]
  %v363 = vld [vmem:[%s4 + $0x270] sm:$0xff]
  %v364 = vld [vmem:[%s4 + $0x278] sm:$0xff]
  %v365 = vld [vmem:[%s4 + $0x280] sm:$0xff]
  %v366 = vld [vmem:[%s4 + $0x288] sm:$0xff]
  %v367 = vld [vmem:[%s4 + $0x290] sm:$0xff]
  %v368 = vld [vmem:[%s4 + $0x298] sm:$0xff]
  %v369 = vld [vmem:[%s4 + $0x2a0] sm:$0xff]
  %v370 = vld [vmem:[%s4 + $0x2a8] sm:$0xff]
  %v371 = vld [vmem:[%s4 + $0x2b0] sm:$0xff]
  %v372 = vld [vmem:[%s4 + $0x2b8] sm:$0xff]
  %v373 = vld [vmem:[%s4 + $0x2c0] sm:$0xff]
  %v374 = vld [vmem:[%s4 + $0x2c8] sm:$0xff]
  %v375 = vld [vmem:[%s4 + $0x2d0] sm:$0xff]
  %v376 = vld [vmem:[%s4 + $0x2d8] sm:$0xff]
  %v377 = vld [vmem:[%s4 + $0x2e0] sm:$0xff]
  %v378 = vld [vmem:[%s4 + $0x2e8] sm:$0xff]
  %v379 = vld [vmem:[%s4 + $0x2f0] sm:$0xff]
  %v380 = vld [vmem:[%s4 + $0x2f8] sm:$0xff]
  %v381 = vld [vmem:[%s4 + $0x300] sm:$0xff]
  %v382 = vld [vmem:[%s4 + $0x308] sm:$0xff]
  %v383 = vld [vmem:[%s4 + $0x310] sm:$0xff]
  %v384 = vld [vmem:[%s4 + $0x318] sm:$0xff]
  %v385 = vld [vmem:[%s4 + $0x320] sm:$0xff]
  %v386 = vld [vmem:[%s4 + $0x328] sm:$0xff]
  %v387 = vld [vmem:[%s4 + $0x330] sm:$0xff]
  %v388 = vld [vmem:[%s4 + $0x338] sm:$0xff]
  %v389 = vld [vmem:[%s4 + $0x340] sm:$0xff]
  %v390 = vld [vmem:[%s4 + $0x348] sm:$0xff]
  %v391 = vld [vmem:[%s4 + $0x350] sm:$0xff]
  %v392 = vld [vmem:[%s4 + $0x358] sm:$0xff]
  %v393 = vld [vmem:[%s4 + $0x360] sm:$0xff]
  %v394 = vld [vmem:[%s4 + $0x368] sm:$0xff]
  %v395 = vld [vmem:[%s4 + $0x370] sm:$0xff]
  %v396 = vld [vmem:[%s4 + $0x378] sm:$0xff]
  %v397 = vld [vmem:[%s4 + $0x380] sm:$0xff]
  %v398 = vld [vmem:[%s4 + $0x388] sm:$0xff]
  %v399 = vld [vmem:[%s4 + $0x390] sm:$0xff]
  %v400 = vld [vmem:[%s4 + $0x398] sm:$0xff]
  %v401 = vld [vmem:[%s4 + $0x3a0] sm:$0xff]
  %v402 = vld [vmem:[%s4 + $0x3a8] sm:$0xff]
  %v403 = vld [vmem:[%s4 + $0x3b0] sm:$0xff]
  %v404 = vld [vmem:[%s4 + $0x3b8] sm:$0xff]
  %v405 = vld [vmem:[%s4 + $0x3c0] sm:$0xff]
  %v406 = vld [vmem:[%s4 + $0x3c8] sm:$0xff]
  %v407 = vld [vmem:[%s4 + $0x3d0] sm:$0xff]
  %v408 = vld [vmem:[%s4 + $0x3d8] sm:$0xff]
  %v409 = vld [vmem:[%s4 + $0x3e0] sm:$0xff]
  %v410 = vld [vmem:[%s4 + $0x3e8] sm:$0xff]
  %v411 = vld [vmem:[%s4 + $0x3f0] sm:$0xff]
  %v412 = vld [vmem:[%s4 + $0x3f8] sm:$0xff]
  %v413 = vld [vmem:[%s4 + $0x400] sm:$0xff]
  %v414 = vld [vmem:[%s4 + $0x408] sm:$0xff]
  %v415 = vld [vmem:[%s4 + $0x410] sm:$0xff]
  %v416 = vld [vmem:[%s4 + $0x418] sm:$0xff]
  %v417 = vld [vmem:[%s4 + $0x420] sm:$0xff]
  %v418 = vld [vmem:[%s4 + $0x428] sm:$0xff]
  %v419 = vld [vmem:[%s4 + $0x430] sm:$0xff]
  %v420 = vld [vmem:[%s4 + $0x438] sm:$0xff]
  %v421 = vld [vmem:[%s4 + $0x440] sm:$0xff]
  %v422 = vld [vmem:[%s4 + $0x448] sm:$0xff]
  %v423 = vld [vmem:[%s4 + $0x450] sm:$0xff]
  %v424 = vld [vmem:[%s4 + $0x458] sm:$0xff]
  %v425 = vld [vmem:[%s4 + $0x460] sm:$0xff]
  %v426 = vld [vmem:[%s4 + $0x468] sm:$0xff]
  %v427 = vld [vmem:[%s4 + $0x470] sm:$0xff]
  %v428 = vld [vmem:[%s4 + $0x478] sm:$0xff]
  %v429 = vld [vmem:[%s4 + $0x480] sm:$0xff]
  %v430 = vld [vmem:[%s4 + $0x488] sm:$0xff]
  %v431 = vld [vmem:[%s4 + $0x490] sm:$0xff]
  %v432 = vld [vmem:[%s4 + $0x498] sm:$0xff]
  %v433 = vld [vmem:[%s4 + $0x4a0] sm:$0xff]
  %v434 = vld [vmem:[%s4 + $0x4a8] sm:$0xff]
  %v435 = vld [vmem:[%s4 + $0x4b0] sm:$0xff]
  %v436 = vld [vmem:[%s4 + $0x4b8] sm:$0xff]
  %v437 = vld [vmem:[%s4 + $0x4c0] sm:$0xff]
  %v438 = vld [vmem:[%s4 + $0x4c8] sm:$0xff]
  %v439 = vld [vmem:[%s4 + $0x4d0] sm:$0xff]
  %v440 = vld [vmem:[%s4 + $0x4d8] sm:$0xff]
  %v441 = vld [vmem:[%s4 + $0x4e0] sm:$0xff]
  %v442 = vld [vmem:[%s4 + $0x4e8] sm:$0xff]
  %v443 = vld [vmem:[%s4 + $0x4f0] sm:$0xff]
  %v444 = vld [vmem:[%s4 + $0x4f8] sm:$0xff]
  %v445 = vld [vmem:[%s4 + $0x500] sm:$0xff]
  %v446 = vld [vmem:[%s4 + $0x508] sm:$0xff]
  %v447 = vld [vmem:[%s4 + $0x510] sm:$0xff]
  %v448 = vld [vmem:[%s4 + $0x518] sm:$0xff]
  %v449 = vld [vmem:[%s4 + $0x520] sm:$0xff]
  %v450 = vld [vmem:[%s4 + $0x528] sm:$0xff]
  %v451 = vld [vmem:[%s4 + $0x530] sm:$0xff]
  %v452 = vld [vmem:[%s4 + $0x538] sm:$0xff]
  %v453 = vld [vmem:[%s4 + $0x540] sm:$0xff]
  %v454 = vld [vmem:[%s4 + $0x548] sm:$0xff]
  %v455 = vld [vmem:[%s4 + $0x550] sm:$0xff]
  %v456 = vld [vmem:[%s4 + $0x558] sm:$0xff]
  %v457 = vld [vmem:[%s4 + $0x560] sm:$0xff]
  %v458 = vld [vmem:[%s4 + $0x568] sm:$0xff]
  %v459 = vld [vmem:[%s4 + $0x570] sm:$0xff]
  %v460 = vld [vmem:[%s4 + $0x578] sm:$0xff]
  %v461 = vld [vmem:[%s4 + $0x580] sm:$0xff]
  %v462 = vld [vmem:[%s4 + $0x588] sm:$0xff]
  %v463 = vld [vmem:[%s4 + $0x590] sm:$0xff]
  %v464 = vld [vmem:[%s4 + $0x598] sm:$0xff]
  %v465 = vld [vmem:[%s4 + $0x5a0] sm:$0xff]
  %v466 = vld [vmem:[%s4 + $0x5a8] sm:$0xff]
  %v467 = vld [vmem:[%s4 + $0x5b0] sm:$0xff]
  %v468 = vld [vmem:[%s4 + $0x5b8] sm:$0xff]
  %v469 = vld [vmem:[%s4 + $0x5c0] sm:$0xff]
  %v470 = vld [vmem:[%s4 + $0x5c8] sm:$0xff]
  %v471 = vld [vmem:[%s4 + $0x5d0] sm:$0xff]
  %v472 = vld [vmem:[%s4 + $0x5d8] sm:$0xff]
  %v473 = vld [vmem:[%s4 + $0x5e0] sm:$0xff]
  %v474 = vld [vmem:[%s4 + $0x5e8] sm:$0xff]
  %v475 = vld [vmem:[%s4 + $0x5f0] sm:$0xff]
  %v476 = vld [vmem:[%s4 + $0x5f8] sm:$0xff]
  %v477 = vld [vmem:[%s4 + $0x600] sm:$0xff]
  %v478 = vld [vmem:[%s4 + $0x608] sm:$0xff]
  %v479 = vld [vmem:[%s4 + $0x610] sm:$0xff]
  %v480 = vld [vmem:[%s4 + $0x618] sm:$0xff]
  %v481 = vld [vmem:[%s4 + $0x620] sm:$0xff]
  %v482 = vld [vmem:[%s4 + $0x628] sm:$0xff]
  %v483 = vld [vmem:[%s4 + $0x630] sm:$0xff]
  %v484 = vld [vmem:[%s4 + $0x638] sm:$0xff]
  %v485 = vld [vmem:[%s4 + $0x640] sm:$0xff]
  %v486 = vld [vmem:[%s4 + $0x648] sm:$0xff]
  %v487 = vld [vmem:[%s4 + $0x650] sm:$0xff]
  %v488 = vld [vmem:[%s4 + $0x658] sm:$0xff]
  %v489 = vld [vmem:[%s4 + $0x660] sm:$0xff]
  %v490 = vld [vmem:[%s4 + $0x668] sm:$0xff]
  %v491 = vld [vmem:[%s4 + $0x670] sm:$0xff]
  %v492 = vld [vmem:[%s4 + $0x678] sm:$0xff]
  %v493 = vld [vmem:[%s4 + $0x680] sm:$0xff]
  %v494 = vld [vmem:[%s4 + $0x688] sm:$0xff]
  %v495 = vld [vmem:[%s4 + $0x690] sm:$0xff]
  %v496 = vld [vmem:[%s4 + $0x698] sm:$0xff]
  %v497 = vld [vmem:[%s4 + $0x6a0] sm:$0xff]
  %v498 = vld [vmem:[%s4 + $0x6a8] sm:$0xff]
  %v499 = vld [vmem:[%s4 + $0x6b0] sm:$0xff]
  %v500 = vld [vmem:[%s4 + $0x6b8] sm:$0xff]
  %v501 = vld [vmem:[%s4 + $0x6c0] sm:$0xff]
  %v502 = vld [vmem:[%s4 + $0x6c8] sm:$0xff]
  %v503 = vld [vmem:[%s4 + $0x6d0] sm:$0xff]
  %v504 = vld [vmem:[%s4 + $0x6d8] sm:$0xff]
  %v505 = vld [vmem:[%s4 + $0x6e0] sm:$0xff]
  %v506 = vld [vmem:[%s4 + $0x6e8] sm:$0xff]
  %v507 = vld [vmem:[%s4 + $0x6f0] sm:$0xff]
  %v508 = vld [vmem:[%s4 + $0x6f8] sm:$0xff]
  %v509 = vld [vmem:[%s4 + $0x700] sm:$0xff]
  %v510 = vld [vmem:[%s4 + $0x708] sm:$0xff]
  %v511 = vld [vmem:[%s4 + $0x710] sm:$0xff]
  %v512 = vld [vmem:[%s4 + $0x718] sm:$0xff]
  %v513 = vld [vmem:[%s4 + $0x720] sm:$0xff]
  %v514 = vld [vmem:[%s4 + $0x728] sm:$0xff]
  %v515 = vld [vmem:[%s4 + $0x730] sm:$0xff]
  %v516 = vld [vmem:[%s4 + $0x738] sm:$0xff]
  %v517 = vld [vmem:[%s4 + $0x740] sm:$0xff]
  %v518 = vld [vmem:[%s4 + $0x748] sm:$0xff]
  %v519 = vld [vmem:[%s4 + $0x750] sm:$0xff]
  %v520 = vld [vmem:[%s4 + $0x758] sm:$0xff]
  %v521 = vld [vmem:[%s4 + $0x760] sm:$0xff]
  %v522 = vld [vmem:[%s4 + $0x768] sm:$0xff]
  %v523 = vld [vmem:[%s4 + $0x770] sm:$0xff]
  %v524 = vld [vmem:[%s4 + $0x778] sm:$0xff]
  %v525 = vld [vmem:[%s4 + $0x780] sm:$0xff]
  %v526 = vld [vmem:[%s4 + $0x788] sm:$0xff]
  %v527 = vld [vmem:[%s4 + $0x790] sm:$0xff]
  %v528 = vld [vmem:[%s4 + $0x798] sm:$0xff]
  %v529 = vld [vmem:[%s4 + $0x7a0] sm:$0xff]
  %v530 = vld [vmem:[%s4 + $0x7a8] sm:$0xff]
  %v531 = vld [vmem:[%s4 + $0x7b0] sm:$0xff]
  %v532 = vld [vmem:[%s4 + $0x7b8] sm:$0xff]
  %v533 = vld [vmem:[%s4 + $0x7c0] sm:$0xff]
  %v534 = vld [vmem:[%s4 + $0x7c8] sm:$0xff]
  %v535 = vld [vmem:[%s4 + $0x7d0] sm:$0xff]
  %v536 = vld [vmem:[%s4 + $0x7d8] sm:$0xff]
  %v537 = vld [vmem:[%s4 + $0x7e0] sm:$0xff]
  %v538 = vld [vmem:[%s4 + $0x7e8] sm:$0xff]
  %v539 = vld [vmem:[%s4 + $0x7f0] sm:$0xff]
  %v540 = vld [vmem:[%s4 + $0x7f8] sm:$0xff]
  %v541 = vld [vmem:[%s4 + $0x800] sm:$0xff]
  %v542 = vld [vmem:[%s4 + $0x808] sm:$0xff]
  %v543 = vld [vmem:[%s4 + $0x810] sm:$0xff]
  %v544 = vld [vmem:[%s4 + $0x818] sm:$0xff]
  %v545 = vld [vmem:[%s4 + $0x820] sm:$0xff]
  %v546 = vld [vmem:[%s4 + $0x828] sm:$0xff]
  %v547 = vld [vmem:[%s4 + $0x830] sm:$0xff]
  %v548 = vld [vmem:[%s4 + $0x838] sm:$0xff]
  %v549 = vld [vmem:[%s4 + $0x840] sm:$0xff]
  %v550 = vld [vmem:[%s4 + $0x848] sm:$0xff]
  %v551 = vld [vmem:[%s4 + $0x850] sm:$0xff]
  %v552 = vld [vmem:[%s4 + $0x858] sm:$0xff]
  %v553 = vld [vmem:[%s4 + $0x860] sm:$0xff]
  %v554 = vld [vmem:[%s4 + $0x868] sm:$0xff]
  %v555 = vld [vmem:[%s4 + $0x870] sm:$0xff]
  %v556 = vld [vmem:[%s4 + $0x878] sm:$0xff]
  %v557 = vld [vmem:[%s4 + $0x880] sm:$0xff]
  %v558 = vld [vmem:[%s4 + $0x888] sm:$0xff]
  %v559 = vld [vmem:[%s4 + $0x890] sm:$0xff]
  %v560 = vld [vmem:[%s4 + $0x898] sm:$0xff]
  %v561 = vld [vmem:[%s4 + $0x8a0] sm:$0xff]
  %v562 = vld [vmem:[%s4 + $0x8a8] sm:$0xff]
  %v563 = vld [vmem:[%s4 + $0x8b0] sm:$0xff]
  %v564 = vld [vmem:[%s4 + $0x8b8] sm:$0xff]
  %v565 = vld [vmem:[%s4 + $0x8c0] sm:$0xff]
  %v566 = vld [vmem:[%s4 + $0x8c8] sm:$0xff]
  %v567 = vld [vmem:[%s4 + $0x8d0] sm:$0xff]
  %v568 = vld [vmem:[%s4 + $0x8d8] sm:$0xff]
  %v569 = vld [vmem:[%s4 + $0x8e0] sm:$0xff]
  %v570 = vld [vmem:[%s4 + $0x8e8] sm:$0xff]
  %v571 = vld [vmem:[%s4 + $0x8f0] sm:$0xff]
  %v572 = vld [vmem:[%s4 + $0x8f8] sm:$0xff]
  %v573 = vld [vmem:[%s4 + $0x900] sm:$0xff]
  %v574 = vld [vmem:[%s4 + $0x908] sm:$0xff]
  %v575 = vld [vmem:[%s4 + $0x910] sm:$0xff]
  %v576 = vld [vmem:[%s4 + $0x918] sm:$0xff]
  %v577 = vld [vmem:[%s4 + $0x920] sm:$0xff]
  %v578 = vld [vmem:[%s4 + $0x928] sm:$0xff]
  %v579 = vld [vmem:[%s4 + $0x930] sm:$0xff]
  %v580 = vld [vmem:[%s4 + $0x938] sm:$0xff]
  %v581 = vld [vmem:[%s4 + $0x940] sm:$0xff]
  %v582 = vld [vmem:[%s4 + $0x948] sm:$0xff]
  %v583 = vld [vmem:[%s4 + $0x950] sm:$0xff]
  %v584 = vld [vmem:[%s4 + $0x958] sm:$0xff]
  %v585 = vld [vmem:[%s4 + $0x960] sm:$0xff]
  %v586 = vld [vmem:[%s4 + $0x968] sm:$0xff]
  %v587 = vld [vmem:[%s4 + $0x970] sm:$0xff]
  %v588 = vld [vmem:[%s4 + $0x978] sm:$0xff]
  %v589 = vld [vmem:[%s4 + $0x980] sm:$0xff]
  %v590 = vld [vmem:[%s4 + $0x988] sm:$0xff]
  %v591 = vld [vmem:[%s4 + $0x990] sm:$0xff]
  %v592 = vld [vmem:[%s4 + $0x998] sm:$0xff]
  %v593 = vld [vmem:[%s4 + $0x9a0] sm:$0xff]
  %v594 = vld [vmem:[%s4 + $0x9a8] sm:$0xff]
  %v595 = vld [vmem:[%s4 + $0x9b0] sm:$0xff]
  %v596 = vld [vmem:[%s4 + $0x9b8] sm:$0xff]
  %v597 = vld [vmem:[%s4 + $0x9c0] sm:$0xff]
  %v598 = vld [vmem:[%s4 + $0x9c8] sm:$0xff]
  %v599 = vld [vmem:[%s4 + $0x9d0] sm:$0xff]
  %v600 = vld [vmem:[%s4 + $0x9d8] sm:$0xff]
  %v601 = vld [vmem:[%s4 + $0x9e0] sm:$0xff]
  %v602 = vld [vmem:[%s4 + $0x9e8] sm:$0xff]
  %v603 = vld [vmem:[%s4 + $0x9f0] sm:$0xff]
  %v604 = vld [vmem:[%s4 + $0x9f8] sm:$0xff]
  %v605 = vld [vmem:[%s4 + $0xa00] sm:$0xff]
  %v606 = vld [vmem:[%s4 + $0xa08] sm:$0xff]
  %v607 = vld [vmem:[%s4 + $0xa10] sm:$0xff]
  %v608 = vld [vmem:[%s4 + $0xa18] sm:$0xff]
  %v609 = vld [vmem:[%s4 + $0xa20] sm:$0xff]
  %v610 = vld [vmem:[%s4 + $0xa28] sm:$0xff]
  %v611 = vld [vmem:[%s4 + $0xa30] sm:$0xff]
  %v612 = vld [vmem:[%s4 + $0xa38] sm:$0xff]
  %v613 = vld [vmem:[%s4 + $0xa40] sm:$0xff]
  %v614 = vld [vmem:[%s4 + $0xa48] sm:$0xff]
  %v615 = vld [vmem:[%s4 + $0xa50] sm:$0xff]
  %v616 = vld [vmem:[%s4 + $0xa58] sm:$0xff]
  %v617 = vld [vmem:[%s4 + $0xa60] sm:$0xff]
  %v618 = vld [vmem:[%s4 + $0xa68] sm:$0xff]
  %v619 = vld [vmem:[%s4 + $0xa70] sm:$0xff]
  %v620 = vld [vmem:[%s4 + $0xa78] sm:$0xff]
  %v621 = vld [vmem:[%s4 + $0xa80] sm:$0xff]
  %v622 = vld [vmem:[%s4 + $0xa88] sm:$0xff]
  %v623 = vld [vmem:[%s4 + $0xa90] sm:$0xff]
  %v624 = vld [vmem:[%s4 + $0xa98] sm:$0xff]
  %v625 = vld [vmem:[%s4 + $0xaa0] sm:$0xff]
  %v626 = vld [vmem:[%s4 + $0xaa8] sm:$0xff]
  %v627 = vld [vmem:[%s4 + $0xab0] sm:$0xff]
  %v628 = vld [vmem:[%s4 + $0xab8] sm:$0xff]
  %v629 = vld [vmem:[%s4 + $0xac0] sm:$0xff]
  %v630 = vld [vmem:[%s4 + $0xac8] sm:$0xff]
  %v631 = vld [vmem:[%s4 + $0xad0] sm:$0xff]
  %v632 = vld [vmem:[%s4 + $0xad8] sm:$0xff]
  %v633 = vld [vmem:[%s4 + $0xae0] sm:$0xff]
  %v634 = vld [vmem:[%s4 + $0xae8] sm:$0xff]
  %v635 = vld [vmem:[%s4 + $0xaf0] sm:$0xff]
  %v636 = vld [vmem:[%s4 + $0xaf8] sm:$0xff]
  %v637 = vld [vmem:[%s4 + $0xb00] sm:$0xff]
  %v638 = vld [vmem:[%s4 + $0xb08] sm:$0xff]
  %v639 = vld [vmem:[%s4 + $0xb10] sm:$0xff]
  %v640 = vld [vmem:[%s4 + $0xb18] sm:$0xff]
  %v641 = vld [vmem:[%s4 + $0xb20] sm:$0xff]
  %v642 = vld [vmem:[%s4 + $0xb28] sm:$0xff]
  %v643 = vld [vmem:[%s4 + $0xb30] sm:$0xff]
  %v644 = vld [vmem:[%s4 + $0xb38] sm:$0xff]
  %v645 = vld [vmem:[%s4 + $0xb40] sm:$0xff]
  %v646 = vld [vmem:[%s4 + $0xb48] sm:$0xff]
  %v647 = vld [vmem:[%s4 + $0xb50] sm:$0xff]
  %v648 = vld [vmem:[%s4 + $0xb58] sm:$0xff]
  %v649 = vld [vmem:[%s4 + $0xb60] sm:$0xff]
  %v650 = vld [vmem:[%s4 + $0xb68] sm:$0xff]
  %v651 = vld [vmem:[%s4 + $0xb70] sm:$0xff]
  %v652 = vld [vmem:[%s4 + $0xb78] sm:$0xff]
  %v653 = vld [vmem:[%s4 + $0xb80] sm:$0xff]
  %v654 = vld [vmem:[%s4 + $0xb88] sm:$0xff]
  %v655 = vld [vmem:[%s4 + $0xb90] sm:$0xff]
  %v656 = vld [vmem:[%s4 + $0xb98] sm:$0xff]
  %v657 = vld [vmem:[%s4 + $0xba0] sm:$0xff]
  %v658 = vld [vmem:[%s4 + $0xba8] sm:$0xff]
  %v659 = vld [vmem:[%s4 + $0xbb0] sm:$0xff]
  %662 = vrot.lane.b32.xlu0 %v283, 126
  %v663 = vpop.permute.xlu0 %662
  %664 = vrot.lane.b32.xlu0 %v284, 126
  %v665 = vpop.permute.xlu0 %664
  %vm668 = vcmask 130048
  %v670 = vsel %vm668, %v300, 0
  %v673 = vsel %vm668, %v301, 0
  %v676 = vsel %vm668, %v302, 0
  %v679 = vsel %vm668, %v303, 0
  %v682 = vsel %vm668, %v304, 0
  %v685 = vsel %vm668, %v305, 0
  %v688 = vsel %vm668, %v306, 0
  %v691 = vsel %vm668, %v307, 0
  %v694 = vsel %vm668, %v308, 0
  %v697 = vsel %vm668, %v309, 0
  %v700 = vsel %vm668, %v310, 0
  %v703 = vsel %vm668, %v311, 0
  %v706 = vsel %vm668, %v312, 0
  %v709 = vsel %vm668, %v313, 0
  %v712 = vsel %vm668, %v314, 0
  %714 = vmatprep.subr.mxu0 0.0
  %715 = vmatpush1.msra.mxu0 0.0
  %716 = vmatprep.subr.mxu0 0.0
  %717 = vmatpush1.msra.mxu0 0.0
  %718 = vmatprep.subr.mxu0 0.0
  %719 = vmatpush1.msra.mxu0 0.0
  %720 = vmatprep.subr.mxu0 0.0
  %721 = vmatpush1.msra.mxu0 0.0
  %722 = vmatprep.subr.mxu0 0.0
  %723 = vmatpush1.msra.mxu0 0.0
  %724 = vmatprep.subr.mxu0 0.0
  %725 = vmatpush1.msra.mxu0 0.0
  %726 = vmatprep.subr.mxu0 0.0
  %727 = vmatpush1.msra.mxu0 0.0
  %728 = vmatprep.subr.mxu0 0.0
  %729 = vmatpush1.msra.mxu0 0.0
  %730 = vmatprep.subr.mxu0 0.0
  %731 = vmatpush1.msra.mxu0 0.0
  %732 = vmatprep.subr.mxu0 0.0
  %733 = vmatpush1.msra.mxu0 0.0
  %734 = vmatprep.subr.mxu0 0.0
  %735 = vmatpush1.msra.mxu0 0.0
  %736 = vmatprep.subr.mxu0 0.0
  %737 = vmatpush1.msra.mxu0 0.0
  %738 = vmatprep.subr.mxu0 0.0
  %739 = vmatpush1.msra.mxu0 0.0
  %740 = vmatprep.subr.mxu0 0.0
  %741 = vmatpush1.msra.mxu0 0.0
  %742 = vmatprep.subr.mxu0 0.0
  %743 = vmatpush1.msra.mxu0 %v665
  %744 = vmatprep.subr.mxu0 0.0
  %745 = vmatpush1.msra.mxu0 %v663
  %746 = vmatprep.subr.mxu0 0.0
  %747 = vmatpush2.msra.mxu0 0.0
  %748 = vmatprep.subr.mxu0 0.0
  %749 = vmatpush2.msra.mxu0 0.0
  %750 = vmatprep.subr.mxu0 0.0
  %751 = vmatpush2.msra.mxu0 0.0
  %752 = vmatprep.subr.mxu0 0.0
  %753 = vmatpush2.msra.mxu0 0.0
  %754 = vmatprep.subr.mxu0 0.0
  %755 = vmatpush2.msra.mxu0 0.0
  %756 = vmatprep.subr.mxu0 0.0
  %757 = vmatpush2.msra.mxu0 0.0
  %758 = vmatprep.subr.mxu0 0.0
  %759 = vmatpush2.msra.mxu0 0.0
  %760 = vmatprep.subr.mxu0 0.0
  %761 = vmatpush2.msra.mxu0 0.0
  %762 = vmatprep.subr.mxu0 0.0
  %763 = vmatpush2.msra.mxu0 0.0
  %764 = vmatprep.subr.mxu0 0.0
  %765 = vmatpush2.msra.mxu0 0.0
  %766 = vmatprep.subr.mxu0 0.0
  %767 = vmatpush2.msra.mxu0 0.0
  %768 = vmatprep.subr.mxu0 0.0
  %769 = vmatpush2.msra.mxu0 0.0
  %770 = vmatprep.subr.mxu0 0.0
  %771 = vmatpush2.msra.mxu0 0.0
  %772 = vmatprep.subr.mxu0 0.0
  %773 = vmatpush2.msra.mxu0 0.0
  %774 = vmatprep.subr.mxu0 0.0
  %775 = vmatpush2.msra.mxu0 0.0
  %776 = vmatprep.subr.mxu0 0.0
  %777 = vmatpush2.msra.mxu0 0.0
  %778 = vmatprep.mubr.f32.mxu0 0.0
  %779 = vmatmul.mubr.f32.gmra.mxu0 %v670
  %v780 = vpop.f32.mrf.mxu0
  %v781 = vadd.f32 0.0, %v780
  %v782 = vpop.f32.mrf.mxu0
  %783 = vmatprep.mubr.f32.mxu0 0.0
  %784 = vmatmul.mubr.f32.gmra.mxu0 %v673
  %v785 = vpop.f32.mrf.mxu0
  %v786 = vadd.f32 0.0, %v785
  %v787 = vpop.f32.mrf.mxu0
  %788 = vmatprep.mubr.f32.mxu0 0.0
  %789 = vmatmul.mubr.f32.gmra.mxu0 %v676
  %v790 = vpop.f32.mrf.mxu0
  %v791 = vadd.f32 0.0, %v790
  %v792 = vpop.f32.mrf.mxu0
  %793 = vmatprep.mubr.f32.mxu0 0.0
  %794 = vmatmul.mubr.f32.gmra.mxu0 %v679
  %v795 = vpop.f32.mrf.mxu0
  %v796 = vadd.f32 0.0, %v795
  %v797 = vpop.f32.mrf.mxu0
  %798 = vmatprep.mubr.f32.mxu0 0.0
  %799 = vmatmul.mubr.f32.gmra.mxu0 %v682
  %v800 = vpop.f32.mrf.mxu0
  %v801 = vadd.f32 0.0, %v800
  %v802 = vpop.f32.mrf.mxu0
  %803 = vmatprep.mubr.f32.mxu0 0.0
  %804 = vmatmul.mubr.f32.gmra.mxu0 %v685
  %v805 = vpop.f32.mrf.mxu0
  %v806 = vadd.f32 0.0, %v805
  %v807 = vpop.f32.mrf.mxu0
  %808 = vmatprep.mubr.f32.mxu0 0.0
  %809 = vmatmul.mubr.f32.gmra.mxu0 %v688
  %v810 = vpop.f32.mrf.mxu0
  %v811 = vadd.f32 0.0, %v810
  %v812 = vpop.f32.mrf.mxu0
  %813 = vmatprep.mubr.f32.mxu0 0.0
  %814 = vmatmul.mubr.f32.gmra.mxu0 %v691
  %v815 = vpop.f32.mrf.mxu0
  %v816 = vadd.f32 0.0, %v815
  %v817 = vpop.f32.mrf.mxu0
  %818 = vmatprep.mubr.f32.mxu0 0.0
  %819 = vmatmul.mubr.f32.gmra.mxu0 %v694
  %v820 = vpop.f32.mrf.mxu0
  %v821 = vadd.f32 0.0, %v820
  %v822 = vpop.f32.mrf.mxu0
  %823 = vmatprep.mubr.f32.mxu0 0.0
  %824 = vmatmul.mubr.f32.gmra.mxu0 %v697
  %v825 = vpop.f32.mrf.mxu0
  %v826 = vadd.f32 0.0, %v825
  %v827 = vpop.f32.mrf.mxu0
  %828 = vmatprep.mubr.f32.mxu0 0.0
  %829 = vmatmul.mubr.f32.gmra.mxu0 %v700
  %v830 = vpop.f32.mrf.mxu0
  %v831 = vadd.f32 0.0, %v830
  %v832 = vpop.f32.mrf.mxu0
  %833 = vmatprep.mubr.f32.mxu0 0.0
  %834 = vmatmul.mubr.f32.gmra.mxu0 %v703
  %v835 = vpop.f32.mrf.mxu0
  %v836 = vadd.f32 0.0, %v835
  %v837 = vpop.f32.mrf.mxu0
  %838 = vmatprep.mubr.f32.mxu0 0.0
  %839 = vmatmul.mubr.f32.gmra.mxu0 %v706
  %v840 = vpop.f32.mrf.mxu0
  %v841 = vadd.f32 0.0, %v840
  %v842 = vpop.f32.mrf.mxu0
  %843 = vmatprep.mubr.f32.mxu0 0.0
  %844 = vmatmul.mubr.f32.gmra.mxu0 %v709
  %v845 = vpop.f32.mrf.mxu0
  %v846 = vadd.f32 0.0, %v845
  %v847 = vpop.f32.mrf.mxu0
  %848 = vmatprep.mubr.f32.mxu0 0.0
  %849 = vmatmul.mubr.f32.gmra.mxu0 %v712
  %v850 = vpop.f32.mrf.mxu0
  %v851 = vadd.f32 0.0, %v850
  %v852 = vpop.f32.mrf.mxu0
  %853 = vdwg.mxu0
  %v855 = vsel %vm668, %v285, 0
  %v858 = vsel %vm668, %v286, 0
  %v861 = vsel %vm668, %v287, 0
  %v864 = vsel %vm668, %v288, 0
  %v867 = vsel %vm668, %v289, 0
  %v870 = vsel %vm668, %v290, 0
  %v873 = vsel %vm668, %v291, 0
  %v876 = vsel %vm668, %v292, 0
  %v879 = vsel %vm668, %v293, 0
  %v882 = vsel %vm668, %v294, 0
  %v885 = vsel %vm668, %v295, 0
  %v888 = vsel %vm668, %v296, 0
  %v891 = vsel %vm668, %v297, 0
  %v894 = vsel %vm668, %v298, 0
  %v897 = vsel %vm668, %v299, 0
  %899 = vmatprep.subr.mxu0 0.0
  %900 = vmatpush1.msra.mxu0 0.0
  %901 = vmatprep.subr.mxu0 0.0
  %902 = vmatpush1.msra.mxu0 0.0
  %903 = vmatprep.subr.mxu0 0.0
  %904 = vmatpush1.msra.mxu0 0.0
  %905 = vmatprep.subr.mxu0 0.0
  %906 = vmatpush1.msra.mxu0 0.0
  %907 = vmatprep.subr.mxu0 0.0
  %908 = vmatpush1.msra.mxu0 0.0
  %909 = vmatprep.subr.mxu0 0.0
  %910 = vmatpush1.msra.mxu0 0.0
  %911 = vmatprep.subr.mxu0 0.0
  %912 = vmatpush1.msra.mxu0 0.0
  %913 = vmatprep.subr.mxu0 0.0
  %914 = vmatpush1.msra.mxu0 0.0
  %915 = vmatprep.subr.mxu0 0.0
  %916 = vmatpush1.msra.mxu0 0.0
  %917 = vmatprep.subr.mxu0 0.0
  %918 = vmatpush1.msra.mxu0 0.0
  %919 = vmatprep.subr.mxu0 0.0
  %920 = vmatpush1.msra.mxu0 0.0
  %921 = vmatprep.subr.mxu0 0.0
  %922 = vmatpush1.msra.mxu0 0.0
  %923 = vmatprep.subr.mxu0 0.0
  %924 = vmatpush1.msra.mxu0 0.0
  %925 = vmatprep.subr.mxu0 0.0
  %926 = vmatpush1.msra.mxu0 0.0
  %927 = vmatprep.subr.mxu0 0.0
  %928 = vmatpush1.msra.mxu0 %v284
  %929 = vmatprep.subr.mxu0 0.0
  %930 = vmatpush1.msra.mxu0 %v283
  %931 = vmatprep.subr.mxu0 0.0
  %932 = vmatpush2.msra.mxu0 0.0
  %933 = vmatprep.subr.mxu0 0.0
  %934 = vmatpush2.msra.mxu0 0.0
  %935 = vmatprep.subr.mxu0 0.0
  %936 = vmatpush2.msra.mxu0 0.0
  %937 = vmatprep.subr.mxu0 0.0
  %938 = vmatpush2.msra.mxu0 0.0
  %939 = vmatprep.subr.mxu0 0.0
  %940 = vmatpush2.msra.mxu0 0.0
  %941 = vmatprep.subr.mxu0 0.0
  %942 = vmatpush2.msra.mxu0 0.0
  %943 = vmatprep.subr.mxu0 0.0
  %944 = vmatpush2.msra.mxu0 0.0
  %945 = vmatprep.subr.mxu0 0.0
  %946 = vmatpush2.msra.mxu0 0.0
  %947 = vmatprep.subr.mxu0 0.0
  %948 = vmatpush2.msra.mxu0 0.0
  %949 = vmatprep.subr.mxu0 0.0
  %950 = vmatpush2.msra.mxu0 0.0
  %951 = vmatprep.subr.mxu0 0.0
  %952 = vmatpush2.msra.mxu0 0.0
  %953 = vmatprep.subr.mxu0 0.0
  %954 = vmatpush2.msra.mxu0 0.0
  %955 = vmatprep.subr.mxu0 0.0
  %956 = vmatpush2.msra.mxu0 0.0
  %957 = vmatprep.subr.mxu0 0.0
  %958 = vmatpush2.msra.mxu0 0.0
  %959 = vmatprep.subr.mxu0 0.0
  %960 = vmatpush2.msra.mxu0 0.0
  %961 = vmatprep.subr.mxu0 0.0
  %962 = vmatpush2.msra.mxu0 0.0
  %963 = vmatprep.mubr.f32.mxu0 0.0
  %964 = vmatmul.mubr.f32.gmra.mxu0 %v855
  %v965 = vpop.f32.mrf.mxu0
  %v966 = vadd.f32 %v781, %v965
  %v967 = vpop.f32.mrf.mxu0
  %968 = vmatprep.mubr.f32.mxu0 0.0
  %969 = vmatmul.mubr.f32.gmra.mxu0 %v858
  %v970 = vpop.f32.mrf.mxu0
  %v971 = vadd.f32 %v786, %v970
  %v972 = vpop.f32.mrf.mxu0
  %973 = vmatprep.mubr.f32.mxu0 0.0
  %974 = vmatmul.mubr.f32.gmra.mxu0 %v861
  %v975 = vpop.f32.mrf.mxu0
  %v976 = vadd.f32 %v791, %v975
  %v977 = vpop.f32.mrf.mxu0
  %978 = vmatprep.mubr.f32.mxu0 0.0
  %979 = vmatmul.mubr.f32.gmra.mxu0 %v864
  %v980 = vpop.f32.mrf.mxu0
  %v981 = vadd.f32 %v796, %v980
  %v982 = vpop.f32.mrf.mxu0
  %983 = vmatprep.mubr.f32.mxu0 0.0
  %984 = vmatmul.mubr.f32.gmra.mxu0 %v867
  %v985 = vpop.f32.mrf.mxu0
  %v986 = vadd.f32 %v801, %v985
  %v987 = vpop.f32.mrf.mxu0
  %988 = vmatprep.mubr.f32.mxu0 0.0
  %989 = vmatmul.mubr.f32.gmra.mxu0 %v870
  %v990 = vpop.f32.mrf.mxu0
  %v991 = vadd.f32 %v806, %v990
  %v992 = vpop.f32.mrf.mxu0
  %993 = vmatprep.mubr.f32.mxu0 0.0
  %994 = vmatmul.mubr.f32.gmra.mxu0 %v873
  %v995 = vpop.f32.mrf.mxu0
  %v996 = vadd.f32 %v811, %v995
  %v997 = vpop.f32.mrf.mxu0
  %998 = vmatprep.mubr.f32.mxu0 0.0
  %999 = vmatmul.mubr.f32.gmra.mxu0 %v876
  %v1000 = vpop.f32.mrf.mxu0
  %v1001 = vadd.f32 %v816, %v1000
  %v1002 = vpop.f32.mrf.mxu0
  %1003 = vmatprep.mubr.f32.mxu0 0.0
  %1004 = vmatmul.mubr.f32.gmra.mxu0 %v879
  %v1005 = vpop.f32.mrf.mxu0
  %v1006 = vadd.f32 %v821, %v1005
  %v1007 = vpop.f32.mrf.mxu0
  %1008 = vmatprep.mubr.f32.mxu0 0.0
  %1009 = vmatmul.mubr.f32.gmra.mxu0 %v882
  %v1010 = vpop.f32.mrf.mxu0
  %v1011 = vadd.f32 %v826, %v1010
  %v1012 = vpop.f32.mrf.mxu0
  %1013 = vmatprep.mubr.f32.mxu0 0.0
  %1014 = vmatmul.mubr.f32.gmra.mxu0 %v885
  %v1015 = vpop.f32.mrf.mxu0
  %v1016 = vadd.f32 %v831, %v1015
  %v1017 = vpop.f32.mrf.mxu0
  %1018 = vmatprep.mubr.f32.mxu0 0.0
  %1019 = vmatmul.mubr.f32.gmra.mxu0 %v888
  %v1020 = vpop.f32.mrf.mxu0
  %v1021 = vadd.f32 %v836, %v1020
  %v1022 = vpop.f32.mrf.mxu0
  %1023 = vmatprep.mubr.f32.mxu0 0.0
  %1024 = vmatmul.mubr.f32.gmra.mxu0 %v891
  %v1025 = vpop.f32.mrf.mxu0
  %v1026 = vadd.f32 %v841, %v1025
  %v1027 = vpop.f32.mrf.mxu0
  %1028 = vmatprep.mubr.f32.mxu0 0.0
  %1029 = vmatmul.mubr.f32.gmra.mxu0 %v894
  %v1030 = vpop.f32.mrf.mxu0
  %v1031 = vadd.f32 %v846, %v1030
  %v1032 = vpop.f32.mrf.mxu0
  %1033 = vmatprep.mubr.f32.mxu0 0.0
  %1034 = vmatmul.mubr.f32.gmra.mxu0 %v897
  %v1035 = vpop.f32.mrf.mxu0
  %v1036 = vadd.f32 %v851, %v1035
  %v1037 = vpop.f32.mrf.mxu0
  %1038 = vdwg.mxu0
  %1039 = vrot.lane.b32.xlu0 %v283, 124
  %v1040 = vpop.permute.xlu0 %1039
  %1041 = vrot.lane.b32.xlu0 %v284, 124
  %v1042 = vpop.permute.xlu0 %1041
  %v1046 = vsel %vm668, %v315, 0
  %v1049 = vsel %vm668, %v316, 0
  %v1052 = vsel %vm668, %v317, 0
  %v1055 = vsel %vm668, %v318, 0
  %v1058 = vsel %vm668, %v319, 0
  %v1061 = vsel %vm668, %v320, 0
  %v1064 = vsel %vm668, %v321, 0
  %v1067 = vsel %vm668, %v322, 0
  %v1070 = vsel %vm668, %v323, 0
  %v1073 = vsel %vm668, %v324, 0
  %v1076 = vsel %vm668, %v325, 0
  %v1079 = vsel %vm668, %v326, 0
  %v1082 = vsel %vm668, %v327, 0
  %v1085 = vsel %vm668, %v328, 0
  %v1088 = vsel %vm668, %v329, 0
  %1090 = vmatprep.subr.mxu0 0.0
  %1091 = vmatpush1.msra.mxu0 0.0
  %1092 = vmatprep.subr.mxu0 0.0
  %1093 = vmatpush1.msra.mxu0 0.0
  %1094 = vmatprep.subr.mxu0 0.0
  %1095 = vmatpush1.msra.mxu0 0.0
  %1096 = vmatprep.subr.mxu0 0.0
  %1097 = vmatpush1.msra.mxu0 0.0
  %1098 = vmatprep.subr.mxu0 0.0
  %1099 = vmatpush1.msra.mxu0 0.0
  %1100 = vmatprep.subr.mxu0 0.0
  %1101 = vmatpush1.msra.mxu0 0.0
  %1102 = vmatprep.subr.mxu0 0.0
  %1103 = vmatpush1.msra.mxu0 0.0
  %1104 = vmatprep.subr.mxu0 0.0
  %1105 = vmatpush1.msra.mxu0 0.0
  %1106 = vmatprep.subr.mxu0 0.0
  %1107 = vmatpush1.msra.mxu0 0.0
  %1108 = vmatprep.subr.mxu0 0.0
  %1109 = vmatpush1.msra.mxu0 0.0
  %1110 = vmatprep.subr.mxu0 0.0
  %1111 = vmatpush1.msra.mxu0 0.0
  %1112 = vmatprep.subr.mxu0 0.0
  %1113 = vmatpush1.msra.mxu0 0.0
  %1114 = vmatprep.subr.mxu0 0.0
  %1115 = vmatpush1.msra.mxu0 0.0
  %1116 = vmatprep.subr.mxu0 0.0
  %1117 = vmatpush1.msra.mxu0 0.0
  %1118 = vmatprep.subr.mxu0 0.0
  %1119 = vmatpush1.msra.mxu0 %v1042
  %1120 = vmatprep.subr.mxu0 0.0
  %1121 = vmatpush1.msra.mxu0 %v1040
  %1122 = vmatprep.subr.mxu0 0.0
  %1123 = vmatpush2.msra.mxu0 0.0
  %1124 = vmatprep.subr.mxu0 0.0
  %1125 = vmatpush2.msra.mxu0 0.0
  %1126 = vmatprep.subr.mxu0 0.0
  %1127 = vmatpush2.msra.mxu0 0.0
  %1128 = vmatprep.subr.mxu0 0.0
  %1129 = vmatpush2.msra.mxu0 0.0
  %1130 = vmatprep.subr.mxu0 0.0
  %1131 = vmatpush2.msra.mxu0 0.0
  %1132 = vmatprep.subr.mxu0 0.0
  %1133 = vmatpush2.msra.mxu0 0.0
  %1134 = vmatprep.subr.mxu0 0.0
  %1135 = vmatpush2.msra.mxu0 0.0
  %1136 = vmatprep.subr.mxu0 0.0
  %1137 = vmatpush2.msra.mxu0 0.0
  %1138 = vmatprep.subr.mxu0 0.0
  %1139 = vmatpush2.msra.mxu0 0.0
  %1140 = vmatprep.subr.mxu0 0.0
  %1141 = vmatpush2.msra.mxu0 0.0
  %1142 = vmatprep.subr.mxu0 0.0
  %1143 = vmatpush2.msra.mxu0 0.0
  %1144 = vmatprep.subr.mxu0 0.0
  %1145 = vmatpush2.msra.mxu0 0.0
  %1146 = vmatprep.subr.mxu0 0.0
  %1147 = vmatpush2.msra.mxu0 0.0
  %1148 = vmatprep.subr.mxu0 0.0
  %1149 = vmatpush2.msra.mxu0 0.0
  %1150 = vmatprep.subr.mxu0 0.0
  %1151 = vmatpush2.msra.mxu0 0.0
  %1152 = vmatprep.subr.mxu0 0.0
  %1153 = vmatpush2.msra.mxu0 0.0
  %1154 = vmatprep.mubr.f32.mxu0 0.0
  %1155 = vmatmul.mubr.f32.gmra.mxu0 %v1046
  %v1156 = vpop.f32.mrf.mxu0
  %v1157 = vadd.f32 0.0, %v1156
  %v1158 = vpop.f32.mrf.mxu0
  %1159 = vmatprep.mubr.f32.mxu0 0.0
  %1160 = vmatmul.mubr.f32.gmra.mxu0 %v1049
  %v1161 = vpop.f32.mrf.mxu0
  %v1162 = vadd.f32 0.0, %v1161
  %v1163 = vpop.f32.mrf.mxu0
  %1164 = vmatprep.mubr.f32.mxu0 0.0
  %1165 = vmatmul.mubr.f32.gmra.mxu0 %v1052
  %v1166 = vpop.f32.mrf.mxu0
  %v1167 = vadd.f32 0.0, %v1166
  %v1168 = vpop.f32.mrf.mxu0
  %1169 = vmatprep.mubr.f32.mxu0 0.0
  %1170 = vmatmul.mubr.f32.gmra.mxu0 %v1055
  %v1171 = vpop.f32.mrf.mxu0
  %v1172 = vadd.f32 0.0, %v1171
  %v1173 = vpop.f32.mrf.mxu0
  %1174 = vmatprep.mubr.f32.mxu0 0.0
  %1175 = vmatmul.mubr.f32.gmra.mxu0 %v1058
  %v1176 = vpop.f32.mrf.mxu0
  %v1177 = vadd.f32 0.0, %v1176
  %v1178 = vpop.f32.mrf.mxu0
  %1179 = vmatprep.mubr.f32.mxu0 0.0
  %1180 = vmatmul.mubr.f32.gmra.mxu0 %v1061
  %v1181 = vpop.f32.mrf.mxu0
  %v1182 = vadd.f32 0.0, %v1181
  %v1183 = vpop.f32.mrf.mxu0
  %1184 = vmatprep.mubr.f32.mxu0 0.0
  %1185 = vmatmul.mubr.f32.gmra.mxu0 %v1064
  %v1186 = vpop.f32.mrf.mxu0
  %v1187 = vadd.f32 0.0, %v1186
  %v1188 = vpop.f32.mrf.mxu0
  %1189 = vmatprep.mubr.f32.mxu0 0.0
  %1190 = vmatmul.mubr.f32.gmra.mxu0 %v1067
  %v1191 = vpop.f32.mrf.mxu0
  %v1192 = vadd.f32 0.0, %v1191
  %v1193 = vpop.f32.mrf.mxu0
  %1194 = vmatprep.mubr.f32.mxu0 0.0
  %1195 = vmatmul.mubr.f32.gmra.mxu0 %v1070
  %v1196 = vpop.f32.mrf.mxu0
  %v1197 = vadd.f32 0.0, %v1196
  %v1198 = vpop.f32.mrf.mxu0
  %1199 = vmatprep.mubr.f32.mxu0 0.0
  %1200 = vmatmul.mubr.f32.gmra.mxu0 %v1073
  %v1201 = vpop.f32.mrf.mxu0
  %v1202 = vadd.f32 0.0, %v1201
  %v1203 = vpop.f32.mrf.mxu0
  %1204 = vmatprep.mubr.f32.mxu0 0.0
  %1205 = vmatmul.mubr.f32.gmra.mxu0 %v1076
  %v1206 = vpop.f32.mrf.mxu0
  %v1207 = vadd.f32 0.0, %v1206
  %v1208 = vpop.f32.mrf.mxu0
  %1209 = vmatprep.mubr.f32.mxu0 0.0
  %1210 = vmatmul.mubr.f32.gmra.mxu0 %v1079
  %v1211 = vpop.f32.mrf.mxu0
  %v1212 = vadd.f32 0.0, %v1211
  %v1213 = vpop.f32.mrf.mxu0
  %1214 = vmatprep.mubr.f32.mxu0 0.0
  %1215 = vmatmul.mubr.f32.gmra.mxu0 %v1082
  %v1216 = vpop.f32.mrf.mxu0
  %v1217 = vadd.f32 0.0, %v1216
  %v1218 = vpop.f32.mrf.mxu0
  %1219 = vmatprep.mubr.f32.mxu0 0.0
  %1220 = vmatmul.mubr.f32.gmra.mxu0 %v1085
  %v1221 = vpop.f32.mrf.mxu0
  %v1222 = vadd.f32 0.0, %v1221
  %v1223 = vpop.f32.mrf.mxu0
  %1224 = vmatprep.mubr.f32.mxu0 0.0
  %1225 = vmatmul.mubr.f32.gmra.mxu0 %v1088
  %v1226 = vpop.f32.mrf.mxu0
  %v1227 = vadd.f32 0.0, %v1226
  %v1228 = vpop.f32.mrf.mxu0
  %1229 = vdwg.mxu0
  %v1230 = vadd.f32 %v966, %v1157
  %v1231 = vadd.f32 %v971, %v1162
  %v1232 = vadd.f32 %v976, %v1167
  %v1233 = vadd.f32 %v981, %v1172
  %v1234 = vadd.f32 %v986, %v1177
  %v1235 = vadd.f32 %v991, %v1182
  %v1236 = vadd.f32 %v996, %v1187
  %v1237 = vadd.f32 %v1001, %v1192
  %v1238 = vadd.f32 %v1006, %v1197
  %v1239 = vadd.f32 %v1011, %v1202
  %v1240 = vadd.f32 %v1016, %v1207
  %v1241 = vadd.f32 %v1021, %v1212
  %v1242 = vadd.f32 %v1026, %v1217
  %v1243 = vadd.f32 %v1031, %v1222
  %v1244 = vadd.f32 %v1036, %v1227
  %1245 = vrot.lane.b32.xlu0 %v283, 122
  %v1246 = vpop.permute.xlu0 %1245
  %1247 = vrot.lane.b32.xlu0 %v284, 122
  %v1248 = vpop.permute.xlu0 %1247
  %v1252 = vsel %vm668, %v330, 0
  %v1255 = vsel %vm668, %v331, 0
  %v1258 = vsel %vm668, %v332, 0
  %v1261 = vsel %vm668, %v333, 0
  %v1264 = vsel %vm668, %v334, 0
  %v1267 = vsel %vm668, %v335, 0
  %v1270 = vsel %vm668, %v336, 0
  %v1273 = vsel %vm668, %v337, 0
  %v1276 = vsel %vm668, %v338, 0
  %v1279 = vsel %vm668, %v339, 0
  %v1282 = vsel %vm668, %v340, 0
  %v1285 = vsel %vm668, %v341, 0
  %v1288 = vsel %vm668, %v342, 0
  %v1291 = vsel %vm668, %v343, 0
  %v1294 = vsel %vm668, %v344, 0
  %1296 = vmatprep.subr.mxu0 0.0
  %1297 = vmatpush1.msra.mxu0 0.0
  %1298 = vmatprep.subr.mxu0 0.0
  %1299 = vmatpush1.msra.mxu0 0.0
  %1300 = vmatprep.subr.mxu0 0.0
  %1301 = vmatpush1.msra.mxu0 0.0
  %1302 = vmatprep.subr.mxu0 0.0
  %1303 = vmatpush1.msra.mxu0 0.0
  %1304 = vmatprep.subr.mxu0 0.0
  %1305 = vmatpush1.msra.mxu0 0.0
  %1306 = vmatprep.subr.mxu0 0.0
  %1307 = vmatpush1.msra.mxu0 0.0
  %1308 = vmatprep.subr.mxu0 0.0
  %1309 = vmatpush1.msra.mxu0 0.0
  %1310 = vmatprep.subr.mxu0 0.0
  %1311 = vmatpush1.msra.mxu0 0.0
  %1312 = vmatprep.subr.mxu0 0.0
  %1313 = vmatpush1.msra.mxu0 0.0
  %1314 = vmatprep.subr.mxu0 0.0
  %1315 = vmatpush1.msra.mxu0 0.0
  %1316 = vmatprep.subr.mxu0 0.0
  %1317 = vmatpush1.msra.mxu0 0.0
  %1318 = vmatprep.subr.mxu0 0.0
  %1319 = vmatpush1.msra.mxu0 0.0
  %1320 = vmatprep.subr.mxu0 0.0
  %1321 = vmatpush1.msra.mxu0 0.0
  %1322 = vmatprep.subr.mxu0 0.0
  %1323 = vmatpush1.msra.mxu0 0.0
  %1324 = vmatprep.subr.mxu0 0.0
  %1325 = vmatpush1.msra.mxu0 %v1248
  %1326 = vmatprep.subr.mxu0 0.0
  %1327 = vmatpush1.msra.mxu0 %v1246
  %1328 = vmatprep.subr.mxu0 0.0
  %1329 = vmatpush2.msra.mxu0 0.0
  %1330 = vmatprep.subr.mxu0 0.0
  %1331 = vmatpush2.msra.mxu0 0.0
  %1332 = vmatprep.subr.mxu0 0.0
  %1333 = vmatpush2.msra.mxu0 0.0
  %1334 = vmatprep.subr.mxu0 0.0
  %1335 = vmatpush2.msra.mxu0 0.0
  %1336 = vmatprep.subr.mxu0 0.0
  %1337 = vmatpush2.msra.mxu0 0.0
  %1338 = vmatprep.subr.mxu0 0.0
  %1339 = vmatpush2.msra.mxu0 0.0
  %1340 = vmatprep.subr.mxu0 0.0
  %1341 = vmatpush2.msra.mxu0 0.0
  %1342 = vmatprep.subr.mxu0 0.0
  %1343 = vmatpush2.msra.mxu0 0.0
  %1344 = vmatprep.subr.mxu0 0.0
  %1345 = vmatpush2.msra.mxu0 0.0
  %1346 = vmatprep.subr.mxu0 0.0
  %1347 = vmatpush2.msra.mxu0 0.0
  %1348 = vmatprep.subr.mxu0 0.0
  %1349 = vmatpush2.msra.mxu0 0.0
  %1350 = vmatprep.subr.mxu0 0.0
  %1351 = vmatpush2.msra.mxu0 0.0
  %1352 = vmatprep.subr.mxu0 0.0
  %1353 = vmatpush2.msra.mxu0 0.0
  %1354 = vmatprep.subr.mxu0 0.0
  %1355 = vmatpush2.msra.mxu0 0.0
  %1356 = vmatprep.subr.mxu0 0.0
  %1357 = vmatpush2.msra.mxu0 0.0
  %1358 = vmatprep.subr.mxu0 0.0
  %1359 = vmatpush2.msra.mxu0 0.0
  %1360 = vmatprep.mubr.f32.mxu0 0.0
  %1361 = vmatmul.mubr.f32.gmra.mxu0 %v1252
  %v1362 = vpop.f32.mrf.mxu0
  %v1363 = vadd.f32 0.0, %v1362
  %v1364 = vpop.f32.mrf.mxu0
  %1365 = vmatprep.mubr.f32.mxu0 0.0
  %1366 = vmatmul.mubr.f32.gmra.mxu0 %v1255
  %v1367 = vpop.f32.mrf.mxu0
  %v1368 = vadd.f32 0.0, %v1367
  %v1369 = vpop.f32.mrf.mxu0
  %1370 = vmatprep.mubr.f32.mxu0 0.0
  %1371 = vmatmul.mubr.f32.gmra.mxu0 %v1258
  %v1372 = vpop.f32.mrf.mxu0
  %v1373 = vadd.f32 0.0, %v1372
  %v1374 = vpop.f32.mrf.mxu0
  %1375 = vmatprep.mubr.f32.mxu0 0.0
  %1376 = vmatmul.mubr.f32.gmra.mxu0 %v1261
  %v1377 = vpop.f32.mrf.mxu0
  %v1378 = vadd.f32 0.0, %v1377
  %v1379 = vpop.f32.mrf.mxu0
  %1380 = vmatprep.mubr.f32.mxu0 0.0
  %1381 = vmatmul.mubr.f32.gmra.mxu0 %v1264
  %v1382 = vpop.f32.mrf.mxu0
  %v1383 = vadd.f32 0.0, %v1382
  %v1384 = vpop.f32.mrf.mxu0
  %1385 = vmatprep.mubr.f32.mxu0 0.0
  %1386 = vmatmul.mubr.f32.gmra.mxu0 %v1267
  %v1387 = vpop.f32.mrf.mxu0
  %v1388 = vadd.f32 0.0, %v1387
  %v1389 = vpop.f32.mrf.mxu0
  %1390 = vmatprep.mubr.f32.mxu0 0.0
  %1391 = vmatmul.mubr.f32.gmra.mxu0 %v1270
  %v1392 = vpop.f32.mrf.mxu0
  %v1393 = vadd.f32 0.0, %v1392
  %v1394 = vpop.f32.mrf.mxu0
  %1395 = vmatprep.mubr.f32.mxu0 0.0
  %1396 = vmatmul.mubr.f32.gmra.mxu0 %v1273
  %v1397 = vpop.f32.mrf.mxu0
  %v1398 = vadd.f32 0.0, %v1397
  %v1399 = vpop.f32.mrf.mxu0
  %1400 = vmatprep.mubr.f32.mxu0 0.0
  %1401 = vmatmul.mubr.f32.gmra.mxu0 %v1276
  %v1402 = vpop.f32.mrf.mxu0
  %v1403 = vadd.f32 0.0, %v1402
  %v1404 = vpop.f32.mrf.mxu0
  %1405 = vmatprep.mubr.f32.mxu0 0.0
  %1406 = vmatmul.mubr.f32.gmra.mxu0 %v1279
  %v1407 = vpop.f32.mrf.mxu0
  %v1408 = vadd.f32 0.0, %v1407
  %v1409 = vpop.f32.mrf.mxu0
  %1410 = vmatprep.mubr.f32.mxu0 0.0
  %1411 = vmatmul.mubr.f32.gmra.mxu0 %v1282
  %v1412 = vpop.f32.mrf.mxu0
  %v1413 = vadd.f32 0.0, %v1412
  %v1414 = vpop.f32.mrf.mxu0
  %1415 = vmatprep.mubr.f32.mxu0 0.0
  %1416 = vmatmul.mubr.f32.gmra.mxu0 %v1285
  %v1417 = vpop.f32.mrf.mxu0
  %v1418 = vadd.f32 0.0, %v1417
  %v1419 = vpop.f32.mrf.mxu0
  %1420 = vmatprep.mubr.f32.mxu0 0.0
  %1421 = vmatmul.mubr.f32.gmra.mxu0 %v1288
  %v1422 = vpop.f32.mrf.mxu0
  %v1423 = vadd.f32 0.0, %v1422
  %v1424 = vpop.f32.mrf.mxu0
  %1425 = vmatprep.mubr.f32.mxu0 0.0
  %1426 = vmatmul.mubr.f32.gmra.mxu0 %v1291
  %v1427 = vpop.f32.mrf.mxu0
  %v1428 = vadd.f32 0.0, %v1427
  %v1429 = vpop.f32.mrf.mxu0
  %1430 = vmatprep.mubr.f32.mxu0 0.0
  %1431 = vmatmul.mubr.f32.gmra.mxu0 %v1294
  %v1432 = vpop.f32.mrf.mxu0
  %v1433 = vadd.f32 0.0, %v1432
  %v1434 = vpop.f32.mrf.mxu0
  %1435 = vdwg.mxu0
  %v1436 = vadd.f32 %v1230, %v1363
  %v1437 = vadd.f32 %v1231, %v1368
  %v1438 = vadd.f32 %v1232, %v1373
  %v1439 = vadd.f32 %v1233, %v1378
  %v1440 = vadd.f32 %v1234, %v1383
  %v1441 = vadd.f32 %v1235, %v1388
  %v1442 = vadd.f32 %v1236, %v1393
  %v1443 = vadd.f32 %v1237, %v1398
  %v1444 = vadd.f32 %v1238, %v1403
  %v1445 = vadd.f32 %v1239, %v1408
  %v1446 = vadd.f32 %v1240, %v1413
  %v1447 = vadd.f32 %v1241, %v1418
  %v1448 = vadd.f32 %v1242, %v1423
  %v1449 = vadd.f32 %v1243, %v1428
  %v1450 = vadd.f32 %v1244, %v1433
  %1451 = vrot.lane.b32.xlu0 %v283, 120
  %v1452 = vpop.permute.xlu0 %1451
  %1453 = vrot.lane.b32.xlu0 %v284, 120
  %v1454 = vpop.permute.xlu0 %1453
  %v1458 = vsel %vm668, %v345, 0
  %v1461 = vsel %vm668, %v346, 0
  %v1464 = vsel %vm668, %v347, 0
  %v1467 = vsel %vm668, %v348, 0
  %v1470 = vsel %vm668, %v349, 0
  %v1473 = vsel %vm668, %v350, 0
  %v1476 = vsel %vm668, %v351, 0
  %v1479 = vsel %vm668, %v352, 0
  %v1482 = vsel %vm668, %v353, 0
  %v1485 = vsel %vm668, %v354, 0
  %v1488 = vsel %vm668, %v355, 0
  %v1491 = vsel %vm668, %v356, 0
  %v1494 = vsel %vm668, %v357, 0
  %v1497 = vsel %vm668, %v358, 0
  %v1500 = vsel %vm668, %v359, 0
  %1502 = vmatprep.subr.mxu0 0.0
  %1503 = vmatpush1.msra.mxu0 0.0
  %1504 = vmatprep.subr.mxu0 0.0
  %1505 = vmatpush1.msra.mxu0 0.0
  %1506 = vmatprep.subr.mxu0 0.0
  %1507 = vmatpush1.msra.mxu0 0.0
  %1508 = vmatprep.subr.mxu0 0.0
  %1509 = vmatpush1.msra.mxu0 0.0
  %1510 = vmatprep.subr.mxu0 0.0
  %1511 = vmatpush1.msra.mxu0 0.0
  %1512 = vmatprep.subr.mxu0 0.0
  %1513 = vmatpush1.msra.mxu0 0.0
  %1514 = vmatprep.subr.mxu0 0.0
  %1515 = vmatpush1.msra.mxu0 0.0
  %1516 = vmatprep.subr.mxu0 0.0
  %1517 = vmatpush1.msra.mxu0 0.0
  %1518 = vmatprep.subr.mxu0 0.0
  %1519 = vmatpush1.msra.mxu0 0.0
  %1520 = vmatprep.subr.mxu0 0.0
  %1521 = vmatpush1.msra.mxu0 0.0
  %1522 = vmatprep.subr.mxu0 0.0
  %1523 = vmatpush1.msra.mxu0 0.0
  %1524 = vmatprep.subr.mxu0 0.0
  %1525 = vmatpush1.msra.mxu0 0.0
  %1526 = vmatprep.subr.mxu0 0.0
  %1527 = vmatpush1.msra.mxu0 0.0
  %1528 = vmatprep.subr.mxu0 0.0
  %1529 = vmatpush1.msra.mxu0 0.0
  %1530 = vmatprep.subr.mxu0 0.0
  %1531 = vmatpush1.msra.mxu0 %v1454
  %1532 = vmatprep.subr.mxu0 0.0
  %1533 = vmatpush1.msra.mxu0 %v1452
  %1534 = vmatprep.subr.mxu0 0.0
  %1535 = vmatpush2.msra.mxu0 0.0
  %1536 = vmatprep.subr.mxu0 0.0
  %1537 = vmatpush2.msra.mxu0 0.0
  %1538 = vmatprep.subr.mxu0 0.0
  %1539 = vmatpush2.msra.mxu0 0.0
  %1540 = vmatprep.subr.mxu0 0.0
  %1541 = vmatpush2.msra.mxu0 0.0
  %1542 = vmatprep.subr.mxu0 0.0
  %1543 = vmatpush2.msra.mxu0 0.0
  %1544 = vmatprep.subr.mxu0 0.0
  %1545 = vmatpush2.msra.mxu0 0.0
  %1546 = vmatprep.subr.mxu0 0.0
  %1547 = vmatpush2.msra.mxu0 0.0
  %1548 = vmatprep.subr.mxu0 0.0
  %1549 = vmatpush2.msra.mxu0 0.0
  %1550 = vmatprep.subr.mxu0 0.0
  %1551 = vmatpush2.msra.mxu0 0.0
  %1552 = vmatprep.subr.mxu0 0.0
  %1553 = vmatpush2.msra.mxu0 0.0
  %1554 = vmatprep.subr.mxu0 0.0
  %1555 = vmatpush2.msra.mxu0 0.0
  %1556 = vmatprep.subr.mxu0 0.0
  %1557 = vmatpush2.msra.mxu0 0.0
  %1558 = vmatprep.subr.mxu0 0.0
  %1559 = vmatpush2.msra.mxu0 0.0
  %1560 = vmatprep.subr.mxu0 0.0
  %1561 = vmatpush2.msra.mxu0 0.0
  %1562 = vmatprep.subr.mxu0 0.0
  %1563 = vmatpush2.msra.mxu0 0.0
  %1564 = vmatprep.subr.mxu0 0.0
  %1565 = vmatpush2.msra.mxu0 0.0
  %1566 = vmatprep.mubr.f32.mxu0 0.0
  %1567 = vmatmul.mubr.f32.gmra.mxu0 %v1458
  %v1568 = vpop.f32.mrf.mxu0
  %v1569 = vadd.f32 0.0, %v1568
  %v1570 = vpop.f32.mrf.mxu0
  %1571 = vmatprep.mubr.f32.mxu0 0.0
  %1572 = vmatmul.mubr.f32.gmra.mxu0 %v1461
  %v1573 = vpop.f32.mrf.mxu0
  %v1574 = vadd.f32 0.0, %v1573
  %v1575 = vpop.f32.mrf.mxu0
  %1576 = vmatprep.mubr.f32.mxu0 0.0
  %1577 = vmatmul.mubr.f32.gmra.mxu0 %v1464
  %v1578 = vpop.f32.mrf.mxu0
  %v1579 = vadd.f32 0.0, %v1578
  %v1580 = vpop.f32.mrf.mxu0
  %1581 = vmatprep.mubr.f32.mxu0 0.0
  %1582 = vmatmul.mubr.f32.gmra.mxu0 %v1467
  %v1583 = vpop.f32.mrf.mxu0
  %v1584 = vadd.f32 0.0, %v1583
  %v1585 = vpop.f32.mrf.mxu0
  %1586 = vmatprep.mubr.f32.mxu0 0.0
  %1587 = vmatmul.mubr.f32.gmra.mxu0 %v1470
  %v1588 = vpop.f32.mrf.mxu0
  %v1589 = vadd.f32 0.0, %v1588
  %v1590 = vpop.f32.mrf.mxu0
  %1591 = vmatprep.mubr.f32.mxu0 0.0
  %1592 = vmatmul.mubr.f32.gmra.mxu0 %v1473
  %v1593 = vpop.f32.mrf.mxu0
  %v1594 = vadd.f32 0.0, %v1593
  %v1595 = vpop.f32.mrf.mxu0
  %1596 = vmatprep.mubr.f32.mxu0 0.0
  %1597 = vmatmul.mubr.f32.gmra.mxu0 %v1476
  %v1598 = vpop.f32.mrf.mxu0
  %v1599 = vadd.f32 0.0, %v1598
  %v1600 = vpop.f32.mrf.mxu0
  %1601 = vmatprep.mubr.f32.mxu0 0.0
  %1602 = vmatmul.mubr.f32.gmra.mxu0 %v1479
  %v1603 = vpop.f32.mrf.mxu0
  %v1604 = vadd.f32 0.0, %v1603
  %v1605 = vpop.f32.mrf.mxu0
  %1606 = vmatprep.mubr.f32.mxu0 0.0
  %1607 = vmatmul.mubr.f32.gmra.mxu0 %v1482
  %v1608 = vpop.f32.mrf.mxu0
  %v1609 = vadd.f32 0.0, %v1608
  %v1610 = vpop.f32.mrf.mxu0
  %1611 = vmatprep.mubr.f32.mxu0 0.0
  %1612 = vmatmul.mubr.f32.gmra.mxu0 %v1485
  %v1613 = vpop.f32.mrf.mxu0
  %v1614 = vadd.f32 0.0, %v1613
  %v1615 = vpop.f32.mrf.mxu0
  %1616 = vmatprep.mubr.f32.mxu0 0.0
  %1617 = vmatmul.mubr.f32.gmra.mxu0 %v1488
  %v1618 = vpop.f32.mrf.mxu0
  %v1619 = vadd.f32 0.0, %v1618
  %v1620 = vpop.f32.mrf.mxu0
  %1621 = vmatprep.mubr.f32.mxu0 0.0
  %1622 = vmatmul.mubr.f32.gmra.mxu0 %v1491
  %v1623 = vpop.f32.mrf.mxu0
  %v1624 = vadd.f32 0.0, %v1623
  %v1625 = vpop.f32.mrf.mxu0
  %1626 = vmatprep.mubr.f32.mxu0 0.0
  %1627 = vmatmul.mubr.f32.gmra.mxu0 %v1494
  %v1628 = vpop.f32.mrf.mxu0
  %v1629 = vadd.f32 0.0, %v1628
  %v1630 = vpop.f32.mrf.mxu0
  %1631 = vmatprep.mubr.f32.mxu0 0.0
  %1632 = vmatmul.mubr.f32.gmra.mxu0 %v1497
  %v1633 = vpop.f32.mrf.mxu0
  %v1634 = vadd.f32 0.0, %v1633
  %v1635 = vpop.f32.mrf.mxu0
  %1636 = vmatprep.mubr.f32.mxu0 0.0
  %1637 = vmatmul.mubr.f32.gmra.mxu0 %v1500
  %v1638 = vpop.f32.mrf.mxu0
  %v1639 = vadd.f32 0.0, %v1638
  %v1640 = vpop.f32.mrf.mxu0
  %1641 = vdwg.mxu0
  %v1642 = vadd.f32 %v1436, %v1569
  %v1643 = vadd.f32 %v1437, %v1574
  %v1644 = vadd.f32 %v1438, %v1579
  %v1645 = vadd.f32 %v1439, %v1584
  %v1646 = vadd.f32 %v1440, %v1589
  %v1647 = vadd.f32 %v1441, %v1594
  %v1648 = vadd.f32 %v1442, %v1599
  %v1649 = vadd.f32 %v1443, %v1604
  %v1650 = vadd.f32 %v1444, %v1609
  %v1651 = vadd.f32 %v1445, %v1614
  %v1652 = vadd.f32 %v1446, %v1619
  %v1653 = vadd.f32 %v1447, %v1624
  %v1654 = vadd.f32 %v1448, %v1629
  %v1655 = vadd.f32 %v1449, %v1634
  %v1656 = vadd.f32 %v1450, %v1639
  %1657 = vrot.lane.b32.xlu0 %v283, 118
  %v1658 = vpop.permute.xlu0 %1657
  %1659 = vrot.lane.b32.xlu0 %v284, 118
  %v1660 = vpop.permute.xlu0 %1659
  %v1664 = vsel %vm668, %v360, 0
  %v1667 = vsel %vm668, %v361, 0
  %v1670 = vsel %vm668, %v362, 0
  %v1673 = vsel %vm668, %v363, 0
  %v1676 = vsel %vm668, %v364, 0
  %v1679 = vsel %vm668, %v365, 0
  %v1682 = vsel %vm668, %v366, 0
  %v1685 = vsel %vm668, %v367, 0
  %v1688 = vsel %vm668, %v368, 0
  %v1691 = vsel %vm668, %v369, 0
  %v1694 = vsel %vm668, %v370, 0
  %v1697 = vsel %vm668, %v371, 0
  %v1700 = vsel %vm668, %v372, 0
  %v1703 = vsel %vm668, %v373, 0
  %v1706 = vsel %vm668, %v374, 0
  %1708 = vmatprep.subr.mxu0 0.0
  %1709 = vmatpush1.msra.mxu0 0.0
  %1710 = vmatprep.subr.mxu0 0.0
  %1711 = vmatpush1.msra.mxu0 0.0
  %1712 = vmatprep.subr.mxu0 0.0
  %1713 = vmatpush1.msra.mxu0 0.0
  %1714 = vmatprep.subr.mxu0 0.0
  %1715 = vmatpush1.msra.mxu0 0.0
  %1716 = vmatprep.subr.mxu0 0.0
  %1717 = vmatpush1.msra.mxu0 0.0
  %1718 = vmatprep.subr.mxu0 0.0
  %1719 = vmatpush1.msra.mxu0 0.0
  %1720 = vmatprep.subr.mxu0 0.0
  %1721 = vmatpush1.msra.mxu0 0.0
  %1722 = vmatprep.subr.mxu0 0.0
  %1723 = vmatpush1.msra.mxu0 0.0
  %1724 = vmatprep.subr.mxu0 0.0
  %1725 = vmatpush1.msra.mxu0 0.0
  %1726 = vmatprep.subr.mxu0 0.0
  %1727 = vmatpush1.msra.mxu0 0.0
  %1728 = vmatprep.subr.mxu0 0.0
  %1729 = vmatpush1.msra.mxu0 0.0
  %1730 = vmatprep.subr.mxu0 0.0
  %1731 = vmatpush1.msra.mxu0 0.0
  %1732 = vmatprep.subr.mxu0 0.0
  %1733 = vmatpush1.msra.mxu0 0.0
  %1734 = vmatprep.subr.mxu0 0.0
  %1735 = vmatpush1.msra.mxu0 0.0
  %1736 = vmatprep.subr.mxu0 0.0
  %1737 = vmatpush1.msra.mxu0 %v1660
  %1738 = vmatprep.subr.mxu0 0.0
  %1739 = vmatpush1.msra.mxu0 %v1658
  %1740 = vmatprep.subr.mxu0 0.0
  %1741 = vmatpush2.msra.mxu0 0.0
  %1742 = vmatprep.subr.mxu0 0.0
  %1743 = vmatpush2.msra.mxu0 0.0
  %1744 = vmatprep.subr.mxu0 0.0
  %1745 = vmatpush2.msra.mxu0 0.0
  %1746 = vmatprep.subr.mxu0 0.0
  %1747 = vmatpush2.msra.mxu0 0.0
  %1748 = vmatprep.subr.mxu0 0.0
  %1749 = vmatpush2.msra.mxu0 0.0
  %1750 = vmatprep.subr.mxu0 0.0
  %1751 = vmatpush2.msra.mxu0 0.0
  %1752 = vmatprep.subr.mxu0 0.0
  %1753 = vmatpush2.msra.mxu0 0.0
  %1754 = vmatprep.subr.mxu0 0.0
  %1755 = vmatpush2.msra.mxu0 0.0
  %1756 = vmatprep.subr.mxu0 0.0
  %1757 = vmatpush2.msra.mxu0 0.0
  %1758 = vmatprep.subr.mxu0 0.0
  %1759 = vmatpush2.msra.mxu0 0.0
  %1760 = vmatprep.subr.mxu0 0.0
  %1761 = vmatpush2.msra.mxu0 0.0
  %1762 = vmatprep.subr.mxu0 0.0
  %1763 = vmatpush2.msra.mxu0 0.0
  %1764 = vmatprep.subr.mxu0 0.0
  %1765 = vmatpush2.msra.mxu0 0.0
  %1766 = vmatprep.subr.mxu0 0.0
  %1767 = vmatpush2.msra.mxu0 0.0
  %1768 = vmatprep.subr.mxu0 0.0
  %1769 = vmatpush2.msra.mxu0 0.0
  %1770 = vmatprep.subr.mxu0 0.0
  %1771 = vmatpush2.msra.mxu0 0.0
  %1772 = vmatprep.mubr.f32.mxu0 0.0
  %1773 = vmatmul.mubr.f32.gmra.mxu0 %v1664
  %v1774 = vpop.f32.mrf.mxu0
  %v1775 = vadd.f32 0.0, %v1774
  %v1776 = vpop.f32.mrf.mxu0
  %1777 = vmatprep.mubr.f32.mxu0 0.0
  %1778 = vmatmul.mubr.f32.gmra.mxu0 %v1667
  %v1779 = vpop.f32.mrf.mxu0
  %v1780 = vadd.f32 0.0, %v1779
  %v1781 = vpop.f32.mrf.mxu0
  %1782 = vmatprep.mubr.f32.mxu0 0.0
  %1783 = vmatmul.mubr.f32.gmra.mxu0 %v1670
  %v1784 = vpop.f32.mrf.mxu0
  %v1785 = vadd.f32 0.0, %v1784
  %v1786 = vpop.f32.mrf.mxu0
  %1787 = vmatprep.mubr.f32.mxu0 0.0
  %1788 = vmatmul.mubr.f32.gmra.mxu0 %v1673
  %v1789 = vpop.f32.mrf.mxu0
  %v1790 = vadd.f32 0.0, %v1789
  %v1791 = vpop.f32.mrf.mxu0
  %1792 = vmatprep.mubr.f32.mxu0 0.0
  %1793 = vmatmul.mubr.f32.gmra.mxu0 %v1676
  %v1794 = vpop.f32.mrf.mxu0
  %v1795 = vadd.f32 0.0, %v1794
  %v1796 = vpop.f32.mrf.mxu0
  %1797 = vmatprep.mubr.f32.mxu0 0.0
  %1798 = vmatmul.mubr.f32.gmra.mxu0 %v1679
  %v1799 = vpop.f32.mrf.mxu0
  %v1800 = vadd.f32 0.0, %v1799
  %v1801 = vpop.f32.mrf.mxu0
  %1802 = vmatprep.mubr.f32.mxu0 0.0
  %1803 = vmatmul.mubr.f32.gmra.mxu0 %v1682
  %v1804 = vpop.f32.mrf.mxu0
  %v1805 = vadd.f32 0.0, %v1804
  %v1806 = vpop.f32.mrf.mxu0
  %1807 = vmatprep.mubr.f32.mxu0 0.0
  %1808 = vmatmul.mubr.f32.gmra.mxu0 %v1685
  %v1809 = vpop.f32.mrf.mxu0
  %v1810 = vadd.f32 0.0, %v1809
  %v1811 = vpop.f32.mrf.mxu0
  %1812 = vmatprep.mubr.f32.mxu0 0.0
  %1813 = vmatmul.mubr.f32.gmra.mxu0 %v1688
  %v1814 = vpop.f32.mrf.mxu0
  %v1815 = vadd.f32 0.0, %v1814
  %v1816 = vpop.f32.mrf.mxu0
  %1817 = vmatprep.mubr.f32.mxu0 0.0
  %1818 = vmatmul.mubr.f32.gmra.mxu0 %v1691
  %v1819 = vpop.f32.mrf.mxu0
  %v1820 = vadd.f32 0.0, %v1819
  %v1821 = vpop.f32.mrf.mxu0
  %1822 = vmatprep.mubr.f32.mxu0 0.0
  %1823 = vmatmul.mubr.f32.gmra.mxu0 %v1694
  %v1824 = vpop.f32.mrf.mxu0
  %v1825 = vadd.f32 0.0, %v1824
  %v1826 = vpop.f32.mrf.mxu0
  %1827 = vmatprep.mubr.f32.mxu0 0.0
  %1828 = vmatmul.mubr.f32.gmra.mxu0 %v1697
  %v1829 = vpop.f32.mrf.mxu0
  %v1830 = vadd.f32 0.0, %v1829
  %v1831 = vpop.f32.mrf.mxu0
  %1832 = vmatprep.mubr.f32.mxu0 0.0
  %1833 = vmatmul.mubr.f32.gmra.mxu0 %v1700
  %v1834 = vpop.f32.mrf.mxu0
  %v1835 = vadd.f32 0.0, %v1834
  %v1836 = vpop.f32.mrf.mxu0
  %1837 = vmatprep.mubr.f32.mxu0 0.0
  %1838 = vmatmul.mubr.f32.gmra.mxu0 %v1703
  %v1839 = vpop.f32.mrf.mxu0
  %v1840 = vadd.f32 0.0, %v1839
  %v1841 = vpop.f32.mrf.mxu0
  %1842 = vmatprep.mubr.f32.mxu0 0.0
  %1843 = vmatmul.mubr.f32.gmra.mxu0 %v1706
  %v1844 = vpop.f32.mrf.mxu0
  %v1845 = vadd.f32 0.0, %v1844
  %v1846 = vpop.f32.mrf.mxu0
  %1847 = vdwg.mxu0
  %v1848 = vadd.f32 %v1642, %v1775
  %v1849 = vadd.f32 %v1643, %v1780
  %v1850 = vadd.f32 %v1644, %v1785
  %v1851 = vadd.f32 %v1645, %v1790
  %v1852 = vadd.f32 %v1646, %v1795
  %v1853 = vadd.f32 %v1647, %v1800
  %v1854 = vadd.f32 %v1648, %v1805
  %v1855 = vadd.f32 %v1649, %v1810
  %v1856 = vadd.f32 %v1650, %v1815
  %v1857 = vadd.f32 %v1651, %v1820
  %v1858 = vadd.f32 %v1652, %v1825
  %v1859 = vadd.f32 %v1653, %v1830
  %v1860 = vadd.f32 %v1654, %v1835
  %v1861 = vadd.f32 %v1655, %v1840
  %v1862 = vadd.f32 %v1656, %v1845
  %1863 = vrot.lane.b32.xlu0 %v283, 116
  %v1864 = vpop.permute.xlu0 %1863
  %1865 = vrot.lane.b32.xlu0 %v284, 116
  %v1866 = vpop.permute.xlu0 %1865
  %v1870 = vsel %vm668, %v375, 0
  %v1873 = vsel %vm668, %v376, 0
  %v1876 = vsel %vm668, %v377, 0
  %v1879 = vsel %vm668, %v378, 0
  %v1882 = vsel %vm668, %v379, 0
  %v1885 = vsel %vm668, %v380, 0
  %v1888 = vsel %vm668, %v381, 0
  %v1891 = vsel %vm668, %v382, 0
  %v1894 = vsel %vm668, %v383, 0
  %v1897 = vsel %vm668, %v384, 0
  %v1900 = vsel %vm668, %v385, 0
  %v1903 = vsel %vm668, %v386, 0
  %v1906 = vsel %vm668, %v387, 0
  %v1909 = vsel %vm668, %v388, 0
  %v1912 = vsel %vm668, %v389, 0
  %1914 = vmatprep.subr.mxu0 0.0
  %1915 = vmatpush1.msra.mxu0 0.0
  %1916 = vmatprep.subr.mxu0 0.0
  %1917 = vmatpush1.msra.mxu0 0.0
  %1918 = vmatprep.subr.mxu0 0.0
  %1919 = vmatpush1.msra.mxu0 0.0
  %1920 = vmatprep.subr.mxu0 0.0
  %1921 = vmatpush1.msra.mxu0 0.0
  %1922 = vmatprep.subr.mxu0 0.0
  %1923 = vmatpush1.msra.mxu0 0.0
  %1924 = vmatprep.subr.mxu0 0.0
  %1925 = vmatpush1.msra.mxu0 0.0
  %1926 = vmatprep.subr.mxu0 0.0
  %1927 = vmatpush1.msra.mxu0 0.0
  %1928 = vmatprep.subr.mxu0 0.0
  %1929 = vmatpush1.msra.mxu0 0.0
  %1930 = vmatprep.subr.mxu0 0.0
  %1931 = vmatpush1.msra.mxu0 0.0
  %1932 = vmatprep.subr.mxu0 0.0
  %1933 = vmatpush1.msra.mxu0 0.0
  %1934 = vmatprep.subr.mxu0 0.0
  %1935 = vmatpush1.msra.mxu0 0.0
  %1936 = vmatprep.subr.mxu0 0.0
  %1937 = vmatpush1.msra.mxu0 0.0
  %1938 = vmatprep.subr.mxu0 0.0
  %1939 = vmatpush1.msra.mxu0 0.0
  %1940 = vmatprep.subr.mxu0 0.0
  %1941 = vmatpush1.msra.mxu0 0.0
  %1942 = vmatprep.subr.mxu0 0.0
  %1943 = vmatpush1.msra.mxu0 %v1866
  %1944 = vmatprep.subr.mxu0 0.0
  %1945 = vmatpush1.msra.mxu0 %v1864
  %1946 = vmatprep.subr.mxu0 0.0
  %1947 = vmatpush2.msra.mxu0 0.0
  %1948 = vmatprep.subr.mxu0 0.0
  %1949 = vmatpush2.msra.mxu0 0.0
  %1950 = vmatprep.subr.mxu0 0.0
  %1951 = vmatpush2.msra.mxu0 0.0
  %1952 = vmatprep.subr.mxu0 0.0
  %1953 = vmatpush2.msra.mxu0 0.0
  %1954 = vmatprep.subr.mxu0 0.0
  %1955 = vmatpush2.msra.mxu0 0.0
  %1956 = vmatprep.subr.mxu0 0.0
  %1957 = vmatpush2.msra.mxu0 0.0
  %1958 = vmatprep.subr.mxu0 0.0
  %1959 = vmatpush2.msra.mxu0 0.0
  %1960 = vmatprep.subr.mxu0 0.0
  %1961 = vmatpush2.msra.mxu0 0.0
  %1962 = vmatprep.subr.mxu0 0.0
  %1963 = vmatpush2.msra.mxu0 0.0
  %1964 = vmatprep.subr.mxu0 0.0
  %1965 = vmatpush2.msra.mxu0 0.0
  %1966 = vmatprep.subr.mxu0 0.0
  %1967 = vmatpush2.msra.mxu0 0.0
  %1968 = vmatprep.subr.mxu0 0.0
  %1969 = vmatpush2.msra.mxu0 0.0
  %1970 = vmatprep.subr.mxu0 0.0
  %1971 = vmatpush2.msra.mxu0 0.0
  %1972 = vmatprep.subr.mxu0 0.0
  %1973 = vmatpush2.msra.mxu0 0.0
  %1974 = vmatprep.subr.mxu0 0.0
  %1975 = vmatpush2.msra.mxu0 0.0
  %1976 = vmatprep.subr.mxu0 0.0
  %1977 = vmatpush2.msra.mxu0 0.0
  %1978 = vmatprep.mubr.f32.mxu0 0.0
  %1979 = vmatmul.mubr.f32.gmra.mxu0 %v1870
  %v1980 = vpop.f32.mrf.mxu0
  %v1981 = vadd.f32 0.0, %v1980
  %v1982 = vpop.f32.mrf.mxu0
  %1983 = vmatprep.mubr.f32.mxu0 0.0
  %1984 = vmatmul.mubr.f32.gmra.mxu0 %v1873
  %v1985 = vpop.f32.mrf.mxu0
  %v1986 = vadd.f32 0.0, %v1985
  %v1987 = vpop.f32.mrf.mxu0
  %1988 = vmatprep.mubr.f32.mxu0 0.0
  %1989 = vmatmul.mubr.f32.gmra.mxu0 %v1876
  %v1990 = vpop.f32.mrf.mxu0
  %v1991 = vadd.f32 0.0, %v1990
  %v1992 = vpop.f32.mrf.mxu0
  %1993 = vmatprep.mubr.f32.mxu0 0.0
  %1994 = vmatmul.mubr.f32.gmra.mxu0 %v1879
  %v1995 = vpop.f32.mrf.mxu0
  %v1996 = vadd.f32 0.0, %v1995
  %v1997 = vpop.f32.mrf.mxu0
  %1998 = vmatprep.mubr.f32.mxu0 0.0
  %1999 = vmatmul.mubr.f32.gmra.mxu0 %v1882
  %v2000 = vpop.f32.mrf.mxu0
  %v2001 = vadd.f32 0.0, %v2000
  %v2002 = vpop.f32.mrf.mxu0
  %2003 = vmatprep.mubr.f32.mxu0 0.0
  %2004 = vmatmul.mubr.f32.gmra.mxu0 %v1885
  %v2005 = vpop.f32.mrf.mxu0
  %v2006 = vadd.f32 0.0, %v2005
  %v2007 = vpop.f32.mrf.mxu0
  %2008 = vmatprep.mubr.f32.mxu0 0.0
  %2009 = vmatmul.mubr.f32.gmra.mxu0 %v1888
  %v2010 = vpop.f32.mrf.mxu0
  %v2011 = vadd.f32 0.0, %v2010
  %v2012 = vpop.f32.mrf.mxu0
  %2013 = vmatprep.mubr.f32.mxu0 0.0
  %2014 = vmatmul.mubr.f32.gmra.mxu0 %v1891
  %v2015 = vpop.f32.mrf.mxu0
  %v2016 = vadd.f32 0.0, %v2015
  %v2017 = vpop.f32.mrf.mxu0
  %2018 = vmatprep.mubr.f32.mxu0 0.0
  %2019 = vmatmul.mubr.f32.gmra.mxu0 %v1894
  %v2020 = vpop.f32.mrf.mxu0
  %v2021 = vadd.f32 0.0, %v2020
  %v2022 = vpop.f32.mrf.mxu0
  %2023 = vmatprep.mubr.f32.mxu0 0.0
  %2024 = vmatmul.mubr.f32.gmra.mxu0 %v1897
  %v2025 = vpop.f32.mrf.mxu0
  %v2026 = vadd.f32 0.0, %v2025
  %v2027 = vpop.f32.mrf.mxu0
  %2028 = vmatprep.mubr.f32.mxu0 0.0
  %2029 = vmatmul.mubr.f32.gmra.mxu0 %v1900
  %v2030 = vpop.f32.mrf.mxu0
  %v2031 = vadd.f32 0.0, %v2030
  %v2032 = vpop.f32.mrf.mxu0
  %2033 = vmatprep.mubr.f32.mxu0 0.0
  %2034 = vmatmul.mubr.f32.gmra.mxu0 %v1903
  %v2035 = vpop.f32.mrf.mxu0
  %v2036 = vadd.f32 0.0, %v2035
  %v2037 = vpop.f32.mrf.mxu0
  %2038 = vmatprep.mubr.f32.mxu0 0.0
  %2039 = vmatmul.mubr.f32.gmra.mxu0 %v1906
  %v2040 = vpop.f32.mrf.mxu0
  %v2041 = vadd.f32 0.0, %v2040
  %v2042 = vpop.f32.mrf.mxu0
  %2043 = vmatprep.mubr.f32.mxu0 0.0
  %2044 = vmatmul.mubr.f32.gmra.mxu0 %v1909
  %v2045 = vpop.f32.mrf.mxu0
  %v2046 = vadd.f32 0.0, %v2045
  %v2047 = vpop.f32.mrf.mxu0
  %2048 = vmatprep.mubr.f32.mxu0 0.0
  %2049 = vmatmul.mubr.f32.gmra.mxu0 %v1912
  %v2050 = vpop.f32.mrf.mxu0
  %v2051 = vadd.f32 0.0, %v2050
  %v2052 = vpop.f32.mrf.mxu0
  %2053 = vdwg.mxu0
  %v2054 = vadd.f32 %v1848, %v1981
  %v2055 = vadd.f32 %v1849, %v1986
  %v2056 = vadd.f32 %v1850, %v1991
  %v2057 = vadd.f32 %v1851, %v1996
  %v2058 = vadd.f32 %v1852, %v2001
  %v2059 = vadd.f32 %v1853, %v2006
  %v2060 = vadd.f32 %v1854, %v2011
  %v2061 = vadd.f32 %v1855, %v2016
  %v2062 = vadd.f32 %v1856, %v2021
  %v2063 = vadd.f32 %v1857, %v2026
  %v2064 = vadd.f32 %v1858, %v2031
  %v2065 = vadd.f32 %v1859, %v2036
  %v2066 = vadd.f32 %v1860, %v2041
  %v2067 = vadd.f32 %v1861, %v2046
  %v2068 = vadd.f32 %v1862, %v2051
  %2069 = vrot.lane.b32.xlu0 %v283, 114
  %v2070 = vpop.permute.xlu0 %2069
  %2071 = vrot.lane.b32.xlu0 %v284, 114
  %v2072 = vpop.permute.xlu0 %2071
  %v2076 = vsel %vm668, %v390, 0
  %v2079 = vsel %vm668, %v391, 0
  %v2082 = vsel %vm668, %v392, 0
  %v2085 = vsel %vm668, %v393, 0
  %v2088 = vsel %vm668, %v394, 0
  %v2091 = vsel %vm668, %v395, 0
  %v2094 = vsel %vm668, %v396, 0
  %v2097 = vsel %vm668, %v397, 0
  %v2100 = vsel %vm668, %v398, 0
  %v2103 = vsel %vm668, %v399, 0
  %v2106 = vsel %vm668, %v400, 0
  %v2109 = vsel %vm668, %v401, 0
  %v2112 = vsel %vm668, %v402, 0
  %v2115 = vsel %vm668, %v403, 0
  %v2118 = vsel %vm668, %v404, 0
  %2120 = vmatprep.subr.mxu0 0.0
  %2121 = vmatpush1.msra.mxu0 0.0
  %2122 = vmatprep.subr.mxu0 0.0
  %2123 = vmatpush1.msra.mxu0 0.0
  %2124 = vmatprep.subr.mxu0 0.0
  %2125 = vmatpush1.msra.mxu0 0.0
  %2126 = vmatprep.subr.mxu0 0.0
  %2127 = vmatpush1.msra.mxu0 0.0
  %2128 = vmatprep.subr.mxu0 0.0
  %2129 = vmatpush1.msra.mxu0 0.0
  %2130 = vmatprep.subr.mxu0 0.0
  %2131 = vmatpush1.msra.mxu0 0.0
  %2132 = vmatprep.subr.mxu0 0.0
  %2133 = vmatpush1.msra.mxu0 0.0
  %2134 = vmatprep.subr.mxu0 0.0
  %2135 = vmatpush1.msra.mxu0 0.0
  %2136 = vmatprep.subr.mxu0 0.0
  %2137 = vmatpush1.msra.mxu0 0.0
  %2138 = vmatprep.subr.mxu0 0.0
  %2139 = vmatpush1.msra.mxu0 0.0
  %2140 = vmatprep.subr.mxu0 0.0
  %2141 = vmatpush1.msra.mxu0 0.0
  %2142 = vmatprep.subr.mxu0 0.0
  %2143 = vmatpush1.msra.mxu0 0.0
  %2144 = vmatprep.subr.mxu0 0.0
  %2145 = vmatpush1.msra.mxu0 0.0
  %2146 = vmatprep.subr.mxu0 0.0
  %2147 = vmatpush1.msra.mxu0 0.0
  %2148 = vmatprep.subr.mxu0 0.0
  %2149 = vmatpush1.msra.mxu0 %v2072
  %2150 = vmatprep.subr.mxu0 0.0
  %2151 = vmatpush1.msra.mxu0 %v2070
  %2152 = vmatprep.subr.mxu0 0.0
  %2153 = vmatpush2.msra.mxu0 0.0
  %2154 = vmatprep.subr.mxu0 0.0
  %2155 = vmatpush2.msra.mxu0 0.0
  %2156 = vmatprep.subr.mxu0 0.0
  %2157 = vmatpush2.msra.mxu0 0.0
  %2158 = vmatprep.subr.mxu0 0.0
  %2159 = vmatpush2.msra.mxu0 0.0
  %2160 = vmatprep.subr.mxu0 0.0
  %2161 = vmatpush2.msra.mxu0 0.0
  %2162 = vmatprep.subr.mxu0 0.0
  %2163 = vmatpush2.msra.mxu0 0.0
  %2164 = vmatprep.subr.mxu0 0.0
  %2165 = vmatpush2.msra.mxu0 0.0
  %2166 = vmatprep.subr.mxu0 0.0
  %2167 = vmatpush2.msra.mxu0 0.0
  %2168 = vmatprep.subr.mxu0 0.0
  %2169 = vmatpush2.msra.mxu0 0.0
  %2170 = vmatprep.subr.mxu0 0.0
  %2171 = vmatpush2.msra.mxu0 0.0
  %2172 = vmatprep.subr.mxu0 0.0
  %2173 = vmatpush2.msra.mxu0 0.0
  %2174 = vmatprep.subr.mxu0 0.0
  %2175 = vmatpush2.msra.mxu0 0.0
  %2176 = vmatprep.subr.mxu0 0.0
  %2177 = vmatpush2.msra.mxu0 0.0
  %2178 = vmatprep.subr.mxu0 0.0
  %2179 = vmatpush2.msra.mxu0 0.0
  %2180 = vmatprep.subr.mxu0 0.0
  %2181 = vmatpush2.msra.mxu0 0.0
  %2182 = vmatprep.subr.mxu0 0.0
  %2183 = vmatpush2.msra.mxu0 0.0
  %2184 = vmatprep.mubr.f32.mxu0 0.0
  %2185 = vmatmul.mubr.f32.gmra.mxu0 %v2076
  %v2186 = vpop.f32.mrf.mxu0
  %v2187 = vadd.f32 0.0, %v2186
  %v2188 = vpop.f32.mrf.mxu0
  %2189 = vmatprep.mubr.f32.mxu0 0.0
  %2190 = vmatmul.mubr.f32.gmra.mxu0 %v2079
  %v2191 = vpop.f32.mrf.mxu0
  %v2192 = vadd.f32 0.0, %v2191
  %v2193 = vpop.f32.mrf.mxu0
  %2194 = vmatprep.mubr.f32.mxu0 0.0
  %2195 = vmatmul.mubr.f32.gmra.mxu0 %v2082
  %v2196 = vpop.f32.mrf.mxu0
  %v2197 = vadd.f32 0.0, %v2196
  %v2198 = vpop.f32.mrf.mxu0
  %2199 = vmatprep.mubr.f32.mxu0 0.0
  %2200 = vmatmul.mubr.f32.gmra.mxu0 %v2085
  %v2201 = vpop.f32.mrf.mxu0
  %v2202 = vadd.f32 0.0, %v2201
  %v2203 = vpop.f32.mrf.mxu0
  %2204 = vmatprep.mubr.f32.mxu0 0.0
  %2205 = vmatmul.mubr.f32.gmra.mxu0 %v2088
  %v2206 = vpop.f32.mrf.mxu0
  %v2207 = vadd.f32 0.0, %v2206
  %v2208 = vpop.f32.mrf.mxu0
  %2209 = vmatprep.mubr.f32.mxu0 0.0
  %2210 = vmatmul.mubr.f32.gmra.mxu0 %v2091
  %v2211 = vpop.f32.mrf.mxu0
  %v2212 = vadd.f32 0.0, %v2211
  %v2213 = vpop.f32.mrf.mxu0
  %2214 = vmatprep.mubr.f32.mxu0 0.0
  %2215 = vmatmul.mubr.f32.gmra.mxu0 %v2094
  %v2216 = vpop.f32.mrf.mxu0
  %v2217 = vadd.f32 0.0, %v2216
  %v2218 = vpop.f32.mrf.mxu0
  %2219 = vmatprep.mubr.f32.mxu0 0.0
  %2220 = vmatmul.mubr.f32.gmra.mxu0 %v2097
  %v2221 = vpop.f32.mrf.mxu0
  %v2222 = vadd.f32 0.0, %v2221
  %v2223 = vpop.f32.mrf.mxu0
  %2224 = vmatprep.mubr.f32.mxu0 0.0
  %2225 = vmatmul.mubr.f32.gmra.mxu0 %v2100
  %v2226 = vpop.f32.mrf.mxu0
  %v2227 = vadd.f32 0.0, %v2226
  %v2228 = vpop.f32.mrf.mxu0
  %2229 = vmatprep.mubr.f32.mxu0 0.0
  %2230 = vmatmul.mubr.f32.gmra.mxu0 %v2103
  %v2231 = vpop.f32.mrf.mxu0
  %v2232 = vadd.f32 0.0, %v2231
  %v2233 = vpop.f32.mrf.mxu0
  %2234 = vmatprep.mubr.f32.mxu0 0.0
  %2235 = vmatmul.mubr.f32.gmra.mxu0 %v2106
  %v2236 = vpop.f32.mrf.mxu0
  %v2237 = vadd.f32 0.0, %v2236
  %v2238 = vpop.f32.mrf.mxu0
  %2239 = vmatprep.mubr.f32.mxu0 0.0
  %2240 = vmatmul.mubr.f32.gmra.mxu0 %v2109
  %v2241 = vpop.f32.mrf.mxu0
  %v2242 = vadd.f32 0.0, %v2241
  %v2243 = vpop.f32.mrf.mxu0
  %2244 = vmatprep.mubr.f32.mxu0 0.0
  %2245 = vmatmul.mubr.f32.gmra.mxu0 %v2112
  %v2246 = vpop.f32.mrf.mxu0
  %v2247 = vadd.f32 0.0, %v2246
  %v2248 = vpop.f32.mrf.mxu0
  %2249 = vmatprep.mubr.f32.mxu0 0.0
  %2250 = vmatmul.mubr.f32.gmra.mxu0 %v2115
  %v2251 = vpop.f32.mrf.mxu0
  %v2252 = vadd.f32 0.0, %v2251
  %v2253 = vpop.f32.mrf.mxu0
  %2254 = vmatprep.mubr.f32.mxu0 0.0
  %2255 = vmatmul.mubr.f32.gmra.mxu0 %v2118
  %v2256 = vpop.f32.mrf.mxu0
  %v2257 = vadd.f32 0.0, %v2256
  %v2258 = vpop.f32.mrf.mxu0
  %2259 = vdwg.mxu0
  %v2260 = vadd.f32 %v2054, %v2187
  %v2261 = vadd.f32 %v2055, %v2192
  %v2262 = vadd.f32 %v2056, %v2197
  %v2263 = vadd.f32 %v2057, %v2202
  %v2264 = vadd.f32 %v2058, %v2207
  %v2265 = vadd.f32 %v2059, %v2212
  %v2266 = vadd.f32 %v2060, %v2217
  %v2267 = vadd.f32 %v2061, %v2222
  %v2268 = vadd.f32 %v2062, %v2227
  %v2269 = vadd.f32 %v2063, %v2232
  %v2270 = vadd.f32 %v2064, %v2237
  %v2271 = vadd.f32 %v2065, %v2242
  %v2272 = vadd.f32 %v2066, %v2247
  %v2273 = vadd.f32 %v2067, %v2252
  %v2274 = vadd.f32 %v2068, %v2257
  %2275 = vrot.lane.b32.xlu0 %v283, 112
  %v2276 = vpop.permute.xlu0 %2275
  %2277 = vrot.lane.b32.xlu0 %v284, 112
  %v2278 = vpop.permute.xlu0 %2277
  %v2282 = vsel %vm668, %v405, 0
  %v2285 = vsel %vm668, %v406, 0
  %v2288 = vsel %vm668, %v407, 0
  %v2291 = vsel %vm668, %v408, 0
  %v2294 = vsel %vm668, %v409, 0
  %v2297 = vsel %vm668, %v410, 0
  %v2300 = vsel %vm668, %v411, 0
  %v2303 = vsel %vm668, %v412, 0
  %v2306 = vsel %vm668, %v413, 0
  %v2309 = vsel %vm668, %v414, 0
  %v2312 = vsel %vm668, %v415, 0
  %v2315 = vsel %vm668, %v416, 0
  %v2318 = vsel %vm668, %v417, 0
  %v2321 = vsel %vm668, %v418, 0
  %v2324 = vsel %vm668, %v419, 0
  %2326 = vmatprep.subr.mxu0 0.0
  %2327 = vmatpush1.msra.mxu0 0.0
  %2328 = vmatprep.subr.mxu0 0.0
  %2329 = vmatpush1.msra.mxu0 0.0
  %2330 = vmatprep.subr.mxu0 0.0
  %2331 = vmatpush1.msra.mxu0 0.0
  %2332 = vmatprep.subr.mxu0 0.0
  %2333 = vmatpush1.msra.mxu0 0.0
  %2334 = vmatprep.subr.mxu0 0.0
  %2335 = vmatpush1.msra.mxu0 0.0
  %2336 = vmatprep.subr.mxu0 0.0
  %2337 = vmatpush1.msra.mxu0 0.0
  %2338 = vmatprep.subr.mxu0 0.0
  %2339 = vmatpush1.msra.mxu0 0.0
  %2340 = vmatprep.subr.mxu0 0.0
  %2341 = vmatpush1.msra.mxu0 0.0
  %2342 = vmatprep.subr.mxu0 0.0
  %2343 = vmatpush1.msra.mxu0 0.0
  %2344 = vmatprep.subr.mxu0 0.0
  %2345 = vmatpush1.msra.mxu0 0.0
  %2346 = vmatprep.subr.mxu0 0.0
  %2347 = vmatpush1.msra.mxu0 0.0
  %2348 = vmatprep.subr.mxu0 0.0
  %2349 = vmatpush1.msra.mxu0 0.0
  %2350 = vmatprep.subr.mxu0 0.0
  %2351 = vmatpush1.msra.mxu0 0.0
  %2352 = vmatprep.subr.mxu0 0.0
  %2353 = vmatpush1.msra.mxu0 0.0
  %2354 = vmatprep.subr.mxu0 0.0
  %2355 = vmatpush1.msra.mxu0 %v2278
  %2356 = vmatprep.subr.mxu0 0.0
  %2357 = vmatpush1.msra.mxu0 %v2276
  %2358 = vmatprep.subr.mxu0 0.0
  %2359 = vmatpush2.msra.mxu0 0.0
  %2360 = vmatprep.subr.mxu0 0.0
  %2361 = vmatpush2.msra.mxu0 0.0
  %2362 = vmatprep.subr.mxu0 0.0
  %2363 = vmatpush2.msra.mxu0 0.0
  %2364 = vmatprep.subr.mxu0 0.0
  %2365 = vmatpush2.msra.mxu0 0.0
  %2366 = vmatprep.subr.mxu0 0.0
  %2367 = vmatpush2.msra.mxu0 0.0
  %2368 = vmatprep.subr.mxu0 0.0
  %2369 = vmatpush2.msra.mxu0 0.0
  %2370 = vmatprep.subr.mxu0 0.0
  %2371 = vmatpush2.msra.mxu0 0.0
  %2372 = vmatprep.subr.mxu0 0.0
  %2373 = vmatpush2.msra.mxu0 0.0
  %2374 = vmatprep.subr.mxu0 0.0
  %2375 = vmatpush2.msra.mxu0 0.0
  %2376 = vmatprep.subr.mxu0 0.0
  %2377 = vmatpush2.msra.mxu0 0.0
  %2378 = vmatprep.subr.mxu0 0.0
  %2379 = vmatpush2.msra.mxu0 0.0
  %2380 = vmatprep.subr.mxu0 0.0
  %2381 = vmatpush2.msra.mxu0 0.0
  %2382 = vmatprep.subr.mxu0 0.0
  %2383 = vmatpush2.msra.mxu0 0.0
  %2384 = vmatprep.subr.mxu0 0.0
  %2385 = vmatpush2.msra.mxu0 0.0
  %2386 = vmatprep.subr.mxu0 0.0
  %2387 = vmatpush2.msra.mxu0 0.0
  %2388 = vmatprep.subr.mxu0 0.0
  %2389 = vmatpush2.msra.mxu0 0.0
  %2390 = vmatprep.mubr.f32.mxu0 0.0
  %2391 = vmatmul.mubr.f32.gmra.mxu0 %v2282
  %v2392 = vpop.f32.mrf.mxu0
  %v2393 = vadd.f32 0.0, %v2392
  %v2394 = vpop.f32.mrf.mxu0
  %2395 = vmatprep.mubr.f32.mxu0 0.0
  %2396 = vmatmul.mubr.f32.gmra.mxu0 %v2285
  %v2397 = vpop.f32.mrf.mxu0
  %v2398 = vadd.f32 0.0, %v2397
  %v2399 = vpop.f32.mrf.mxu0
  %2400 = vmatprep.mubr.f32.mxu0 0.0
  %2401 = vmatmul.mubr.f32.gmra.mxu0 %v2288
  %v2402 = vpop.f32.mrf.mxu0
  %v2403 = vadd.f32 0.0, %v2402
  %v2404 = vpop.f32.mrf.mxu0
  %2405 = vmatprep.mubr.f32.mxu0 0.0
  %2406 = vmatmul.mubr.f32.gmra.mxu0 %v2291
  %v2407 = vpop.f32.mrf.mxu0
  %v2408 = vadd.f32 0.0, %v2407
  %v2409 = vpop.f32.mrf.mxu0
  %2410 = vmatprep.mubr.f32.mxu0 0.0
  %2411 = vmatmul.mubr.f32.gmra.mxu0 %v2294
  %v2412 = vpop.f32.mrf.mxu0
  %v2413 = vadd.f32 0.0, %v2412
  %v2414 = vpop.f32.mrf.mxu0
  %2415 = vmatprep.mubr.f32.mxu0 0.0
  %2416 = vmatmul.mubr.f32.gmra.mxu0 %v2297
  %v2417 = vpop.f32.mrf.mxu0
  %v2418 = vadd.f32 0.0, %v2417
  %v2419 = vpop.f32.mrf.mxu0
  %2420 = vmatprep.mubr.f32.mxu0 0.0
  %2421 = vmatmul.mubr.f32.gmra.mxu0 %v2300
  %v2422 = vpop.f32.mrf.mxu0
  %v2423 = vadd.f32 0.0, %v2422
  %v2424 = vpop.f32.mrf.mxu0
  %2425 = vmatprep.mubr.f32.mxu0 0.0
  %2426 = vmatmul.mubr.f32.gmra.mxu0 %v2303
  %v2427 = vpop.f32.mrf.mxu0
  %v2428 = vadd.f32 0.0, %v2427
  %v2429 = vpop.f32.mrf.mxu0
  %2430 = vmatprep.mubr.f32.mxu0 0.0
  %2431 = vmatmul.mubr.f32.gmra.mxu0 %v2306
  %v2432 = vpop.f32.mrf.mxu0
  %v2433 = vadd.f32 0.0, %v2432
  %v2434 = vpop.f32.mrf.mxu0
  %2435 = vmatprep.mubr.f32.mxu0 0.0
  %2436 = vmatmul.mubr.f32.gmra.mxu0 %v2309
  %v2437 = vpop.f32.mrf.mxu0
  %v2438 = vadd.f32 0.0, %v2437
  %v2439 = vpop.f32.mrf.mxu0
  %2440 = vmatprep.mubr.f32.mxu0 0.0
  %2441 = vmatmul.mubr.f32.gmra.mxu0 %v2312
  %v2442 = vpop.f32.mrf.mxu0
  %v2443 = vadd.f32 0.0, %v2442
  %v2444 = vpop.f32.mrf.mxu0
  %2445 = vmatprep.mubr.f32.mxu0 0.0
  %2446 = vmatmul.mubr.f32.gmra.mxu0 %v2315
  %v2447 = vpop.f32.mrf.mxu0
  %v2448 = vadd.f32 0.0, %v2447
  %v2449 = vpop.f32.mrf.mxu0
  %2450 = vmatprep.mubr.f32.mxu0 0.0
  %2451 = vmatmul.mubr.f32.gmra.mxu0 %v2318
  %v2452 = vpop.f32.mrf.mxu0
  %v2453 = vadd.f32 0.0, %v2452
  %v2454 = vpop.f32.mrf.mxu0
  %2455 = vmatprep.mubr.f32.mxu0 0.0
  %2456 = vmatmul.mubr.f32.gmra.mxu0 %v2321
  %v2457 = vpop.f32.mrf.mxu0
  %v2458 = vadd.f32 0.0, %v2457
  %v2459 = vpop.f32.mrf.mxu0
  %2460 = vmatprep.mubr.f32.mxu0 0.0
  %2461 = vmatmul.mubr.f32.gmra.mxu0 %v2324
  %v2462 = vpop.f32.mrf.mxu0
  %v2463 = vadd.f32 0.0, %v2462
  %v2464 = vpop.f32.mrf.mxu0
  %2465 = vdwg.mxu0
  %v2466 = vadd.f32 %v2260, %v2393
  %v2467 = vadd.f32 %v2261, %v2398
  %v2468 = vadd.f32 %v2262, %v2403
  %v2469 = vadd.f32 %v2263, %v2408
  %v2470 = vadd.f32 %v2264, %v2413
  %v2471 = vadd.f32 %v2265, %v2418
  %v2472 = vadd.f32 %v2266, %v2423
  %v2473 = vadd.f32 %v2267, %v2428
  %v2474 = vadd.f32 %v2268, %v2433
  %v2475 = vadd.f32 %v2269, %v2438
  %v2476 = vadd.f32 %v2270, %v2443
  %v2477 = vadd.f32 %v2271, %v2448
  %v2478 = vadd.f32 %v2272, %v2453
  %v2479 = vadd.f32 %v2273, %v2458
  %v2480 = vadd.f32 %v2274, %v2463
  %2481 = vrot.lane.b32.xlu0 %v283, 110
  %v2482 = vpop.permute.xlu0 %2481
  %2483 = vrot.lane.b32.xlu0 %v284, 110
  %v2484 = vpop.permute.xlu0 %2483
  %v2488 = vsel %vm668, %v420, 0
  %v2491 = vsel %vm668, %v421, 0
  %v2494 = vsel %vm668, %v422, 0
  %v2497 = vsel %vm668, %v423, 0
  %v2500 = vsel %vm668, %v424, 0
  %v2503 = vsel %vm668, %v425, 0
  %v2506 = vsel %vm668, %v426, 0
  %v2509 = vsel %vm668, %v427, 0
  %v2512 = vsel %vm668, %v428, 0
  %v2515 = vsel %vm668, %v429, 0
  %v2518 = vsel %vm668, %v430, 0
  %v2521 = vsel %vm668, %v431, 0
  %v2524 = vsel %vm668, %v432, 0
  %v2527 = vsel %vm668, %v433, 0
  %v2530 = vsel %vm668, %v434, 0
  %2532 = vmatprep.subr.mxu0 0.0
  %2533 = vmatpush1.msra.mxu0 0.0
  %2534 = vmatprep.subr.mxu0 0.0
  %2535 = vmatpush1.msra.mxu0 0.0
  %2536 = vmatprep.subr.mxu0 0.0
  %2537 = vmatpush1.msra.mxu0 0.0
  %2538 = vmatprep.subr.mxu0 0.0
  %2539 = vmatpush1.msra.mxu0 0.0
  %2540 = vmatprep.subr.mxu0 0.0
  %2541 = vmatpush1.msra.mxu0 0.0
  %2542 = vmatprep.subr.mxu0 0.0
  %2543 = vmatpush1.msra.mxu0 0.0
  %2544 = vmatprep.subr.mxu0 0.0
  %2545 = vmatpush1.msra.mxu0 0.0
  %2546 = vmatprep.subr.mxu0 0.0
  %2547 = vmatpush1.msra.mxu0 0.0
  %2548 = vmatprep.subr.mxu0 0.0
  %2549 = vmatpush1.msra.mxu0 0.0
  %2550 = vmatprep.subr.mxu0 0.0
  %2551 = vmatpush1.msra.mxu0 0.0
  %2552 = vmatprep.subr.mxu0 0.0
  %2553 = vmatpush1.msra.mxu0 0.0
  %2554 = vmatprep.subr.mxu0 0.0
  %2555 = vmatpush1.msra.mxu0 0.0
  %2556 = vmatprep.subr.mxu0 0.0
  %2557 = vmatpush1.msra.mxu0 0.0
  %2558 = vmatprep.subr.mxu0 0.0
  %2559 = vmatpush1.msra.mxu0 0.0
  %2560 = vmatprep.subr.mxu0 0.0
  %2561 = vmatpush1.msra.mxu0 %v2484
  %2562 = vmatprep.subr.mxu0 0.0
  %2563 = vmatpush1.msra.mxu0 %v2482
  %2564 = vmatprep.subr.mxu0 0.0
  %2565 = vmatpush2.msra.mxu0 0.0
  %2566 = vmatprep.subr.mxu0 0.0
  %2567 = vmatpush2.msra.mxu0 0.0
  %2568 = vmatprep.subr.mxu0 0.0
  %2569 = vmatpush2.msra.mxu0 0.0
  %2570 = vmatprep.subr.mxu0 0.0
  %2571 = vmatpush2.msra.mxu0 0.0
  %2572 = vmatprep.subr.mxu0 0.0
  %2573 = vmatpush2.msra.mxu0 0.0
  %2574 = vmatprep.subr.mxu0 0.0
  %2575 = vmatpush2.msra.mxu0 0.0
  %2576 = vmatprep.subr.mxu0 0.0
  %2577 = vmatpush2.msra.mxu0 0.0
  %2578 = vmatprep.subr.mxu0 0.0
  %2579 = vmatpush2.msra.mxu0 0.0
  %2580 = vmatprep.subr.mxu0 0.0
  %2581 = vmatpush2.msra.mxu0 0.0
  %2582 = vmatprep.subr.mxu0 0.0
  %2583 = vmatpush2.msra.mxu0 0.0
  %2584 = vmatprep.subr.mxu0 0.0
  %2585 = vmatpush2.msra.mxu0 0.0
  %2586 = vmatprep.subr.mxu0 0.0
  %2587 = vmatpush2.msra.mxu0 0.0
  %2588 = vmatprep.subr.mxu0 0.0
  %2589 = vmatpush2.msra.mxu0 0.0
  %2590 = vmatprep.subr.mxu0 0.0
  %2591 = vmatpush2.msra.mxu0 0.0
  %2592 = vmatprep.subr.mxu0 0.0
  %2593 = vmatpush2.msra.mxu0 0.0
  %2594 = vmatprep.subr.mxu0 0.0
  %2595 = vmatpush2.msra.mxu0 0.0
  %2596 = vmatprep.mubr.f32.mxu0 0.0
  %2597 = vmatmul.mubr.f32.gmra.mxu0 %v2488
  %v2598 = vpop.f32.mrf.mxu0
  %v2599 = vadd.f32 0.0, %v2598
  %v2600 = vpop.f32.mrf.mxu0
  %2601 = vmatprep.mubr.f32.mxu0 0.0
  %2602 = vmatmul.mubr.f32.gmra.mxu0 %v2491
  %v2603 = vpop.f32.mrf.mxu0
  %v2604 = vadd.f32 0.0, %v2603
  %v2605 = vpop.f32.mrf.mxu0
  %2606 = vmatprep.mubr.f32.mxu0 0.0
  %2607 = vmatmul.mubr.f32.gmra.mxu0 %v2494
  %v2608 = vpop.f32.mrf.mxu0
  %v2609 = vadd.f32 0.0, %v2608
  %v2610 = vpop.f32.mrf.mxu0
  %2611 = vmatprep.mubr.f32.mxu0 0.0
  %2612 = vmatmul.mubr.f32.gmra.mxu0 %v2497
  %v2613 = vpop.f32.mrf.mxu0
  %v2614 = vadd.f32 0.0, %v2613
  %v2615 = vpop.f32.mrf.mxu0
  %2616 = vmatprep.mubr.f32.mxu0 0.0
  %2617 = vmatmul.mubr.f32.gmra.mxu0 %v2500
  %v2618 = vpop.f32.mrf.mxu0
  %v2619 = vadd.f32 0.0, %v2618
  %v2620 = vpop.f32.mrf.mxu0
  %2621 = vmatprep.mubr.f32.mxu0 0.0
  %2622 = vmatmul.mubr.f32.gmra.mxu0 %v2503
  %v2623 = vpop.f32.mrf.mxu0
  %v2624 = vadd.f32 0.0, %v2623
  %v2625 = vpop.f32.mrf.mxu0
  %2626 = vmatprep.mubr.f32.mxu0 0.0
  %2627 = vmatmul.mubr.f32.gmra.mxu0 %v2506
  %v2628 = vpop.f32.mrf.mxu0
  %v2629 = vadd.f32 0.0, %v2628
  %v2630 = vpop.f32.mrf.mxu0
  %2631 = vmatprep.mubr.f32.mxu0 0.0
  %2632 = vmatmul.mubr.f32.gmra.mxu0 %v2509
  %v2633 = vpop.f32.mrf.mxu0
  %v2634 = vadd.f32 0.0, %v2633
  %v2635 = vpop.f32.mrf.mxu0
  %2636 = vmatprep.mubr.f32.mxu0 0.0
  %2637 = vmatmul.mubr.f32.gmra.mxu0 %v2512
  %v2638 = vpop.f32.mrf.mxu0
  %v2639 = vadd.f32 0.0, %v2638
  %v2640 = vpop.f32.mrf.mxu0
  %2641 = vmatprep.mubr.f32.mxu0 0.0
  %2642 = vmatmul.mubr.f32.gmra.mxu0 %v2515
  %v2643 = vpop.f32.mrf.mxu0
  %v2644 = vadd.f32 0.0, %v2643
  %v2645 = vpop.f32.mrf.mxu0
  %2646 = vmatprep.mubr.f32.mxu0 0.0
  %2647 = vmatmul.mubr.f32.gmra.mxu0 %v2518
  %v2648 = vpop.f32.mrf.mxu0
  %v2649 = vadd.f32 0.0, %v2648
  %v2650 = vpop.f32.mrf.mxu0
  %2651 = vmatprep.mubr.f32.mxu0 0.0
  %2652 = vmatmul.mubr.f32.gmra.mxu0 %v2521
  %v2653 = vpop.f32.mrf.mxu0
  %v2654 = vadd.f32 0.0, %v2653
  %v2655 = vpop.f32.mrf.mxu0
  %2656 = vmatprep.mubr.f32.mxu0 0.0
  %2657 = vmatmul.mubr.f32.gmra.mxu0 %v2524
  %v2658 = vpop.f32.mrf.mxu0
  %v2659 = vadd.f32 0.0, %v2658
  %v2660 = vpop.f32.mrf.mxu0
  %2661 = vmatprep.mubr.f32.mxu0 0.0
  %2662 = vmatmul.mubr.f32.gmra.mxu0 %v2527
  %v2663 = vpop.f32.mrf.mxu0
  %v2664 = vadd.f32 0.0, %v2663
  %v2665 = vpop.f32.mrf.mxu0
  %2666 = vmatprep.mubr.f32.mxu0 0.0
  %2667 = vmatmul.mubr.f32.gmra.mxu0 %v2530
  %v2668 = vpop.f32.mrf.mxu0
  %v2669 = vadd.f32 0.0, %v2668
  %v2670 = vpop.f32.mrf.mxu0
  %2671 = vdwg.mxu0
  %v2672 = vadd.f32 %v2466, %v2599
  %v2673 = vadd.f32 %v2467, %v2604
  %v2674 = vadd.f32 %v2468, %v2609
  %v2675 = vadd.f32 %v2469, %v2614
  %v2676 = vadd.f32 %v2470, %v2619
  %v2677 = vadd.f32 %v2471, %v2624
  %v2678 = vadd.f32 %v2472, %v2629
  %v2679 = vadd.f32 %v2473, %v2634
  %v2680 = vadd.f32 %v2474, %v2639
  %v2681 = vadd.f32 %v2475, %v2644
  %v2682 = vadd.f32 %v2476, %v2649
  %v2683 = vadd.f32 %v2477, %v2654
  %v2684 = vadd.f32 %v2478, %v2659
  %v2685 = vadd.f32 %v2479, %v2664
  %v2686 = vadd.f32 %v2480, %v2669
  %2687 = vrot.lane.b32.xlu0 %v283, 108
  %v2688 = vpop.permute.xlu0 %2687
  %2689 = vrot.lane.b32.xlu0 %v284, 108
  %v2690 = vpop.permute.xlu0 %2689
  %v2694 = vsel %vm668, %v435, 0
  %v2697 = vsel %vm668, %v436, 0
  %v2700 = vsel %vm668, %v437, 0
  %v2703 = vsel %vm668, %v438, 0
  %v2706 = vsel %vm668, %v439, 0
  %v2709 = vsel %vm668, %v440, 0
  %v2712 = vsel %vm668, %v441, 0
  %v2715 = vsel %vm668, %v442, 0
  %v2718 = vsel %vm668, %v443, 0
  %v2721 = vsel %vm668, %v444, 0
  %v2724 = vsel %vm668, %v445, 0
  %v2727 = vsel %vm668, %v446, 0
  %v2730 = vsel %vm668, %v447, 0
  %v2733 = vsel %vm668, %v448, 0
  %v2736 = vsel %vm668, %v449, 0
  %2738 = vmatprep.subr.mxu0 0.0
  %2739 = vmatpush1.msra.mxu0 0.0
  %2740 = vmatprep.subr.mxu0 0.0
  %2741 = vmatpush1.msra.mxu0 0.0
  %2742 = vmatprep.subr.mxu0 0.0
  %2743 = vmatpush1.msra.mxu0 0.0
  %2744 = vmatprep.subr.mxu0 0.0
  %2745 = vmatpush1.msra.mxu0 0.0
  %2746 = vmatprep.subr.mxu0 0.0
  %2747 = vmatpush1.msra.mxu0 0.0
  %2748 = vmatprep.subr.mxu0 0.0
  %2749 = vmatpush1.msra.mxu0 0.0
  %2750 = vmatprep.subr.mxu0 0.0
  %2751 = vmatpush1.msra.mxu0 0.0
  %2752 = vmatprep.subr.mxu0 0.0
  %2753 = vmatpush1.msra.mxu0 0.0
  %2754 = vmatprep.subr.mxu0 0.0
  %2755 = vmatpush1.msra.mxu0 0.0
  %2756 = vmatprep.subr.mxu0 0.0
  %2757 = vmatpush1.msra.mxu0 0.0
  %2758 = vmatprep.subr.mxu0 0.0
  %2759 = vmatpush1.msra.mxu0 0.0
  %2760 = vmatprep.subr.mxu0 0.0
  %2761 = vmatpush1.msra.mxu0 0.0
  %2762 = vmatprep.subr.mxu0 0.0
  %2763 = vmatpush1.msra.mxu0 0.0
  %2764 = vmatprep.subr.mxu0 0.0
  %2765 = vmatpush1.msra.mxu0 0.0
  %2766 = vmatprep.subr.mxu0 0.0
  %2767 = vmatpush1.msra.mxu0 %v2690
  %2768 = vmatprep.subr.mxu0 0.0
  %2769 = vmatpush1.msra.mxu0 %v2688
  %2770 = vmatprep.subr.mxu0 0.0
  %2771 = vmatpush2.msra.mxu0 0.0
  %2772 = vmatprep.subr.mxu0 0.0
  %2773 = vmatpush2.msra.mxu0 0.0
  %2774 = vmatprep.subr.mxu0 0.0
  %2775 = vmatpush2.msra.mxu0 0.0
  %2776 = vmatprep.subr.mxu0 0.0
  %2777 = vmatpush2.msra.mxu0 0.0
  %2778 = vmatprep.subr.mxu0 0.0
  %2779 = vmatpush2.msra.mxu0 0.0
  %2780 = vmatprep.subr.mxu0 0.0
  %2781 = vmatpush2.msra.mxu0 0.0
  %2782 = vmatprep.subr.mxu0 0.0
  %2783 = vmatpush2.msra.mxu0 0.0
  %2784 = vmatprep.subr.mxu0 0.0
  %2785 = vmatpush2.msra.mxu0 0.0
  %2786 = vmatprep.subr.mxu0 0.0
  %2787 = vmatpush2.msra.mxu0 0.0
  %2788 = vmatprep.subr.mxu0 0.0
  %2789 = vmatpush2.msra.mxu0 0.0
  %2790 = vmatprep.subr.mxu0 0.0
  %2791 = vmatpush2.msra.mxu0 0.0
  %2792 = vmatprep.subr.mxu0 0.0
  %2793 = vmatpush2.msra.mxu0 0.0
  %2794 = vmatprep.subr.mxu0 0.0
  %2795 = vmatpush2.msra.mxu0 0.0
  %2796 = vmatprep.subr.mxu0 0.0
  %2797 = vmatpush2.msra.mxu0 0.0
  %2798 = vmatprep.subr.mxu0 0.0
  %2799 = vmatpush2.msra.mxu0 0.0
  %2800 = vmatprep.subr.mxu0 0.0
  %2801 = vmatpush2.msra.mxu0 0.0
  %2802 = vmatprep.mubr.f32.mxu0 0.0
  %2803 = vmatmul.mubr.f32.gmra.mxu0 %v2694
  %v2804 = vpop.f32.mrf.mxu0
  %v2805 = vadd.f32 0.0, %v2804
  %v2806 = vpop.f32.mrf.mxu0
  %2807 = vmatprep.mubr.f32.mxu0 0.0
  %2808 = vmatmul.mubr.f32.gmra.mxu0 %v2697
  %v2809 = vpop.f32.mrf.mxu0
  %v2810 = vadd.f32 0.0, %v2809
  %v2811 = vpop.f32.mrf.mxu0
  %2812 = vmatprep.mubr.f32.mxu0 0.0
  %2813 = vmatmul.mubr.f32.gmra.mxu0 %v2700
  %v2814 = vpop.f32.mrf.mxu0
  %v2815 = vadd.f32 0.0, %v2814
  %v2816 = vpop.f32.mrf.mxu0
  %2817 = vmatprep.mubr.f32.mxu0 0.0
  %2818 = vmatmul.mubr.f32.gmra.mxu0 %v2703
  %v2819 = vpop.f32.mrf.mxu0
  %v2820 = vadd.f32 0.0, %v2819
  %v2821 = vpop.f32.mrf.mxu0
  %2822 = vmatprep.mubr.f32.mxu0 0.0
  %2823 = vmatmul.mubr.f32.gmra.mxu0 %v2706
  %v2824 = vpop.f32.mrf.mxu0
  %v2825 = vadd.f32 0.0, %v2824
  %v2826 = vpop.f32.mrf.mxu0
  %2827 = vmatprep.mubr.f32.mxu0 0.0
  %2828 = vmatmul.mubr.f32.gmra.mxu0 %v2709
  %v2829 = vpop.f32.mrf.mxu0
  %v2830 = vadd.f32 0.0, %v2829
  %v2831 = vpop.f32.mrf.mxu0
  %2832 = vmatprep.mubr.f32.mxu0 0.0
  %2833 = vmatmul.mubr.f32.gmra.mxu0 %v2712
  %v2834 = vpop.f32.mrf.mxu0
  %v2835 = vadd.f32 0.0, %v2834
  %v2836 = vpop.f32.mrf.mxu0
  %2837 = vmatprep.mubr.f32.mxu0 0.0
  %2838 = vmatmul.mubr.f32.gmra.mxu0 %v2715
  %v2839 = vpop.f32.mrf.mxu0
  %v2840 = vadd.f32 0.0, %v2839
  %v2841 = vpop.f32.mrf.mxu0
  %2842 = vmatprep.mubr.f32.mxu0 0.0
  %2843 = vmatmul.mubr.f32.gmra.mxu0 %v2718
  %v2844 = vpop.f32.mrf.mxu0
  %v2845 = vadd.f32 0.0, %v2844
  %v2846 = vpop.f32.mrf.mxu0
  %2847 = vmatprep.mubr.f32.mxu0 0.0
  %2848 = vmatmul.mubr.f32.gmra.mxu0 %v2721
  %v2849 = vpop.f32.mrf.mxu0
  %v2850 = vadd.f32 0.0, %v2849
  %v2851 = vpop.f32.mrf.mxu0
  %2852 = vmatprep.mubr.f32.mxu0 0.0
  %2853 = vmatmul.mubr.f32.gmra.mxu0 %v2724
  %v2854 = vpop.f32.mrf.mxu0
  %v2855 = vadd.f32 0.0, %v2854
  %v2856 = vpop.f32.mrf.mxu0
  %2857 = vmatprep.mubr.f32.mxu0 0.0
  %2858 = vmatmul.mubr.f32.gmra.mxu0 %v2727
  %v2859 = vpop.f32.mrf.mxu0
  %v2860 = vadd.f32 0.0, %v2859
  %v2861 = vpop.f32.mrf.mxu0
  %2862 = vmatprep.mubr.f32.mxu0 0.0
  %2863 = vmatmul.mubr.f32.gmra.mxu0 %v2730
  %v2864 = vpop.f32.mrf.mxu0
  %v2865 = vadd.f32 0.0, %v2864
  %v2866 = vpop.f32.mrf.mxu0
  %2867 = vmatprep.mubr.f32.mxu0 0.0
  %2868 = vmatmul.mubr.f32.gmra.mxu0 %v2733
  %v2869 = vpop.f32.mrf.mxu0
  %v2870 = vadd.f32 0.0, %v2869
  %v2871 = vpop.f32.mrf.mxu0
  %2872 = vmatprep.mubr.f32.mxu0 0.0
  %2873 = vmatmul.mubr.f32.gmra.mxu0 %v2736
  %v2874 = vpop.f32.mrf.mxu0
  %v2875 = vadd.f32 0.0, %v2874
  %v2876 = vpop.f32.mrf.mxu0
  %2877 = vdwg.mxu0
  %v2878 = vadd.f32 %v2672, %v2805
  %v2879 = vadd.f32 %v2673, %v2810
  %v2880 = vadd.f32 %v2674, %v2815
  %v2881 = vadd.f32 %v2675, %v2820
  %v2882 = vadd.f32 %v2676, %v2825
  %v2883 = vadd.f32 %v2677, %v2830
  %v2884 = vadd.f32 %v2678, %v2835
  %v2885 = vadd.f32 %v2679, %v2840
  %v2886 = vadd.f32 %v2680, %v2845
  %v2887 = vadd.f32 %v2681, %v2850
  %v2888 = vadd.f32 %v2682, %v2855
  %v2889 = vadd.f32 %v2683, %v2860
  %v2890 = vadd.f32 %v2684, %v2865
  %v2891 = vadd.f32 %v2685, %v2870
  %v2892 = vadd.f32 %v2686, %v2875
  %2893 = vrot.lane.b32.xlu0 %v283, 106
  %v2894 = vpop.permute.xlu0 %2893
  %2895 = vrot.lane.b32.xlu0 %v284, 106
  %v2896 = vpop.permute.xlu0 %2895
  %v2900 = vsel %vm668, %v450, 0
  %v2903 = vsel %vm668, %v451, 0
  %v2906 = vsel %vm668, %v452, 0
  %v2909 = vsel %vm668, %v453, 0
  %v2912 = vsel %vm668, %v454, 0
  %v2915 = vsel %vm668, %v455, 0
  %v2918 = vsel %vm668, %v456, 0
  %v2921 = vsel %vm668, %v457, 0
  %v2924 = vsel %vm668, %v458, 0
  %v2927 = vsel %vm668, %v459, 0
  %v2930 = vsel %vm668, %v460, 0
  %v2933 = vsel %vm668, %v461, 0
  %v2936 = vsel %vm668, %v462, 0
  %v2939 = vsel %vm668, %v463, 0
  %v2942 = vsel %vm668, %v464, 0
  %2944 = vmatprep.subr.mxu0 0.0
  %2945 = vmatpush1.msra.mxu0 0.0
  %2946 = vmatprep.subr.mxu0 0.0
  %2947 = vmatpush1.msra.mxu0 0.0
  %2948 = vmatprep.subr.mxu0 0.0
  %2949 = vmatpush1.msra.mxu0 0.0
  %2950 = vmatprep.subr.mxu0 0.0
  %2951 = vmatpush1.msra.mxu0 0.0
  %2952 = vmatprep.subr.mxu0 0.0
  %2953 = vmatpush1.msra.mxu0 0.0
  %2954 = vmatprep.subr.mxu0 0.0
  %2955 = vmatpush1.msra.mxu0 0.0
  %2956 = vmatprep.subr.mxu0 0.0
  %2957 = vmatpush1.msra.mxu0 0.0
  %2958 = vmatprep.subr.mxu0 0.0
  %2959 = vmatpush1.msra.mxu0 0.0
  %2960 = vmatprep.subr.mxu0 0.0
  %2961 = vmatpush1.msra.mxu0 0.0
  %2962 = vmatprep.subr.mxu0 0.0
  %2963 = vmatpush1.msra.mxu0 0.0
  %2964 = vmatprep.subr.mxu0 0.0
  %2965 = vmatpush1.msra.mxu0 0.0
  %2966 = vmatprep.subr.mxu0 0.0
  %2967 = vmatpush1.msra.mxu0 0.0
  %2968 = vmatprep.subr.mxu0 0.0
  %2969 = vmatpush1.msra.mxu0 0.0
  %2970 = vmatprep.subr.mxu0 0.0
  %2971 = vmatpush1.msra.mxu0 0.0
  %2972 = vmatprep.subr.mxu0 0.0
  %2973 = vmatpush1.msra.mxu0 %v2896
  %2974 = vmatprep.subr.mxu0 0.0
  %2975 = vmatpush1.msra.mxu0 %v2894
  %2976 = vmatprep.subr.mxu0 0.0
  %2977 = vmatpush2.msra.mxu0 0.0
  %2978 = vmatprep.subr.mxu0 0.0
  %2979 = vmatpush2.msra.mxu0 0.0
  %2980 = vmatprep.subr.mxu0 0.0
  %2981 = vmatpush2.msra.mxu0 0.0
  %2982 = vmatprep.subr.mxu0 0.0
  %2983 = vmatpush2.msra.mxu0 0.0
  %2984 = vmatprep.subr.mxu0 0.0
  %2985 = vmatpush2.msra.mxu0 0.0
  %2986 = vmatprep.subr.mxu0 0.0
  %2987 = vmatpush2.msra.mxu0 0.0
  %2988 = vmatprep.subr.mxu0 0.0
  %2989 = vmatpush2.msra.mxu0 0.0
  %2990 = vmatprep.subr.mxu0 0.0
  %2991 = vmatpush2.msra.mxu0 0.0
  %2992 = vmatprep.subr.mxu0 0.0
  %2993 = vmatpush2.msra.mxu0 0.0
  %2994 = vmatprep.subr.mxu0 0.0
  %2995 = vmatpush2.msra.mxu0 0.0
  %2996 = vmatprep.subr.mxu0 0.0
  %2997 = vmatpush2.msra.mxu0 0.0
  %2998 = vmatprep.subr.mxu0 0.0
  %2999 = vmatpush2.msra.mxu0 0.0
  %3000 = vmatprep.subr.mxu0 0.0
  %3001 = vmatpush2.msra.mxu0 0.0
  %3002 = vmatprep.subr.mxu0 0.0
  %3003 = vmatpush2.msra.mxu0 0.0
  %3004 = vmatprep.subr.mxu0 0.0
  %3005 = vmatpush2.msra.mxu0 0.0
  %3006 = vmatprep.subr.mxu0 0.0
  %3007 = vmatpush2.msra.mxu0 0.0
  %3008 = vmatprep.mubr.f32.mxu0 0.0
  %3009 = vmatmul.mubr.f32.gmra.mxu0 %v2900
  %v3010 = vpop.f32.mrf.mxu0
  %v3011 = vadd.f32 0.0, %v3010
  %v3012 = vpop.f32.mrf.mxu0
  %3013 = vmatprep.mubr.f32.mxu0 0.0
  %3014 = vmatmul.mubr.f32.gmra.mxu0 %v2903
  %v3015 = vpop.f32.mrf.mxu0
  %v3016 = vadd.f32 0.0, %v3015
  %v3017 = vpop.f32.mrf.mxu0
  %3018 = vmatprep.mubr.f32.mxu0 0.0
  %3019 = vmatmul.mubr.f32.gmra.mxu0 %v2906
  %v3020 = vpop.f32.mrf.mxu0
  %v3021 = vadd.f32 0.0, %v3020
  %v3022 = vpop.f32.mrf.mxu0
  %3023 = vmatprep.mubr.f32.mxu0 0.0
  %3024 = vmatmul.mubr.f32.gmra.mxu0 %v2909
  %v3025 = vpop.f32.mrf.mxu0
  %v3026 = vadd.f32 0.0, %v3025
  %v3027 = vpop.f32.mrf.mxu0
  %3028 = vmatprep.mubr.f32.mxu0 0.0
  %3029 = vmatmul.mubr.f32.gmra.mxu0 %v2912
  %v3030 = vpop.f32.mrf.mxu0
  %v3031 = vadd.f32 0.0, %v3030
  %v3032 = vpop.f32.mrf.mxu0
  %3033 = vmatprep.mubr.f32.mxu0 0.0
  %3034 = vmatmul.mubr.f32.gmra.mxu0 %v2915
  %v3035 = vpop.f32.mrf.mxu0
  %v3036 = vadd.f32 0.0, %v3035
  %v3037 = vpop.f32.mrf.mxu0
  %3038 = vmatprep.mubr.f32.mxu0 0.0
  %3039 = vmatmul.mubr.f32.gmra.mxu0 %v2918
  %v3040 = vpop.f32.mrf.mxu0
  %v3041 = vadd.f32 0.0, %v3040
  %v3042 = vpop.f32.mrf.mxu0
  %3043 = vmatprep.mubr.f32.mxu0 0.0
  %3044 = vmatmul.mubr.f32.gmra.mxu0 %v2921
  %v3045 = vpop.f32.mrf.mxu0
  %v3046 = vadd.f32 0.0, %v3045
  %v3047 = vpop.f32.mrf.mxu0
  %3048 = vmatprep.mubr.f32.mxu0 0.0
  %3049 = vmatmul.mubr.f32.gmra.mxu0 %v2924
  %v3050 = vpop.f32.mrf.mxu0
  %v3051 = vadd.f32 0.0, %v3050
  %v3052 = vpop.f32.mrf.mxu0
  %3053 = vmatprep.mubr.f32.mxu0 0.0
  %3054 = vmatmul.mubr.f32.gmra.mxu0 %v2927
  %v3055 = vpop.f32.mrf.mxu0
  %v3056 = vadd.f32 0.0, %v3055
  %v3057 = vpop.f32.mrf.mxu0
  %3058 = vmatprep.mubr.f32.mxu0 0.0
  %3059 = vmatmul.mubr.f32.gmra.mxu0 %v2930
  %v3060 = vpop.f32.mrf.mxu0
  %v3061 = vadd.f32 0.0, %v3060
  %v3062 = vpop.f32.mrf.mxu0
  %3063 = vmatprep.mubr.f32.mxu0 0.0
  %3064 = vmatmul.mubr.f32.gmra.mxu0 %v2933
  %v3065 = vpop.f32.mrf.mxu0
  %v3066 = vadd.f32 0.0, %v3065
  %v3067 = vpop.f32.mrf.mxu0
  %3068 = vmatprep.mubr.f32.mxu0 0.0
  %3069 = vmatmul.mubr.f32.gmra.mxu0 %v2936
  %v3070 = vpop.f32.mrf.mxu0
  %v3071 = vadd.f32 0.0, %v3070
  %v3072 = vpop.f32.mrf.mxu0
  %3073 = vmatprep.mubr.f32.mxu0 0.0
  %3074 = vmatmul.mubr.f32.gmra.mxu0 %v2939
  %v3075 = vpop.f32.mrf.mxu0
  %v3076 = vadd.f32 0.0, %v3075
  %v3077 = vpop.f32.mrf.mxu0
  %3078 = vmatprep.mubr.f32.mxu0 0.0
  %3079 = vmatmul.mubr.f32.gmra.mxu0 %v2942
  %v3080 = vpop.f32.mrf.mxu0
  %v3081 = vadd.f32 0.0, %v3080
  %v3082 = vpop.f32.mrf.mxu0
  %3083 = vdwg.mxu0
  %v3084 = vadd.f32 %v2878, %v3011
  %v3085 = vadd.f32 %v2879, %v3016
  %v3086 = vadd.f32 %v2880, %v3021
  %v3087 = vadd.f32 %v2881, %v3026
  %v3088 = vadd.f32 %v2882, %v3031
  %v3089 = vadd.f32 %v2883, %v3036
  %v3090 = vadd.f32 %v2884, %v3041
  %v3091 = vadd.f32 %v2885, %v3046
  %v3092 = vadd.f32 %v2886, %v3051
  %v3093 = vadd.f32 %v2887, %v3056
  %v3094 = vadd.f32 %v2888, %v3061
  %v3095 = vadd.f32 %v2889, %v3066
  %v3096 = vadd.f32 %v2890, %v3071
  %v3097 = vadd.f32 %v2891, %v3076
  %v3098 = vadd.f32 %v2892, %v3081
  %3099 = vrot.lane.b32.xlu0 %v283, 104
  %v3100 = vpop.permute.xlu0 %3099
  %3101 = vrot.lane.b32.xlu0 %v284, 104
  %v3102 = vpop.permute.xlu0 %3101
  %v3106 = vsel %vm668, %v465, 0
  %v3109 = vsel %vm668, %v466, 0
  %v3112 = vsel %vm668, %v467, 0
  %v3115 = vsel %vm668, %v468, 0
  %v3118 = vsel %vm668, %v469, 0
  %v3121 = vsel %vm668, %v470, 0
  %v3124 = vsel %vm668, %v471, 0
  %v3127 = vsel %vm668, %v472, 0
  %v3130 = vsel %vm668, %v473, 0
  %v3133 = vsel %vm668, %v474, 0
  %v3136 = vsel %vm668, %v475, 0
  %v3139 = vsel %vm668, %v476, 0
  %v3142 = vsel %vm668, %v477, 0
  %v3145 = vsel %vm668, %v478, 0
  %v3148 = vsel %vm668, %v479, 0
  %3150 = vmatprep.subr.mxu0 0.0
  %3151 = vmatpush1.msra.mxu0 0.0
  %3152 = vmatprep.subr.mxu0 0.0
  %3153 = vmatpush1.msra.mxu0 0.0
  %3154 = vmatprep.subr.mxu0 0.0
  %3155 = vmatpush1.msra.mxu0 0.0
  %3156 = vmatprep.subr.mxu0 0.0
  %3157 = vmatpush1.msra.mxu0 0.0
  %3158 = vmatprep.subr.mxu0 0.0
  %3159 = vmatpush1.msra.mxu0 0.0
  %3160 = vmatprep.subr.mxu0 0.0
  %3161 = vmatpush1.msra.mxu0 0.0
  %3162 = vmatprep.subr.mxu0 0.0
  %3163 = vmatpush1.msra.mxu0 0.0
  %3164 = vmatprep.subr.mxu0 0.0
  %3165 = vmatpush1.msra.mxu0 0.0
  %3166 = vmatprep.subr.mxu0 0.0
  %3167 = vmatpush1.msra.mxu0 0.0
  %3168 = vmatprep.subr.mxu0 0.0
  %3169 = vmatpush1.msra.mxu0 0.0
  %3170 = vmatprep.subr.mxu0 0.0
  %3171 = vmatpush1.msra.mxu0 0.0
  %3172 = vmatprep.subr.mxu0 0.0
  %3173 = vmatpush1.msra.mxu0 0.0
  %3174 = vmatprep.subr.mxu0 0.0
  %3175 = vmatpush1.msra.mxu0 0.0
  %3176 = vmatprep.subr.mxu0 0.0
  %3177 = vmatpush1.msra.mxu0 0.0
  %3178 = vmatprep.subr.mxu0 0.0
  %3179 = vmatpush1.msra.mxu0 %v3102
  %3180 = vmatprep.subr.mxu0 0.0
  %3181 = vmatpush1.msra.mxu0 %v3100
  %3182 = vmatprep.subr.mxu0 0.0
  %3183 = vmatpush2.msra.mxu0 0.0
  %3184 = vmatprep.subr.mxu0 0.0
  %3185 = vmatpush2.msra.mxu0 0.0
  %3186 = vmatprep.subr.mxu0 0.0
  %3187 = vmatpush2.msra.mxu0 0.0
  %3188 = vmatprep.subr.mxu0 0.0
  %3189 = vmatpush2.msra.mxu0 0.0
  %3190 = vmatprep.subr.mxu0 0.0
  %3191 = vmatpush2.msra.mxu0 0.0
  %3192 = vmatprep.subr.mxu0 0.0
  %3193 = vmatpush2.msra.mxu0 0.0
  %3194 = vmatprep.subr.mxu0 0.0
  %3195 = vmatpush2.msra.mxu0 0.0
  %3196 = vmatprep.subr.mxu0 0.0
  %3197 = vmatpush2.msra.mxu0 0.0
  %3198 = vmatprep.subr.mxu0 0.0
  %3199 = vmatpush2.msra.mxu0 0.0
  %3200 = vmatprep.subr.mxu0 0.0
  %3201 = vmatpush2.msra.mxu0 0.0
  %3202 = vmatprep.subr.mxu0 0.0
  %3203 = vmatpush2.msra.mxu0 0.0
  %3204 = vmatprep.subr.mxu0 0.0
  %3205 = vmatpush2.msra.mxu0 0.0
  %3206 = vmatprep.subr.mxu0 0.0
  %3207 = vmatpush2.msra.mxu0 0.0
  %3208 = vmatprep.subr.mxu0 0.0
  %3209 = vmatpush2.msra.mxu0 0.0
  %3210 = vmatprep.subr.mxu0 0.0
  %3211 = vmatpush2.msra.mxu0 0.0
  %3212 = vmatprep.subr.mxu0 0.0
  %3213 = vmatpush2.msra.mxu0 0.0
  %3214 = vmatprep.mubr.f32.mxu0 0.0
  %3215 = vmatmul.mubr.f32.gmra.mxu0 %v3106
  %v3216 = vpop.f32.mrf.mxu0
  %v3217 = vadd.f32 0.0, %v3216
  %v3218 = vpop.f32.mrf.mxu0
  %3219 = vmatprep.mubr.f32.mxu0 0.0
  %3220 = vmatmul.mubr.f32.gmra.mxu0 %v3109
  %v3221 = vpop.f32.mrf.mxu0
  %v3222 = vadd.f32 0.0, %v3221
  %v3223 = vpop.f32.mrf.mxu0
  %3224 = vmatprep.mubr.f32.mxu0 0.0
  %3225 = vmatmul.mubr.f32.gmra.mxu0 %v3112
  %v3226 = vpop.f32.mrf.mxu0
  %v3227 = vadd.f32 0.0, %v3226
  %v3228 = vpop.f32.mrf.mxu0
  %3229 = vmatprep.mubr.f32.mxu0 0.0
  %3230 = vmatmul.mubr.f32.gmra.mxu0 %v3115
  %v3231 = vpop.f32.mrf.mxu0
  %v3232 = vadd.f32 0.0, %v3231
  %v3233 = vpop.f32.mrf.mxu0
  %3234 = vmatprep.mubr.f32.mxu0 0.0
  %3235 = vmatmul.mubr.f32.gmra.mxu0 %v3118
  %v3236 = vpop.f32.mrf.mxu0
  %v3237 = vadd.f32 0.0, %v3236
  %v3238 = vpop.f32.mrf.mxu0
  %3239 = vmatprep.mubr.f32.mxu0 0.0
  %3240 = vmatmul.mubr.f32.gmra.mxu0 %v3121
  %v3241 = vpop.f32.mrf.mxu0
  %v3242 = vadd.f32 0.0, %v3241
  %v3243 = vpop.f32.mrf.mxu0
  %3244 = vmatprep.mubr.f32.mxu0 0.0
  %3245 = vmatmul.mubr.f32.gmra.mxu0 %v3124
  %v3246 = vpop.f32.mrf.mxu0
  %v3247 = vadd.f32 0.0, %v3246
  %v3248 = vpop.f32.mrf.mxu0
  %3249 = vmatprep.mubr.f32.mxu0 0.0
  %3250 = vmatmul.mubr.f32.gmra.mxu0 %v3127
  %v3251 = vpop.f32.mrf.mxu0
  %v3252 = vadd.f32 0.0, %v3251
  %v3253 = vpop.f32.mrf.mxu0
  %3254 = vmatprep.mubr.f32.mxu0 0.0
  %3255 = vmatmul.mubr.f32.gmra.mxu0 %v3130
  %v3256 = vpop.f32.mrf.mxu0
  %v3257 = vadd.f32 0.0, %v3256
  %v3258 = vpop.f32.mrf.mxu0
  %3259 = vmatprep.mubr.f32.mxu0 0.0
  %3260 = vmatmul.mubr.f32.gmra.mxu0 %v3133
  %v3261 = vpop.f32.mrf.mxu0
  %v3262 = vadd.f32 0.0, %v3261
  %v3263 = vpop.f32.mrf.mxu0
  %3264 = vmatprep.mubr.f32.mxu0 0.0
  %3265 = vmatmul.mubr.f32.gmra.mxu0 %v3136
  %v3266 = vpop.f32.mrf.mxu0
  %v3267 = vadd.f32 0.0, %v3266
  %v3268 = vpop.f32.mrf.mxu0
  %3269 = vmatprep.mubr.f32.mxu0 0.0
  %3270 = vmatmul.mubr.f32.gmra.mxu0 %v3139
  %v3271 = vpop.f32.mrf.mxu0
  %v3272 = vadd.f32 0.0, %v3271
  %v3273 = vpop.f32.mrf.mxu0
  %3274 = vmatprep.mubr.f32.mxu0 0.0
  %3275 = vmatmul.mubr.f32.gmra.mxu0 %v3142
  %v3276 = vpop.f32.mrf.mxu0
  %v3277 = vadd.f32 0.0, %v3276
  %v3278 = vpop.f32.mrf.mxu0
  %3279 = vmatprep.mubr.f32.mxu0 0.0
  %3280 = vmatmul.mubr.f32.gmra.mxu0 %v3145
  %v3281 = vpop.f32.mrf.mxu0
  %v3282 = vadd.f32 0.0, %v3281
  %v3283 = vpop.f32.mrf.mxu0
  %3284 = vmatprep.mubr.f32.mxu0 0.0
  %3285 = vmatmul.mubr.f32.gmra.mxu0 %v3148
  %v3286 = vpop.f32.mrf.mxu0
  %v3287 = vadd.f32 0.0, %v3286
  %v3288 = vpop.f32.mrf.mxu0
  %3289 = vdwg.mxu0
  %v3290 = vadd.f32 %v3084, %v3217
  %v3291 = vadd.f32 %v3085, %v3222
  %v3292 = vadd.f32 %v3086, %v3227
  %v3293 = vadd.f32 %v3087, %v3232
  %v3294 = vadd.f32 %v3088, %v3237
  %v3295 = vadd.f32 %v3089, %v3242
  %v3296 = vadd.f32 %v3090, %v3247
  %v3297 = vadd.f32 %v3091, %v3252
  %v3298 = vadd.f32 %v3092, %v3257
  %v3299 = vadd.f32 %v3093, %v3262
  %v3300 = vadd.f32 %v3094, %v3267
  %v3301 = vadd.f32 %v3095, %v3272
  %v3302 = vadd.f32 %v3096, %v3277
  %v3303 = vadd.f32 %v3097, %v3282
  %v3304 = vadd.f32 %v3098, %v3287
  %3305 = vrot.lane.b32.xlu0 %v283, 102
  %v3306 = vpop.permute.xlu0 %3305
  %3307 = vrot.lane.b32.xlu0 %v284, 102
  %v3308 = vpop.permute.xlu0 %3307
  %v3312 = vsel %vm668, %v480, 0
  %v3315 = vsel %vm668, %v481, 0
  %v3318 = vsel %vm668, %v482, 0
  %v3321 = vsel %vm668, %v483, 0
  %v3324 = vsel %vm668, %v484, 0
  %v3327 = vsel %vm668, %v485, 0
  %v3330 = vsel %vm668, %v486, 0
  %v3333 = vsel %vm668, %v487, 0
  %v3336 = vsel %vm668, %v488, 0
  %v3339 = vsel %vm668, %v489, 0
  %v3342 = vsel %vm668, %v490, 0
  %v3345 = vsel %vm668, %v491, 0
  %v3348 = vsel %vm668, %v492, 0
  %v3351 = vsel %vm668, %v493, 0
  %v3354 = vsel %vm668, %v494, 0
  %3356 = vmatprep.subr.mxu0 0.0
  %3357 = vmatpush1.msra.mxu0 0.0
  %3358 = vmatprep.subr.mxu0 0.0
  %3359 = vmatpush1.msra.mxu0 0.0
  %3360 = vmatprep.subr.mxu0 0.0
  %3361 = vmatpush1.msra.mxu0 0.0
  %3362 = vmatprep.subr.mxu0 0.0
  %3363 = vmatpush1.msra.mxu0 0.0
  %3364 = vmatprep.subr.mxu0 0.0
  %3365 = vmatpush1.msra.mxu0 0.0
  %3366 = vmatprep.subr.mxu0 0.0
  %3367 = vmatpush1.msra.mxu0 0.0
  %3368 = vmatprep.subr.mxu0 0.0
  %3369 = vmatpush1.msra.mxu0 0.0
  %3370 = vmatprep.subr.mxu0 0.0
  %3371 = vmatpush1.msra.mxu0 0.0
  %3372 = vmatprep.subr.mxu0 0.0
  %3373 = vmatpush1.msra.mxu0 0.0
  %3374 = vmatprep.subr.mxu0 0.0
  %3375 = vmatpush1.msra.mxu0 0.0
  %3376 = vmatprep.subr.mxu0 0.0
  %3377 = vmatpush1.msra.mxu0 0.0
  %3378 = vmatprep.subr.mxu0 0.0
  %3379 = vmatpush1.msra.mxu0 0.0
  %3380 = vmatprep.subr.mxu0 0.0
  %3381 = vmatpush1.msra.mxu0 0.0
  %3382 = vmatprep.subr.mxu0 0.0
  %3383 = vmatpush1.msra.mxu0 0.0
  %3384 = vmatprep.subr.mxu0 0.0
  %3385 = vmatpush1.msra.mxu0 %v3308
  %3386 = vmatprep.subr.mxu0 0.0
  %3387 = vmatpush1.msra.mxu0 %v3306
  %3388 = vmatprep.subr.mxu0 0.0
  %3389 = vmatpush2.msra.mxu0 0.0
  %3390 = vmatprep.subr.mxu0 0.0
  %3391 = vmatpush2.msra.mxu0 0.0
  %3392 = vmatprep.subr.mxu0 0.0
  %3393 = vmatpush2.msra.mxu0 0.0
  %3394 = vmatprep.subr.mxu0 0.0
  %3395 = vmatpush2.msra.mxu0 0.0
  %3396 = vmatprep.subr.mxu0 0.0
  %3397 = vmatpush2.msra.mxu0 0.0
  %3398 = vmatprep.subr.mxu0 0.0
  %3399 = vmatpush2.msra.mxu0 0.0
  %3400 = vmatprep.subr.mxu0 0.0
  %3401 = vmatpush2.msra.mxu0 0.0
  %3402 = vmatprep.subr.mxu0 0.0
  %3403 = vmatpush2.msra.mxu0 0.0
  %3404 = vmatprep.subr.mxu0 0.0
  %3405 = vmatpush2.msra.mxu0 0.0
  %3406 = vmatprep.subr.mxu0 0.0
  %3407 = vmatpush2.msra.mxu0 0.0
  %3408 = vmatprep.subr.mxu0 0.0
  %3409 = vmatpush2.msra.mxu0 0.0
  %3410 = vmatprep.subr.mxu0 0.0
  %3411 = vmatpush2.msra.mxu0 0.0
  %3412 = vmatprep.subr.mxu0 0.0
  %3413 = vmatpush2.msra.mxu0 0.0
  %3414 = vmatprep.subr.mxu0 0.0
  %3415 = vmatpush2.msra.mxu0 0.0
  %3416 = vmatprep.subr.mxu0 0.0
  %3417 = vmatpush2.msra.mxu0 0.0
  %3418 = vmatprep.subr.mxu0 0.0
  %3419 = vmatpush2.msra.mxu0 0.0
  %3420 = vmatprep.mubr.f32.mxu0 0.0
  %3421 = vmatmul.mubr.f32.gmra.mxu0 %v3312
  %v3422 = vpop.f32.mrf.mxu0
  %v3423 = vadd.f32 0.0, %v3422
  %v3424 = vpop.f32.mrf.mxu0
  %3425 = vmatprep.mubr.f32.mxu0 0.0
  %3426 = vmatmul.mubr.f32.gmra.mxu0 %v3315
  %v3427 = vpop.f32.mrf.mxu0
  %v3428 = vadd.f32 0.0, %v3427
  %v3429 = vpop.f32.mrf.mxu0
  %3430 = vmatprep.mubr.f32.mxu0 0.0
  %3431 = vmatmul.mubr.f32.gmra.mxu0 %v3318
  %v3432 = vpop.f32.mrf.mxu0
  %v3433 = vadd.f32 0.0, %v3432
  %v3434 = vpop.f32.mrf.mxu0
  %3435 = vmatprep.mubr.f32.mxu0 0.0
  %3436 = vmatmul.mubr.f32.gmra.mxu0 %v3321
  %v3437 = vpop.f32.mrf.mxu0
  %v3438 = vadd.f32 0.0, %v3437
  %v3439 = vpop.f32.mrf.mxu0
  %3440 = vmatprep.mubr.f32.mxu0 0.0
  %3441 = vmatmul.mubr.f32.gmra.mxu0 %v3324
  %v3442 = vpop.f32.mrf.mxu0
  %v3443 = vadd.f32 0.0, %v3442
  %v3444 = vpop.f32.mrf.mxu0
  %3445 = vmatprep.mubr.f32.mxu0 0.0
  %3446 = vmatmul.mubr.f32.gmra.mxu0 %v3327
  %v3447 = vpop.f32.mrf.mxu0
  %v3448 = vadd.f32 0.0, %v3447
  %v3449 = vpop.f32.mrf.mxu0
  %3450 = vmatprep.mubr.f32.mxu0 0.0
  %3451 = vmatmul.mubr.f32.gmra.mxu0 %v3330
  %v3452 = vpop.f32.mrf.mxu0
  %v3453 = vadd.f32 0.0, %v3452
  %v3454 = vpop.f32.mrf.mxu0
  %3455 = vmatprep.mubr.f32.mxu0 0.0
  %3456 = vmatmul.mubr.f32.gmra.mxu0 %v3333
  %v3457 = vpop.f32.mrf.mxu0
  %v3458 = vadd.f32 0.0, %v3457
  %v3459 = vpop.f32.mrf.mxu0
  %3460 = vmatprep.mubr.f32.mxu0 0.0
  %3461 = vmatmul.mubr.f32.gmra.mxu0 %v3336
  %v3462 = vpop.f32.mrf.mxu0
  %v3463 = vadd.f32 0.0, %v3462
  %v3464 = vpop.f32.mrf.mxu0
  %3465 = vmatprep.mubr.f32.mxu0 0.0
  %3466 = vmatmul.mubr.f32.gmra.mxu0 %v3339
  %v3467 = vpop.f32.mrf.mxu0
  %v3468 = vadd.f32 0.0, %v3467
  %v3469 = vpop.f32.mrf.mxu0
  %3470 = vmatprep.mubr.f32.mxu0 0.0
  %3471 = vmatmul.mubr.f32.gmra.mxu0 %v3342
  %v3472 = vpop.f32.mrf.mxu0
  %v3473 = vadd.f32 0.0, %v3472
  %v3474 = vpop.f32.mrf.mxu0
  %3475 = vmatprep.mubr.f32.mxu0 0.0
  %3476 = vmatmul.mubr.f32.gmra.mxu0 %v3345
  %v3477 = vpop.f32.mrf.mxu0
  %v3478 = vadd.f32 0.0, %v3477
  %v3479 = vpop.f32.mrf.mxu0
  %3480 = vmatprep.mubr.f32.mxu0 0.0
  %3481 = vmatmul.mubr.f32.gmra.mxu0 %v3348
  %v3482 = vpop.f32.mrf.mxu0
  %v3483 = vadd.f32 0.0, %v3482
  %v3484 = vpop.f32.mrf.mxu0
  %3485 = vmatprep.mubr.f32.mxu0 0.0
  %3486 = vmatmul.mubr.f32.gmra.mxu0 %v3351
  %v3487 = vpop.f32.mrf.mxu0
  %v3488 = vadd.f32 0.0, %v3487
  %v3489 = vpop.f32.mrf.mxu0
  %3490 = vmatprep.mubr.f32.mxu0 0.0
  %3491 = vmatmul.mubr.f32.gmra.mxu0 %v3354
  %v3492 = vpop.f32.mrf.mxu0
  %v3493 = vadd.f32 0.0, %v3492
  %v3494 = vpop.f32.mrf.mxu0
  %3495 = vdwg.mxu0
  %v3496 = vadd.f32 %v3290, %v3423
  %v3497 = vadd.f32 %v3291, %v3428
  %v3498 = vadd.f32 %v3292, %v3433
  %v3499 = vadd.f32 %v3293, %v3438
  %v3500 = vadd.f32 %v3294, %v3443
  %v3501 = vadd.f32 %v3295, %v3448
  %v3502 = vadd.f32 %v3296, %v3453
  %v3503 = vadd.f32 %v3297, %v3458
  %v3504 = vadd.f32 %v3298, %v3463
  %v3505 = vadd.f32 %v3299, %v3468
  %v3506 = vadd.f32 %v3300, %v3473
  %v3507 = vadd.f32 %v3301, %v3478
  %v3508 = vadd.f32 %v3302, %v3483
  %v3509 = vadd.f32 %v3303, %v3488
  %v3510 = vadd.f32 %v3304, %v3493
  %3511 = vrot.lane.b32.xlu0 %v283, 100
  %v3512 = vpop.permute.xlu0 %3511
  %3513 = vrot.lane.b32.xlu0 %v284, 100
  %v3514 = vpop.permute.xlu0 %3513
  %v3518 = vsel %vm668, %v495, 0
  %v3521 = vsel %vm668, %v496, 0
  %v3524 = vsel %vm668, %v497, 0
  %v3527 = vsel %vm668, %v498, 0
  %v3530 = vsel %vm668, %v499, 0
  %v3533 = vsel %vm668, %v500, 0
  %v3536 = vsel %vm668, %v501, 0
  %v3539 = vsel %vm668, %v502, 0
  %v3542 = vsel %vm668, %v503, 0
  %v3545 = vsel %vm668, %v504, 0
  %v3548 = vsel %vm668, %v505, 0
  %v3551 = vsel %vm668, %v506, 0
  %v3554 = vsel %vm668, %v507, 0
  %v3557 = vsel %vm668, %v508, 0
  %v3560 = vsel %vm668, %v509, 0
  %3562 = vmatprep.subr.mxu0 0.0
  %3563 = vmatpush1.msra.mxu0 0.0
  %3564 = vmatprep.subr.mxu0 0.0
  %3565 = vmatpush1.msra.mxu0 0.0
  %3566 = vmatprep.subr.mxu0 0.0
  %3567 = vmatpush1.msra.mxu0 0.0
  %3568 = vmatprep.subr.mxu0 0.0
  %3569 = vmatpush1.msra.mxu0 0.0
  %3570 = vmatprep.subr.mxu0 0.0
  %3571 = vmatpush1.msra.mxu0 0.0
  %3572 = vmatprep.subr.mxu0 0.0
  %3573 = vmatpush1.msra.mxu0 0.0
  %3574 = vmatprep.subr.mxu0 0.0
  %3575 = vmatpush1.msra.mxu0 0.0
  %3576 = vmatprep.subr.mxu0 0.0
  %3577 = vmatpush1.msra.mxu0 0.0
  %3578 = vmatprep.subr.mxu0 0.0
  %3579 = vmatpush1.msra.mxu0 0.0
  %3580 = vmatprep.subr.mxu0 0.0
  %3581 = vmatpush1.msra.mxu0 0.0
  %3582 = vmatprep.subr.mxu0 0.0
  %3583 = vmatpush1.msra.mxu0 0.0
  %3584 = vmatprep.subr.mxu0 0.0
  %3585 = vmatpush1.msra.mxu0 0.0
  %3586 = vmatprep.subr.mxu0 0.0
  %3587 = vmatpush1.msra.mxu0 0.0
  %3588 = vmatprep.subr.mxu0 0.0
  %3589 = vmatpush1.msra.mxu0 0.0
  %3590 = vmatprep.subr.mxu0 0.0
  %3591 = vmatpush1.msra.mxu0 %v3514
  %3592 = vmatprep.subr.mxu0 0.0
  %3593 = vmatpush1.msra.mxu0 %v3512
  %3594 = vmatprep.subr.mxu0 0.0
  %3595 = vmatpush2.msra.mxu0 0.0
  %3596 = vmatprep.subr.mxu0 0.0
  %3597 = vmatpush2.msra.mxu0 0.0
  %3598 = vmatprep.subr.mxu0 0.0
  %3599 = vmatpush2.msra.mxu0 0.0
  %3600 = vmatprep.subr.mxu0 0.0
  %3601 = vmatpush2.msra.mxu0 0.0
  %3602 = vmatprep.subr.mxu0 0.0
  %3603 = vmatpush2.msra.mxu0 0.0
  %3604 = vmatprep.subr.mxu0 0.0
  %3605 = vmatpush2.msra.mxu0 0.0
  %3606 = vmatprep.subr.mxu0 0.0
  %3607 = vmatpush2.msra.mxu0 0.0
  %3608 = vmatprep.subr.mxu0 0.0
  %3609 = vmatpush2.msra.mxu0 0.0
  %3610 = vmatprep.subr.mxu0 0.0
  %3611 = vmatpush2.msra.mxu0 0.0
  %3612 = vmatprep.subr.mxu0 0.0
  %3613 = vmatpush2.msra.mxu0 0.0
  %3614 = vmatprep.subr.mxu0 0.0
  %3615 = vmatpush2.msra.mxu0 0.0
  %3616 = vmatprep.subr.mxu0 0.0
  %3617 = vmatpush2.msra.mxu0 0.0
  %3618 = vmatprep.subr.mxu0 0.0
  %3619 = vmatpush2.msra.mxu0 0.0
  %3620 = vmatprep.subr.mxu0 0.0
  %3621 = vmatpush2.msra.mxu0 0.0
  %3622 = vmatprep.subr.mxu0 0.0
  %3623 = vmatpush2.msra.mxu0 0.0
  %3624 = vmatprep.subr.mxu0 0.0
  %3625 = vmatpush2.msra.mxu0 0.0
  %3626 = vmatprep.mubr.f32.mxu0 0.0
  %3627 = vmatmul.mubr.f32.gmra.mxu0 %v3518
  %v3628 = vpop.f32.mrf.mxu0
  %v3629 = vadd.f32 0.0, %v3628
  %v3630 = vpop.f32.mrf.mxu0
  %3631 = vmatprep.mubr.f32.mxu0 0.0
  %3632 = vmatmul.mubr.f32.gmra.mxu0 %v3521
  %v3633 = vpop.f32.mrf.mxu0
  %v3634 = vadd.f32 0.0, %v3633
  %v3635 = vpop.f32.mrf.mxu0
  %3636 = vmatprep.mubr.f32.mxu0 0.0
  %3637 = vmatmul.mubr.f32.gmra.mxu0 %v3524
  %v3638 = vpop.f32.mrf.mxu0
  %v3639 = vadd.f32 0.0, %v3638
  %v3640 = vpop.f32.mrf.mxu0
  %3641 = vmatprep.mubr.f32.mxu0 0.0
  %3642 = vmatmul.mubr.f32.gmra.mxu0 %v3527
  %v3643 = vpop.f32.mrf.mxu0
  %v3644 = vadd.f32 0.0, %v3643
  %v3645 = vpop.f32.mrf.mxu0
  %3646 = vmatprep.mubr.f32.mxu0 0.0
  %3647 = vmatmul.mubr.f32.gmra.mxu0 %v3530
  %v3648 = vpop.f32.mrf.mxu0
  %v3649 = vadd.f32 0.0, %v3648
  %v3650 = vpop.f32.mrf.mxu0
  %3651 = vmatprep.mubr.f32.mxu0 0.0
  %3652 = vmatmul.mubr.f32.gmra.mxu0 %v3533
  %v3653 = vpop.f32.mrf.mxu0
  %v3654 = vadd.f32 0.0, %v3653
  %v3655 = vpop.f32.mrf.mxu0
  %3656 = vmatprep.mubr.f32.mxu0 0.0
  %3657 = vmatmul.mubr.f32.gmra.mxu0 %v3536
  %v3658 = vpop.f32.mrf.mxu0
  %v3659 = vadd.f32 0.0, %v3658
  %v3660 = vpop.f32.mrf.mxu0
  %3661 = vmatprep.mubr.f32.mxu0 0.0
  %3662 = vmatmul.mubr.f32.gmra.mxu0 %v3539
  %v3663 = vpop.f32.mrf.mxu0
  %v3664 = vadd.f32 0.0, %v3663
  %v3665 = vpop.f32.mrf.mxu0
  %3666 = vmatprep.mubr.f32.mxu0 0.0
  %3667 = vmatmul.mubr.f32.gmra.mxu0 %v3542
  %v3668 = vpop.f32.mrf.mxu0
  %v3669 = vadd.f32 0.0, %v3668
  %v3670 = vpop.f32.mrf.mxu0
  %3671 = vmatprep.mubr.f32.mxu0 0.0
  %3672 = vmatmul.mubr.f32.gmra.mxu0 %v3545
  %v3673 = vpop.f32.mrf.mxu0
  %v3674 = vadd.f32 0.0, %v3673
  %v3675 = vpop.f32.mrf.mxu0
  %3676 = vmatprep.mubr.f32.mxu0 0.0
  %3677 = vmatmul.mubr.f32.gmra.mxu0 %v3548
  %v3678 = vpop.f32.mrf.mxu0
  %v3679 = vadd.f32 0.0, %v3678
  %v3680 = vpop.f32.mrf.mxu0
  %3681 = vmatprep.mubr.f32.mxu0 0.0
  %3682 = vmatmul.mubr.f32.gmra.mxu0 %v3551
  %v3683 = vpop.f32.mrf.mxu0
  %v3684 = vadd.f32 0.0, %v3683
  %v3685 = vpop.f32.mrf.mxu0
  %3686 = vmatprep.mubr.f32.mxu0 0.0
  %3687 = vmatmul.mubr.f32.gmra.mxu0 %v3554
  %v3688 = vpop.f32.mrf.mxu0
  %v3689 = vadd.f32 0.0, %v3688
  %v3690 = vpop.f32.mrf.mxu0
  %3691 = vmatprep.mubr.f32.mxu0 0.0
  %3692 = vmatmul.mubr.f32.gmra.mxu0 %v3557
  %v3693 = vpop.f32.mrf.mxu0
  %v3694 = vadd.f32 0.0, %v3693
  %v3695 = vpop.f32.mrf.mxu0
  %3696 = vmatprep.mubr.f32.mxu0 0.0
  %3697 = vmatmul.mubr.f32.gmra.mxu0 %v3560
  %v3698 = vpop.f32.mrf.mxu0
  %v3699 = vadd.f32 0.0, %v3698
  %v3700 = vpop.f32.mrf.mxu0
  %3701 = vdwg.mxu0
  %v3702 = vadd.f32 %v3496, %v3629
  %v3703 = vadd.f32 %v3497, %v3634
  %v3704 = vadd.f32 %v3498, %v3639
  %v3705 = vadd.f32 %v3499, %v3644
  %v3706 = vadd.f32 %v3500, %v3649
  %v3707 = vadd.f32 %v3501, %v3654
  %v3708 = vadd.f32 %v3502, %v3659
  %v3709 = vadd.f32 %v3503, %v3664
  %v3710 = vadd.f32 %v3504, %v3669
  %v3711 = vadd.f32 %v3505, %v3674
  %v3712 = vadd.f32 %v3506, %v3679
  %v3713 = vadd.f32 %v3507, %v3684
  %v3714 = vadd.f32 %v3508, %v3689
  %v3715 = vadd.f32 %v3509, %v3694
  %v3716 = vadd.f32 %v3510, %v3699
  %3717 = vrot.lane.b32.xlu0 %v283, 98
  %v3718 = vpop.permute.xlu0 %3717
  %3719 = vrot.lane.b32.xlu0 %v284, 98
  %v3720 = vpop.permute.xlu0 %3719
  %v3724 = vsel %vm668, %v510, 0
  %v3727 = vsel %vm668, %v511, 0
  %v3730 = vsel %vm668, %v512, 0
  %v3733 = vsel %vm668, %v513, 0
  %v3736 = vsel %vm668, %v514, 0
  %v3739 = vsel %vm668, %v515, 0
  %v3742 = vsel %vm668, %v516, 0
  %v3745 = vsel %vm668, %v517, 0
  %v3748 = vsel %vm668, %v518, 0
  %v3751 = vsel %vm668, %v519, 0
  %v3754 = vsel %vm668, %v520, 0
  %v3757 = vsel %vm668, %v521, 0
  %v3760 = vsel %vm668, %v522, 0
  %v3763 = vsel %vm668, %v523, 0
  %v3766 = vsel %vm668, %v524, 0
  %3768 = vmatprep.subr.mxu0 0.0
  %3769 = vmatpush1.msra.mxu0 0.0
  %3770 = vmatprep.subr.mxu0 0.0
  %3771 = vmatpush1.msra.mxu0 0.0
  %3772 = vmatprep.subr.mxu0 0.0
  %3773 = vmatpush1.msra.mxu0 0.0
  %3774 = vmatprep.subr.mxu0 0.0
  %3775 = vmatpush1.msra.mxu0 0.0
  %3776 = vmatprep.subr.mxu0 0.0
  %3777 = vmatpush1.msra.mxu0 0.0
  %3778 = vmatprep.subr.mxu0 0.0
  %3779 = vmatpush1.msra.mxu0 0.0
  %3780 = vmatprep.subr.mxu0 0.0
  %3781 = vmatpush1.msra.mxu0 0.0
  %3782 = vmatprep.subr.mxu0 0.0
  %3783 = vmatpush1.msra.mxu0 0.0
  %3784 = vmatprep.subr.mxu0 0.0
  %3785 = vmatpush1.msra.mxu0 0.0
  %3786 = vmatprep.subr.mxu0 0.0
  %3787 = vmatpush1.msra.mxu0 0.0
  %3788 = vmatprep.subr.mxu0 0.0
  %3789 = vmatpush1.msra.mxu0 0.0
  %3790 = vmatprep.subr.mxu0 0.0
  %3791 = vmatpush1.msra.mxu0 0.0
  %3792 = vmatprep.subr.mxu0 0.0
  %3793 = vmatpush1.msra.mxu0 0.0
  %3794 = vmatprep.subr.mxu0 0.0
  %3795 = vmatpush1.msra.mxu0 0.0
  %3796 = vmatprep.subr.mxu0 0.0
  %3797 = vmatpush1.msra.mxu0 %v3720
  %3798 = vmatprep.subr.mxu0 0.0
  %3799 = vmatpush1.msra.mxu0 %v3718
  %3800 = vmatprep.subr.mxu0 0.0
  %3801 = vmatpush2.msra.mxu0 0.0
  %3802 = vmatprep.subr.mxu0 0.0
  %3803 = vmatpush2.msra.mxu0 0.0
  %3804 = vmatprep.subr.mxu0 0.0
  %3805 = vmatpush2.msra.mxu0 0.0
  %3806 = vmatprep.subr.mxu0 0.0
  %3807 = vmatpush2.msra.mxu0 0.0
  %3808 = vmatprep.subr.mxu0 0.0
  %3809 = vmatpush2.msra.mxu0 0.0
  %3810 = vmatprep.subr.mxu0 0.0
  %3811 = vmatpush2.msra.mxu0 0.0
  %3812 = vmatprep.subr.mxu0 0.0
  %3813 = vmatpush2.msra.mxu0 0.0
  %3814 = vmatprep.subr.mxu0 0.0
  %3815 = vmatpush2.msra.mxu0 0.0
  %3816 = vmatprep.subr.mxu0 0.0
  %3817 = vmatpush2.msra.mxu0 0.0
  %3818 = vmatprep.subr.mxu0 0.0
  %3819 = vmatpush2.msra.mxu0 0.0
  %3820 = vmatprep.subr.mxu0 0.0
  %3821 = vmatpush2.msra.mxu0 0.0
  %3822 = vmatprep.subr.mxu0 0.0
  %3823 = vmatpush2.msra.mxu0 0.0
  %3824 = vmatprep.subr.mxu0 0.0
  %3825 = vmatpush2.msra.mxu0 0.0
  %3826 = vmatprep.subr.mxu0 0.0
  %3827 = vmatpush2.msra.mxu0 0.0
  %3828 = vmatprep.subr.mxu0 0.0
  %3829 = vmatpush2.msra.mxu0 0.0
  %3830 = vmatprep.subr.mxu0 0.0
  %3831 = vmatpush2.msra.mxu0 0.0
  %3832 = vmatprep.mubr.f32.mxu0 0.0
  %3833 = vmatmul.mubr.f32.gmra.mxu0 %v3724
  %v3834 = vpop.f32.mrf.mxu0
  %v3835 = vadd.f32 0.0, %v3834
  %v3836 = vpop.f32.mrf.mxu0
  %3837 = vmatprep.mubr.f32.mxu0 0.0
  %3838 = vmatmul.mubr.f32.gmra.mxu0 %v3727
  %v3839 = vpop.f32.mrf.mxu0
  %v3840 = vadd.f32 0.0, %v3839
  %v3841 = vpop.f32.mrf.mxu0
  %3842 = vmatprep.mubr.f32.mxu0 0.0
  %3843 = vmatmul.mubr.f32.gmra.mxu0 %v3730
  %v3844 = vpop.f32.mrf.mxu0
  %v3845 = vadd.f32 0.0, %v3844
  %v3846 = vpop.f32.mrf.mxu0
  %3847 = vmatprep.mubr.f32.mxu0 0.0
  %3848 = vmatmul.mubr.f32.gmra.mxu0 %v3733
  %v3849 = vpop.f32.mrf.mxu0
  %v3850 = vadd.f32 0.0, %v3849
  %v3851 = vpop.f32.mrf.mxu0
  %3852 = vmatprep.mubr.f32.mxu0 0.0
  %3853 = vmatmul.mubr.f32.gmra.mxu0 %v3736
  %v3854 = vpop.f32.mrf.mxu0
  %v3855 = vadd.f32 0.0, %v3854
  %v3856 = vpop.f32.mrf.mxu0
  %3857 = vmatprep.mubr.f32.mxu0 0.0
  %3858 = vmatmul.mubr.f32.gmra.mxu0 %v3739
  %v3859 = vpop.f32.mrf.mxu0
  %v3860 = vadd.f32 0.0, %v3859
  %v3861 = vpop.f32.mrf.mxu0
  %3862 = vmatprep.mubr.f32.mxu0 0.0
  %3863 = vmatmul.mubr.f32.gmra.mxu0 %v3742
  %v3864 = vpop.f32.mrf.mxu0
  %v3865 = vadd.f32 0.0, %v3864
  %v3866 = vpop.f32.mrf.mxu0
  %3867 = vmatprep.mubr.f32.mxu0 0.0
  %3868 = vmatmul.mubr.f32.gmra.mxu0 %v3745
  %v3869 = vpop.f32.mrf.mxu0
  %v3870 = vadd.f32 0.0, %v3869
  %v3871 = vpop.f32.mrf.mxu0
  %3872 = vmatprep.mubr.f32.mxu0 0.0
  %3873 = vmatmul.mubr.f32.gmra.mxu0 %v3748
  %v3874 = vpop.f32.mrf.mxu0
  %v3875 = vadd.f32 0.0, %v3874
  %v3876 = vpop.f32.mrf.mxu0
  %3877 = vmatprep.mubr.f32.mxu0 0.0
  %3878 = vmatmul.mubr.f32.gmra.mxu0 %v3751
  %v3879 = vpop.f32.mrf.mxu0
  %v3880 = vadd.f32 0.0, %v3879
  %v3881 = vpop.f32.mrf.mxu0
  %3882 = vmatprep.mubr.f32.mxu0 0.0
  %3883 = vmatmul.mubr.f32.gmra.mxu0 %v3754
  %v3884 = vpop.f32.mrf.mxu0
  %v3885 = vadd.f32 0.0, %v3884
  %v3886 = vpop.f32.mrf.mxu0
  %3887 = vmatprep.mubr.f32.mxu0 0.0
  %3888 = vmatmul.mubr.f32.gmra.mxu0 %v3757
  %v3889 = vpop.f32.mrf.mxu0
  %v3890 = vadd.f32 0.0, %v3889
  %v3891 = vpop.f32.mrf.mxu0
  %3892 = vmatprep.mubr.f32.mxu0 0.0
  %3893 = vmatmul.mubr.f32.gmra.mxu0 %v3760
  %v3894 = vpop.f32.mrf.mxu0
  %v3895 = vadd.f32 0.0, %v3894
  %v3896 = vpop.f32.mrf.mxu0
  %3897 = vmatprep.mubr.f32.mxu0 0.0
  %3898 = vmatmul.mubr.f32.gmra.mxu0 %v3763
  %v3899 = vpop.f32.mrf.mxu0
  %v3900 = vadd.f32 0.0, %v3899
  %v3901 = vpop.f32.mrf.mxu0
  %3902 = vmatprep.mubr.f32.mxu0 0.0
  %3903 = vmatmul.mubr.f32.gmra.mxu0 %v3766
  %v3904 = vpop.f32.mrf.mxu0
  %v3905 = vadd.f32 0.0, %v3904
  %v3906 = vpop.f32.mrf.mxu0
  %3907 = vdwg.mxu0
  %v3908 = vadd.f32 %v3702, %v3835
  %v3909 = vadd.f32 %v3703, %v3840
  %v3910 = vadd.f32 %v3704, %v3845
  %v3911 = vadd.f32 %v3705, %v3850
  %v3912 = vadd.f32 %v3706, %v3855
  %v3913 = vadd.f32 %v3707, %v3860
  %v3914 = vadd.f32 %v3708, %v3865
  %v3915 = vadd.f32 %v3709, %v3870
  %v3916 = vadd.f32 %v3710, %v3875
  %v3917 = vadd.f32 %v3711, %v3880
  %v3918 = vadd.f32 %v3712, %v3885
  %v3919 = vadd.f32 %v3713, %v3890
  %v3920 = vadd.f32 %v3714, %v3895
  %v3921 = vadd.f32 %v3715, %v3900
  %v3922 = vadd.f32 %v3716, %v3905
  %3923 = vrot.lane.b32.xlu0 %v283, 96
  %v3924 = vpop.permute.xlu0 %3923
  %3925 = vrot.lane.b32.xlu0 %v284, 96
  %v3926 = vpop.permute.xlu0 %3925
  %v3930 = vsel %vm668, %v525, 0
  %v3933 = vsel %vm668, %v526, 0
  %v3936 = vsel %vm668, %v527, 0
  %v3939 = vsel %vm668, %v528, 0
  %v3942 = vsel %vm668, %v529, 0
  %v3945 = vsel %vm668, %v530, 0
  %v3948 = vsel %vm668, %v531, 0
  %v3951 = vsel %vm668, %v532, 0
  %v3954 = vsel %vm668, %v533, 0
  %v3957 = vsel %vm668, %v534, 0
  %v3960 = vsel %vm668, %v535, 0
  %v3963 = vsel %vm668, %v536, 0
  %v3966 = vsel %vm668, %v537, 0
  %v3969 = vsel %vm668, %v538, 0
  %v3972 = vsel %vm668, %v539, 0
  %3974 = vmatprep.subr.mxu0 0.0
  %3975 = vmatpush1.msra.mxu0 0.0
  %3976 = vmatprep.subr.mxu0 0.0
  %3977 = vmatpush1.msra.mxu0 0.0
  %3978 = vmatprep.subr.mxu0 0.0
  %3979 = vmatpush1.msra.mxu0 0.0
  %3980 = vmatprep.subr.mxu0 0.0
  %3981 = vmatpush1.msra.mxu0 0.0
  %3982 = vmatprep.subr.mxu0 0.0
  %3983 = vmatpush1.msra.mxu0 0.0
  %3984 = vmatprep.subr.mxu0 0.0
  %3985 = vmatpush1.msra.mxu0 0.0
  %3986 = vmatprep.subr.mxu0 0.0
  %3987 = vmatpush1.msra.mxu0 0.0
  %3988 = vmatprep.subr.mxu0 0.0
  %3989 = vmatpush1.msra.mxu0 0.0
  %3990 = vmatprep.subr.mxu0 0.0
  %3991 = vmatpush1.msra.mxu0 0.0
  %3992 = vmatprep.subr.mxu0 0.0
  %3993 = vmatpush1.msra.mxu0 0.0
  %3994 = vmatprep.subr.mxu0 0.0
  %3995 = vmatpush1.msra.mxu0 0.0
  %3996 = vmatprep.subr.mxu0 0.0
  %3997 = vmatpush1.msra.mxu0 0.0
  %3998 = vmatprep.subr.mxu0 0.0
  %3999 = vmatpush1.msra.mxu0 0.0
  %4000 = vmatprep.subr.mxu0 0.0
  %4001 = vmatpush1.msra.mxu0 0.0
  %4002 = vmatprep.subr.mxu0 0.0
  %4003 = vmatpush1.msra.mxu0 %v3926
  %4004 = vmatprep.subr.mxu0 0.0
  %4005 = vmatpush1.msra.mxu0 %v3924
  %4006 = vmatprep.subr.mxu0 0.0
  %4007 = vmatpush2.msra.mxu0 0.0
  %4008 = vmatprep.subr.mxu0 0.0
  %4009 = vmatpush2.msra.mxu0 0.0
  %4010 = vmatprep.subr.mxu0 0.0
  %4011 = vmatpush2.msra.mxu0 0.0
  %4012 = vmatprep.subr.mxu0 0.0
  %4013 = vmatpush2.msra.mxu0 0.0
  %4014 = vmatprep.subr.mxu0 0.0
  %4015 = vmatpush2.msra.mxu0 0.0
  %4016 = vmatprep.subr.mxu0 0.0
  %4017 = vmatpush2.msra.mxu0 0.0
  %4018 = vmatprep.subr.mxu0 0.0
  %4019 = vmatpush2.msra.mxu0 0.0
  %4020 = vmatprep.subr.mxu0 0.0
  %4021 = vmatpush2.msra.mxu0 0.0
  %4022 = vmatprep.subr.mxu0 0.0
  %4023 = vmatpush2.msra.mxu0 0.0
  %4024 = vmatprep.subr.mxu0 0.0
  %4025 = vmatpush2.msra.mxu0 0.0
  %4026 = vmatprep.subr.mxu0 0.0
  %4027 = vmatpush2.msra.mxu0 0.0
  %4028 = vmatprep.subr.mxu0 0.0
  %4029 = vmatpush2.msra.mxu0 0.0
  %4030 = vmatprep.subr.mxu0 0.0
  %4031 = vmatpush2.msra.mxu0 0.0
  %4032 = vmatprep.subr.mxu0 0.0
  %4033 = vmatpush2.msra.mxu0 0.0
  %4034 = vmatprep.subr.mxu0 0.0
  %4035 = vmatpush2.msra.mxu0 0.0
  %4036 = vmatprep.subr.mxu0 0.0
  %4037 = vmatpush2.msra.mxu0 0.0
  %4038 = vmatprep.mubr.f32.mxu0 0.0
  %4039 = vmatmul.mubr.f32.gmra.mxu0 %v3930
  %v4040 = vpop.f32.mrf.mxu0
  %v4041 = vadd.f32 0.0, %v4040
  %v4042 = vpop.f32.mrf.mxu0
  %4043 = vmatprep.mubr.f32.mxu0 0.0
  %4044 = vmatmul.mubr.f32.gmra.mxu0 %v3933
  %v4045 = vpop.f32.mrf.mxu0
  %v4046 = vadd.f32 0.0, %v4045
  %v4047 = vpop.f32.mrf.mxu0
  %4048 = vmatprep.mubr.f32.mxu0 0.0
  %4049 = vmatmul.mubr.f32.gmra.mxu0 %v3936
  %v4050 = vpop.f32.mrf.mxu0
  %v4051 = vadd.f32 0.0, %v4050
  %v4052 = vpop.f32.mrf.mxu0
  %4053 = vmatprep.mubr.f32.mxu0 0.0
  %4054 = vmatmul.mubr.f32.gmra.mxu0 %v3939
  %v4055 = vpop.f32.mrf.mxu0
  %v4056 = vadd.f32 0.0, %v4055
  %v4057 = vpop.f32.mrf.mxu0
  %4058 = vmatprep.mubr.f32.mxu0 0.0
  %4059 = vmatmul.mubr.f32.gmra.mxu0 %v3942
  %v4060 = vpop.f32.mrf.mxu0
  %v4061 = vadd.f32 0.0, %v4060
  %v4062 = vpop.f32.mrf.mxu0
  %4063 = vmatprep.mubr.f32.mxu0 0.0
  %4064 = vmatmul.mubr.f32.gmra.mxu0 %v3945
  %v4065 = vpop.f32.mrf.mxu0
  %v4066 = vadd.f32 0.0, %v4065
  %v4067 = vpop.f32.mrf.mxu0
  %4068 = vmatprep.mubr.f32.mxu0 0.0
  %4069 = vmatmul.mubr.f32.gmra.mxu0 %v3948
  %v4070 = vpop.f32.mrf.mxu0
  %v4071 = vadd.f32 0.0, %v4070
  %v4072 = vpop.f32.mrf.mxu0
  %4073 = vmatprep.mubr.f32.mxu0 0.0
  %4074 = vmatmul.mubr.f32.gmra.mxu0 %v3951
  %v4075 = vpop.f32.mrf.mxu0
  %v4076 = vadd.f32 0.0, %v4075
  %v4077 = vpop.f32.mrf.mxu0
  %4078 = vmatprep.mubr.f32.mxu0 0.0
  %4079 = vmatmul.mubr.f32.gmra.mxu0 %v3954
  %v4080 = vpop.f32.mrf.mxu0
  %v4081 = vadd.f32 0.0, %v4080
  %v4082 = vpop.f32.mrf.mxu0
  %4083 = vmatprep.mubr.f32.mxu0 0.0
  %4084 = vmatmul.mubr.f32.gmra.mxu0 %v3957
  %v4085 = vpop.f32.mrf.mxu0
  %v4086 = vadd.f32 0.0, %v4085
  %v4087 = vpop.f32.mrf.mxu0
  %4088 = vmatprep.mubr.f32.mxu0 0.0
  %4089 = vmatmul.mubr.f32.gmra.mxu0 %v3960
  %v4090 = vpop.f32.mrf.mxu0
  %v4091 = vadd.f32 0.0, %v4090
  %v4092 = vpop.f32.mrf.mxu0
  %4093 = vmatprep.mubr.f32.mxu0 0.0
  %4094 = vmatmul.mubr.f32.gmra.mxu0 %v3963
  %v4095 = vpop.f32.mrf.mxu0
  %v4096 = vadd.f32 0.0, %v4095
  %v4097 = vpop.f32.mrf.mxu0
  %4098 = vmatprep.mubr.f32.mxu0 0.0
  %4099 = vmatmul.mubr.f32.gmra.mxu0 %v3966
  %v4100 = vpop.f32.mrf.mxu0
  %v4101 = vadd.f32 0.0, %v4100
  %v4102 = vpop.f32.mrf.mxu0
  %4103 = vmatprep.mubr.f32.mxu0 0.0
  %4104 = vmatmul.mubr.f32.gmra.mxu0 %v3969
  %v4105 = vpop.f32.mrf.mxu0
  %v4106 = vadd.f32 0.0, %v4105
  %v4107 = vpop.f32.mrf.mxu0
  %4108 = vmatprep.mubr.f32.mxu0 0.0
  %4109 = vmatmul.mubr.f32.gmra.mxu0 %v3972
  %v4110 = vpop.f32.mrf.mxu0
  %v4111 = vadd.f32 0.0, %v4110
  %v4112 = vpop.f32.mrf.mxu0
  %4113 = vdwg.mxu0
  %v4114 = vadd.f32 %v3908, %v4041
  %v4115 = vadd.f32 %v3909, %v4046
  %v4116 = vadd.f32 %v3910, %v4051
  %v4117 = vadd.f32 %v3911, %v4056
  %v4118 = vadd.f32 %v3912, %v4061
  %v4119 = vadd.f32 %v3913, %v4066
  %v4120 = vadd.f32 %v3914, %v4071
  %v4121 = vadd.f32 %v3915, %v4076
  %v4122 = vadd.f32 %v3916, %v4081
  %v4123 = vadd.f32 %v3917, %v4086
  %v4124 = vadd.f32 %v3918, %v4091
  %v4125 = vadd.f32 %v3919, %v4096
  %v4126 = vadd.f32 %v3920, %v4101
  %v4127 = vadd.f32 %v3921, %v4106
  %v4128 = vadd.f32 %v3922, %v4111
  %4129 = vrot.lane.b32.xlu0 %v283, 94
  %v4130 = vpop.permute.xlu0 %4129
  %4131 = vrot.lane.b32.xlu0 %v284, 94
  %v4132 = vpop.permute.xlu0 %4131
  %v4136 = vsel %vm668, %v540, 0
  %v4139 = vsel %vm668, %v541, 0
  %v4142 = vsel %vm668, %v542, 0
  %v4145 = vsel %vm668, %v543, 0
  %v4148 = vsel %vm668, %v544, 0
  %v4151 = vsel %vm668, %v545, 0
  %v4154 = vsel %vm668, %v546, 0
  %v4157 = vsel %vm668, %v547, 0
  %v4160 = vsel %vm668, %v548, 0
  %v4163 = vsel %vm668, %v549, 0
  %v4166 = vsel %vm668, %v550, 0
  %v4169 = vsel %vm668, %v551, 0
  %v4172 = vsel %vm668, %v552, 0
  %v4175 = vsel %vm668, %v553, 0
  %v4178 = vsel %vm668, %v554, 0
  %4180 = vmatprep.subr.mxu0 0.0
  %4181 = vmatpush1.msra.mxu0 0.0
  %4182 = vmatprep.subr.mxu0 0.0
  %4183 = vmatpush1.msra.mxu0 0.0
  %4184 = vmatprep.subr.mxu0 0.0
  %4185 = vmatpush1.msra.mxu0 0.0
  %4186 = vmatprep.subr.mxu0 0.0
  %4187 = vmatpush1.msra.mxu0 0.0
  %4188 = vmatprep.subr.mxu0 0.0
  %4189 = vmatpush1.msra.mxu0 0.0
  %4190 = vmatprep.subr.mxu0 0.0
  %4191 = vmatpush1.msra.mxu0 0.0
  %4192 = vmatprep.subr.mxu0 0.0
  %4193 = vmatpush1.msra.mxu0 0.0
  %4194 = vmatprep.subr.mxu0 0.0
  %4195 = vmatpush1.msra.mxu0 0.0
  %4196 = vmatprep.subr.mxu0 0.0
  %4197 = vmatpush1.msra.mxu0 0.0
  %4198 = vmatprep.subr.mxu0 0.0
  %4199 = vmatpush1.msra.mxu0 0.0
  %4200 = vmatprep.subr.mxu0 0.0
  %4201 = vmatpush1.msra.mxu0 0.0
  %4202 = vmatprep.subr.mxu0 0.0
  %4203 = vmatpush1.msra.mxu0 0.0
  %4204 = vmatprep.subr.mxu0 0.0
  %4205 = vmatpush1.msra.mxu0 0.0
  %4206 = vmatprep.subr.mxu0 0.0
  %4207 = vmatpush1.msra.mxu0 0.0
  %4208 = vmatprep.subr.mxu0 0.0
  %4209 = vmatpush1.msra.mxu0 %v4132
  %4210 = vmatprep.subr.mxu0 0.0
  %4211 = vmatpush1.msra.mxu0 %v4130
  %4212 = vmatprep.subr.mxu0 0.0
  %4213 = vmatpush2.msra.mxu0 0.0
  %4214 = vmatprep.subr.mxu0 0.0
  %4215 = vmatpush2.msra.mxu0 0.0
  %4216 = vmatprep.subr.mxu0 0.0
  %4217 = vmatpush2.msra.mxu0 0.0
  %4218 = vmatprep.subr.mxu0 0.0
  %4219 = vmatpush2.msra.mxu0 0.0
  %4220 = vmatprep.subr.mxu0 0.0
  %4221 = vmatpush2.msra.mxu0 0.0
  %4222 = vmatprep.subr.mxu0 0.0
  %4223 = vmatpush2.msra.mxu0 0.0
  %4224 = vmatprep.subr.mxu0 0.0
  %4225 = vmatpush2.msra.mxu0 0.0
  %4226 = vmatprep.subr.mxu0 0.0
  %4227 = vmatpush2.msra.mxu0 0.0
  %4228 = vmatprep.subr.mxu0 0.0
  %4229 = vmatpush2.msra.mxu0 0.0
  %4230 = vmatprep.subr.mxu0 0.0
  %4231 = vmatpush2.msra.mxu0 0.0
  %4232 = vmatprep.subr.mxu0 0.0
  %4233 = vmatpush2.msra.mxu0 0.0
  %4234 = vmatprep.subr.mxu0 0.0
  %4235 = vmatpush2.msra.mxu0 0.0
  %4236 = vmatprep.subr.mxu0 0.0
  %4237 = vmatpush2.msra.mxu0 0.0
  %4238 = vmatprep.subr.mxu0 0.0
  %4239 = vmatpush2.msra.mxu0 0.0
  %4240 = vmatprep.subr.mxu0 0.0
  %4241 = vmatpush2.msra.mxu0 0.0
  %4242 = vmatprep.subr.mxu0 0.0
  %4243 = vmatpush2.msra.mxu0 0.0
  %4244 = vmatprep.mubr.f32.mxu0 0.0
  %4245 = vmatmul.mubr.f32.gmra.mxu0 %v4136
  %v4246 = vpop.f32.mrf.mxu0
  %v4247 = vadd.f32 0.0, %v4246
  %v4248 = vpop.f32.mrf.mxu0
  %4249 = vmatprep.mubr.f32.mxu0 0.0
  %4250 = vmatmul.mubr.f32.gmra.mxu0 %v4139
  %v4251 = vpop.f32.mrf.mxu0
  %v4252 = vadd.f32 0.0, %v4251
  %v4253 = vpop.f32.mrf.mxu0
  %4254 = vmatprep.mubr.f32.mxu0 0.0
  %4255 = vmatmul.mubr.f32.gmra.mxu0 %v4142
  %v4256 = vpop.f32.mrf.mxu0
  %v4257 = vadd.f32 0.0, %v4256
  %v4258 = vpop.f32.mrf.mxu0
  %4259 = vmatprep.mubr.f32.mxu0 0.0
  %4260 = vmatmul.mubr.f32.gmra.mxu0 %v4145
  %v4261 = vpop.f32.mrf.mxu0
  %v4262 = vadd.f32 0.0, %v4261
  %v4263 = vpop.f32.mrf.mxu0
  %4264 = vmatprep.mubr.f32.mxu0 0.0
  %4265 = vmatmul.mubr.f32.gmra.mxu0 %v4148
  %v4266 = vpop.f32.mrf.mxu0
  %v4267 = vadd.f32 0.0, %v4266
  %v4268 = vpop.f32.mrf.mxu0
  %4269 = vmatprep.mubr.f32.mxu0 0.0
  %4270 = vmatmul.mubr.f32.gmra.mxu0 %v4151
  %v4271 = vpop.f32.mrf.mxu0
  %v4272 = vadd.f32 0.0, %v4271
  %v4273 = vpop.f32.mrf.mxu0
  %4274 = vmatprep.mubr.f32.mxu0 0.0
  %4275 = vmatmul.mubr.f32.gmra.mxu0 %v4154
  %v4276 = vpop.f32.mrf.mxu0
  %v4277 = vadd.f32 0.0, %v4276
  %v4278 = vpop.f32.mrf.mxu0
  %4279 = vmatprep.mubr.f32.mxu0 0.0
  %4280 = vmatmul.mubr.f32.gmra.mxu0 %v4157
  %v4281 = vpop.f32.mrf.mxu0
  %v4282 = vadd.f32 0.0, %v4281
  %v4283 = vpop.f32.mrf.mxu0
  %4284 = vmatprep.mubr.f32.mxu0 0.0
  %4285 = vmatmul.mubr.f32.gmra.mxu0 %v4160
  %v4286 = vpop.f32.mrf.mxu0
  %v4287 = vadd.f32 0.0, %v4286
  %v4288 = vpop.f32.mrf.mxu0
  %4289 = vmatprep.mubr.f32.mxu0 0.0
  %4290 = vmatmul.mubr.f32.gmra.mxu0 %v4163
  %v4291 = vpop.f32.mrf.mxu0
  %v4292 = vadd.f32 0.0, %v4291
  %v4293 = vpop.f32.mrf.mxu0
  %4294 = vmatprep.mubr.f32.mxu0 0.0
  %4295 = vmatmul.mubr.f32.gmra.mxu0 %v4166
  %v4296 = vpop.f32.mrf.mxu0
  %v4297 = vadd.f32 0.0, %v4296
  %v4298 = vpop.f32.mrf.mxu0
  %4299 = vmatprep.mubr.f32.mxu0 0.0
  %4300 = vmatmul.mubr.f32.gmra.mxu0 %v4169
  %v4301 = vpop.f32.mrf.mxu0
  %v4302 = vadd.f32 0.0, %v4301
  %v4303 = vpop.f32.mrf.mxu0
  %4304 = vmatprep.mubr.f32.mxu0 0.0
  %4305 = vmatmul.mubr.f32.gmra.mxu0 %v4172
  %v4306 = vpop.f32.mrf.mxu0
  %v4307 = vadd.f32 0.0, %v4306
  %v4308 = vpop.f32.mrf.mxu0
  %4309 = vmatprep.mubr.f32.mxu0 0.0
  %4310 = vmatmul.mubr.f32.gmra.mxu0 %v4175
  %v4311 = vpop.f32.mrf.mxu0
  %v4312 = vadd.f32 0.0, %v4311
  %v4313 = vpop.f32.mrf.mxu0
  %4314 = vmatprep.mubr.f32.mxu0 0.0
  %4315 = vmatmul.mubr.f32.gmra.mxu0 %v4178
  %v4316 = vpop.f32.mrf.mxu0
  %v4317 = vadd.f32 0.0, %v4316
  %v4318 = vpop.f32.mrf.mxu0
  %4319 = vdwg.mxu0
  %v4320 = vadd.f32 %v4114, %v4247
  %v4321 = vadd.f32 %v4115, %v4252
  %v4322 = vadd.f32 %v4116, %v4257
  %v4323 = vadd.f32 %v4117, %v4262
  %v4324 = vadd.f32 %v4118, %v4267
  %v4325 = vadd.f32 %v4119, %v4272
  %v4326 = vadd.f32 %v4120, %v4277
  %v4327 = vadd.f32 %v4121, %v4282
  %v4328 = vadd.f32 %v4122, %v4287
  %v4329 = vadd.f32 %v4123, %v4292
  %v4330 = vadd.f32 %v4124, %v4297
  %v4331 = vadd.f32 %v4125, %v4302
  %v4332 = vadd.f32 %v4126, %v4307
  %v4333 = vadd.f32 %v4127, %v4312
  %v4334 = vadd.f32 %v4128, %v4317
  %4335 = vrot.lane.b32.xlu0 %v283, 92
  %v4336 = vpop.permute.xlu0 %4335
  %4337 = vrot.lane.b32.xlu0 %v284, 92
  %v4338 = vpop.permute.xlu0 %4337
  %v4342 = vsel %vm668, %v555, 0
  %v4345 = vsel %vm668, %v556, 0
  %v4348 = vsel %vm668, %v557, 0
  %v4351 = vsel %vm668, %v558, 0
  %v4354 = vsel %vm668, %v559, 0
  %v4357 = vsel %vm668, %v560, 0
  %v4360 = vsel %vm668, %v561, 0
  %v4363 = vsel %vm668, %v562, 0
  %v4366 = vsel %vm668, %v563, 0
  %v4369 = vsel %vm668, %v564, 0
  %v4372 = vsel %vm668, %v565, 0
  %v4375 = vsel %vm668, %v566, 0
  %v4378 = vsel %vm668, %v567, 0
  %v4381 = vsel %vm668, %v568, 0
  %v4384 = vsel %vm668, %v569, 0
  %4386 = vmatprep.subr.mxu0 0.0
  %4387 = vmatpush1.msra.mxu0 0.0
  %4388 = vmatprep.subr.mxu0 0.0
  %4389 = vmatpush1.msra.mxu0 0.0
  %4390 = vmatprep.subr.mxu0 0.0
  %4391 = vmatpush1.msra.mxu0 0.0
  %4392 = vmatprep.subr.mxu0 0.0
  %4393 = vmatpush1.msra.mxu0 0.0
  %4394 = vmatprep.subr.mxu0 0.0
  %4395 = vmatpush1.msra.mxu0 0.0
  %4396 = vmatprep.subr.mxu0 0.0
  %4397 = vmatpush1.msra.mxu0 0.0
  %4398 = vmatprep.subr.mxu0 0.0
  %4399 = vmatpush1.msra.mxu0 0.0
  %4400 = vmatprep.subr.mxu0 0.0
  %4401 = vmatpush1.msra.mxu0 0.0
  %4402 = vmatprep.subr.mxu0 0.0
  %4403 = vmatpush1.msra.mxu0 0.0
  %4404 = vmatprep.subr.mxu0 0.0
  %4405 = vmatpush1.msra.mxu0 0.0
  %4406 = vmatprep.subr.mxu0 0.0
  %4407 = vmatpush1.msra.mxu0 0.0
  %4408 = vmatprep.subr.mxu0 0.0
  %4409 = vmatpush1.msra.mxu0 0.0
  %4410 = vmatprep.subr.mxu0 0.0
  %4411 = vmatpush1.msra.mxu0 0.0
  %4412 = vmatprep.subr.mxu0 0.0
  %4413 = vmatpush1.msra.mxu0 0.0
  %4414 = vmatprep.subr.mxu0 0.0
  %4415 = vmatpush1.msra.mxu0 %v4338
  %4416 = vmatprep.subr.mxu0 0.0
  %4417 = vmatpush1.msra.mxu0 %v4336
  %4418 = vmatprep.subr.mxu0 0.0
  %4419 = vmatpush2.msra.mxu0 0.0
  %4420 = vmatprep.subr.mxu0 0.0
  %4421 = vmatpush2.msra.mxu0 0.0
  %4422 = vmatprep.subr.mxu0 0.0
  %4423 = vmatpush2.msra.mxu0 0.0
  %4424 = vmatprep.subr.mxu0 0.0
  %4425 = vmatpush2.msra.mxu0 0.0
  %4426 = vmatprep.subr.mxu0 0.0
  %4427 = vmatpush2.msra.mxu0 0.0
  %4428 = vmatprep.subr.mxu0 0.0
  %4429 = vmatpush2.msra.mxu0 0.0
  %4430 = vmatprep.subr.mxu0 0.0
  %4431 = vmatpush2.msra.mxu0 0.0
  %4432 = vmatprep.subr.mxu0 0.0
  %4433 = vmatpush2.msra.mxu0 0.0
  %4434 = vmatprep.subr.mxu0 0.0
  %4435 = vmatpush2.msra.mxu0 0.0
  %4436 = vmatprep.subr.mxu0 0.0
  %4437 = vmatpush2.msra.mxu0 0.0
  %4438 = vmatprep.subr.mxu0 0.0
  %4439 = vmatpush2.msra.mxu0 0.0
  %4440 = vmatprep.subr.mxu0 0.0
  %4441 = vmatpush2.msra.mxu0 0.0
  %4442 = vmatprep.subr.mxu0 0.0
  %4443 = vmatpush2.msra.mxu0 0.0
  %4444 = vmatprep.subr.mxu0 0.0
  %4445 = vmatpush2.msra.mxu0 0.0
  %4446 = vmatprep.subr.mxu0 0.0
  %4447 = vmatpush2.msra.mxu0 0.0
  %4448 = vmatprep.subr.mxu0 0.0
  %4449 = vmatpush2.msra.mxu0 0.0
  %4450 = vmatprep.mubr.f32.mxu0 0.0
  %4451 = vmatmul.mubr.f32.gmra.mxu0 %v4342
  %v4452 = vpop.f32.mrf.mxu0
  %v4453 = vadd.f32 0.0, %v4452
  %v4454 = vpop.f32.mrf.mxu0
  %4455 = vmatprep.mubr.f32.mxu0 0.0
  %4456 = vmatmul.mubr.f32.gmra.mxu0 %v4345
  %v4457 = vpop.f32.mrf.mxu0
  %v4458 = vadd.f32 0.0, %v4457
  %v4459 = vpop.f32.mrf.mxu0
  %4460 = vmatprep.mubr.f32.mxu0 0.0
  %4461 = vmatmul.mubr.f32.gmra.mxu0 %v4348
  %v4462 = vpop.f32.mrf.mxu0
  %v4463 = vadd.f32 0.0, %v4462
  %v4464 = vpop.f32.mrf.mxu0
  %4465 = vmatprep.mubr.f32.mxu0 0.0
  %4466 = vmatmul.mubr.f32.gmra.mxu0 %v4351
  %v4467 = vpop.f32.mrf.mxu0
  %v4468 = vadd.f32 0.0, %v4467
  %v4469 = vpop.f32.mrf.mxu0
  %4470 = vmatprep.mubr.f32.mxu0 0.0
  %4471 = vmatmul.mubr.f32.gmra.mxu0 %v4354
  %v4472 = vpop.f32.mrf.mxu0
  %v4473 = vadd.f32 0.0, %v4472
  %v4474 = vpop.f32.mrf.mxu0
  %4475 = vmatprep.mubr.f32.mxu0 0.0
  %4476 = vmatmul.mubr.f32.gmra.mxu0 %v4357
  %v4477 = vpop.f32.mrf.mxu0
  %v4478 = vadd.f32 0.0, %v4477
  %v4479 = vpop.f32.mrf.mxu0
  %4480 = vmatprep.mubr.f32.mxu0 0.0
  %4481 = vmatmul.mubr.f32.gmra.mxu0 %v4360
  %v4482 = vpop.f32.mrf.mxu0
  %v4483 = vadd.f32 0.0, %v4482
  %v4484 = vpop.f32.mrf.mxu0
  %4485 = vmatprep.mubr.f32.mxu0 0.0
  %4486 = vmatmul.mubr.f32.gmra.mxu0 %v4363
  %v4487 = vpop.f32.mrf.mxu0
  %v4488 = vadd.f32 0.0, %v4487
  %v4489 = vpop.f32.mrf.mxu0
  %4490 = vmatprep.mubr.f32.mxu0 0.0
  %4491 = vmatmul.mubr.f32.gmra.mxu0 %v4366
  %v4492 = vpop.f32.mrf.mxu0
  %v4493 = vadd.f32 0.0, %v4492
  %v4494 = vpop.f32.mrf.mxu0
  %4495 = vmatprep.mubr.f32.mxu0 0.0
  %4496 = vmatmul.mubr.f32.gmra.mxu0 %v4369
  %v4497 = vpop.f32.mrf.mxu0
  %v4498 = vadd.f32 0.0, %v4497
  %v4499 = vpop.f32.mrf.mxu0
  %4500 = vmatprep.mubr.f32.mxu0 0.0
  %4501 = vmatmul.mubr.f32.gmra.mxu0 %v4372
  %v4502 = vpop.f32.mrf.mxu0
  %v4503 = vadd.f32 0.0, %v4502
  %v4504 = vpop.f32.mrf.mxu0
  %4505 = vmatprep.mubr.f32.mxu0 0.0
  %4506 = vmatmul.mubr.f32.gmra.mxu0 %v4375
  %v4507 = vpop.f32.mrf.mxu0
  %v4508 = vadd.f32 0.0, %v4507
  %v4509 = vpop.f32.mrf.mxu0
  %4510 = vmatprep.mubr.f32.mxu0 0.0
  %4511 = vmatmul.mubr.f32.gmra.mxu0 %v4378
  %v4512 = vpop.f32.mrf.mxu0
  %v4513 = vadd.f32 0.0, %v4512
  %v4514 = vpop.f32.mrf.mxu0
  %4515 = vmatprep.mubr.f32.mxu0 0.0
  %4516 = vmatmul.mubr.f32.gmra.mxu0 %v4381
  %v4517 = vpop.f32.mrf.mxu0
  %v4518 = vadd.f32 0.0, %v4517
  %v4519 = vpop.f32.mrf.mxu0
  %4520 = vmatprep.mubr.f32.mxu0 0.0
  %4521 = vmatmul.mubr.f32.gmra.mxu0 %v4384
  %v4522 = vpop.f32.mrf.mxu0
  %v4523 = vadd.f32 0.0, %v4522
  %v4524 = vpop.f32.mrf.mxu0
  %4525 = vdwg.mxu0
  %v4526 = vadd.f32 %v4320, %v4453
  %v4527 = vadd.f32 %v4321, %v4458
  %v4528 = vadd.f32 %v4322, %v4463
  %v4529 = vadd.f32 %v4323, %v4468
  %v4530 = vadd.f32 %v4324, %v4473
  %v4531 = vadd.f32 %v4325, %v4478
  %v4532 = vadd.f32 %v4326, %v4483
  %v4533 = vadd.f32 %v4327, %v4488
  %v4534 = vadd.f32 %v4328, %v4493
  %v4535 = vadd.f32 %v4329, %v4498
  %v4536 = vadd.f32 %v4330, %v4503
  %v4537 = vadd.f32 %v4331, %v4508
  %v4538 = vadd.f32 %v4332, %v4513
  %v4539 = vadd.f32 %v4333, %v4518
  %v4540 = vadd.f32 %v4334, %v4523
  %4541 = vrot.lane.b32.xlu0 %v283, 90
  %v4542 = vpop.permute.xlu0 %4541
  %4543 = vrot.lane.b32.xlu0 %v284, 90
  %v4544 = vpop.permute.xlu0 %4543
  %v4548 = vsel %vm668, %v570, 0
  %v4551 = vsel %vm668, %v571, 0
  %v4554 = vsel %vm668, %v572, 0
  %v4557 = vsel %vm668, %v573, 0
  %v4560 = vsel %vm668, %v574, 0
  %v4563 = vsel %vm668, %v575, 0
  %v4566 = vsel %vm668, %v576, 0
  %v4569 = vsel %vm668, %v577, 0
  %v4572 = vsel %vm668, %v578, 0
  %v4575 = vsel %vm668, %v579, 0
  %v4578 = vsel %vm668, %v580, 0
  %v4581 = vsel %vm668, %v581, 0
  %v4584 = vsel %vm668, %v582, 0
  %v4587 = vsel %vm668, %v583, 0
  %v4590 = vsel %vm668, %v584, 0
  %4592 = vmatprep.subr.mxu0 0.0
  %4593 = vmatpush1.msra.mxu0 0.0
  %4594 = vmatprep.subr.mxu0 0.0
  %4595 = vmatpush1.msra.mxu0 0.0
  %4596 = vmatprep.subr.mxu0 0.0
  %4597 = vmatpush1.msra.mxu0 0.0
  %4598 = vmatprep.subr.mxu0 0.0
  %4599 = vmatpush1.msra.mxu0 0.0
  %4600 = vmatprep.subr.mxu0 0.0
  %4601 = vmatpush1.msra.mxu0 0.0
  %4602 = vmatprep.subr.mxu0 0.0
  %4603 = vmatpush1.msra.mxu0 0.0
  %4604 = vmatprep.subr.mxu0 0.0
  %4605 = vmatpush1.msra.mxu0 0.0
  %4606 = vmatprep.subr.mxu0 0.0
  %4607 = vmatpush1.msra.mxu0 0.0
  %4608 = vmatprep.subr.mxu0 0.0
  %4609 = vmatpush1.msra.mxu0 0.0
  %4610 = vmatprep.subr.mxu0 0.0
  %4611 = vmatpush1.msra.mxu0 0.0
  %4612 = vmatprep.subr.mxu0 0.0
  %4613 = vmatpush1.msra.mxu0 0.0
  %4614 = vmatprep.subr.mxu0 0.0
  %4615 = vmatpush1.msra.mxu0 0.0
  %4616 = vmatprep.subr.mxu0 0.0
  %4617 = vmatpush1.msra.mxu0 0.0
  %4618 = vmatprep.subr.mxu0 0.0
  %4619 = vmatpush1.msra.mxu0 0.0
  %4620 = vmatprep.subr.mxu0 0.0
  %4621 = vmatpush1.msra.mxu0 %v4544
  %4622 = vmatprep.subr.mxu0 0.0
  %4623 = vmatpush1.msra.mxu0 %v4542
  %4624 = vmatprep.subr.mxu0 0.0
  %4625 = vmatpush2.msra.mxu0 0.0
  %4626 = vmatprep.subr.mxu0 0.0
  %4627 = vmatpush2.msra.mxu0 0.0
  %4628 = vmatprep.subr.mxu0 0.0
  %4629 = vmatpush2.msra.mxu0 0.0
  %4630 = vmatprep.subr.mxu0 0.0
  %4631 = vmatpush2.msra.mxu0 0.0
  %4632 = vmatprep.subr.mxu0 0.0
  %4633 = vmatpush2.msra.mxu0 0.0
  %4634 = vmatprep.subr.mxu0 0.0
  %4635 = vmatpush2.msra.mxu0 0.0
  %4636 = vmatprep.subr.mxu0 0.0
  %4637 = vmatpush2.msra.mxu0 0.0
  %4638 = vmatprep.subr.mxu0 0.0
  %4639 = vmatpush2.msra.mxu0 0.0
  %4640 = vmatprep.subr.mxu0 0.0
  %4641 = vmatpush2.msra.mxu0 0.0
  %4642 = vmatprep.subr.mxu0 0.0
  %4643 = vmatpush2.msra.mxu0 0.0
  %4644 = vmatprep.subr.mxu0 0.0
  %4645 = vmatpush2.msra.mxu0 0.0
  %4646 = vmatprep.subr.mxu0 0.0
  %4647 = vmatpush2.msra.mxu0 0.0
  %4648 = vmatprep.subr.mxu0 0.0
  %4649 = vmatpush2.msra.mxu0 0.0
  %4650 = vmatprep.subr.mxu0 0.0
  %4651 = vmatpush2.msra.mxu0 0.0
  %4652 = vmatprep.subr.mxu0 0.0
  %4653 = vmatpush2.msra.mxu0 0.0
  %4654 = vmatprep.subr.mxu0 0.0
  %4655 = vmatpush2.msra.mxu0 0.0
  %4656 = vmatprep.mubr.f32.mxu0 0.0
  %4657 = vmatmul.mubr.f32.gmra.mxu0 %v4548
  %v4658 = vpop.f32.mrf.mxu0
  %v4659 = vadd.f32 0.0, %v4658
  %v4660 = vpop.f32.mrf.mxu0
  %4661 = vmatprep.mubr.f32.mxu0 0.0
  %4662 = vmatmul.mubr.f32.gmra.mxu0 %v4551
  %v4663 = vpop.f32.mrf.mxu0
  %v4664 = vadd.f32 0.0, %v4663
  %v4665 = vpop.f32.mrf.mxu0
  %4666 = vmatprep.mubr.f32.mxu0 0.0
  %4667 = vmatmul.mubr.f32.gmra.mxu0 %v4554
  %v4668 = vpop.f32.mrf.mxu0
  %v4669 = vadd.f32 0.0, %v4668
  %v4670 = vpop.f32.mrf.mxu0
  %4671 = vmatprep.mubr.f32.mxu0 0.0
  %4672 = vmatmul.mubr.f32.gmra.mxu0 %v4557
  %v4673 = vpop.f32.mrf.mxu0
  %v4674 = vadd.f32 0.0, %v4673
  %v4675 = vpop.f32.mrf.mxu0
  %4676 = vmatprep.mubr.f32.mxu0 0.0
  %4677 = vmatmul.mubr.f32.gmra.mxu0 %v4560
  %v4678 = vpop.f32.mrf.mxu0
  %v4679 = vadd.f32 0.0, %v4678
  %v4680 = vpop.f32.mrf.mxu0
  %4681 = vmatprep.mubr.f32.mxu0 0.0
  %4682 = vmatmul.mubr.f32.gmra.mxu0 %v4563
  %v4683 = vpop.f32.mrf.mxu0
  %v4684 = vadd.f32 0.0, %v4683
  %v4685 = vpop.f32.mrf.mxu0
  %4686 = vmatprep.mubr.f32.mxu0 0.0
  %4687 = vmatmul.mubr.f32.gmra.mxu0 %v4566
  %v4688 = vpop.f32.mrf.mxu0
  %v4689 = vadd.f32 0.0, %v4688
  %v4690 = vpop.f32.mrf.mxu0
  %4691 = vmatprep.mubr.f32.mxu0 0.0
  %4692 = vmatmul.mubr.f32.gmra.mxu0 %v4569
  %v4693 = vpop.f32.mrf.mxu0
  %v4694 = vadd.f32 0.0, %v4693
  %v4695 = vpop.f32.mrf.mxu0
  %4696 = vmatprep.mubr.f32.mxu0 0.0
  %4697 = vmatmul.mubr.f32.gmra.mxu0 %v4572
  %v4698 = vpop.f32.mrf.mxu0
  %v4699 = vadd.f32 0.0, %v4698
  %v4700 = vpop.f32.mrf.mxu0
  %4701 = vmatprep.mubr.f32.mxu0 0.0
  %4702 = vmatmul.mubr.f32.gmra.mxu0 %v4575
  %v4703 = vpop.f32.mrf.mxu0
  %v4704 = vadd.f32 0.0, %v4703
  %v4705 = vpop.f32.mrf.mxu0
  %4706 = vmatprep.mubr.f32.mxu0 0.0
  %4707 = vmatmul.mubr.f32.gmra.mxu0 %v4578
  %v4708 = vpop.f32.mrf.mxu0
  %v4709 = vadd.f32 0.0, %v4708
  %v4710 = vpop.f32.mrf.mxu0
  %4711 = vmatprep.mubr.f32.mxu0 0.0
  %4712 = vmatmul.mubr.f32.gmra.mxu0 %v4581
  %v4713 = vpop.f32.mrf.mxu0
  %v4714 = vadd.f32 0.0, %v4713
  %v4715 = vpop.f32.mrf.mxu0
  %4716 = vmatprep.mubr.f32.mxu0 0.0
  %4717 = vmatmul.mubr.f32.gmra.mxu0 %v4584
  %v4718 = vpop.f32.mrf.mxu0
  %v4719 = vadd.f32 0.0, %v4718
  %v4720 = vpop.f32.mrf.mxu0
  %4721 = vmatprep.mubr.f32.mxu0 0.0
  %4722 = vmatmul.mubr.f32.gmra.mxu0 %v4587
  %v4723 = vpop.f32.mrf.mxu0
  %v4724 = vadd.f32 0.0, %v4723
  %v4725 = vpop.f32.mrf.mxu0
  %4726 = vmatprep.mubr.f32.mxu0 0.0
  %4727 = vmatmul.mubr.f32.gmra.mxu0 %v4590
  %v4728 = vpop.f32.mrf.mxu0
  %v4729 = vadd.f32 0.0, %v4728
  %v4730 = vpop.f32.mrf.mxu0
  %4731 = vdwg.mxu0
  %v4732 = vadd.f32 %v4526, %v4659
  %v4733 = vadd.f32 %v4527, %v4664
  %v4734 = vadd.f32 %v4528, %v4669
  %v4735 = vadd.f32 %v4529, %v4674
  %v4736 = vadd.f32 %v4530, %v4679
  %v4737 = vadd.f32 %v4531, %v4684
  %v4738 = vadd.f32 %v4532, %v4689
  %v4739 = vadd.f32 %v4533, %v4694
  %v4740 = vadd.f32 %v4534, %v4699
  %v4741 = vadd.f32 %v4535, %v4704
  %v4742 = vadd.f32 %v4536, %v4709
  %v4743 = vadd.f32 %v4537, %v4714
  %v4744 = vadd.f32 %v4538, %v4719
  %v4745 = vadd.f32 %v4539, %v4724
  %v4746 = vadd.f32 %v4540, %v4729
  %4747 = vrot.lane.b32.xlu0 %v283, 88
  %v4748 = vpop.permute.xlu0 %4747
  %4749 = vrot.lane.b32.xlu0 %v284, 88
  %v4750 = vpop.permute.xlu0 %4749
  %v4754 = vsel %vm668, %v585, 0
  %v4757 = vsel %vm668, %v586, 0
  %v4760 = vsel %vm668, %v587, 0
  %v4763 = vsel %vm668, %v588, 0
  %v4766 = vsel %vm668, %v589, 0
  %v4769 = vsel %vm668, %v590, 0
  %v4772 = vsel %vm668, %v591, 0
  %v4775 = vsel %vm668, %v592, 0
  %v4778 = vsel %vm668, %v593, 0
  %v4781 = vsel %vm668, %v594, 0
  %v4784 = vsel %vm668, %v595, 0
  %v4787 = vsel %vm668, %v596, 0
  %v4790 = vsel %vm668, %v597, 0
  %v4793 = vsel %vm668, %v598, 0
  %v4796 = vsel %vm668, %v599, 0
  %4798 = vmatprep.subr.mxu0 0.0
  %4799 = vmatpush1.msra.mxu0 0.0
  %4800 = vmatprep.subr.mxu0 0.0
  %4801 = vmatpush1.msra.mxu0 0.0
  %4802 = vmatprep.subr.mxu0 0.0
  %4803 = vmatpush1.msra.mxu0 0.0
  %4804 = vmatprep.subr.mxu0 0.0
  %4805 = vmatpush1.msra.mxu0 0.0
  %4806 = vmatprep.subr.mxu0 0.0
  %4807 = vmatpush1.msra.mxu0 0.0
  %4808 = vmatprep.subr.mxu0 0.0
  %4809 = vmatpush1.msra.mxu0 0.0
  %4810 = vmatprep.subr.mxu0 0.0
  %4811 = vmatpush1.msra.mxu0 0.0
  %4812 = vmatprep.subr.mxu0 0.0
  %4813 = vmatpush1.msra.mxu0 0.0
  %4814 = vmatprep.subr.mxu0 0.0
  %4815 = vmatpush1.msra.mxu0 0.0
  %4816 = vmatprep.subr.mxu0 0.0
  %4817 = vmatpush1.msra.mxu0 0.0
  %4818 = vmatprep.subr.mxu0 0.0
  %4819 = vmatpush1.msra.mxu0 0.0
  %4820 = vmatprep.subr.mxu0 0.0
  %4821 = vmatpush1.msra.mxu0 0.0
  %4822 = vmatprep.subr.mxu0 0.0
  %4823 = vmatpush1.msra.mxu0 0.0
  %4824 = vmatprep.subr.mxu0 0.0
  %4825 = vmatpush1.msra.mxu0 0.0
  %4826 = vmatprep.subr.mxu0 0.0
  %4827 = vmatpush1.msra.mxu0 %v4750
  %4828 = vmatprep.subr.mxu0 0.0
  %4829 = vmatpush1.msra.mxu0 %v4748
  %4830 = vmatprep.subr.mxu0 0.0
  %4831 = vmatpush2.msra.mxu0 0.0
  %4832 = vmatprep.subr.mxu0 0.0
  %4833 = vmatpush2.msra.mxu0 0.0
  %4834 = vmatprep.subr.mxu0 0.0
  %4835 = vmatpush2.msra.mxu0 0.0
  %4836 = vmatprep.subr.mxu0 0.0
  %4837 = vmatpush2.msra.mxu0 0.0
  %4838 = vmatprep.subr.mxu0 0.0
  %4839 = vmatpush2.msra.mxu0 0.0
  %4840 = vmatprep.subr.mxu0 0.0
  %4841 = vmatpush2.msra.mxu0 0.0
  %4842 = vmatprep.subr.mxu0 0.0
  %4843 = vmatpush2.msra.mxu0 0.0
  %4844 = vmatprep.subr.mxu0 0.0
  %4845 = vmatpush2.msra.mxu0 0.0
  %4846 = vmatprep.subr.mxu0 0.0
  %4847 = vmatpush2.msra.mxu0 0.0
  %4848 = vmatprep.subr.mxu0 0.0
  %4849 = vmatpush2.msra.mxu0 0.0
  %4850 = vmatprep.subr.mxu0 0.0
  %4851 = vmatpush2.msra.mxu0 0.0
  %4852 = vmatprep.subr.mxu0 0.0
  %4853 = vmatpush2.msra.mxu0 0.0
  %4854 = vmatprep.subr.mxu0 0.0
  %4855 = vmatpush2.msra.mxu0 0.0
  %4856 = vmatprep.subr.mxu0 0.0
  %4857 = vmatpush2.msra.mxu0 0.0
  %4858 = vmatprep.subr.mxu0 0.0
  %4859 = vmatpush2.msra.mxu0 0.0
  %4860 = vmatprep.subr.mxu0 0.0
  %4861 = vmatpush2.msra.mxu0 0.0
  %4862 = vmatprep.mubr.f32.mxu0 0.0
  %4863 = vmatmul.mubr.f32.gmra.mxu0 %v4754
  %v4864 = vpop.f32.mrf.mxu0
  %v4865 = vadd.f32 0.0, %v4864
  %v4866 = vpop.f32.mrf.mxu0
  %4867 = vmatprep.mubr.f32.mxu0 0.0
  %4868 = vmatmul.mubr.f32.gmra.mxu0 %v4757
  %v4869 = vpop.f32.mrf.mxu0
  %v4870 = vadd.f32 0.0, %v4869
  %v4871 = vpop.f32.mrf.mxu0
  %4872 = vmatprep.mubr.f32.mxu0 0.0
  %4873 = vmatmul.mubr.f32.gmra.mxu0 %v4760
  %v4874 = vpop.f32.mrf.mxu0
  %v4875 = vadd.f32 0.0, %v4874
  %v4876 = vpop.f32.mrf.mxu0
  %4877 = vmatprep.mubr.f32.mxu0 0.0
  %4878 = vmatmul.mubr.f32.gmra.mxu0 %v4763
  %v4879 = vpop.f32.mrf.mxu0
  %v4880 = vadd.f32 0.0, %v4879
  %v4881 = vpop.f32.mrf.mxu0
  %4882 = vmatprep.mubr.f32.mxu0 0.0
  %4883 = vmatmul.mubr.f32.gmra.mxu0 %v4766
  %v4884 = vpop.f32.mrf.mxu0
  %v4885 = vadd.f32 0.0, %v4884
  %v4886 = vpop.f32.mrf.mxu0
  %4887 = vmatprep.mubr.f32.mxu0 0.0
  %4888 = vmatmul.mubr.f32.gmra.mxu0 %v4769
  %v4889 = vpop.f32.mrf.mxu0
  %v4890 = vadd.f32 0.0, %v4889
  %v4891 = vpop.f32.mrf.mxu0
  %4892 = vmatprep.mubr.f32.mxu0 0.0
  %4893 = vmatmul.mubr.f32.gmra.mxu0 %v4772
  %v4894 = vpop.f32.mrf.mxu0
  %v4895 = vadd.f32 0.0, %v4894
  %v4896 = vpop.f32.mrf.mxu0
  %4897 = vmatprep.mubr.f32.mxu0 0.0
  %4898 = vmatmul.mubr.f32.gmra.mxu0 %v4775
  %v4899 = vpop.f32.mrf.mxu0
  %v4900 = vadd.f32 0.0, %v4899
  %v4901 = vpop.f32.mrf.mxu0
  %4902 = vmatprep.mubr.f32.mxu0 0.0
  %4903 = vmatmul.mubr.f32.gmra.mxu0 %v4778
  %v4904 = vpop.f32.mrf.mxu0
  %v4905 = vadd.f32 0.0, %v4904
  %v4906 = vpop.f32.mrf.mxu0
  %4907 = vmatprep.mubr.f32.mxu0 0.0
  %4908 = vmatmul.mubr.f32.gmra.mxu0 %v4781
  %v4909 = vpop.f32.mrf.mxu0
  %v4910 = vadd.f32 0.0, %v4909
  %v4911 = vpop.f32.mrf.mxu0
  %4912 = vmatprep.mubr.f32.mxu0 0.0
  %4913 = vmatmul.mubr.f32.gmra.mxu0 %v4784
  %v4914 = vpop.f32.mrf.mxu0
  %v4915 = vadd.f32 0.0, %v4914
  %v4916 = vpop.f32.mrf.mxu0
  %4917 = vmatprep.mubr.f32.mxu0 0.0
  %4918 = vmatmul.mubr.f32.gmra.mxu0 %v4787
  %v4919 = vpop.f32.mrf.mxu0
  %v4920 = vadd.f32 0.0, %v4919
  %v4921 = vpop.f32.mrf.mxu0
  %4922 = vmatprep.mubr.f32.mxu0 0.0
  %4923 = vmatmul.mubr.f32.gmra.mxu0 %v4790
  %v4924 = vpop.f32.mrf.mxu0
  %v4925 = vadd.f32 0.0, %v4924
  %v4926 = vpop.f32.mrf.mxu0
  %4927 = vmatprep.mubr.f32.mxu0 0.0
  %4928 = vmatmul.mubr.f32.gmra.mxu0 %v4793
  %v4929 = vpop.f32.mrf.mxu0
  %v4930 = vadd.f32 0.0, %v4929
  %v4931 = vpop.f32.mrf.mxu0
  %4932 = vmatprep.mubr.f32.mxu0 0.0
  %4933 = vmatmul.mubr.f32.gmra.mxu0 %v4796
  %v4934 = vpop.f32.mrf.mxu0
  %v4935 = vadd.f32 0.0, %v4934
  %v4936 = vpop.f32.mrf.mxu0
  %4937 = vdwg.mxu0
  %v4938 = vadd.f32 %v4732, %v4865
  %v4939 = vadd.f32 %v4733, %v4870
  %v4940 = vadd.f32 %v4734, %v4875
  %v4941 = vadd.f32 %v4735, %v4880
  %v4942 = vadd.f32 %v4736, %v4885
  %v4943 = vadd.f32 %v4737, %v4890
  %v4944 = vadd.f32 %v4738, %v4895
  %v4945 = vadd.f32 %v4739, %v4900
  %v4946 = vadd.f32 %v4740, %v4905
  %v4947 = vadd.f32 %v4741, %v4910
  %v4948 = vadd.f32 %v4742, %v4915
  %v4949 = vadd.f32 %v4743, %v4920
  %v4950 = vadd.f32 %v4744, %v4925
  %v4951 = vadd.f32 %v4745, %v4930
  %v4952 = vadd.f32 %v4746, %v4935
  %4953 = vrot.lane.b32.xlu0 %v283, 86
  %v4954 = vpop.permute.xlu0 %4953
  %4955 = vrot.lane.b32.xlu0 %v284, 86
  %v4956 = vpop.permute.xlu0 %4955
  %v4960 = vsel %vm668, %v600, 0
  %v4963 = vsel %vm668, %v601, 0
  %v4966 = vsel %vm668, %v602, 0
  %v4969 = vsel %vm668, %v603, 0
  %v4972 = vsel %vm668, %v604, 0
  %v4975 = vsel %vm668, %v605, 0
  %v4978 = vsel %vm668, %v606, 0
  %v4981 = vsel %vm668, %v607, 0
  %v4984 = vsel %vm668, %v608, 0
  %v4987 = vsel %vm668, %v609, 0
  %v4990 = vsel %vm668, %v610, 0
  %v4993 = vsel %vm668, %v611, 0
  %v4996 = vsel %vm668, %v612, 0
  %v4999 = vsel %vm668, %v613, 0
  %v5002 = vsel %vm668, %v614, 0
  %5004 = vmatprep.subr.mxu0 0.0
  %5005 = vmatpush1.msra.mxu0 0.0
  %5006 = vmatprep.subr.mxu0 0.0
  %5007 = vmatpush1.msra.mxu0 0.0
  %5008 = vmatprep.subr.mxu0 0.0
  %5009 = vmatpush1.msra.mxu0 0.0
  %5010 = vmatprep.subr.mxu0 0.0
  %5011 = vmatpush1.msra.mxu0 0.0
  %5012 = vmatprep.subr.mxu0 0.0
  %5013 = vmatpush1.msra.mxu0 0.0
  %5014 = vmatprep.subr.mxu0 0.0
  %5015 = vmatpush1.msra.mxu0 0.0
  %5016 = vmatprep.subr.mxu0 0.0
  %5017 = vmatpush1.msra.mxu0 0.0
  %5018 = vmatprep.subr.mxu0 0.0
  %5019 = vmatpush1.msra.mxu0 0.0
  %5020 = vmatprep.subr.mxu0 0.0
  %5021 = vmatpush1.msra.mxu0 0.0
  %5022 = vmatprep.subr.mxu0 0.0
  %5023 = vmatpush1.msra.mxu0 0.0
  %5024 = vmatprep.subr.mxu0 0.0
  %5025 = vmatpush1.msra.mxu0 0.0
  %5026 = vmatprep.subr.mxu0 0.0
  %5027 = vmatpush1.msra.mxu0 0.0
  %5028 = vmatprep.subr.mxu0 0.0
  %5029 = vmatpush1.msra.mxu0 0.0
  %5030 = vmatprep.subr.mxu0 0.0
  %5031 = vmatpush1.msra.mxu0 0.0
  %5032 = vmatprep.subr.mxu0 0.0
  %5033 = vmatpush1.msra.mxu0 %v4956
  %5034 = vmatprep.subr.mxu0 0.0
  %5035 = vmatpush1.msra.mxu0 %v4954
  %5036 = vmatprep.subr.mxu0 0.0
  %5037 = vmatpush2.msra.mxu0 0.0
  %5038 = vmatprep.subr.mxu0 0.0
  %5039 = vmatpush2.msra.mxu0 0.0
  %5040 = vmatprep.subr.mxu0 0.0
  %5041 = vmatpush2.msra.mxu0 0.0
  %5042 = vmatprep.subr.mxu0 0.0
  %5043 = vmatpush2.msra.mxu0 0.0
  %5044 = vmatprep.subr.mxu0 0.0
  %5045 = vmatpush2.msra.mxu0 0.0
  %5046 = vmatprep.subr.mxu0 0.0
  %5047 = vmatpush2.msra.mxu0 0.0
  %5048 = vmatprep.subr.mxu0 0.0
  %5049 = vmatpush2.msra.mxu0 0.0
  %5050 = vmatprep.subr.mxu0 0.0
  %5051 = vmatpush2.msra.mxu0 0.0
  %5052 = vmatprep.subr.mxu0 0.0
  %5053 = vmatpush2.msra.mxu0 0.0
  %5054 = vmatprep.subr.mxu0 0.0
  %5055 = vmatpush2.msra.mxu0 0.0
  %5056 = vmatprep.subr.mxu0 0.0
  %5057 = vmatpush2.msra.mxu0 0.0
  %5058 = vmatprep.subr.mxu0 0.0
  %5059 = vmatpush2.msra.mxu0 0.0
  %5060 = vmatprep.subr.mxu0 0.0
  %5061 = vmatpush2.msra.mxu0 0.0
  %5062 = vmatprep.subr.mxu0 0.0
  %5063 = vmatpush2.msra.mxu0 0.0
  %5064 = vmatprep.subr.mxu0 0.0
  %5065 = vmatpush2.msra.mxu0 0.0
  %5066 = vmatprep.subr.mxu0 0.0
  %5067 = vmatpush2.msra.mxu0 0.0
  %5068 = vmatprep.mubr.f32.mxu0 0.0
  %5069 = vmatmul.mubr.f32.gmra.mxu0 %v4960
  %v5070 = vpop.f32.mrf.mxu0
  %v5071 = vadd.f32 0.0, %v5070
  %v5072 = vpop.f32.mrf.mxu0
  %5073 = vmatprep.mubr.f32.mxu0 0.0
  %5074 = vmatmul.mubr.f32.gmra.mxu0 %v4963
  %v5075 = vpop.f32.mrf.mxu0
  %v5076 = vadd.f32 0.0, %v5075
  %v5077 = vpop.f32.mrf.mxu0
  %5078 = vmatprep.mubr.f32.mxu0 0.0
  %5079 = vmatmul.mubr.f32.gmra.mxu0 %v4966
  %v5080 = vpop.f32.mrf.mxu0
  %v5081 = vadd.f32 0.0, %v5080
  %v5082 = vpop.f32.mrf.mxu0
  %5083 = vmatprep.mubr.f32.mxu0 0.0
  %5084 = vmatmul.mubr.f32.gmra.mxu0 %v4969
  %v5085 = vpop.f32.mrf.mxu0
  %v5086 = vadd.f32 0.0, %v5085
  %v5087 = vpop.f32.mrf.mxu0
  %5088 = vmatprep.mubr.f32.mxu0 0.0
  %5089 = vmatmul.mubr.f32.gmra.mxu0 %v4972
  %v5090 = vpop.f32.mrf.mxu0
  %v5091 = vadd.f32 0.0, %v5090
  %v5092 = vpop.f32.mrf.mxu0
  %5093 = vmatprep.mubr.f32.mxu0 0.0
  %5094 = vmatmul.mubr.f32.gmra.mxu0 %v4975
  %v5095 = vpop.f32.mrf.mxu0
  %v5096 = vadd.f32 0.0, %v5095
  %v5097 = vpop.f32.mrf.mxu0
  %5098 = vmatprep.mubr.f32.mxu0 0.0
  %5099 = vmatmul.mubr.f32.gmra.mxu0 %v4978
  %v5100 = vpop.f32.mrf.mxu0
  %v5101 = vadd.f32 0.0, %v5100
  %v5102 = vpop.f32.mrf.mxu0
  %5103 = vmatprep.mubr.f32.mxu0 0.0
  %5104 = vmatmul.mubr.f32.gmra.mxu0 %v4981
  %v5105 = vpop.f32.mrf.mxu0
  %v5106 = vadd.f32 0.0, %v5105
  %v5107 = vpop.f32.mrf.mxu0
  %5108 = vmatprep.mubr.f32.mxu0 0.0
  %5109 = vmatmul.mubr.f32.gmra.mxu0 %v4984
  %v5110 = vpop.f32.mrf.mxu0
  %v5111 = vadd.f32 0.0, %v5110
  %v5112 = vpop.f32.mrf.mxu0
  %5113 = vmatprep.mubr.f32.mxu0 0.0
  %5114 = vmatmul.mubr.f32.gmra.mxu0 %v4987
  %v5115 = vpop.f32.mrf.mxu0
  %v5116 = vadd.f32 0.0, %v5115
  %v5117 = vpop.f32.mrf.mxu0
  %5118 = vmatprep.mubr.f32.mxu0 0.0
  %5119 = vmatmul.mubr.f32.gmra.mxu0 %v4990
  %v5120 = vpop.f32.mrf.mxu0
  %v5121 = vadd.f32 0.0, %v5120
  %v5122 = vpop.f32.mrf.mxu0
  %5123 = vmatprep.mubr.f32.mxu0 0.0
  %5124 = vmatmul.mubr.f32.gmra.mxu0 %v4993
  %v5125 = vpop.f32.mrf.mxu0
  %v5126 = vadd.f32 0.0, %v5125
  %v5127 = vpop.f32.mrf.mxu0
  %5128 = vmatprep.mubr.f32.mxu0 0.0
  %5129 = vmatmul.mubr.f32.gmra.mxu0 %v4996
  %v5130 = vpop.f32.mrf.mxu0
  %v5131 = vadd.f32 0.0, %v5130
  %v5132 = vpop.f32.mrf.mxu0
  %5133 = vmatprep.mubr.f32.mxu0 0.0
  %5134 = vmatmul.mubr.f32.gmra.mxu0 %v4999
  %v5135 = vpop.f32.mrf.mxu0
  %v5136 = vadd.f32 0.0, %v5135
  %v5137 = vpop.f32.mrf.mxu0
  %5138 = vmatprep.mubr.f32.mxu0 0.0
  %5139 = vmatmul.mubr.f32.gmra.mxu0 %v5002
  %v5140 = vpop.f32.mrf.mxu0
  %v5141 = vadd.f32 0.0, %v5140
  %v5142 = vpop.f32.mrf.mxu0
  %5143 = vdwg.mxu0
  %v5144 = vadd.f32 %v4938, %v5071
  %v5145 = vadd.f32 %v4939, %v5076
  %v5146 = vadd.f32 %v4940, %v5081
  %v5147 = vadd.f32 %v4941, %v5086
  %v5148 = vadd.f32 %v4942, %v5091
  %v5149 = vadd.f32 %v4943, %v5096
  %v5150 = vadd.f32 %v4944, %v5101
  %v5151 = vadd.f32 %v4945, %v5106
  %v5152 = vadd.f32 %v4946, %v5111
  %v5153 = vadd.f32 %v4947, %v5116
  %v5154 = vadd.f32 %v4948, %v5121
  %v5155 = vadd.f32 %v4949, %v5126
  %v5156 = vadd.f32 %v4950, %v5131
  %v5157 = vadd.f32 %v4951, %v5136
  %v5158 = vadd.f32 %v4952, %v5141
  %5159 = vrot.lane.b32.xlu0 %v283, 84
  %v5160 = vpop.permute.xlu0 %5159
  %5161 = vrot.lane.b32.xlu0 %v284, 84
  %v5162 = vpop.permute.xlu0 %5161
  %v5166 = vsel %vm668, %v615, 0
  %v5169 = vsel %vm668, %v616, 0
  %v5172 = vsel %vm668, %v617, 0
  %v5175 = vsel %vm668, %v618, 0
  %v5178 = vsel %vm668, %v619, 0
  %v5181 = vsel %vm668, %v620, 0
  %v5184 = vsel %vm668, %v621, 0
  %v5187 = vsel %vm668, %v622, 0
  %v5190 = vsel %vm668, %v623, 0
  %v5193 = vsel %vm668, %v624, 0
  %v5196 = vsel %vm668, %v625, 0
  %v5199 = vsel %vm668, %v626, 0
  %v5202 = vsel %vm668, %v627, 0
  %v5205 = vsel %vm668, %v628, 0
  %v5208 = vsel %vm668, %v629, 0
  %5210 = vmatprep.subr.mxu0 0.0
  %5211 = vmatpush1.msra.mxu0 0.0
  %5212 = vmatprep.subr.mxu0 0.0
  %5213 = vmatpush1.msra.mxu0 0.0
  %5214 = vmatprep.subr.mxu0 0.0
  %5215 = vmatpush1.msra.mxu0 0.0
  %5216 = vmatprep.subr.mxu0 0.0
  %5217 = vmatpush1.msra.mxu0 0.0
  %5218 = vmatprep.subr.mxu0 0.0
  %5219 = vmatpush1.msra.mxu0 0.0
  %5220 = vmatprep.subr.mxu0 0.0
  %5221 = vmatpush1.msra.mxu0 0.0
  %5222 = vmatprep.subr.mxu0 0.0
  %5223 = vmatpush1.msra.mxu0 0.0
  %5224 = vmatprep.subr.mxu0 0.0
  %5225 = vmatpush1.msra.mxu0 0.0
  %5226 = vmatprep.subr.mxu0 0.0
  %5227 = vmatpush1.msra.mxu0 0.0
  %5228 = vmatprep.subr.mxu0 0.0
  %5229 = vmatpush1.msra.mxu0 0.0
  %5230 = vmatprep.subr.mxu0 0.0
  %5231 = vmatpush1.msra.mxu0 0.0
  %5232 = vmatprep.subr.mxu0 0.0
  %5233 = vmatpush1.msra.mxu0 0.0
  %5234 = vmatprep.subr.mxu0 0.0
  %5235 = vmatpush1.msra.mxu0 0.0
  %5236 = vmatprep.subr.mxu0 0.0
  %5237 = vmatpush1.msra.mxu0 0.0
  %5238 = vmatprep.subr.mxu0 0.0
  %5239 = vmatpush1.msra.mxu0 %v5162
  %5240 = vmatprep.subr.mxu0 0.0
  %5241 = vmatpush1.msra.mxu0 %v5160
  %5242 = vmatprep.subr.mxu0 0.0
  %5243 = vmatpush2.msra.mxu0 0.0
  %5244 = vmatprep.subr.mxu0 0.0
  %5245 = vmatpush2.msra.mxu0 0.0
  %5246 = vmatprep.subr.mxu0 0.0
  %5247 = vmatpush2.msra.mxu0 0.0
  %5248 = vmatprep.subr.mxu0 0.0
  %5249 = vmatpush2.msra.mxu0 0.0
  %5250 = vmatprep.subr.mxu0 0.0
  %5251 = vmatpush2.msra.mxu0 0.0
  %5252 = vmatprep.subr.mxu0 0.0
  %5253 = vmatpush2.msra.mxu0 0.0
  %5254 = vmatprep.subr.mxu0 0.0
  %5255 = vmatpush2.msra.mxu0 0.0
  %5256 = vmatprep.subr.mxu0 0.0
  %5257 = vmatpush2.msra.mxu0 0.0
  %5258 = vmatprep.subr.mxu0 0.0
  %5259 = vmatpush2.msra.mxu0 0.0
  %5260 = vmatprep.subr.mxu0 0.0
  %5261 = vmatpush2.msra.mxu0 0.0
  %5262 = vmatprep.subr.mxu0 0.0
  %5263 = vmatpush2.msra.mxu0 0.0
  %5264 = vmatprep.subr.mxu0 0.0
  %5265 = vmatpush2.msra.mxu0 0.0
  %5266 = vmatprep.subr.mxu0 0.0
  %5267 = vmatpush2.msra.mxu0 0.0
  %5268 = vmatprep.subr.mxu0 0.0
  %5269 = vmatpush2.msra.mxu0 0.0
  %5270 = vmatprep.subr.mxu0 0.0
  %5271 = vmatpush2.msra.mxu0 0.0
  %5272 = vmatprep.subr.mxu0 0.0
  %5273 = vmatpush2.msra.mxu0 0.0
  %5274 = vmatprep.mubr.f32.mxu0 0.0
  %5275 = vmatmul.mubr.f32.gmra.mxu0 %v5166
  %v5276 = vpop.f32.mrf.mxu0
  %v5277 = vadd.f32 0.0, %v5276
  %v5278 = vpop.f32.mrf.mxu0
  %5279 = vmatprep.mubr.f32.mxu0 0.0
  %5280 = vmatmul.mubr.f32.gmra.mxu0 %v5169
  %v5281 = vpop.f32.mrf.mxu0
  %v5282 = vadd.f32 0.0, %v5281
  %v5283 = vpop.f32.mrf.mxu0
  %5284 = vmatprep.mubr.f32.mxu0 0.0
  %5285 = vmatmul.mubr.f32.gmra.mxu0 %v5172
  %v5286 = vpop.f32.mrf.mxu0
  %v5287 = vadd.f32 0.0, %v5286
  %v5288 = vpop.f32.mrf.mxu0
  %5289 = vmatprep.mubr.f32.mxu0 0.0
  %5290 = vmatmul.mubr.f32.gmra.mxu0 %v5175
  %v5291 = vpop.f32.mrf.mxu0
  %v5292 = vadd.f32 0.0, %v5291
  %v5293 = vpop.f32.mrf.mxu0
  %5294 = vmatprep.mubr.f32.mxu0 0.0
  %5295 = vmatmul.mubr.f32.gmra.mxu0 %v5178
  %v5296 = vpop.f32.mrf.mxu0
  %v5297 = vadd.f32 0.0, %v5296
  %v5298 = vpop.f32.mrf.mxu0
  %5299 = vmatprep.mubr.f32.mxu0 0.0
  %5300 = vmatmul.mubr.f32.gmra.mxu0 %v5181
  %v5301 = vpop.f32.mrf.mxu0
  %v5302 = vadd.f32 0.0, %v5301
  %v5303 = vpop.f32.mrf.mxu0
  %5304 = vmatprep.mubr.f32.mxu0 0.0
  %5305 = vmatmul.mubr.f32.gmra.mxu0 %v5184
  %v5306 = vpop.f32.mrf.mxu0
  %v5307 = vadd.f32 0.0, %v5306
  %v5308 = vpop.f32.mrf.mxu0
  %5309 = vmatprep.mubr.f32.mxu0 0.0
  %5310 = vmatmul.mubr.f32.gmra.mxu0 %v5187
  %v5311 = vpop.f32.mrf.mxu0
  %v5312 = vadd.f32 0.0, %v5311
  %v5313 = vpop.f32.mrf.mxu0
  %5314 = vmatprep.mubr.f32.mxu0 0.0
  %5315 = vmatmul.mubr.f32.gmra.mxu0 %v5190
  %v5316 = vpop.f32.mrf.mxu0
  %v5317 = vadd.f32 0.0, %v5316
  %v5318 = vpop.f32.mrf.mxu0
  %5319 = vmatprep.mubr.f32.mxu0 0.0
  %5320 = vmatmul.mubr.f32.gmra.mxu0 %v5193
  %v5321 = vpop.f32.mrf.mxu0
  %v5322 = vadd.f32 0.0, %v5321
  %v5323 = vpop.f32.mrf.mxu0
  %5324 = vmatprep.mubr.f32.mxu0 0.0
  %5325 = vmatmul.mubr.f32.gmra.mxu0 %v5196
  %v5326 = vpop.f32.mrf.mxu0
  %v5327 = vadd.f32 0.0, %v5326
  %v5328 = vpop.f32.mrf.mxu0
  %5329 = vmatprep.mubr.f32.mxu0 0.0
  %5330 = vmatmul.mubr.f32.gmra.mxu0 %v5199
  %v5331 = vpop.f32.mrf.mxu0
  %v5332 = vadd.f32 0.0, %v5331
  %v5333 = vpop.f32.mrf.mxu0
  %5334 = vmatprep.mubr.f32.mxu0 0.0
  %5335 = vmatmul.mubr.f32.gmra.mxu0 %v5202
  %v5336 = vpop.f32.mrf.mxu0
  %v5337 = vadd.f32 0.0, %v5336
  %v5338 = vpop.f32.mrf.mxu0
  %5339 = vmatprep.mubr.f32.mxu0 0.0
  %5340 = vmatmul.mubr.f32.gmra.mxu0 %v5205
  %v5341 = vpop.f32.mrf.mxu0
  %v5342 = vadd.f32 0.0, %v5341
  %v5343 = vpop.f32.mrf.mxu0
  %5344 = vmatprep.mubr.f32.mxu0 0.0
  %5345 = vmatmul.mubr.f32.gmra.mxu0 %v5208
  %v5346 = vpop.f32.mrf.mxu0
  %v5347 = vadd.f32 0.0, %v5346
  %v5348 = vpop.f32.mrf.mxu0
  %5349 = vdwg.mxu0
  %v5350 = vadd.f32 %v5144, %v5277
  %v5351 = vadd.f32 %v5145, %v5282
  %v5352 = vadd.f32 %v5146, %v5287
  %v5353 = vadd.f32 %v5147, %v5292
  %v5354 = vadd.f32 %v5148, %v5297
  %v5355 = vadd.f32 %v5149, %v5302
  %v5356 = vadd.f32 %v5150, %v5307
  %v5357 = vadd.f32 %v5151, %v5312
  %v5358 = vadd.f32 %v5152, %v5317
  %v5359 = vadd.f32 %v5153, %v5322
  %v5360 = vadd.f32 %v5154, %v5327
  %v5361 = vadd.f32 %v5155, %v5332
  %v5362 = vadd.f32 %v5156, %v5337
  %v5363 = vadd.f32 %v5157, %v5342
  %v5364 = vadd.f32 %v5158, %v5347
  %5365 = vrot.lane.b32.xlu0 %v283, 82
  %v5366 = vpop.permute.xlu0 %5365
  %5367 = vrot.lane.b32.xlu0 %v284, 82
  %v5368 = vpop.permute.xlu0 %5367
  %v5372 = vsel %vm668, %v630, 0
  %v5375 = vsel %vm668, %v631, 0
  %v5378 = vsel %vm668, %v632, 0
  %v5381 = vsel %vm668, %v633, 0
  %v5384 = vsel %vm668, %v634, 0
  %v5387 = vsel %vm668, %v635, 0
  %v5390 = vsel %vm668, %v636, 0
  %v5393 = vsel %vm668, %v637, 0
  %v5396 = vsel %vm668, %v638, 0
  %v5399 = vsel %vm668, %v639, 0
  %v5402 = vsel %vm668, %v640, 0
  %v5405 = vsel %vm668, %v641, 0
  %v5408 = vsel %vm668, %v642, 0
  %v5411 = vsel %vm668, %v643, 0
  %v5414 = vsel %vm668, %v644, 0
  %5416 = vmatprep.subr.mxu0 0.0
  %5417 = vmatpush1.msra.mxu0 0.0
  %5418 = vmatprep.subr.mxu0 0.0
  %5419 = vmatpush1.msra.mxu0 0.0
  %5420 = vmatprep.subr.mxu0 0.0
  %5421 = vmatpush1.msra.mxu0 0.0
  %5422 = vmatprep.subr.mxu0 0.0
  %5423 = vmatpush1.msra.mxu0 0.0
  %5424 = vmatprep.subr.mxu0 0.0
  %5425 = vmatpush1.msra.mxu0 0.0
  %5426 = vmatprep.subr.mxu0 0.0
  %5427 = vmatpush1.msra.mxu0 0.0
  %5428 = vmatprep.subr.mxu0 0.0
  %5429 = vmatpush1.msra.mxu0 0.0
  %5430 = vmatprep.subr.mxu0 0.0
  %5431 = vmatpush1.msra.mxu0 0.0
  %5432 = vmatprep.subr.mxu0 0.0
  %5433 = vmatpush1.msra.mxu0 0.0
  %5434 = vmatprep.subr.mxu0 0.0
  %5435 = vmatpush1.msra.mxu0 0.0
  %5436 = vmatprep.subr.mxu0 0.0
  %5437 = vmatpush1.msra.mxu0 0.0
  %5438 = vmatprep.subr.mxu0 0.0
  %5439 = vmatpush1.msra.mxu0 0.0
  %5440 = vmatprep.subr.mxu0 0.0
  %5441 = vmatpush1.msra.mxu0 0.0
  %5442 = vmatprep.subr.mxu0 0.0
  %5443 = vmatpush1.msra.mxu0 0.0
  %5444 = vmatprep.subr.mxu0 0.0
  %5445 = vmatpush1.msra.mxu0 %v5368
  %5446 = vmatprep.subr.mxu0 0.0
  %5447 = vmatpush1.msra.mxu0 %v5366
  %5448 = vmatprep.subr.mxu0 0.0
  %5449 = vmatpush2.msra.mxu0 0.0
  %5450 = vmatprep.subr.mxu0 0.0
  %5451 = vmatpush2.msra.mxu0 0.0
  %5452 = vmatprep.subr.mxu0 0.0
  %5453 = vmatpush2.msra.mxu0 0.0
  %5454 = vmatprep.subr.mxu0 0.0
  %5455 = vmatpush2.msra.mxu0 0.0
  %5456 = vmatprep.subr.mxu0 0.0
  %5457 = vmatpush2.msra.mxu0 0.0
  %5458 = vmatprep.subr.mxu0 0.0
  %5459 = vmatpush2.msra.mxu0 0.0
  %5460 = vmatprep.subr.mxu0 0.0
  %5461 = vmatpush2.msra.mxu0 0.0
  %5462 = vmatprep.subr.mxu0 0.0
  %5463 = vmatpush2.msra.mxu0 0.0
  %5464 = vmatprep.subr.mxu0 0.0
  %5465 = vmatpush2.msra.mxu0 0.0
  %5466 = vmatprep.subr.mxu0 0.0
  %5467 = vmatpush2.msra.mxu0 0.0
  %5468 = vmatprep.subr.mxu0 0.0
  %5469 = vmatpush2.msra.mxu0 0.0
  %5470 = vmatprep.subr.mxu0 0.0
  %5471 = vmatpush2.msra.mxu0 0.0
  %5472 = vmatprep.subr.mxu0 0.0
  %5473 = vmatpush2.msra.mxu0 0.0
  %5474 = vmatprep.subr.mxu0 0.0
  %5475 = vmatpush2.msra.mxu0 0.0
  %5476 = vmatprep.subr.mxu0 0.0
  %5477 = vmatpush2.msra.mxu0 0.0
  %5478 = vmatprep.subr.mxu0 0.0
  %5479 = vmatpush2.msra.mxu0 0.0
  %5480 = vmatprep.mubr.f32.mxu0 0.0
  %5481 = vmatmul.mubr.f32.gmra.mxu0 %v5372
  %v5482 = vpop.f32.mrf.mxu0
  %v5483 = vadd.f32 0.0, %v5482
  %v5484 = vpop.f32.mrf.mxu0
  %5485 = vmatprep.mubr.f32.mxu0 0.0
  %5486 = vmatmul.mubr.f32.gmra.mxu0 %v5375
  %v5487 = vpop.f32.mrf.mxu0
  %v5488 = vadd.f32 0.0, %v5487
  %v5489 = vpop.f32.mrf.mxu0
  %5490 = vmatprep.mubr.f32.mxu0 0.0
  %5491 = vmatmul.mubr.f32.gmra.mxu0 %v5378
  %v5492 = vpop.f32.mrf.mxu0
  %v5493 = vadd.f32 0.0, %v5492
  %v5494 = vpop.f32.mrf.mxu0
  %5495 = vmatprep.mubr.f32.mxu0 0.0
  %5496 = vmatmul.mubr.f32.gmra.mxu0 %v5381
  %v5497 = vpop.f32.mrf.mxu0
  %v5498 = vadd.f32 0.0, %v5497
  %v5499 = vpop.f32.mrf.mxu0
  %5500 = vmatprep.mubr.f32.mxu0 0.0
  %5501 = vmatmul.mubr.f32.gmra.mxu0 %v5384
  %v5502 = vpop.f32.mrf.mxu0
  %v5503 = vadd.f32 0.0, %v5502
  %v5504 = vpop.f32.mrf.mxu0
  %5505 = vmatprep.mubr.f32.mxu0 0.0
  %5506 = vmatmul.mubr.f32.gmra.mxu0 %v5387
  %v5507 = vpop.f32.mrf.mxu0
  %v5508 = vadd.f32 0.0, %v5507
  %v5509 = vpop.f32.mrf.mxu0
  %5510 = vmatprep.mubr.f32.mxu0 0.0
  %5511 = vmatmul.mubr.f32.gmra.mxu0 %v5390
  %v5512 = vpop.f32.mrf.mxu0
  %v5513 = vadd.f32 0.0, %v5512
  %v5514 = vpop.f32.mrf.mxu0
  %5515 = vmatprep.mubr.f32.mxu0 0.0
  %5516 = vmatmul.mubr.f32.gmra.mxu0 %v5393
  %v5517 = vpop.f32.mrf.mxu0
  %v5518 = vadd.f32 0.0, %v5517
  %v5519 = vpop.f32.mrf.mxu0
  %5520 = vmatprep.mubr.f32.mxu0 0.0
  %5521 = vmatmul.mubr.f32.gmra.mxu0 %v5396
  %v5522 = vpop.f32.mrf.mxu0
  %v5523 = vadd.f32 0.0, %v5522
  %v5524 = vpop.f32.mrf.mxu0
  %5525 = vmatprep.mubr.f32.mxu0 0.0
  %5526 = vmatmul.mubr.f32.gmra.mxu0 %v5399
  %v5527 = vpop.f32.mrf.mxu0
  %v5528 = vadd.f32 0.0, %v5527
  %v5529 = vpop.f32.mrf.mxu0
  %5530 = vmatprep.mubr.f32.mxu0 0.0
  %5531 = vmatmul.mubr.f32.gmra.mxu0 %v5402
  %v5532 = vpop.f32.mrf.mxu0
  %v5533 = vadd.f32 0.0, %v5532
  %v5534 = vpop.f32.mrf.mxu0
  %5535 = vmatprep.mubr.f32.mxu0 0.0
  %5536 = vmatmul.mubr.f32.gmra.mxu0 %v5405
  %v5537 = vpop.f32.mrf.mxu0
  %v5538 = vadd.f32 0.0, %v5537
  %v5539 = vpop.f32.mrf.mxu0
  %5540 = vmatprep.mubr.f32.mxu0 0.0
  %5541 = vmatmul.mubr.f32.gmra.mxu0 %v5408
  %v5542 = vpop.f32.mrf.mxu0
  %v5543 = vadd.f32 0.0, %v5542
  %v5544 = vpop.f32.mrf.mxu0
  %5545 = vmatprep.mubr.f32.mxu0 0.0
  %5546 = vmatmul.mubr.f32.gmra.mxu0 %v5411
  %v5547 = vpop.f32.mrf.mxu0
  %v5548 = vadd.f32 0.0, %v5547
  %v5549 = vpop.f32.mrf.mxu0
  %5550 = vmatprep.mubr.f32.mxu0 0.0
  %5551 = vmatmul.mubr.f32.gmra.mxu0 %v5414
  %v5552 = vpop.f32.mrf.mxu0
  %v5553 = vadd.f32 0.0, %v5552
  %v5554 = vpop.f32.mrf.mxu0
  %5555 = vdwg.mxu0
  %v5556 = vadd.f32 %v5350, %v5483
  %v5557 = vadd.f32 %v5351, %v5488
  %v5558 = vadd.f32 %v5352, %v5493
  %v5559 = vadd.f32 %v5353, %v5498
  %v5560 = vadd.f32 %v5354, %v5503
  %v5561 = vadd.f32 %v5355, %v5508
  %v5562 = vadd.f32 %v5356, %v5513
  %v5563 = vadd.f32 %v5357, %v5518
  %v5564 = vadd.f32 %v5358, %v5523
  %v5565 = vadd.f32 %v5359, %v5528
  %v5566 = vadd.f32 %v5360, %v5533
  %v5567 = vadd.f32 %v5361, %v5538
  %v5568 = vadd.f32 %v5362, %v5543
  %v5569 = vadd.f32 %v5363, %v5548
  %v5570 = vadd.f32 %v5364, %v5553
  %5571 = vrot.lane.b32.xlu0 %v283, 80
  %v5572 = vpop.permute.xlu0 %5571
  %5573 = vrot.lane.b32.xlu0 %v284, 80
  %v5574 = vpop.permute.xlu0 %5573
  %v5578 = vsel %vm668, %v645, 0
  %v5581 = vsel %vm668, %v646, 0
  %v5584 = vsel %vm668, %v647, 0
  %v5587 = vsel %vm668, %v648, 0
  %v5590 = vsel %vm668, %v649, 0
  %v5593 = vsel %vm668, %v650, 0
  %v5596 = vsel %vm668, %v651, 0
  %v5599 = vsel %vm668, %v652, 0
  %v5602 = vsel %vm668, %v653, 0
  %v5605 = vsel %vm668, %v654, 0
  %v5608 = vsel %vm668, %v655, 0
  %v5611 = vsel %vm668, %v656, 0
  %v5614 = vsel %vm668, %v657, 0
  %v5617 = vsel %vm668, %v658, 0
  %v5620 = vsel %vm668, %v659, 0
  %5622 = vmatprep.subr.mxu0 0.0
  %5623 = vmatpush1.msra.mxu0 0.0
  %5624 = vmatprep.subr.mxu0 0.0
  %5625 = vmatpush1.msra.mxu0 0.0
  %5626 = vmatprep.subr.mxu0 0.0
  %5627 = vmatpush1.msra.mxu0 0.0
  %5628 = vmatprep.subr.mxu0 0.0
  %5629 = vmatpush1.msra.mxu0 0.0
  %5630 = vmatprep.subr.mxu0 0.0
  %5631 = vmatpush1.msra.mxu0 0.0
  %5632 = vmatprep.subr.mxu0 0.0
  %5633 = vmatpush1.msra.mxu0 0.0
  %5634 = vmatprep.subr.mxu0 0.0
  %5635 = vmatpush1.msra.mxu0 0.0
  %5636 = vmatprep.subr.mxu0 0.0
  %5637 = vmatpush1.msra.mxu0 0.0
  %5638 = vmatprep.subr.mxu0 0.0
  %5639 = vmatpush1.msra.mxu0 0.0
  %5640 = vmatprep.subr.mxu0 0.0
  %5641 = vmatpush1.msra.mxu0 0.0
  %5642 = vmatprep.subr.mxu0 0.0
  %5643 = vmatpush1.msra.mxu0 0.0
  %5644 = vmatprep.subr.mxu0 0.0
  %5645 = vmatpush1.msra.mxu0 0.0
  %5646 = vmatprep.subr.mxu0 0.0
  %5647 = vmatpush1.msra.mxu0 0.0
  %5648 = vmatprep.subr.mxu0 0.0
  %5649 = vmatpush1.msra.mxu0 0.0
  %5650 = vmatprep.subr.mxu0 0.0
  %5651 = vmatpush1.msra.mxu0 %v5574
  %5652 = vmatprep.subr.mxu0 0.0
  %5653 = vmatpush1.msra.mxu0 %v5572
  %5654 = vmatprep.subr.mxu0 0.0
  %5655 = vmatpush2.msra.mxu0 0.0
  %5656 = vmatprep.subr.mxu0 0.0
  %5657 = vmatpush2.msra.mxu0 0.0
  %5658 = vmatprep.subr.mxu0 0.0
  %5659 = vmatpush2.msra.mxu0 0.0
  %5660 = vmatprep.subr.mxu0 0.0
  %5661 = vmatpush2.msra.mxu0 0.0
  %5662 = vmatprep.subr.mxu0 0.0
  %5663 = vmatpush2.msra.mxu0 0.0
  %5664 = vmatprep.subr.mxu0 0.0
  %5665 = vmatpush2.msra.mxu0 0.0
  %5666 = vmatprep.subr.mxu0 0.0
  %5667 = vmatpush2.msra.mxu0 0.0
  %5668 = vmatprep.subr.mxu0 0.0
  %5669 = vmatpush2.msra.mxu0 0.0
  %5670 = vmatprep.subr.mxu0 0.0
  %5671 = vmatpush2.msra.mxu0 0.0
  %5672 = vmatprep.subr.mxu0 0.0
  %5673 = vmatpush2.msra.mxu0 0.0
  %5674 = vmatprep.subr.mxu0 0.0
  %5675 = vmatpush2.msra.mxu0 0.0
  %5676 = vmatprep.subr.mxu0 0.0
  %5677 = vmatpush2.msra.mxu0 0.0
  %5678 = vmatprep.subr.mxu0 0.0
  %5679 = vmatpush2.msra.mxu0 0.0
  %5680 = vmatprep.subr.mxu0 0.0
  %5681 = vmatpush2.msra.mxu0 0.0
  %5682 = vmatprep.subr.mxu0 0.0
  %5683 = vmatpush2.msra.mxu0 0.0
  %5684 = vmatprep.subr.mxu0 0.0
  %5685 = vmatpush2.msra.mxu0 0.0
  %5686 = vmatprep.mubr.f32.mxu0 0.0
  %5687 = vmatmul.mubr.f32.gmra.mxu0 %v5578
  %v5688 = vpop.f32.mrf.mxu0
  %v5689 = vadd.f32 0.0, %v5688
  %v5690 = vpop.f32.mrf.mxu0
  %5691 = vmatprep.mubr.f32.mxu0 0.0
  %5692 = vmatmul.mubr.f32.gmra.mxu0 %v5581
  %v5693 = vpop.f32.mrf.mxu0
  %v5694 = vadd.f32 0.0, %v5693
  %v5695 = vpop.f32.mrf.mxu0
  %5696 = vmatprep.mubr.f32.mxu0 0.0
  %5697 = vmatmul.mubr.f32.gmra.mxu0 %v5584
  %v5698 = vpop.f32.mrf.mxu0
  %v5699 = vadd.f32 0.0, %v5698
  %v5700 = vpop.f32.mrf.mxu0
  %5701 = vmatprep.mubr.f32.mxu0 0.0
  %5702 = vmatmul.mubr.f32.gmra.mxu0 %v5587
  %v5703 = vpop.f32.mrf.mxu0
  %v5704 = vadd.f32 0.0, %v5703
  %v5705 = vpop.f32.mrf.mxu0
  %5706 = vmatprep.mubr.f32.mxu0 0.0
  %5707 = vmatmul.mubr.f32.gmra.mxu0 %v5590
  %v5708 = vpop.f32.mrf.mxu0
  %v5709 = vadd.f32 0.0, %v5708
  %v5710 = vpop.f32.mrf.mxu0
  %5711 = vmatprep.mubr.f32.mxu0 0.0
  %5712 = vmatmul.mubr.f32.gmra.mxu0 %v5593
  %v5713 = vpop.f32.mrf.mxu0
  %v5714 = vadd.f32 0.0, %v5713
  %v5715 = vpop.f32.mrf.mxu0
  %5716 = vmatprep.mubr.f32.mxu0 0.0
  %5717 = vmatmul.mubr.f32.gmra.mxu0 %v5596
  %v5718 = vpop.f32.mrf.mxu0
  %v5719 = vadd.f32 0.0, %v5718
  %v5720 = vpop.f32.mrf.mxu0
  %5721 = vmatprep.mubr.f32.mxu0 0.0
  %5722 = vmatmul.mubr.f32.gmra.mxu0 %v5599
  %v5723 = vpop.f32.mrf.mxu0
  %v5724 = vadd.f32 0.0, %v5723
  %v5725 = vpop.f32.mrf.mxu0
  %5726 = vmatprep.mubr.f32.mxu0 0.0
  %5727 = vmatmul.mubr.f32.gmra.mxu0 %v5602
  %v5728 = vpop.f32.mrf.mxu0
  %v5729 = vadd.f32 0.0, %v5728
  %v5730 = vpop.f32.mrf.mxu0
  %5731 = vmatprep.mubr.f32.mxu0 0.0
  %5732 = vmatmul.mubr.f32.gmra.mxu0 %v5605
  %v5733 = vpop.f32.mrf.mxu0
  %v5734 = vadd.f32 0.0, %v5733
  %v5735 = vpop.f32.mrf.mxu0
  %5736 = vmatprep.mubr.f32.mxu0 0.0
  %5737 = vmatmul.mubr.f32.gmra.mxu0 %v5608
  %v5738 = vpop.f32.mrf.mxu0
  %v5739 = vadd.f32 0.0, %v5738
  %v5740 = vpop.f32.mrf.mxu0
  %5741 = vmatprep.mubr.f32.mxu0 0.0
  %5742 = vmatmul.mubr.f32.gmra.mxu0 %v5611
  %v5743 = vpop.f32.mrf.mxu0
  %v5744 = vadd.f32 0.0, %v5743
  %v5745 = vpop.f32.mrf.mxu0
  %5746 = vmatprep.mubr.f32.mxu0 0.0
  %5747 = vmatmul.mubr.f32.gmra.mxu0 %v5614
  %v5748 = vpop.f32.mrf.mxu0
  %v5749 = vadd.f32 0.0, %v5748
  %v5750 = vpop.f32.mrf.mxu0
  %5751 = vmatprep.mubr.f32.mxu0 0.0
  %5752 = vmatmul.mubr.f32.gmra.mxu0 %v5617
  %v5753 = vpop.f32.mrf.mxu0
  %v5754 = vadd.f32 0.0, %v5753
  %v5755 = vpop.f32.mrf.mxu0
  %5756 = vmatprep.mubr.f32.mxu0 0.0
  %5757 = vmatmul.mubr.f32.gmra.mxu0 %v5620
  %v5758 = vpop.f32.mrf.mxu0
  %v5759 = vadd.f32 0.0, %v5758
  %v5760 = vpop.f32.mrf.mxu0
  %5761 = vdwg.mxu0
  %v5762 = vadd.f32 %v5556, %v5689
  %v5763 = vadd.f32 %v5557, %v5694
  %v5764 = vadd.f32 %v5558, %v5699
  %v5765 = vadd.f32 %v5559, %v5704
  %v5766 = vadd.f32 %v5560, %v5709
  %v5767 = vadd.f32 %v5561, %v5714
  %v5768 = vadd.f32 %v5562, %v5719
  %v5769 = vadd.f32 %v5563, %v5724
  %v5770 = vadd.f32 %v5564, %v5729
  %v5771 = vadd.f32 %v5565, %v5734
  %v5772 = vadd.f32 %v5566, %v5739
  %v5773 = vadd.f32 %v5567, %v5744
  %v5774 = vadd.f32 %v5568, %v5749
  %v5775 = vadd.f32 %v5569, %v5754
  %v5776 = vadd.f32 %v5570, %v5759
  %v5777 = vld [vmem:[%s5] sm:$0xff]
  %v5778 = vld [vmem:[%s5 + $0x8] sm:$0xff]
  %v5779 = vld [vmem:[%s5 + $0x10] sm:$0xff]
  %v5780 = vld [vmem:[%s5 + $0x18] sm:$0xff]
  %v5781 = vld [vmem:[%s5 + $0x20] sm:$0xff]
  %v5782 = vld [vmem:[%s5 + $0x28] sm:$0xff]
  %v5783 = vld [vmem:[%s5 + $0x30] sm:$0xff]
  %v5784 = vld [vmem:[%s5 + $0x38] sm:$0xff]
  %v5785 = vld [vmem:[%s5 + $0x40] sm:$0xff]
  %v5786 = vld [vmem:[%s5 + $0x48] sm:$0xff]
  %v5787 = vld [vmem:[%s5 + $0x50] sm:$0xff]
  %v5788 = vld [vmem:[%s5 + $0x58] sm:$0xff]
  %v5789 = vld [vmem:[%s5 + $0x60] sm:$0xff]
  %v5790 = vld [vmem:[%s5 + $0x68] sm:$0xff]
  %v5791 = vld [vmem:[%s5 + $0x70] sm:$0xff]
  %5793 = vset.pattern.permute.xlu0 0
  %5794 = vperm.xlu0 %5793, %v5777
  %v5795 = vpop.permute.xlu0 %5794
  %5798 = vset.pattern.permute.xlu0 0
  %5799 = vperm.xlu0 %5798, %v5778
  %v5800 = vpop.permute.xlu0 %5799
  %5803 = vset.pattern.permute.xlu0 0
  %5804 = vperm.xlu0 %5803, %v5779
  %v5805 = vpop.permute.xlu0 %5804
  %5808 = vset.pattern.permute.xlu0 0
  %5809 = vperm.xlu0 %5808, %v5780
  %v5810 = vpop.permute.xlu0 %5809
  %5813 = vset.pattern.permute.xlu0 0
  %5814 = vperm.xlu0 %5813, %v5781
  %v5815 = vpop.permute.xlu0 %5814
  %5818 = vset.pattern.permute.xlu0 0
  %5819 = vperm.xlu0 %5818, %v5782
  %v5820 = vpop.permute.xlu0 %5819
  %5823 = vset.pattern.permute.xlu0 0
  %5824 = vperm.xlu0 %5823, %v5783
  %v5825 = vpop.permute.xlu0 %5824
  %5828 = vset.pattern.permute.xlu0 0
  %5829 = vperm.xlu0 %5828, %v5784
  %v5830 = vpop.permute.xlu0 %5829
  %5833 = vset.pattern.permute.xlu0 0
  %5834 = vperm.xlu0 %5833, %v5785
  %v5835 = vpop.permute.xlu0 %5834
  %5838 = vset.pattern.permute.xlu0 0
  %5839 = vperm.xlu0 %5838, %v5786
  %v5840 = vpop.permute.xlu0 %5839
  %5843 = vset.pattern.permute.xlu0 0
  %5844 = vperm.xlu0 %5843, %v5787
  %v5845 = vpop.permute.xlu0 %5844
  %5848 = vset.pattern.permute.xlu0 0
  %5849 = vperm.xlu0 %5848, %v5788
  %v5850 = vpop.permute.xlu0 %5849
  %5853 = vset.pattern.permute.xlu0 0
  %5854 = vperm.xlu0 %5853, %v5789
  %v5855 = vpop.permute.xlu0 %5854
  %5858 = vset.pattern.permute.xlu0 0
  %5859 = vperm.xlu0 %5858, %v5790
  %v5860 = vpop.permute.xlu0 %5859
  %5863 = vset.pattern.permute.xlu0 0
  %5864 = vperm.xlu0 %5863, %v5791
  %v5865 = vpop.permute.xlu0 %5864
  %v5867 = vadd.f32 %v5762, %v5795
  %v5868 = vadd.f32 %v5763, %v5800
  %v5869 = vadd.f32 %v5764, %v5805
  %v5870 = vadd.f32 %v5765, %v5810
  %v5871 = vadd.f32 %v5766, %v5815
  %v5872 = vadd.f32 %v5767, %v5820
  %v5873 = vadd.f32 %v5768, %v5825
  %v5874 = vadd.f32 %v5769, %v5830
  %v5875 = vadd.f32 %v5770, %v5835
  %v5876 = vadd.f32 %v5771, %v5840
  %v5877 = vadd.f32 %v5772, %v5845
  %v5878 = vadd.f32 %v5773, %v5850
  %v5879 = vadd.f32 %v5774, %v5855
  %v5880 = vadd.f32 %v5775, %v5860
  %v5881 = vadd.f32 %v5776, %v5865
  %v5882 = vmax.f32 %v5867, 0.0
  %v5883 = vmax.f32 %v5868, 0.0
  %v5884 = vmax.f32 %v5869, 0.0
  %v5885 = vmax.f32 %v5870, 0.0
  %v5886 = vmax.f32 %v5871, 0.0
  %v5887 = vmax.f32 %v5872, 0.0
  %v5888 = vmax.f32 %v5873, 0.0
  %v5889 = vmax.f32 %v5874, 0.0
  %v5890 = vmax.f32 %v5875, 0.0
  %v5891 = vmax.f32 %v5876, 0.0
  %v5892 = vmax.f32 %v5877, 0.0
  %v5893 = vmax.f32 %v5878, 0.0
  %v5894 = vmax.f32 %v5879, 0.0
  %v5895 = vmax.f32 %v5880, 0.0
  %v5896 = vmax.f32 %v5881, 0.0
  %v5897 = vld [vmem:[%s6] sm:$0xff]
  %v5898 = vld [vmem:[%s6 + $0x8] sm:$0xff]
  %v5899 = vld [vmem:[%s6 + $0x10] sm:$0xff]
  %v5900 = vld [vmem:[%s6 + $0x18] sm:$0xff]
  %v5901 = vld [vmem:[%s6 + $0x20] sm:$0xff]
  %v5902 = vld [vmem:[%s6 + $0x28] sm:$0xff]
  %v5903 = vld [vmem:[%s6 + $0x30] sm:$0xff]
  %v5904 = vld [vmem:[%s6 + $0x38] sm:$0xff]
  %v5905 = vld [vmem:[%s6 + $0x40] sm:$0xff]
  %v5906 = vld [vmem:[%s6 + $0x48] sm:$0xff]
  %v5907 = vld [vmem:[%s6 + $0x50] sm:$0xf]
  %v5908 = vld [vmem:[%s7] sm:$0xff]
  %v5909 = vld [vmem:[%s7 + $0x8] sm:$0xff]
  %v5910 = vld [vmem:[%s7 + $0x10] sm:$0xff]
  %v5911 = vld [vmem:[%s7 + $0x18] sm:$0xff]
  %v5912 = vld [vmem:[%s7 + $0x20] sm:$0xff]
  %v5913 = vld [vmem:[%s7 + $0x28] sm:$0xff]
  %v5914 = vld [vmem:[%s7 + $0x30] sm:$0xff]
  %v5915 = vld [vmem:[%s7 + $0x38] sm:$0xff]
  %v5916 = vld [vmem:[%s7 + $0x40] sm:$0xff]
  %v5917 = vld [vmem:[%s7 + $0x48] sm:$0xff]
  %v5918 = vld [vmem:[%s7 + $0x50] sm:$0xf]
  %5920 = vset.pattern.permute.xlu0 0
  %5921 = vperm.xlu0 %5920, %v5908
  %v5922 = vpop.permute.xlu0 %5921
  %5925 = vset.pattern.permute.xlu0 0
  %5926 = vperm.xlu0 %5925, %v5909
  %v5927 = vpop.permute.xlu0 %5926
  %5930 = vset.pattern.permute.xlu0 0
  %5931 = vperm.xlu0 %5930, %v5910
  %v5932 = vpop.permute.xlu0 %5931
  %5935 = vset.pattern.permute.xlu0 0
  %5936 = vperm.xlu0 %5935, %v5911
  %v5937 = vpop.permute.xlu0 %5936
  %5940 = vset.pattern.permute.xlu0 0
  %5941 = vperm.xlu0 %5940, %v5912
  %v5942 = vpop.permute.xlu0 %5941
  %5945 = vset.pattern.permute.xlu0 0
  %5946 = vperm.xlu0 %5945, %v5913
  %v5947 = vpop.permute.xlu0 %5946
  %5950 = vset.pattern.permute.xlu0 0
  %5951 = vperm.xlu0 %5950, %v5914
  %v5952 = vpop.permute.xlu0 %5951
  %5955 = vset.pattern.permute.xlu0 0
  %5956 = vperm.xlu0 %5955, %v5915
  %v5957 = vpop.permute.xlu0 %5956
  %5960 = vset.pattern.permute.xlu0 0
  %5961 = vperm.xlu0 %5960, %v5916
  %v5962 = vpop.permute.xlu0 %5961
  %5965 = vset.pattern.permute.xlu0 0
  %5966 = vperm.xlu0 %5965, %v5917
  %v5967 = vpop.permute.xlu0 %5966
  %5970 = vset.pattern.permute.xlu0 0
  %5971 = vperm.xlu0 %5970, %v5918
  %v5972 = vpop.permute.xlu0 %5971
  %vm5974 = vcmask 982016
  %v5976 = vsel %vm5974, %v5897, 0
  %v5979 = vsel %vm5974, %v5898, 0
  %v5982 = vsel %vm5974, %v5899, 0
  %v5985 = vsel %vm5974, %v5900, 0
  %v5988 = vsel %vm5974, %v5901, 0
  %v5991 = vsel %vm5974, %v5902, 0
  %v5994 = vsel %vm5974, %v5903, 0
  %v5997 = vsel %vm5974, %v5904, 0
  %v6000 = vsel %vm5974, %v5905, 0
  %v6003 = vsel %vm5974, %v5906, 0
  %v6006 = vsel %vm5974, %v5907, 0
  %6008 = vmatprep.subr.mxu0 0.0
  %6009 = vmatpush1.msra.mxu0 0.0
  %6010 = vmatprep.subr.mxu0 0.0
  %6011 = vmatpush1.msra.mxu0 %v5896
  %6012 = vmatprep.subr.mxu0 0.0
  %6013 = vmatpush1.msra.mxu0 %v5895
  %6014 = vmatprep.subr.mxu0 0.0
  %6015 = vmatpush1.msra.mxu0 %v5894
  %6016 = vmatprep.subr.mxu0 0.0
  %6017 = vmatpush1.msra.mxu0 %v5893
  %6018 = vmatprep.subr.mxu0 0.0
  %6019 = vmatpush1.msra.mxu0 %v5892
  %6020 = vmatprep.subr.mxu0 0.0
  %6021 = vmatpush1.msra.mxu0 %v5891
  %6022 = vmatprep.subr.mxu0 0.0
  %6023 = vmatpush1.msra.mxu0 %v5890
  %6024 = vmatprep.subr.mxu0 0.0
  %6025 = vmatpush1.msra.mxu0 %v5889
  %6026 = vmatprep.subr.mxu0 0.0
  %6027 = vmatpush1.msra.mxu0 %v5888
  %6028 = vmatprep.subr.mxu0 0.0
  %6029 = vmatpush1.msra.mxu0 %v5887
  %6030 = vmatprep.subr.mxu0 0.0
  %6031 = vmatpush1.msra.mxu0 %v5886
  %6032 = vmatprep.subr.mxu0 0.0
  %6033 = vmatpush1.msra.mxu0 %v5885
  %6034 = vmatprep.subr.mxu0 0.0
  %6035 = vmatpush1.msra.mxu0 %v5884
  %6036 = vmatprep.subr.mxu0 0.0
  %6037 = vmatpush1.msra.mxu0 %v5883
  %6038 = vmatprep.subr.mxu0 0.0
  %6039 = vmatpush1.msra.mxu0 %v5882
  %6040 = vmatprep.subr.mxu0 0.0
  %6041 = vmatpush2.msra.mxu0 0.0
  %6042 = vmatprep.subr.mxu0 0.0
  %6043 = vmatpush2.msra.mxu0 0.0
  %6044 = vmatprep.subr.mxu0 0.0
  %6045 = vmatpush2.msra.mxu0 0.0
  %6046 = vmatprep.subr.mxu0 0.0
  %6047 = vmatpush2.msra.mxu0 0.0
  %6048 = vmatprep.subr.mxu0 0.0
  %6049 = vmatpush2.msra.mxu0 0.0
  %6050 = vmatprep.subr.mxu0 0.0
  %6051 = vmatpush2.msra.mxu0 0.0
  %6052 = vmatprep.subr.mxu0 0.0
  %6053 = vmatpush2.msra.mxu0 0.0
  %6054 = vmatprep.subr.mxu0 0.0
  %6055 = vmatpush2.msra.mxu0 0.0
  %6056 = vmatprep.subr.mxu0 0.0
  %6057 = vmatpush2.msra.mxu0 0.0
  %6058 = vmatprep.subr.mxu0 0.0
  %6059 = vmatpush2.msra.mxu0 0.0
  %6060 = vmatprep.subr.mxu0 0.0
  %6061 = vmatpush2.msra.mxu0 0.0
  %6062 = vmatprep.subr.mxu0 0.0
  %6063 = vmatpush2.msra.mxu0 0.0
  %6064 = vmatprep.subr.mxu0 0.0
  %6065 = vmatpush2.msra.mxu0 0.0
  %6066 = vmatprep.subr.mxu0 0.0
  %6067 = vmatpush2.msra.mxu0 0.0
  %6068 = vmatprep.subr.mxu0 0.0
  %6069 = vmatpush2.msra.mxu0 0.0
  %6070 = vmatprep.subr.mxu0 0.0
  %6071 = vmatpush2.msra.mxu0 0.0
  %6072 = vmatprep.mubr.f32.mxu0 0.0
  %6073 = vmatmul.mubr.f32.gmra.mxu0 %v5976
  %v6074 = vpop.f32.mrf.mxu0
  %v6075 = vadd.f32 %v5922, %v6074
  %v6076 = vpop.f32.mrf.mxu0
  %6077 = vmatprep.mubr.f32.mxu0 0.0
  %6078 = vmatmul.mubr.f32.gmra.mxu0 %v5979
  %v6079 = vpop.f32.mrf.mxu0
  %v6080 = vadd.f32 %v5927, %v6079
  %v6081 = vpop.f32.mrf.mxu0
  %6082 = vmatprep.mubr.f32.mxu0 0.0
  %6083 = vmatmul.mubr.f32.gmra.mxu0 %v5982
  %v6084 = vpop.f32.mrf.mxu0
  %v6085 = vadd.f32 %v5932, %v6084
  %v6086 = vpop.f32.mrf.mxu0
  %6087 = vmatprep.mubr.f32.mxu0 0.0
  %6088 = vmatmul.mubr.f32.gmra.mxu0 %v5985
  %v6089 = vpop.f32.mrf.mxu0
  %v6090 = vadd.f32 %v5937, %v6089
  %v6091 = vpop.f32.mrf.mxu0
  %6092 = vmatprep.mubr.f32.mxu0 0.0
  %6093 = vmatmul.mubr.f32.gmra.mxu0 %v5988
  %v6094 = vpop.f32.mrf.mxu0
  %v6095 = vadd.f32 %v5942, %v6094
  %v6096 = vpop.f32.mrf.mxu0
  %6097 = vmatprep.mubr.f32.mxu0 0.0
  %6098 = vmatmul.mubr.f32.gmra.mxu0 %v5991
  %v6099 = vpop.f32.mrf.mxu0
  %v6100 = vadd.f32 %v5947, %v6099
  %v6101 = vpop.f32.mrf.mxu0
  %6102 = vmatprep.mubr.f32.mxu0 0.0
  %6103 = vmatmul.mubr.f32.gmra.mxu0 %v5994
  %v6104 = vpop.f32.mrf.mxu0
  %v6105 = vadd.f32 %v5952, %v6104
  %v6106 = vpop.f32.mrf.mxu0
  %6107 = vmatprep.mubr.f32.mxu0 0.0
  %6108 = vmatmul.mubr.f32.gmra.mxu0 %v5997
  %v6109 = vpop.f32.mrf.mxu0
  %v6110 = vadd.f32 %v5957, %v6109
  %v6111 = vpop.f32.mrf.mxu0
  %6112 = vmatprep.mubr.f32.mxu0 0.0
  %6113 = vmatmul.mubr.f32.gmra.mxu0 %v6000
  %v6114 = vpop.f32.mrf.mxu0
  %v6115 = vadd.f32 %v5962, %v6114
  %v6116 = vpop.f32.mrf.mxu0
  %6117 = vmatprep.mubr.f32.mxu0 0.0
  %6118 = vmatmul.mubr.f32.gmra.mxu0 %v6003
  %v6119 = vpop.f32.mrf.mxu0
  %v6120 = vadd.f32 %v5967, %v6119
  %v6121 = vpop.f32.mrf.mxu0
  %6122 = vmatprep.mubr.f32.mxu0 0.0
  %6123 = vmatmul.mubr.f32.gmra.mxu0 %v6006
  %v6124 = vpop.f32.mrf.mxu0
  %v6125 = vadd.f32 %v5972, %v6124
  %v6126 = vpop.f32.mrf.mxu0
  %6127 = vdwg.mxu0
  %v6128 = vmax.f32 %v6075, 0.0
  %v6129 = vmax.f32 %v6080, 0.0
  %v6130 = vmax.f32 %v6085, 0.0
  %v6131 = vmax.f32 %v6090, 0.0
  %v6132 = vmax.f32 %v6095, 0.0
  %v6133 = vmax.f32 %v6100, 0.0
  %v6134 = vmax.f32 %v6105, 0.0
  %v6135 = vmax.f32 %v6110, 0.0
  %v6136 = vmax.f32 %v6115, 0.0
  %v6137 = vmax.f32 %v6120, 0.0
  %v6138 = vmax.f32 %v6125, 0.0
  %v6139 = vld [vmem:[%s8] sm:$0xff]
  %v6140 = vld [vmem:[%s8 + $0x8] sm:$0x3]
  %v6141 = vld [vmem:[%s9] sm:$0xff]
  %v6142 = vld [vmem:[%s9 + $0x8] sm:$0x3]
  %6144 = vset.pattern.permute.xlu0 0
  %6145 = vperm.xlu0 %6144, %v6141
  %v6146 = vpop.permute.xlu0 %6145
  %6149 = vset.pattern.permute.xlu0 0
  %6150 = vperm.xlu0 %6149, %v6142
  %v6151 = vpop.permute.xlu0 %6150
  %vm6153 = vcmask 687104
  %v6155 = vsel %vm6153, %v6139, 0
  %v6158 = vsel %vm6153, %v6140, 0
  %vm6160 = vcmask 1043456
  %v6162 = vsel %vm6160, %v6138, 0
  %6164 = vmatprep.subr.mxu0 0.0
  %6165 = vmatpush1.msra.mxu0 0.0
  %6166 = vmatprep.subr.mxu0 0.0
  %6167 = vmatpush1.msra.mxu0 0.0
  %6168 = vmatprep.subr.mxu0 0.0
  %6169 = vmatpush1.msra.mxu0 0.0
  %6170 = vmatprep.subr.mxu0 0.0
  %6171 = vmatpush1.msra.mxu0 0.0
  %6172 = vmatprep.subr.mxu0 0.0
  %6173 = vmatpush1.msra.mxu0 0.0
  %6174 = vmatprep.subr.mxu0 0.0
  %6175 = vmatpush1.msra.mxu0 %v6162
  %6176 = vmatprep.subr.mxu0 0.0
  %6177 = vmatpush1.msra.mxu0 %v6137
  %6178 = vmatprep.subr.mxu0 0.0
  %6179 = vmatpush1.msra.mxu0 %v6136
  %6180 = vmatprep.subr.mxu0 0.0
  %6181 = vmatpush1.msra.mxu0 %v6135
  %6182 = vmatprep.subr.mxu0 0.0
  %6183 = vmatpush1.msra.mxu0 %v6134
  %6184 = vmatprep.subr.mxu0 0.0
  %6185 = vmatpush1.msra.mxu0 %v6133
  %6186 = vmatprep.subr.mxu0 0.0
  %6187 = vmatpush1.msra.mxu0 %v6132
  %6188 = vmatprep.subr.mxu0 0.0
  %6189 = vmatpush1.msra.mxu0 %v6131
  %6190 = vmatprep.subr.mxu0 0.0
  %6191 = vmatpush1.msra.mxu0 %v6130
  %6192 = vmatprep.subr.mxu0 0.0
  %6193 = vmatpush1.msra.mxu0 %v6129
  %6194 = vmatprep.subr.mxu0 0.0
  %6195 = vmatpush1.msra.mxu0 %v6128
  %6196 = vmatprep.subr.mxu0 0.0
  %6197 = vmatpush2.msra.mxu0 0.0
  %6198 = vmatprep.subr.mxu0 0.0
  %6199 = vmatpush2.msra.mxu0 0.0
  %6200 = vmatprep.subr.mxu0 0.0
  %6201 = vmatpush2.msra.mxu0 0.0
  %6202 = vmatprep.subr.mxu0 0.0
  %6203 = vmatpush2.msra.mxu0 0.0
  %6204 = vmatprep.subr.mxu0 0.0
  %6205 = vmatpush2.msra.mxu0 0.0
  %6206 = vmatprep.subr.mxu0 0.0
  %6207 = vmatpush2.msra.mxu0 0.0
  %6208 = vmatprep.subr.mxu0 0.0
  %6209 = vmatpush2.msra.mxu0 0.0
  %6210 = vmatprep.subr.mxu0 0.0
  %6211 = vmatpush2.msra.mxu0 0.0
  %6212 = vmatprep.subr.mxu0 0.0
  %6213 = vmatpush2.msra.mxu0 0.0
  %6214 = vmatprep.subr.mxu0 0.0
  %6215 = vmatpush2.msra.mxu0 0.0
  %6216 = vmatprep.subr.mxu0 0.0
  %6217 = vmatpush2.msra.mxu0 0.0
  %6218 = vmatprep.subr.mxu0 0.0
  %6219 = vmatpush2.msra.mxu0 0.0
  %6220 = vmatprep.subr.mxu0 0.0
  %6221 = vmatpush2.msra.mxu0 0.0
  %6222 = vmatprep.subr.mxu0 0.0
  %6223 = vmatpush2.msra.mxu0 0.0
  %6224 = vmatprep.subr.mxu0 0.0
  %6225 = vmatpush2.msra.mxu0 0.0
  %6226 = vmatprep.subr.mxu0 0.0
  %6227 = vmatpush2.msra.mxu0 0.0
  %6228 = vmatprep.mubr.f32.mxu0 0.0
  %6229 = vmatmul.mubr.f32.gmra.mxu0 %v6155
  %v6230 = vpop.f32.mrf.mxu0
  %v6231 = vadd.f32 %v6146, %v6230
  %v6232 = vpop.f32.mrf.mxu0
  %6233 = vmatprep.mubr.f32.mxu0 0.0
  %6234 = vmatmul.mubr.f32.gmra.mxu0 %v6158
  %v6235 = vpop.f32.mrf.mxu0
  %v6236 = vadd.f32 %v6151, %v6235
  %v6237 = vpop.f32.mrf.mxu0
  %6238 = vdwg.mxu0
  %vm6239 = vcmask 15360
  %6240 = vst.msk [vmem:[%s10] sm:$0xff] %vm6239, %v6231
  %vm6241 = vcmask 9216
  %6242 = vst.msk [vmem:[%s10 + $0x8] sm:$0x3] %vm6241, %v6236
  // Predicated region
  $region42: #{lenet_bn_forward.3} parent=0 // pred_check
    _
  $region43: #{lenet_bn_forward.3} parent=0 // pred_check_branch
    %6244 = sbr.rel (0) target = $region45
  $region44: #{lenet_bn_forward.3} parent=0 // pred_region
    _
  $region45: #{lenet_bn_forward.3} parent=0 // pred_fallthru
    _
  // Predicated region
  $region46: #{lenet_bn_forward.3} parent=0 // pred_check
    _
  $region47: #{lenet_bn_forward.3} parent=0 // pred_check_branch
    %6246 = sbr.rel (0) target = $region49
  $region48: #{lenet_bn_forward.3} parent=0 // pred_region
    _
  $region49: #{lenet_bn_forward.3} parent=0 // pred_fallthru
    _

</llo_original>
